<compile_context>
chip_gen: v5e
topology: v5e:2x2
jax: 0.10.0
libtpu: 0.0.40
codegen_flags: <defaults>
</compile_context>

<pallas_src>
import functools
import math

import jax
import jax.numpy as jnp
from jax.experimental import pallas as pl
from jax.experimental.pallas import tpu as pltpu


# ----------------------------- sizing helpers -------------------------------

def _round_up(x, m):
    return ((x + m - 1) // m) * m


def _tpu_vmem_capacity():
    try:
        info = pltpu.get_tpu_info()
        cap = getattr(info, "vmem_capacity_bytes", None)
        if cap:
            return int(cap)
    except Exception:
        pass
    return 64 << 20            # conservative default (v7x per-TC VMEM)


_VMEM_CAP = _tpu_vmem_capacity()


def _attn_vmem_limit():
    # ~100 MiB on 128 MiB parts (v5e/v6e), ~52 MiB on 64 MiB parts (v7x).
    return int(max(32 << 20, min(_VMEM_CAP - (12 << 20), 100 << 20)))


def _z_tile_budget():
    # Bytes for the double-buffered bf16 z tile inside the attention kernel.
    return int(min(_VMEM_CAP // 4, 32 << 20))


def _vmem_limit(estimate_bytes):
    cap = max(32 << 20, min(_VMEM_CAP - (12 << 20), 100 << 20))
    return int(min(max(estimate_bytes + (8 << 20), 32 << 20), cap))


def _pick_row_tile(rows, width_f32, align=8):
    """Row tile for row-parallel kernels: as large as a ~8 MiB VMEM budget
    allows, preferring a divisor of `rows` (skips the pad/slice copy)."""
    cap = 1024
    while cap > align and cap * width_f32 * 4 > (8 << 20):
        cap //= 2
    cap = max(cap, align)
    tr = cap
    while tr > align and rows % tr != 0:
        tr //= 2
    if rows % tr == 0:
        return tr, rows
    tr = min(cap, _round_up(rows, align))
    return tr, _round_up(rows, tr)


# ----------------------------- Pallas kernels ------------------------------

def _linear_kernel(x_ref, w_ref, b_ref, o_ref, *, pre_relu):
    x = x_ref[...].astype(jnp.float32)
    if pre_relu:
        x = jnp.maximum(x, 0.0)
    y = jnp.dot(x, w_ref[...], preferred_element_type=jnp.float32) + b_ref[...]
    o_ref[...] = y.astype(o_ref.dtype)


def pallas_linear(x, w, b, pre_relu=False):
    """y = (relu(x) if pre_relu else x) @ w + b.  x: [..., Din]."""
    orig_shape = x.shape
    din = orig_shape[-1]
    dout = w.shape[1]
    x2 = x.reshape(-1, din)
    rows = x2.shape[0]
    align = 16 if x2.dtype == jnp.bfloat16 else 8
    tr, rows_p = _pick_row_tile(rows, din + dout, align)
    if rows_p != rows:
        x2 = jnp.pad(x2, ((0, rows_p - rows), (0, 0)))
    est = 4 * (2 * tr * (din + dout) + din * dout + dout)
    out = pl.pallas_call(
        functools.partial(_linear_kernel, pre_relu=pre_relu),
        out_shape=jax.ShapeDtypeStruct((rows_p, dout), jnp.float32),
        grid=(rows_p // tr,),
        in_specs=[
            pl.BlockSpec((tr, din), lambda i: (i, 0)),
            pl.BlockSpec((din, dout), lambda i: (0, 0)),
            pl.BlockSpec((1, dout), lambda i: (0, 0)),
        ],
        out_specs=pl.BlockSpec((tr, dout), lambda i: (i, 0)),
        compiler_params=pltpu.CompilerParams(
            dimension_semantics=("parallel",),
            vmem_limit_bytes=_vmem_limit(est)),
    )(x2, w, b.reshape(1, dout))
    if rows_p != rows:
        out = out[:rows]
    return out.reshape(orig_shape[:-1] + (dout,))


def _linear_ln_kernel(x_ref, w_ref, b_ref, g_ref, bb_ref, o_ref, *, eps):
    y = jnp.dot(x_ref[...].astype(jnp.float32), w_ref[...],
                preferred_element_type=jnp.float32) + b_ref[...]
    mu = jnp.mean(y, axis=-1, keepdims=True)
    yc = y - mu
    var = jnp.mean(yc * yc, axis=-1, keepdims=True)
    y = yc * jax.lax.rsqrt(var + eps) * g_ref[...] + bb_ref[...]
    o_ref[...] = y.astype(o_ref.dtype)


def pallas_linear_layernorm(x, w, b, gamma, beta, eps=1e-5,
                            out_dtype=jnp.float32):
    """y = LayerNorm(x @ w + b) * gamma + beta, fused (no HBM round-trip)."""
    orig_shape = x.shape
    din = orig_shape[-1]
    dout = w.shape[1]
    x2 = x.reshape(-1, din)
    rows = x2.shape[0]
    align = 16 if (x2.dtype == jnp.bfloat16 or out_dtype == jnp.bfloat16) else 8
    tr, rows_p = _pick_row_tile(rows, din + dout, align)
    if rows_p != rows:
        x2 = jnp.pad(x2, ((0, rows_p - rows), (0, 0)))
    est = 4 * (2 * tr * (din + dout) + din * dout + 3 * dout + 2 * tr * dout)
    out = pl.pallas_call(
        functools.partial(_linear_ln_kernel, eps=eps),
        out_shape=jax.ShapeDtypeStruct((rows_p, dout), out_dtype),
        grid=(rows_p // tr,),
        in_specs=[
            pl.BlockSpec((tr, din), lambda i: (i, 0)),
            pl.BlockSpec((din, dout), lambda i: (0, 0)),
            pl.BlockSpec((1, dout), lambda i: (0, 0)),
            pl.BlockSpec((1, dout), lambda i: (0, 0)),
            pl.BlockSpec((1, dout), lambda i: (0, 0)),
        ],
        out_specs=pl.BlockSpec((tr, dout), lambda i: (i, 0)),
        compiler_params=pltpu.CompilerParams(
            dimension_semantics=("parallel",),
            vmem_limit_bytes=_vmem_limit(est)),
    )(x2, w, b.reshape(1, dout), gamma.reshape(1, dout), beta.reshape(1, dout))
    if rows_p != rows:
        out = out[:rows]
    return out.reshape(orig_shape[:-1] + (dout,))


def _mlp2_kernel(x_ref, w1_ref, b1_ref, w2_ref, b2_ref, o_ref, *,
                 pre_relu, residual, post_sigmoid):
    x = x_ref[...]
    h = jnp.maximum(x, 0.0) if pre_relu else x
    h = jnp.dot(h, w1_ref[...], preferred_element_type=jnp.float32) + b1_ref[...]
    h = jnp.maximum(h, 0.0)
    y = jnp.dot(h, w2_ref[...], preferred_element_type=jnp.float32) + b2_ref[...]
    if post_sigmoid:
        y = 1.0 / (1.0 + jnp.exp(-y))
    if residual:
        y = y + x
    o_ref[...] = y.astype(o_ref.dtype)


def pallas_mlp2(x, w1, b1, w2, b2, pre_relu=False, residual=False,
                post_sigmoid=False):
    """Fused 2-layer MLP kept resident in VMEM."""
    orig_shape = x.shape
    din = orig_shape[-1]
    dh = w1.shape[1]
    dout = w2.shape[1]
    x2 = x.reshape(-1, din)
    rows = x2.shape[0]
    tr, rows_p = _pick_row_tile(rows, din + dh + dout)
    if rows_p != rows:
        x2 = jnp.pad(x2, ((0, rows_p - rows), (0, 0)))
    est = 4 * (2 * tr * (din + dout) + tr * dh + din * dh + dh * dout + dh + dout)
    out = pl.pallas_call(
        functools.partial(_mlp2_kernel, pre_relu=pre_relu, residual=residual,
                          post_sigmoid=post_sigmoid),
        out_shape=jax.ShapeDtypeStruct((rows_p, dout), jnp.float32),
        grid=(rows_p // tr,),
        in_specs=[
            pl.BlockSpec((tr, din), lambda i: (i, 0)),
            pl.BlockSpec((din, dh), lambda i: (0, 0)),
            pl.BlockSpec((1, dh), lambda i: (0, 0)),
            pl.BlockSpec((dh, dout), lambda i: (0, 0)),
            pl.BlockSpec((1, dout), lambda i: (0, 0)),
        ],
        out_specs=pl.BlockSpec((tr, dout), lambda i: (i, 0)),
        compiler_params=pltpu.CompilerParams(
            dimension_semantics=("parallel",),
            vmem_limit_bytes=_vmem_limit(est)),
    )(x2, w1, b1.reshape(1, dh), w2, b2.reshape(1, dout))
    if rows_p != rows:
        out = out[:rows]
    return out.reshape(orig_shape[:-1] + (dout,))


def _layernorm_kernel(x_ref, g_ref, b_ref, o_ref, *, eps):
    x = x_ref[...]
    mu = jnp.mean(x, axis=-1, keepdims=True)
    xc = x - mu
    var = jnp.mean(xc * xc, axis=-1, keepdims=True)
    o_ref[...] = xc * jax.lax.rsqrt(var + eps) * g_ref[...] + b_ref[...]


def pallas_layernorm(x, gamma, beta, eps=1e-5):
    orig_shape = x.shape
    d = orig_shape[-1]
    x2 = x.reshape(-1, d)
    rows = x2.shape[0]
    tr, rows_p = _pick_row_tile(rows, 2 * d)
    if rows_p != rows:
        x2 = jnp.pad(x2, ((0, rows_p - rows), (0, 0)))
    est = 4 * (4 * tr * d + 2 * d)
    out = pl.pallas_call(
        functools.partial(_layernorm_kernel, eps=eps),
        out_shape=jax.ShapeDtypeStruct((rows_p, d), jnp.float32),
        grid=(rows_p // tr,),
        in_specs=[
            pl.BlockSpec((tr, d), lambda i: (i, 0)),
            pl.BlockSpec((1, d), lambda i: (0, 0)),
            pl.BlockSpec((1, d), lambda i: (0, 0)),
        ],
        out_specs=pl.BlockSpec((tr, d), lambda i: (i, 0)),
        compiler_params=pltpu.CompilerParams(
            dimension_semantics=("parallel",),
            vmem_limit_bytes=_vmem_limit(est)),
    )(x2, gamma.reshape(1, d), beta.reshape(1, d))
    if rows_p != rows:
        out = out[:rows]
    return out.reshape(orig_shape)


# --------------------------- IPA attention kernel ----------------------------

def _ipa_attn_kernel(qc_ref, kcT_ref, vvp_ref, z_ref, bias_ref,
                     ovvp_ref, opair_ref, *, H, Dv, Cz):
    # qc_ref:   [H, tq, Dcp]   f32  (per-head augmented query features)
    # kcT_ref:  [H, Dcp, N]    f32  (pre-transposed augmented key features)
    # vvp_ref:  [H, N, Dv]     f32  (v and v_pts interleaved per head)
    # z_ref:    [tq, N, Cz]    bf16 (pair repr tile)
    # bias_ref: [H, tq, N]     f32  (linear_b bias + square mask, precomputed)
    z = z_ref[...]
    o_parts = []
    a_parts = []
    for h in range(H):                                  # H is small; unrolled
        logits = jnp.dot(qc_ref[h], kcT_ref[h],
                         preferred_element_type=jnp.float32)       # [tq, N]
        logits = logits + bias_ref[h]
        logits = logits - jnp.max(logits, axis=-1, keepdims=True)
        e = jnp.exp(logits)
        a = e / jnp.sum(e, axis=-1, keepdims=True)                 # exact
        o_parts.append(jnp.dot(a, vvp_ref[h],
                               preferred_element_type=jnp.float32))  # [tq, Dv]
        a_parts.append(a.astype(jnp.bfloat16))
    # One lane-dense [tq, H*Dv] store for o / o_pt.
    ovvp_ref[...] = jnp.concatenate(o_parts, axis=-1)
    # o_pair: one batched (over query rows, M=H) bf16 matmul against z.
    attn = jnp.stack(a_parts, axis=1)                   # [tq, H, N] bf16
    opair = jax.lax.dot_general(
        attn, z, (((2,), (1,)), ((0,), (0,))),
        preferred_element_type=jnp.float32)             # [tq, H, Cz]
    opair_ref[...] = opair.reshape(opair.shape[0], H * Cz)


def _choose_q_tile(n, cz):
    if n <= 128:
        return n
    budget = _z_tile_budget()
    tq = budget // (2 * n * cz * 2)          # 2 buffers x bf16 bytes
    tq = max(8, min((tq // 8) * 8, 256, n))
    while tq > 8 and n % tq != 0:
        tq -= 8
    return tq                                # n is padded to a multiple of 8


def ipa_attention_pallas(qc, kcT, vvp, z_bf, bias, H, Cz):
    B, _, N, Dcp = qc.shape
    Dv = vvp.shape[-1]
    tq = _choose_q_tile(N, Cz)
    nq = N // tq

    ovvp, opair = pl.pallas_call(
        functools.partial(_ipa_attn_kernel, H=H, Dv=Dv, Cz=Cz),
        out_shape=(
            jax.ShapeDtypeStruct((B, N, H * Dv), jnp.float32),
            jax.ShapeDtypeStruct((B, N, H * Cz), jnp.float32),
        ),
        grid=(B, nq),
        in_specs=[
            pl.BlockSpec((None, H, tq, Dcp), lambda b, i: (b, 0, i, 0)),
            pl.BlockSpec((None, H, Dcp, N), lambda b, i: (b, 0, 0, 0)),
            pl.BlockSpec((None, H, N, Dv), lambda b, i: (b, 0, 0, 0)),
            pl.BlockSpec((None, tq, N, Cz), lambda b, i: (b, i, 0, 0)),
            pl.BlockSpec((None, H, tq, N), lambda b, i: (b, 0, i, 0)),
        ],
        out_specs=(
            pl.BlockSpec((None, tq, H * Dv), lambda b, i: (b, i, 0)),
            pl.BlockSpec((None, tq, H * Cz), lambda b, i: (b, i, 0)),
        ),
        compiler_params=pltpu.CompilerParams(
            dimension_semantics=("parallel", "parallel"),
            vmem_limit_bytes=_attn_vmem_limit()),
    )(qc, kcT, vvp, z_bf, bias)
    return ovvp, opair


# --------------------------- rigid-frame glue (JAX) -------------------------

def quat_multiply(q1, q2):
    r1, i1, j1, k1 = (q1[..., i] for i in range(4))
    r2, i2, j2, k2 = (q2[..., i] for i in range(4))
    return jnp.stack([
        r1 * r2 - i1 * i2 - j1 * j2 - k1 * k2,
        r1 * i2 + i1 * r2 + j1 * k2 - k1 * j2,
        r1 * j2 - i1 * k2 + j1 * r2 + k1 * i2,
        r1 * k2 + i1 * j2 - j1 * i2 + k1 * r2,
    ], axis=-1)


def quat_to_rot(q):
    w, x, y, z = (q[..., i] for i in range(4))
    r00 = w * w + x * x - y * y - z * z
    r01 = 2 * (x * y - w * z)
    r02 = 2 * (x * z + w * y)
    r10 = 2 * (x * y + w * z)
    r11 = w * w - x * x + y * y - z * z
    r12 = 2 * (y * z - w * x)
    r20 = 2 * (x * z - w * y)
    r21 = 2 * (y * z + w * x)
    r22 = w * w - x * x - y * y + z * z
    return jnp.stack([
        jnp.stack([r00, r01, r02], axis=-1),
        jnp.stack([r10, r11, r12], axis=-1),
        jnp.stack([r20, r21, r22], axis=-1),
    ], axis=-2)


def rot_to_quat(rot):
    # OpenFold-style: eigenvector of the largest eigenvalue of the K matrix.
    xx, xy, xz = rot[..., 0, 0], rot[..., 0, 1], rot[..., 0, 2]
    yx, yy, yz = rot[..., 1, 0], rot[..., 1, 1], rot[..., 1, 2]
    zx, zy, zz = rot[..., 2, 0], rot[..., 2, 1], rot[..., 2, 2]
    k = jnp.stack([
        jnp.stack([xx + yy + zz, zy - yz, xz - zx, yx - xy], axis=-1),
        jnp.stack([zy - yz, xx - yy - zz, xy + yx, xz + zx], axis=-1),
        jnp.stack([xz - zx, xy + yx, yy - xx - zz, yz + zy], axis=-1),
        jnp.stack([yx - xy, xz + zx, yz + zy, zz - xx - yy], axis=-1),
    ], axis=-2) / 3.0
    _, vecs = jnp.linalg.eigh(k)
    return vecs[..., -1]


def compose_q_update(quats, rots, trans, upd):
    bcd = upd[..., :3]
    t_vec = upd[..., 3:]
    upd_q = jnp.concatenate([jnp.ones_like(bcd[..., :1]), bcd], axis=-1)
    new_q = quat_multiply(quats, upd_q)
    new_q = new_q / jnp.linalg.norm(new_q, axis=-1, keepdims=True)
    new_rots = quat_to_rot(new_q)
    new_trans = jnp.einsum("bnij,bnj->bni", rots, t_vec) + trans
    return new_q, new_rots, new_trans


# ------------------------------- model pieces -------------------------------

def frame_initializer_forward(p, s, mask_f):
    coords = pallas_mlp2(s, *p["coord_w1"], *p["coord_w2"]) * mask_f[..., None]
    rot6d = pallas_mlp2(s, *p["orient_w1"], *p["orient_w2"]) * mask_f[..., None]

    x_b = rot6d[..., :3]
    y_raw = rot6d[..., 3:]
    x_n = x_b / jnp.maximum(jnp.linalg.norm(x_b, axis=-1, keepdims=True), 1e-12)
    y_o = y_raw - jnp.sum(y_raw * x_n, axis=-1, keepdims=True) * x_n
    y_n = y_o / jnp.maximum(jnp.linalg.norm(y_o, axis=-1, keepdims=True), 1e-12)
    z_b = jnp.cross(x_n, y_n)
    rots = jnp.stack([x_n, y_n, z_b], axis=-2)     # [B, N, 3, 3]
    return rots, coords


def ipa_forward(p, s, z_bf, bias, rots, trans, cfg):
    B, N, _ = s.shape
    H, C = cfg["no_heads"], cfg["c_ipa"]
    Pq, Pv = cfg["no_qk_points"], cfg["no_v_points"]
    Cz = z_bf.shape[-1]
    Pq3, Pv3 = 3 * Pq, 3 * Pv

    # --- fused projection of s: [q | kv | q_pts | kv_pts] in one MXU matmul ---
    wq, bq = p["linear_q"]
    wkv, bkv = p["linear_kv"]
    wqp, bqp = p["linear_q_points"]
    wkvp, bkvp = p["linear_kv_points"]
    w_fused = jnp.concatenate([wq, wkv, wqp, wkvp], axis=1)
    b_fused = jnp.concatenate([bq, bkv, bqp, bkvp], axis=0)
    proj = pallas_linear(s, w_fused, b_fused)

    d0 = H * C
    d1 = d0 + 2 * H * C
    d2 = d1 + H * Pq3
    q = proj[..., :d0].reshape(B, N, H, C)
    kv = proj[..., d0:d1].reshape(B, N, H, 2 * C)
    k = kv[..., :C]
    v = kv[..., C:]
    qp_flat = proj[..., d1:d2]
    kvp_flat = proj[..., d2:]

    def to_points(flat):
        pts = jnp.stack(jnp.split(flat, 3, axis=-1), axis=-1)     # [B,N,P,3]
        return jnp.einsum("bnij,bnpj->bnpi", rots, pts) + trans[:, :, None, :]

    q_pts = to_points(qp_flat).reshape(B, N, H, Pq, 3)
    kv_pts = to_points(kvp_flat).reshape(B, N, H, Pq + Pv, 3)
    k_pts = kv_pts[..., :Pq, :]
    v_pts = kv_pts[..., Pq:, :]

    # Per-head point weights (softplus + OpenFold scaling) folded into qp/kp.
    hw = jax.nn.softplus(p["head_weights"]) * math.sqrt(
        1.0 / (3.0 * (Pq * 9.0 / 2.0)))
    pt_scale = jnp.sqrt(hw)[None, None, :, None]                  # [1,1,H,1]

    qp_s = q_pts.reshape(B, N, H, Pq3) * pt_scale
    kp_s = k_pts.reshape(B, N, H, Pq3) * pt_scale
    qn = -0.5 * jnp.sum(qp_s * qp_s, axis=-1, keepdims=True)      # [B,N,H,1]
    kn = -0.5 * jnp.sum(kp_s * kp_s, axis=-1, keepdims=True)
    ones = jnp.ones_like(qn)
    q_h = q * math.sqrt(1.0 / (3.0 * C))

    # qc_h . kc_h^T = qk/sqrt(3C) + qp.kp - 0.5||qp||^2 - 0.5||kp||^2
    Dc = C + Pq3 + 2
    Dcp = _round_up(Dc, 8)                       # pad 30 -> 32 for MXU K-align
    qc = jnp.concatenate([q_h, qp_s, qn, ones], axis=-1)          # [B,N,H,Dc]
    kc = jnp.concatenate([k, kp_s, ones, kn], axis=-1)
    if Dcp != Dc:
        pad = ((0, 0), (0, 0), (0, 0), (0, Dcp - Dc))
        qc = jnp.pad(qc, pad)
        kc = jnp.pad(kc, pad)
    qc_t = jnp.transpose(qc, (0, 2, 1, 3))                        # [B,H,N,Dcp]
    kcT = jnp.transpose(kc, (0, 2, 3, 1))                         # [B,H,Dcp,N]
    vvp = jnp.concatenate([v, v_pts.reshape(B, N, H, Pv3)], axis=-1)
    vvp_t = jnp.transpose(vvp, (0, 2, 1, 3))                      # [B,H,N,C+Pv3]

    ovvp, o_pair = ipa_attention_pallas(qc_t, kcT, vvp_t, z_bf, bias, H, Cz)

    ovvp = ovvp.reshape(B, N, H, C + Pv3)
    o = ovvp[..., :C].reshape(B, N, H * C)
    o_pt = ovvp[..., C:].reshape(B, N, H, Pv, 3)
    diff = o_pt - trans[:, :, None, None, :]
    o_pt_local = jnp.einsum("bnji,bnhpj->bnhpi", rots, diff)      # R^T (p - t)
    o_pt_norm = jnp.sqrt(jnp.sum(o_pt_local ** 2, axis=-1) + 1e-8
                         ).reshape(B, N, H * Pv)
    o_pt_flat = o_pt_local.reshape(B, N, H * Pv, 3)

    cat = jnp.concatenate(
        [o, o_pt_flat[..., 0], o_pt_flat[..., 1], o_pt_flat[..., 2],
         o_pt_norm, o_pair], axis=-1)
    return pallas_linear(cat, *p["linear_out"])


def angle_resnet_forward(p, s, s_initial, cfg):
    # linear_in(relu(s)) + linear_initial(relu(s_initial)) fused into ONE matmul
    w_in, b_in = p["linear_in"]
    w_ini, b_ini = p["linear_initial"]
    cat = jnp.concatenate([s, s_initial], axis=-1)
    w_cat = jnp.concatenate([w_in, w_ini], axis=0)
    a = pallas_linear(cat, w_cat, b_in + b_ini, pre_relu=True)
    for blk in p["blocks"]:
        a = pallas_mlp2(a, *blk["l1"], *blk["l2"], pre_relu=True, residual=True)
    out = pallas_linear(a, *p["linear_out"], pre_relu=True)
    out = out.reshape(out.shape[:-1] + (cfg["no_angles"], 2))
    unnorm = out
    denom = jnp.sqrt(jnp.maximum(jnp.sum(out * out, axis=-1, keepdims=True),
                                 cfg["epsilon"]))
    return unnorm, out / denom


def rhofold_ipa_forward(params, residue_repr, pair_repr, mask, cfg):
    B, N0, _ = residue_repr.shape
    if mask is None:
        mask = jnp.ones((B, N0), dtype=bool)

    # Pad N up-front to a multiple of 8; padded keys are masked out, padded
    # rows are sliced from all outputs at the end.
    N = _round_up(max(N0, 8), 8)
    if N != N0:
        pad_n = N - N0
        residue_repr = jnp.pad(residue_repr, ((0, 0), (0, pad_n), (0, 0)))
        pair_repr = jnp.pad(pair_repr, ((0, 0), (0, pad_n), (0, pad_n), (0, 0)))
        mask = jnp.pad(mask, ((0, 0), (0, pad_n)))
    mask_f = mask.astype(jnp.float32)

    # Adapters fused with their LayerNorms; z emitted directly in bf16.
    s = pallas_linear_layernorm(residue_repr, *params["residue_adapter"],
                                *params["ln_s"])
    z_bf = pallas_linear_layernorm(pair_repr, *params["pair_adapter"],
                                   *params["ln_z"], out_dtype=jnp.bfloat16)
    s_initial = s

    # Pair bias (linear_b, scaled sqrt(1/3)) + square mask, precomputed once
    # and shared by every IPA block: [B, H, N, N] (N lane-dense).
    wb, bb = params["ipa"]["linear_b"]
    bias_scale = math.sqrt(1.0 / 3.0)
    bias = pallas_linear(z_bf, wb * bias_scale, bb * bias_scale)   # [B,N,N,H]
    bias = jnp.transpose(bias, (0, 3, 1, 2))                       # [B,H,N,N]
    sq_mask = mask_f[:, None, :, None] * mask_f[:, None, None, :]  # [B,1,N,N]
    bias = bias + 1e5 * (sq_mask - 1.0)

    rots, coords = frame_initializer_forward(params["frame_init"], s, mask_f)
    trans = coords
    quats = rot_to_quat(rots)

    outputs = []
    for _ in range(cfg["num_ipa_blocks"]):
        s = s + ipa_forward(params["ipa"], s, z_bf, bias, rots, trans, cfg)
        s = pallas_layernorm(s, *params["ln_ipa"])
        upd = pallas_linear(s, *params["bb_update"])                # [B, N, 6]
        quats, rots, trans = compose_q_update(quats, rots, trans, upd)
        unnorm_angles, angles = angle_resnet_forward(params["angle_resnet"], s,
                                                     s_initial, cfg)
        outputs.append({
            "frames": jnp.concatenate([quats, trans], axis=-1),
            "unnormalized_angles": unnorm_angles,
            "angles": angles,
            "single": s,
        })

    stacked = {k: jnp.stack([o[k] for o in outputs], axis=0) for k in outputs[0]}

    # sequences_int is None path: scaled rigid translations are the C1' coords.
    c1 = trans * cfg["trans_scale_factor"]
    confidence = pallas_mlp2(s, *params["conf_w1"], *params["conf_w2"],
                             post_sigmoid=True)[..., 0]
    c1 = c1 * mask_f[..., None]
    confidence = confidence * mask_f

    if N != N0:
        c1 = c1[:, :N0]
        confidence = confidence[:, :N0]
        stacked = {k: v[:, :, :N0] for k, v in stacked.items()}

    return {
        "pred_coords": c1,
        "pred_angles": stacked["angles"][-1],
        "pred_confidence": confidence,
        "all_outputs": stacked,
    }


# ------------------------------- parameters ---------------------------------

def init_params(key, cfg):
    c_s, c_z = cfg["residue_embed_dim"], cfg["pair_embed_dim"]
    H, C = cfg["no_heads"], cfg["c_ipa"]
    Pq, Pv = cfg["no_qk_points"], cfg["no_v_points"]
    c_res = cfg["c_resnet"]
    keys = iter(jax.random.split(key, 64))

    def dense(din, dout):
        return (0.02 * jax.random.normal(next(keys), (din, dout), jnp.float32),
                jnp.zeros((dout,), jnp.float32))

    return {
        "residue_adapter": dense(c_s, 384),
        "pair_adapter": dense(c_z, 128),
        "ln_s": (jnp.ones((384,), jnp.float32), jnp.zeros((384,), jnp.float32)),
        "ln_z": (jnp.ones((128,), jnp.float32), jnp.zeros((128,), jnp.float32)),
        "frame_init": {
            "coord_w1": dense(384, 192), "coord_w2": dense(192, 3),
            "orient_w1": dense(384, 192), "orient_w2": dense(192, 6),
        },
        "ipa": {
            "linear_q": dense(384, H * C),
            "linear_kv": dense(384, 2 * H * C),
            "linear_q_points": dense(384, H * Pq * 3),
            "linear_kv_points": dense(384, H * (Pq + Pv) * 3),
            "linear_b": dense(128, H),
            "head_weights": jnp.zeros((H,), jnp.float32),
            "linear_out": dense(H * (128 + C + Pv * 4), 384),
        },
        "ln_ipa": (jnp.ones((384,), jnp.float32), jnp.zeros((384,), jnp.float32)),
        "bb_update": dense(384, 6),
        "angle_resnet": {
            "linear_in": dense(384, c_res),
            "linear_initial": dense(384, c_res),
            "blocks": [{"l1": dense(c_res, c_res), "l2": dense(c_res, c_res)}
                       for _ in range(3)],
            "linear_out": dense(c_res, cfg["no_angles"] * 2),
        },
        "conf_w1": dense(384, 128),
        "conf_w2": dense(128, 1),
    }


# ---------------------------------- main -------------------------------------

if __name__ == "__main__":
    cfg = dict(
        residue_embed_dim=128, pair_embed_dim=64, c_ipa=16, c_resnet=128,
        no_heads=4, no_qk_points=4, no_v_points=8, num_ipa_blocks=2,
        no_angles=7, trans_scale_factor=10.0, epsilon=1e-8,
    )
    B, N = 2, 8

    key = jax.random.PRNGKey(0)
    kp, kr, kz = jax.random.split(key, 3)
    params = init_params(kp, cfg)
    residue_repr = jax.random.normal(kr, (B, N, cfg["residue_embed_dim"]), jnp.float32)
    pair_repr = jax.random.normal(kz, (B, N, N, cfg["pair_embed_dim"]), jnp.float32)
    mask = jnp.ones((B, N), dtype=bool)

    fwd = jax.jit(lambda p, r, z, m: rhofold_ipa_forward(p, r, z, m, cfg))
    out = fwd(params, residue_repr, pair_repr, mask)
    jax.block_until_ready(out)

    assert out["pred_coords"].shape == (B, N, 3)
    assert out["pred_angles"].shape == (B, N, cfg["no_angles"], 2)
    assert out["pred_confidence"].shape == (B, N)
    assert out["all_outputs"]["frames"].shape == (cfg["num_ipa_blocks"], B, N, 7)
    print("KERNEL_OK")
</pallas_src>

<mosaic_0001>
module attributes {stable_mosaic.version = 11 : i64} {
  func.func @_linear_ln_kernel(%arg0: i32, %arg1: memref<16x128xf32, #tpu.memory_space<vmem>>, %arg2: memref<128x384xf32, #tpu.memory_space<vmem>>, %arg3: memref<1x384xf32, #tpu.memory_space<vmem>>, %arg4: memref<1x384xf32, #tpu.memory_space<vmem>>, %arg5: memref<1x384xf32, #tpu.memory_space<vmem>>, %arg6: memref<16x384xf32, #tpu.memory_space<vmem>>) attributes {dimension_semantics = [#tpu.dimension_semantics<parallel>], iteration_bounds = array<i64: 1>, scalar_prefetch = 0 : i64, scratch_operands = 0 : i64, tpu.core_type = #tpu.core_type<tc>, window_params = [{transform_indices = @transform_0, window_bounds = array<i64: 16, 128>}, {pipeline_mode = #tpu.pipeline_mode<synchronous>, transform_indices = @transform_1, window_bounds = array<i64: 128, 384>}, {pipeline_mode = #tpu.pipeline_mode<synchronous>, transform_indices = @transform_2, window_bounds = array<i64: 1, 384>}, {pipeline_mode = #tpu.pipeline_mode<synchronous>, transform_indices = @transform_3, window_bounds = array<i64: 1, 384>}, {pipeline_mode = #tpu.pipeline_mode<synchronous>, transform_indices = @transform_4, window_bounds = array<i64: 1, 384>}, {transform_indices = @transform_5, window_bounds = array<i64: 16, 384>}]} {
    %c0 = arith.constant 0 : index
    %c0_0 = arith.constant 0 : index
    %0 = vector.load %arg1[%c0, %c0_0] : memref<16x128xf32, #tpu.memory_space<vmem>>, vector<16x128xf32>
    %c0_1 = arith.constant 0 : index
    %c0_2 = arith.constant 0 : index
    %1 = vector.load %arg2[%c0_1, %c0_2] : memref<128x384xf32, #tpu.memory_space<vmem>>, vector<128x384xf32>
    %cst = arith.constant dense<0.000000e+00> : vector<16x384xf32>
    %2 = tpu.matmul %0, %1, %cst {dimension_numbers = #tpu.dot_dimension_numbers<[1], [0], [0], [1], [0, 0, 1, 1], [], []>} : vector<16x128xf32>, vector<128x384xf32>, vector<16x384xf32> -> vector<16x384xf32>
    %c0_3 = arith.constant 0 : index
    %c0_4 = arith.constant 0 : index
    %3 = vector.load %arg3[%c0_3, %c0_4] : memref<1x384xf32, #tpu.memory_space<vmem>>, vector<1x384xf32>
    %4 = vector.broadcast %3 : vector<1x384xf32> to vector<16x384xf32>
    %5 = arith.addf %2, %4 : vector<16x384xf32>
    %cst_5 = arith.constant dense<0.000000e+00> : vector<16xf32>
    %6 = vector.multi_reduction <add>, %5, %cst_5 [1] : vector<16x384xf32> to vector<16xf32>
    %7 = vector.shape_cast %6 : vector<16xf32> to vector<16x1xf32>
    %cst_6 = arith.constant 3.840000e+02 : f32
    %8 = vector.broadcast %cst_6 : f32 to vector<16x1xf32>
    %9 = arith.divf %7, %8 : vector<16x1xf32>
    %10 = vector.broadcast %9 : vector<16x1xf32> to vector<16x384xf32>
    %11 = arith.subf %5, %10 : vector<16x384xf32>
    %12 = arith.mulf %11, %11 : vector<16x384xf32>
    %cst_7 = arith.constant dense<0.000000e+00> : vector<16xf32>
    %13 = vector.multi_reduction <add>, %12, %cst_7 [1] : vector<16x384xf32> to vector<16xf32>
    %14 = vector.shape_cast %13 : vector<16xf32> to vector<16x1xf32>
    %cst_8 = arith.constant 3.840000e+02 : f32
    %15 = vector.broadcast %cst_8 : f32 to vector<16x1xf32>
    %16 = arith.divf %14, %15 : vector<16x1xf32>
    %cst_9 = arith.constant 9.99999974E-6 : f32
    %17 = vector.broadcast %cst_9 : f32 to vector<16x1xf32>
    %18 = arith.addf %16, %17 : vector<16x1xf32>
    %19 = math.rsqrt %18 : vector<16x1xf32>
    %20 = vector.broadcast %19 : vector<16x1xf32> to vector<16x384xf32>
    %21 = arith.mulf %11, %20 : vector<16x384xf32>
    %c0_10 = arith.constant 0 : index
    %c0_11 = arith.constant 0 : index
    %22 = vector.load %arg4[%c0_10, %c0_11] : memref<1x384xf32, #tpu.memory_space<vmem>>, vector<1x384xf32>
    %23 = vector.broadcast %22 : vector<1x384xf32> to vector<16x384xf32>
    %24 = arith.mulf %21, %23 : vector<16x384xf32>
    %c0_12 = arith.constant 0 : index
    %c0_13 = arith.constant 0 : index
    %25 = vector.load %arg5[%c0_12, %c0_13] : memref<1x384xf32, #tpu.memory_space<vmem>>, vector<1x384xf32>
    %26 = vector.broadcast %25 : vector<1x384xf32> to vector<16x384xf32>
    %27 = arith.addf %24, %26 : vector<16x384xf32>
    %c0_14 = arith.constant 0 : index
    %c0_15 = arith.constant 0 : index
    %28 = vector.load %arg6[%c0_14, %c0_15] : memref<16x384xf32, #tpu.memory_space<vmem>>, vector<16x384xf32>
    tpu.vector_store %arg6[%c0_14, %c0_15], %27 {strides = array<i32>} : memref<16x384xf32, #tpu.memory_space<vmem>>, vector<16x384xf32>,
    return
  }
  func.func @transform_0(%arg0: i32) -> (i32, i32) {
    %c0_i32 = arith.constant 0 : i32
    %c0_i32_0 = arith.constant 0 : i32
    return %arg0, %c0_i32 : i32, i32
  }
  func.func @transform_1(%arg0: i32) -> (i32, i32) {
    %c0_i32 = arith.constant 0 : i32
    %c0_i32_0 = arith.constant 0 : i32
    %c0_i32_1 = arith.constant 0 : i32
    return %c0_i32, %c0_i32_0 : i32, i32
  }
  func.func @transform_2(%arg0: i32) -> (i32, i32) {
    %c0_i32 = arith.constant 0 : i32
    %c0_i32_0 = arith.constant 0 : i32
    %c0_i32_1 = arith.constant 0 : i32
    return %c0_i32, %c0_i32_0 : i32, i32
  }
  func.func @transform_3(%arg0: i32) -> (i32, i32) {
    %c0_i32 = arith.constant 0 : i32
    %c0_i32_0 = arith.constant 0 : i32
    %c0_i32_1 = arith.constant 0 : i32
    return %c0_i32, %c0_i32_0 : i32, i32
  }
  func.func @transform_4(%arg0: i32) -> (i32, i32) {
    %c0_i32 = arith.constant 0 : i32
    %c0_i32_0 = arith.constant 0 : i32
    %c0_i32_1 = arith.constant 0 : i32
    return %c0_i32, %c0_i32_0 : i32, i32
  }
  func.func @transform_5(%arg0: i32) -> (i32, i32) {
    %c0_i32 = arith.constant 0 : i32
    %c0_i32_0 = arith.constant 0 : i32
    return %arg0, %c0_i32 : i32, i32
  }
}

module attributes {stable_mosaic.version = 11 : i64} {
  func.func @_mlp2_kernel(%arg0: i32, %arg1: memref<16x384xf32, #tpu.memory_space<vmem>>, %arg2: memref<384x192xf32, #tpu.memory_space<vmem>>, %arg3: memref<1x192xf32, #tpu.memory_space<vmem>>, %arg4: memref<192x6xf32, #tpu.memory_space<vmem>>, %arg5: memref<1x6xf32, #tpu.memory_space<vmem>>, %arg6: memref<16x6xf32, #tpu.memory_space<vmem>>) attributes {dimension_semantics = [#tpu.dimension_semantics<parallel>], iteration_bounds = array<i64: 1>, scalar_prefetch = 0 : i64, scratch_operands = 0 : i64, tpu.core_type = #tpu.core_type<tc>, window_params = [{transform_indices = @transform_0, window_bounds = array<i64: 16, 384>}, {pipeline_mode = #tpu.pipeline_mode<synchronous>, transform_indices = @transform_1, window_bounds = array<i64: 384, 192>}, {pipeline_mode = #tpu.pipeline_mode<synchronous>, transform_indices = @transform_2, window_bounds = array<i64: 1, 192>}, {pipeline_mode = #tpu.pipeline_mode<synchronous>, transform_indices = @transform_3, window_bounds = array<i64: 192, 6>}, {pipeline_mode = #tpu.pipeline_mode<synchronous>, transform_indices = @transform_4, window_bounds = array<i64: 1, 6>}, {transform_indices = @transform_5, window_bounds = array<i64: 16, 6>}]} {
    %c0 = arith.constant 0 : index
    %c0_0 = arith.constant 0 : index
    %0 = vector.load %arg1[%c0, %c0_0] : memref<16x384xf32, #tpu.memory_space<vmem>>, vector<16x384xf32>
    %c0_1 = arith.constant 0 : index
    %c0_2 = arith.constant 0 : index
    %1 = vector.load %arg2[%c0_1, %c0_2] : memref<384x192xf32, #tpu.memory_space<vmem>>, vector<384x192xf32>
    %cst = arith.constant dense<0.000000e+00> : vector<16x192xf32>
    %2 = tpu.matmul %0, %1, %cst {dimension_numbers = #tpu.dot_dimension_numbers<[1], [0], [0], [1], [0, 0, 1, 1], [], []>} : vector<16x384xf32>, vector<384x192xf32>, vector<16x192xf32> -> vector<16x192xf32>
    %c0_3 = arith.constant 0 : index
    %c0_4 = arith.constant 0 : index
    %3 = vector.load %arg3[%c0_3, %c0_4] : memref<1x192xf32, #tpu.memory_space<vmem>>, vector<1x192xf32>
    %4 = vector.broadcast %3 : vector<1x192xf32> to vector<16x192xf32>
    %5 = arith.addf %2, %4 : vector<16x192xf32>
    %cst_5 = arith.constant 0.000000e+00 : f32
    %6 = vector.broadcast %cst_5 : f32 to vector<16x192xf32>
    %7 = arith.maximumf %5, %6 : vector<16x192xf32>
    %c0_6 = arith.constant 0 : index
    %c0_7 = arith.constant 0 : index
    %8 = vector.load %arg4[%c0_6, %c0_7] : memref<192x6xf32, #tpu.memory_space<vmem>>, vector<192x6xf32>
    %cst_8 = arith.constant dense<0.000000e+00> : vector<16x6xf32>
    %9 = tpu.matmul %7, %8, %cst_8 {dimension_numbers = #tpu.dot_dimension_numbers<[1], [0], [0], [1], [0, 0, 1, 1], [], []>} : vector<16x192xf32>, vector<192x6xf32>, vector<16x6xf32> -> vector<16x6xf32>
    %c0_9 = arith.constant 0 : index
    %c0_10 = arith.constant 0 : index
    %10 = vector.load %arg5[%c0_9, %c0_10] : memref<1x6xf32, #tpu.memory_space<vmem>>, vector<1x6xf32>
    %11 = vector.broadcast %10 : vector<1x6xf32> to vector<16x6xf32>
    %12 = arith.addf %9, %11 : vector<16x6xf32>
    %c0_11 = arith.constant 0 : index
    %c0_12 = arith.constant 0 : index
    %13 = vector.load %arg6[%c0_11, %c0_12] : memref<16x6xf32, #tpu.memory_space<vmem>>, vector<16x6xf32>
    tpu.vector_store %arg6[%c0_11, %c0_12], %12 {strides = array<i32>} : memref<16x6xf32, #tpu.memory_space<vmem>>, vector<16x6xf32>,
    return
  }
  func.func @transform_0(%arg0: i32) -> (i32, i32) {
    %c0_i32 = arith.constant 0 : i32
    %c0_i32_0 = arith.constant 0 : i32
    return %arg0, %c0_i32 : i32, i32
  }
  func.func @transform_1(%arg0: i32) -> (i32, i32) {
    %c0_i32 = arith.constant 0 : i32
    %c0_i32_0 = arith.constant 0 : i32
    %c0_i32_1 = arith.constant 0 : i32
    return %c0_i32, %c0_i32_0 : i32, i32
  }
  func.func @transform_2(%arg0: i32) -> (i32, i32) {
    %c0_i32 = arith.constant 0 : i32
    %c0_i32_0 = arith.constant 0 : i32
    %c0_i32_1 = arith.constant 0 : i32
    return %c0_i32, %c0_i32_0 : i32, i32
  }
  func.func @transform_3(%arg0: i32) -> (i32, i32) {
    %c0_i32 = arith.constant 0 : i32
    %c0_i32_0 = arith.constant 0 : i32
    %c0_i32_1 = arith.constant 0 : i32
    return %c0_i32, %c0_i32_0 : i32, i32
  }
  func.func @transform_4(%arg0: i32) -> (i32, i32) {
    %c0_i32 = arith.constant 0 : i32
    %c0_i32_0 = arith.constant 0 : i32
    %c0_i32_1 = arith.constant 0 : i32
    return %c0_i32, %c0_i32_0 : i32, i32
  }
  func.func @transform_5(%arg0: i32) -> (i32, i32) {
    %c0_i32 = arith.constant 0 : i32
    %c0_i32_0 = arith.constant 0 : i32
    return %arg0, %c0_i32 : i32, i32
  }
}

module attributes {stable_mosaic.version = 11 : i64} {
  func.func @_linear_kernel(%arg0: i32, %arg1: memref<16x384xf32, #tpu.memory_space<vmem>>, %arg2: memref<384x384xf32, #tpu.memory_space<vmem>>, %arg3: memref<1x384xf32, #tpu.memory_space<vmem>>, %arg4: memref<16x384xf32, #tpu.memory_space<vmem>>) attributes {dimension_semantics = [#tpu.dimension_semantics<parallel>], iteration_bounds = array<i64: 1>, scalar_prefetch = 0 : i64, scratch_operands = 0 : i64, tpu.core_type = #tpu.core_type<tc>, window_params = [{transform_indices = @transform_0, window_bounds = array<i64: 16, 384>}, {pipeline_mode = #tpu.pipeline_mode<synchronous>, transform_indices = @transform_1, window_bounds = array<i64: 384, 384>}, {pipeline_mode = #tpu.pipeline_mode<synchronous>, transform_indices = @transform_2, window_bounds = array<i64: 1, 384>}, {transform_indices = @transform_3, window_bounds = array<i64: 16, 384>}]} {
    %c0 = arith.constant 0 : index
    %c0_0 = arith.constant 0 : index
    %0 = vector.load %arg1[%c0, %c0_0] : memref<16x384xf32, #tpu.memory_space<vmem>>, vector<16x384xf32>
    %c0_1 = arith.constant 0 : index
    %c0_2 = arith.constant 0 : index
    %1 = vector.load %arg2[%c0_1, %c0_2] : memref<384x384xf32, #tpu.memory_space<vmem>>, vector<384x384xf32>
    %cst = arith.constant dense<0.000000e+00> : vector<16x384xf32>
    %2 = tpu.matmul %0, %1, %cst {dimension_numbers = #tpu.dot_dimension_numbers<[1], [0], [0], [1], [0, 0, 1, 1], [], []>} : vector<16x384xf32>, vector<384x384xf32>, vector<16x384xf32> -> vector<16x384xf32>
    %c0_3 = arith.constant 0 : index
    %c0_4 = arith.constant 0 : index
    %3 = vector.load %arg3[%c0_3, %c0_4] : memref<1x384xf32, #tpu.memory_space<vmem>>, vector<1x384xf32>
    %4 = vector.broadcast %3 : vector<1x384xf32> to vector<16x384xf32>
    %5 = arith.addf %2, %4 : vector<16x384xf32>
    %c0_5 = arith.constant 0 : index
    %c0_6 = arith.constant 0 : index
    %6 = vector.load %arg4[%c0_5, %c0_6] : memref<16x384xf32, #tpu.memory_space<vmem>>, vector<16x384xf32>
    tpu.vector_store %arg4[%c0_5, %c0_6], %5 {strides = array<i32>} : memref<16x384xf32, #tpu.memory_space<vmem>>, vector<16x384xf32>,
    return
  }
  func.func @transform_0(%arg0: i32) -> (i32, i32) {
    %c0_i32 = arith.constant 0 : i32
    %c0_i32_0 = arith.constant 0 : i32
    return %arg0, %c0_i32 : i32, i32
  }
  func.func @transform_1(%arg0: i32) -> (i32, i32) {
    %c0_i32 = arith.constant 0 : i32
    %c0_i32_0 = arith.constant 0 : i32
    %c0_i32_1 = arith.constant 0 : i32
    return %c0_i32, %c0_i32_0 : i32, i32
  }
  func.func @transform_2(%arg0: i32) -> (i32, i32) {
    %c0_i32 = arith.constant 0 : i32
    %c0_i32_0 = arith.constant 0 : i32
    %c0_i32_1 = arith.constant 0 : i32
    return %c0_i32, %c0_i32_0 : i32, i32
  }
  func.func @transform_3(%arg0: i32) -> (i32, i32) {
    %c0_i32 = arith.constant 0 : i32
    %c0_i32_0 = arith.constant 0 : i32
    return %arg0, %c0_i32 : i32, i32
  }
}

module attributes {stable_mosaic.version = 11 : i64} {
  func.func @_mlp2_kernel(%arg0: i32, %arg1: memref<16x384xf32, #tpu.memory_space<vmem>>, %arg2: memref<384x192xf32, #tpu.memory_space<vmem>>, %arg3: memref<1x192xf32, #tpu.memory_space<vmem>>, %arg4: memref<192x3xf32, #tpu.memory_space<vmem>>, %arg5: memref<1x3xf32, #tpu.memory_space<vmem>>, %arg6: memref<16x3xf32, #tpu.memory_space<vmem>>) attributes {dimension_semantics = [#tpu.dimension_semantics<parallel>], iteration_bounds = array<i64: 1>, scalar_prefetch = 0 : i64, scratch_operands = 0 : i64, tpu.core_type = #tpu.core_type<tc>, window_params = [{transform_indices = @transform_0, window_bounds = array<i64: 16, 384>}, {pipeline_mode = #tpu.pipeline_mode<synchronous>, transform_indices = @transform_1, window_bounds = array<i64: 384, 192>}, {pipeline_mode = #tpu.pipeline_mode<synchronous>, transform_indices = @transform_2, window_bounds = array<i64: 1, 192>}, {pipeline_mode = #tpu.pipeline_mode<synchronous>, transform_indices = @transform_3, window_bounds = array<i64: 192, 3>}, {pipeline_mode = #tpu.pipeline_mode<synchronous>, transform_indices = @transform_4, window_bounds = array<i64: 1, 3>}, {transform_indices = @transform_5, window_bounds = array<i64: 16, 3>}]} {
    %c0 = arith.constant 0 : index
    %c0_0 = arith.constant 0 : index
    %0 = vector.load %arg1[%c0, %c0_0] : memref<16x384xf32, #tpu.memory_space<vmem>>, vector<16x384xf32>
    %c0_1 = arith.constant 0 : index
    %c0_2 = arith.constant 0 : index
    %1 = vector.load %arg2[%c0_1, %c0_2] : memref<384x192xf32, #tpu.memory_space<vmem>>, vector<384x192xf32>
    %cst = arith.constant dense<0.000000e+00> : vector<16x192xf32>
    %2 = tpu.matmul %0, %1, %cst {dimension_numbers = #tpu.dot_dimension_numbers<[1], [0], [0], [1], [0, 0, 1, 1], [], []>} : vector<16x384xf32>, vector<384x192xf32>, vector<16x192xf32> -> vector<16x192xf32>
    %c0_3 = arith.constant 0 : index
    %c0_4 = arith.constant 0 : index
    %3 = vector.load %arg3[%c0_3, %c0_4] : memref<1x192xf32, #tpu.memory_space<vmem>>, vector<1x192xf32>
    %4 = vector.broadcast %3 : vector<1x192xf32> to vector<16x192xf32>
    %5 = arith.addf %2, %4 : vector<16x192xf32>
    %cst_5 = arith.constant 0.000000e+00 : f32
    %6 = vector.broadcast %cst_5 : f32 to vector<16x192xf32>
    %7 = arith.maximumf %5, %6 : vector<16x192xf32>
    %c0_6 = arith.constant 0 : index
    %c0_7 = arith.constant 0 : index
    %8 = vector.load %arg4[%c0_6, %c0_7] : memref<192x3xf32, #tpu.memory_space<vmem>>, vector<192x3xf32>
    %cst_8 = arith.constant dense<0.000000e+00> : vector<16x3xf32>
    %9 = tpu.matmul %7, %8, %cst_8 {dimension_numbers = #tpu.dot_dimension_numbers<[1], [0], [0], [1], [0, 0, 1, 1], [], []>} : vector<16x192xf32>, vector<192x3xf32>, vector<16x3xf32> -> vector<16x3xf32>
    %c0_9 = arith.constant 0 : index
    %c0_10 = arith.constant 0 : index
    %10 = vector.load %arg5[%c0_9, %c0_10] : memref<1x3xf32, #tpu.memory_space<vmem>>, vector<1x3xf32>
    %11 = vector.broadcast %10 : vector<1x3xf32> to vector<16x3xf32>
    %12 = arith.addf %9, %11 : vector<16x3xf32>
    %c0_11 = arith.constant 0 : index
    %c0_12 = arith.constant 0 : index
    %13 = vector.load %arg6[%c0_11, %c0_12] : memref<16x3xf32, #tpu.memory_space<vmem>>, vector<16x3xf32>
    tpu.vector_store %arg6[%c0_11, %c0_12], %12 {strides = array<i32>} : memref<16x3xf32, #tpu.memory_space<vmem>>, vector<16x3xf32>,
    return
  }
  func.func @transform_0(%arg0: i32) -> (i32, i32) {
    %c0_i32 = arith.constant 0 : i32
    %c0_i32_0 = arith.constant 0 : i32
    return %arg0, %c0_i32 : i32, i32
  }
  func.func @transform_1(%arg0: i32) -> (i32, i32) {
    %c0_i32 = arith.constant 0 : i32
    %c0_i32_0 = arith.constant 0 : i32
    %c0_i32_1 = arith.constant 0 : i32
    return %c0_i32, %c0_i32_0 : i32, i32
  }
  func.func @transform_2(%arg0: i32) -> (i32, i32) {
    %c0_i32 = arith.constant 0 : i32
    %c0_i32_0 = arith.constant 0 : i32
    %c0_i32_1 = arith.constant 0 : i32
    return %c0_i32, %c0_i32_0 : i32, i32
  }
  func.func @transform_3(%arg0: i32) -> (i32, i32) {
    %c0_i32 = arith.constant 0 : i32
    %c0_i32_0 = arith.constant 0 : i32
    %c0_i32_1 = arith.constant 0 : i32
    return %c0_i32, %c0_i32_0 : i32, i32
  }
  func.func @transform_4(%arg0: i32) -> (i32, i32) {
    %c0_i32 = arith.constant 0 : i32
    %c0_i32_0 = arith.constant 0 : i32
    %c0_i32_1 = arith.constant 0 : i32
    return %c0_i32, %c0_i32_0 : i32, i32
  }
  func.func @transform_5(%arg0: i32) -> (i32, i32) {
    %c0_i32 = arith.constant 0 : i32
    %c0_i32_0 = arith.constant 0 : i32
    return %arg0, %c0_i32 : i32, i32
  }
}

module attributes {stable_mosaic.version = 11 : i64} {
  func.func @_linear_kernel(%arg0: i32, %arg1: memref<128x128xbf16, #tpu.memory_space<vmem>>, %arg2: memref<128x4xf32, #tpu.memory_space<vmem>>, %arg3: memref<1x4xf32, #tpu.memory_space<vmem>>, %arg4: memref<128x4xf32, #tpu.memory_space<vmem>>) attributes {dimension_semantics = [#tpu.dimension_semantics<parallel>], iteration_bounds = array<i64: 1>, scalar_prefetch = 0 : i64, scratch_operands = 0 : i64, tpu.core_type = #tpu.core_type<tc>, window_params = [{transform_indices = @transform_0, window_bounds = array<i64: 128, 128>}, {pipeline_mode = #tpu.pipeline_mode<synchronous>, transform_indices = @transform_1, window_bounds = array<i64: 128, 4>}, {pipeline_mode = #tpu.pipeline_mode<synchronous>, transform_indices = @transform_2, window_bounds = array<i64: 1, 4>}, {transform_indices = @transform_3, window_bounds = array<i64: 128, 4>}]} {
    %c0 = arith.constant 0 : index
    %c0_0 = arith.constant 0 : index
    %0 = vector.load %arg1[%c0, %c0_0] : memref<128x128xbf16, #tpu.memory_space<vmem>>, vector<128x128xbf16>
    %1 = arith.extf %0 : vector<128x128xbf16> to vector<128x128xf32>
    %c0_1 = arith.constant 0 : index
    %c0_2 = arith.constant 0 : index
    %2 = vector.load %arg2[%c0_1, %c0_2] : memref<128x4xf32, #tpu.memory_space<vmem>>, vector<128x4xf32>
    %cst = arith.constant dense<0.000000e+00> : vector<128x4xf32>
    %3 = tpu.matmul %1, %2, %cst {dimension_numbers = #tpu.dot_dimension_numbers<[1], [0], [0], [1], [0, 0, 1, 1], [], []>} : vector<128x128xf32>, vector<128x4xf32>, vector<128x4xf32> -> vector<128x4xf32>
    %c0_3 = arith.constant 0 : index
    %c0_4 = arith.constant 0 : index
    %4 = vector.load %arg3[%c0_3, %c0_4] : memref<1x4xf32, #tpu.memory_space<vmem>>, vector<1x4xf32>
    %5 = vector.broadcast %4 : vector<1x4xf32> to vector<128x4xf32>
    %6 = arith.addf %3, %5 : vector<128x4xf32>
    %c0_5 = arith.constant 0 : index
    %c0_6 = arith.constant 0 : index
    %7 = vector.load %arg4[%c0_5, %c0_6] : memref<128x4xf32, #tpu.memory_space<vmem>>, vector<128x4xf32>
    tpu.vector_store %arg4[%c0_5, %c0_6], %6 {strides = array<i32>} : memref<128x4xf32, #tpu.memory_space<vmem>>, vector<128x4xf32>,
    return
  }
  func.func @transform_0(%arg0: i32) -> (i32, i32) {
    %c0_i32 = arith.constant 0 : i32
    %c0_i32_0 = arith.constant 0 : i32
    return %arg0, %c0_i32 : i32, i32
  }
  func.func @transform_1(%arg0: i32) -> (i32, i32) {
    %c0_i32 = arith.constant 0 : i32
    %c0_i32_0 = arith.constant 0 : i32
    %c0_i32_1 = arith.constant 0 : i32
    return %c0_i32, %c0_i32_0 : i32, i32
  }
  func.func @transform_2(%arg0: i32) -> (i32, i32) {
    %c0_i32 = arith.constant 0 : i32
    %c0_i32_0 = arith.constant 0 : i32
    %c0_i32_1 = arith.constant 0 : i32
    return %c0_i32, %c0_i32_0 : i32, i32
  }
  func.func @transform_3(%arg0: i32) -> (i32, i32) {
    %c0_i32 = arith.constant 0 : i32
    %c0_i32_0 = arith.constant 0 : i32
    return %arg0, %c0_i32 : i32, i32
  }
}

module attributes {stable_mosaic.version = 11 : i64} {
  func.func @_linear_ln_kernel(%arg0: i32, %arg1: memref<128x64xf32, #tpu.memory_space<vmem>>, %arg2: memref<64x128xf32, #tpu.memory_space<vmem>>, %arg3: memref<1x128xf32, #tpu.memory_space<vmem>>, %arg4: memref<1x128xf32, #tpu.memory_space<vmem>>, %arg5: memref<1x128xf32, #tpu.memory_space<vmem>>, %arg6: memref<128x128xbf16, #tpu.memory_space<vmem>>) attributes {dimension_semantics = [#tpu.dimension_semantics<parallel>], iteration_bounds = array<i64: 1>, scalar_prefetch = 0 : i64, scratch_operands = 0 : i64, tpu.core_type = #tpu.core_type<tc>, window_params = [{transform_indices = @transform_0, window_bounds = array<i64: 128, 64>}, {pipeline_mode = #tpu.pipeline_mode<synchronous>, transform_indices = @transform_1, window_bounds = array<i64: 64, 128>}, {pipeline_mode = #tpu.pipeline_mode<synchronous>, transform_indices = @transform_2, window_bounds = array<i64: 1, 128>}, {pipeline_mode = #tpu.pipeline_mode<synchronous>, transform_indices = @transform_3, window_bounds = array<i64: 1, 128>}, {pipeline_mode = #tpu.pipeline_mode<synchronous>, transform_indices = @transform_4, window_bounds = array<i64: 1, 128>}, {transform_indices = @transform_5, window_bounds = array<i64: 128, 128>}]} {
    %c0 = arith.constant 0 : index
    %c0_0 = arith.constant 0 : index
    %0 = vector.load %arg1[%c0, %c0_0] : memref<128x64xf32, #tpu.memory_space<vmem>>, vector<128x64xf32>
    %c0_1 = arith.constant 0 : index
    %c0_2 = arith.constant 0 : index
    %1 = vector.load %arg2[%c0_1, %c0_2] : memref<64x128xf32, #tpu.memory_space<vmem>>, vector<64x128xf32>
    %cst = arith.constant dense<0.000000e+00> : vector<128x128xf32>
    %2 = tpu.matmul %0, %1, %cst {dimension_numbers = #tpu.dot_dimension_numbers<[1], [0], [0], [1], [0, 0, 1, 1], [], []>} : vector<128x64xf32>, vector<64x128xf32>, vector<128x128xf32> -> vector<128x128xf32>
    %c0_3 = arith.constant 0 : index
    %c0_4 = arith.constant 0 : index
    %3 = vector.load %arg3[%c0_3, %c0_4] : memref<1x128xf32, #tpu.memory_space<vmem>>, vector<1x128xf32>
    %4 = vector.broadcast %3 : vector<1x128xf32> to vector<128x128xf32>
    %5 = arith.addf %2, %4 : vector<128x128xf32>
    %cst_5 = arith.constant dense<0.000000e+00> : vector<128xf32>
    %6 = vector.multi_reduction <add>, %5, %cst_5 [1] : vector<128x128xf32> to vector<128xf32>
    %7 = vector.shape_cast %6 : vector<128xf32> to vector<128x1xf32>
    %cst_6 = arith.constant 1.280000e+02 : f32
    %8 = vector.broadcast %cst_6 : f32 to vector<128x1xf32>
    %9 = arith.divf %7, %8 : vector<128x1xf32>
    %10 = vector.broadcast %9 : vector<128x1xf32> to vector<128x128xf32>
    %11 = arith.subf %5, %10 : vector<128x128xf32>
    %12 = arith.mulf %11, %11 : vector<128x128xf32>
    %cst_7 = arith.constant dense<0.000000e+00> : vector<128xf32>
    %13 = vector.multi_reduction <add>, %12, %cst_7 [1] : vector<128x128xf32> to vector<128xf32>
    %14 = vector.shape_cast %13 : vector<128xf32> to vector<128x1xf32>
    %cst_8 = arith.constant 1.280000e+02 : f32
    %15 = vector.broadcast %cst_8 : f32 to vector<128x1xf32>
    %16 = arith.divf %14, %15 : vector<128x1xf32>
    %cst_9 = arith.constant 9.99999974E-6 : f32
    %17 = vector.broadcast %cst_9 : f32 to vector<128x1xf32>
    %18 = arith.addf %16, %17 : vector<128x1xf32>
    %19 = math.rsqrt %18 : vector<128x1xf32>
    %20 = vector.broadcast %19 : vector<128x1xf32> to vector<128x128xf32>
    %21 = arith.mulf %11, %20 : vector<128x128xf32>
    %c0_10 = arith.constant 0 : index
    %c0_11 = arith.constant 0 : index
    %22 = vector.load %arg4[%c0_10, %c0_11] : memref<1x128xf32, #tpu.memory_space<vmem>>, vector<1x128xf32>
    %23 = vector.broadcast %22 : vector<1x128xf32> to vector<128x128xf32>
    %24 = arith.mulf %21, %23 : vector<128x128xf32>
    %c0_12 = arith.constant 0 : index
    %c0_13 = arith.constant 0 : index
    %25 = vector.load %arg5[%c0_12, %c0_13] : memref<1x128xf32, #tpu.memory_space<vmem>>, vector<1x128xf32>
    %26 = vector.broadcast %25 : vector<1x128xf32> to vector<128x128xf32>
    %27 = arith.addf %24, %26 : vector<128x128xf32>
    %28 = arith.truncf %27 : vector<128x128xf32> to vector<128x128xbf16>
    %c0_14 = arith.constant 0 : index
    %c0_15 = arith.constant 0 : index
    %29 = vector.load %arg6[%c0_14, %c0_15] : memref<128x128xbf16, #tpu.memory_space<vmem>>, vector<128x128xbf16>
    tpu.vector_store %arg6[%c0_14, %c0_15], %28 {strides = array<i32>} : memref<128x128xbf16, #tpu.memory_space<vmem>>, vector<128x128xbf16>,
    return
  }
  func.func @transform_0(%arg0: i32) -> (i32, i32) {
    %c0_i32 = arith.constant 0 : i32
    %c0_i32_0 = arith.constant 0 : i32
    return %arg0, %c0_i32 : i32, i32
  }
  func.func @transform_1(%arg0: i32) -> (i32, i32) {
    %c0_i32 = arith.constant 0 : i32
    %c0_i32_0 = arith.constant 0 : i32
    %c0_i32_1 = arith.constant 0 : i32
    return %c0_i32, %c0_i32_0 : i32, i32
  }
  func.func @transform_2(%arg0: i32) -> (i32, i32) {
    %c0_i32 = arith.constant 0 : i32
    %c0_i32_0 = arith.constant 0 : i32
    %c0_i32_1 = arith.constant 0 : i32
    return %c0_i32, %c0_i32_0 : i32, i32
  }
  func.func @transform_3(%arg0: i32) -> (i32, i32) {
    %c0_i32 = arith.constant 0 : i32
    %c0_i32_0 = arith.constant 0 : i32
    %c0_i32_1 = arith.constant 0 : i32
    return %c0_i32, %c0_i32_0 : i32, i32
  }
  func.func @transform_4(%arg0: i32) -> (i32, i32) {
    %c0_i32 = arith.constant 0 : i32
    %c0_i32_0 = arith.constant 0 : i32
    %c0_i32_1 = arith.constant 0 : i32
    return %c0_i32, %c0_i32_0 : i32, i32
  }
  func.func @transform_5(%arg0: i32) -> (i32, i32) {
    %c0_i32 = arith.constant 0 : i32
    %c0_i32_0 = arith.constant 0 : i32
    return %arg0, %c0_i32 : i32, i32
  }
}

module attributes {stable_mosaic.version = 11 : i64} {
  func.func @_ipa_attn_kernel(%arg0: i32, %arg1: i32, %arg2: memref<1x4x8x32xf32, #tpu.memory_space<vmem>>, %arg3: memref<1x4x32x8xf32, #tpu.memory_space<vmem>>, %arg4: memref<1x4x8x40xf32, #tpu.memory_space<vmem>>, %arg5: memref<1x8x8x128xbf16, #tpu.memory_space<vmem>>, %arg6: memref<1x4x8x8xf32, #tpu.memory_space<vmem>>, %arg7: memref<1x8x160xf32, #tpu.memory_space<vmem>>, %arg8: memref<1x8x512xf32, #tpu.memory_space<vmem>>) attributes {dimension_semantics = [#tpu.dimension_semantics<parallel>, #tpu.dimension_semantics<parallel>], iteration_bounds = array<i64: 2, 1>, scalar_prefetch = 0 : i64, scratch_operands = 0 : i64, tpu.core_type = #tpu.core_type<tc>, window_params = [{transform_indices = @transform_0, window_bounds = array<i64: 1, 4, 8, 32>}, {transform_indices = @transform_1, window_bounds = array<i64: 1, 4, 32, 8>}, {transform_indices = @transform_2, window_bounds = array<i64: 1, 4, 8, 40>}, {transform_indices = @transform_3, window_bounds = array<i64: 1, 8, 8, 128>}, {transform_indices = @transform_4, window_bounds = array<i64: 1, 4, 8, 8>}, {transform_indices = @transform_5, window_bounds = array<i64: 1, 8, 160>}, {transform_indices = @transform_6, window_bounds = array<i64: 1, 8, 512>}]} {
    %c0 = arith.constant 0 : index
    %c0_0 = arith.constant 0 : index
    %c0_1 = arith.constant 0 : index
    %c0_2 = arith.constant 0 : index
    %0 = vector.load %arg5[%c0, %c0_0, %c0_1, %c0_2] : memref<1x8x8x128xbf16, #tpu.memory_space<vmem>>, vector<1x8x8x128xbf16>
    %1 = vector.shape_cast %0 : vector<1x8x8x128xbf16> to vector<8x8x128xbf16>
    %c0_3 = arith.constant 0 : index
    %c0_4 = arith.constant 0 : index
    %c0_5 = arith.constant 0 : index
    %c0_6 = arith.constant 0 : index
    %2 = vector.load %arg2[%c0_3, %c0_4, %c0_5, %c0_6] : memref<1x4x8x32xf32, #tpu.memory_space<vmem>>, vector<1x1x8x32xf32>
    %3 = vector.shape_cast %2 : vector<1x1x8x32xf32> to vector<8x32xf32>
    %c0_7 = arith.constant 0 : index
    %c0_8 = arith.constant 0 : index
    %c0_9 = arith.constant 0 : index
    %c0_10 = arith.constant 0 : index
    %4 = vector.load %arg3[%c0_7, %c0_8, %c0_9, %c0_10] : memref<1x4x32x8xf32, #tpu.memory_space<vmem>>, vector<1x1x32x8xf32>
    %5 = vector.shape_cast %4 : vector<1x1x32x8xf32> to vector<32x8xf32>
    %cst = arith.constant dense<0.000000e+00> : vector<8x8xf32>
    %6 = tpu.matmul %3, %5, %cst {dimension_numbers = #tpu.dot_dimension_numbers<[1], [0], [0], [1], [0, 0, 1, 1], [], []>} : vector<8x32xf32>, vector<32x8xf32>, vector<8x8xf32> -> vector<8x8xf32>
    %c0_11 = arith.constant 0 : index
    %c0_12 = arith.constant 0 : index
    %c0_13 = arith.constant 0 : index
    %c0_14 = arith.constant 0 : index
    %7 = vector.load %arg6[%c0_11, %c0_12, %c0_13, %c0_14] : memref<1x4x8x8xf32, #tpu.memory_space<vmem>>, vector<1x1x8x8xf32>
    %8 = vector.shape_cast %7 : vector<1x1x8x8xf32> to vector<8x8xf32>
    %9 = arith.addf %6, %8 : vector<8x8xf32>
    %cst_15 = arith.constant dense<0xFF800000> : vector<8xf32>
    %10 = vector.multi_reduction <maximumf>, %9, %cst_15 [1] : vector<8x8xf32> to vector<8xf32>
    %11 = vector.shape_cast %10 : vector<8xf32> to vector<8x1xf32>
    %12 = vector.broadcast %11 : vector<8x1xf32> to vector<8x8xf32>
    %13 = arith.subf %9, %12 : vector<8x8xf32>
    %14 = math.exp %13 : vector<8x8xf32>
    %cst_16 = arith.constant dense<0.000000e+00> : vector<8xf32>
    %15 = vector.multi_reduction <add>, %14, %cst_16 [1] : vector<8x8xf32> to vector<8xf32>
    %16 = vector.shape_cast %15 : vector<8xf32> to vector<8x1xf32>
    %17 = vector.broadcast %16 : vector<8x1xf32> to vector<8x8xf32>
    %18 = arith.divf %14, %17 : vector<8x8xf32>
    %c0_17 = arith.constant 0 : index
    %c0_18 = arith.constant 0 : index
    %c0_19 = arith.constant 0 : index
    %c0_20 = arith.constant 0 : index
    %19 = vector.load %arg4[%c0_17, %c0_18, %c0_19, %c0_20] : memref<1x4x8x40xf32, #tpu.memory_space<vmem>>, vector<1x1x8x40xf32>
    %20 = vector.shape_cast %19 : vector<1x1x8x40xf32> to vector<8x40xf32>
    %cst_21 = arith.constant dense<0.000000e+00> : vector<8x40xf32>
    %21 = tpu.matmul %18, %20, %cst_21 {dimension_numbers = #tpu.dot_dimension_numbers<[1], [0], [0], [1], [0, 0, 1, 1], [], []>} : vector<8x8xf32>, vector<8x40xf32>, vector<8x40xf32> -> vector<8x40xf32>
    %22 = arith.truncf %18 : vector<8x8xf32> to vector<8x8xbf16>
    %c0_22 = arith.constant 0 : index
    %c1 = arith.constant 1 : index
    %c0_23 = arith.constant 0 : index
    %c0_24 = arith.constant 0 : index
    %23 = vector.load %arg2[%c0_22, %c1, %c0_23, %c0_24] : memref<1x4x8x32xf32, #tpu.memory_space<vmem>>, vector<1x1x8x32xf32>
    %24 = vector.shape_cast %23 : vector<1x1x8x32xf32> to vector<8x32xf32>
    %c0_25 = arith.constant 0 : index
    %c1_26 = arith.constant 1 : index
    %c0_27 = arith.constant 0 : index
    %c0_28 = arith.constant 0 : index
    %25 = vector.load %arg3[%c0_25, %c1_26, %c0_27, %c0_28] : memref<1x4x32x8xf32, #tpu.memory_space<vmem>>, vector<1x1x32x8xf32>
    %26 = vector.shape_cast %25 : vector<1x1x32x8xf32> to vector<32x8xf32>
    %cst_29 = arith.constant dense<0.000000e+00> : vector<8x8xf32>
    %27 = tpu.matmul %24, %26, %cst_29 {dimension_numbers = #tpu.dot_dimension_numbers<[1], [0], [0], [1], [0, 0, 1, 1], [], []>} : vector<8x32xf32>, vector<32x8xf32>, vector<8x8xf32> -> vector<8x8xf32>
    %c0_30 = arith.constant 0 : index
    %c1_31 = arith.constant 1 : index
    %c0_32 = arith.constant 0 : index
    %c0_33 = arith.constant 0 : index
    %28 = vector.load %arg6[%c0_30, %c1_31, %c0_32, %c0_33] : memref<1x4x8x8xf32, #tpu.memory_space<vmem>>, vector<1x1x8x8xf32>
    %29 = vector.shape_cast %28 : vector<1x1x8x8xf32> to vector<8x8xf32>
    %30 = arith.addf %27, %29 : vector<8x8xf32>
    %cst_34 = arith.constant dense<0xFF800000> : vector<8xf32>
    %31 = vector.multi_reduction <maximumf>, %30, %cst_34 [1] : vector<8x8xf32> to vector<8xf32>
    %32 = vector.shape_cast %31 : vector<8xf32> to vector<8x1xf32>
    %33 = vector.broadcast %32 : vector<8x1xf32> to vector<8x8xf32>
    %34 = arith.subf %30, %33 : vector<8x8xf32>
    %35 = math.exp %34 : vector<8x8xf32>
    %cst_35 = arith.constant dense<0.000000e+00> : vector<8xf32>
    %36 = vector.multi_reduction <add>, %35, %cst_35 [1] : vector<8x8xf32> to vector<8xf32>
    %37 = vector.shape_cast %36 : vector<8xf32> to vector<8x1xf32>
    %38 = vector.broadcast %37 : vector<8x1xf32> to vector<8x8xf32>
    %39 = arith.divf %35, %38 : vector<8x8xf32>
    %c0_36 = arith.constant 0 : index
    %c1_37 = arith.constant 1 : index
    %c0_38 = arith.constant 0 : index
    %c0_39 = arith.constant 0 : index
    %40 = vector.load %arg4[%c0_36, %c1_37, %c0_38, %c0_39] : memref<1x4x8x40xf32, #tpu.memory_space<vmem>>, vector<1x1x8x40xf32>
    %41 = vector.shape_cast %40 : vector<1x1x8x40xf32> to vector<8x40xf32>
    %cst_40 = arith.constant dense<0.000000e+00> : vector<8x40xf32>
    %42 = tpu.matmul %39, %41, %cst_40 {dimension_numbers = #tpu.dot_dimension_numbers<[1], [0], [0], [1], [0, 0, 1, 1], [], []>} : vector<8x8xf32>, vector<8x40xf32>, vector<8x40xf32> -> vector<8x40xf32>
    %43 = arith.truncf %39 : vector<8x8xf32> to vector<8x8xbf16>
    %c0_41 = arith.constant 0 : index
    %c2 = arith.constant 2 : index
    %c0_42 = arith.constant 0 : index
    %c0_43 = arith.constant 0 : index
    %44 = vector.load %arg2[%c0_41, %c2, %c0_42, %c0_43] : memref<1x4x8x32xf32, #tpu.memory_space<vmem>>, vector<1x1x8x32xf32>
    %45 = vector.shape_cast %44 : vector<1x1x8x32xf32> to vector<8x32xf32>
    %c0_44 = arith.constant 0 : index
    %c2_45 = arith.constant 2 : index
    %c0_46 = arith.constant 0 : index
    %c0_47 = arith.constant 0 : index
    %46 = vector.load %arg3[%c0_44, %c2_45, %c0_46, %c0_47] : memref<1x4x32x8xf32, #tpu.memory_space<vmem>>, vector<1x1x32x8xf32>
    %47 = vector.shape_cast %46 : vector<1x1x32x8xf32> to vector<32x8xf32>
    %cst_48 = arith.constant dense<0.000000e+00> : vector<8x8xf32>
    %48 = tpu.matmul %45, %47, %cst_48 {dimension_numbers = #tpu.dot_dimension_numbers<[1], [0], [0], [1], [0, 0, 1, 1], [], []>} : vector<8x32xf32>, vector<32x8xf32>, vector<8x8xf32> -> vector<8x8xf32>
    %c0_49 = arith.constant 0 : index
    %c2_50 = arith.constant 2 : index
    %c0_51 = arith.constant 0 : index
    %c0_52 = arith.constant 0 : index
    %49 = vector.load %arg6[%c0_49, %c2_50, %c0_51, %c0_52] : memref<1x4x8x8xf32, #tpu.memory_space<vmem>>, vector<1x1x8x8xf32>
    %50 = vector.shape_cast %49 : vector<1x1x8x8xf32> to vector<8x8xf32>
    %51 = arith.addf %48, %50 : vector<8x8xf32>
    %cst_53 = arith.constant dense<0xFF800000> : vector<8xf32>
    %52 = vector.multi_reduction <maximumf>, %51, %cst_53 [1] : vector<8x8xf32> to vector<8xf32>
    %53 = vector.shape_cast %52 : vector<8xf32> to vector<8x1xf32>
    %54 = vector.broadcast %53 : vector<8x1xf32> to vector<8x8xf32>
    %55 = arith.subf %51, %54 : vector<8x8xf32>
    %56 = math.exp %55 : vector<8x8xf32>
    %cst_54 = arith.constant dense<0.000000e+00> : vector<8xf32>
    %57 = vector.multi_reduction <add>, %56, %cst_54 [1] : vector<8x8xf32> to vector<8xf32>
    %58 = vector.shape_cast %57 : vector<8xf32> to vector<8x1xf32>
    %59 = vector.broadcast %58 : vector<8x1xf32> to vector<8x8xf32>
    %60 = arith.divf %56, %59 : vector<8x8xf32>
    %c0_55 = arith.constant 0 : index
    %c2_56 = arith.constant 2 : index
    %c0_57 = arith.constant 0 : index
    %c0_58 = arith.constant 0 : index
    %61 = vector.load %arg4[%c0_55, %c2_56, %c0_57, %c0_58] : memref<1x4x8x40xf32, #tpu.memory_space<vmem>>, vector<1x1x8x40xf32>
    %62 = vector.shape_cast %61 : vector<1x1x8x40xf32> to vector<8x40xf32>
    %cst_59 = arith.constant dense<0.000000e+00> : vector<8x40xf32>
    %63 = tpu.matmul %60, %62, %cst_59 {dimension_numbers = #tpu.dot_dimension_numbers<[1], [0], [0], [1], [0, 0, 1, 1], [], []>} : vector<8x8xf32>, vector<8x40xf32>, vector<8x40xf32> -> vector<8x40xf32>
    %64 = arith.truncf %60 : vector<8x8xf32> to vector<8x8xbf16>
    %c0_60 = arith.constant 0 : index
    %c3 = arith.constant 3 : index
    %c0_61 = arith.constant 0 : index
    %c0_62 = arith.constant 0 : index
    %65 = vector.load %arg2[%c0_60, %c3, %c0_61, %c0_62] : memref<1x4x8x32xf32, #tpu.memory_space<vmem>>, vector<1x1x8x32xf32>
    %66 = vector.shape_cast %65 : vector<1x1x8x32xf32> to vector<8x32xf32>
    %c0_63 = arith.constant 0 : index
    %c3_64 = arith.constant 3 : index
    %c0_65 = arith.constant 0 : index
    %c0_66 = arith.constant 0 : index
    %67 = vector.load %arg3[%c0_63, %c3_64, %c0_65, %c0_66] : memref<1x4x32x8xf32, #tpu.memory_space<vmem>>, vector<1x1x32x8xf32>
    %68 = vector.shape_cast %67 : vector<1x1x32x8xf32> to vector<32x8xf32>
    %cst_67 = arith.constant dense<0.000000e+00> : vector<8x8xf32>
    %69 = tpu.matmul %66, %68, %cst_67 {dimension_numbers = #tpu.dot_dimension_numbers<[1], [0], [0], [1], [0, 0, 1, 1], [], []>} : vector<8x32xf32>, vector<32x8xf32>, vector<8x8xf32> -> vector<8x8xf32>
    %c0_68 = arith.constant 0 : index
    %c3_69 = arith.constant 3 : index
    %c0_70 = arith.constant 0 : index
    %c0_71 = arith.constant 0 : index
    %70 = vector.load %arg6[%c0_68, %c3_69, %c0_70, %c0_71] : memref<1x4x8x8xf32, #tpu.memory_space<vmem>>, vector<1x1x8x8xf32>
    %71 = vector.shape_cast %70 : vector<1x1x8x8xf32> to vector<8x8xf32>
    %72 = arith.addf %69, %71 : vector<8x8xf32>
    %cst_72 = arith.constant dense<0xFF800000> : vector<8xf32>
    %73 = vector.multi_reduction <maximumf>, %72, %cst_72 [1] : vector<8x8xf32> to vector<8xf32>
    %74 = vector.shape_cast %73 : vector<8xf32> to vector<8x1xf32>
    %75 = vector.broadcast %74 : vector<8x1xf32> to vector<8x8xf32>
    %76 = arith.subf %72, %75 : vector<8x8xf32>
    %77 = math.exp %76 : vector<8x8xf32>
    %cst_73 = arith.constant dense<0.000000e+00> : vector<8xf32>
    %78 = vector.multi_reduction <add>, %77, %cst_73 [1] : vector<8x8xf32> to vector<8xf32>
    %79 = vector.shape_cast %78 : vector<8xf32> to vector<8x1xf32>
    %80 = vector.broadcast %79 : vector<8x1xf32> to vector<8x8xf32>
    %81 = arith.divf %77, %80 : vector<8x8xf32>
    %c0_74 = arith.constant 0 : index
    %c3_75 = arith.constant 3 : index
    %c0_76 = arith.constant 0 : index
    %c0_77 = arith.constant 0 : index
    %82 = vector.load %arg4[%c0_74, %c3_75, %c0_76, %c0_77] : memref<1x4x8x40xf32, #tpu.memory_space<vmem>>, vector<1x1x8x40xf32>
    %83 = vector.shape_cast %82 : vector<1x1x8x40xf32> to vector<8x40xf32>
    %cst_78 = arith.constant dense<0.000000e+00> : vector<8x40xf32>
    %84 = tpu.matmul %81, %83, %cst_78 {dimension_numbers = #tpu.dot_dimension_numbers<[1], [0], [0], [1], [0, 0, 1, 1], [], []>} : vector<8x8xf32>, vector<8x40xf32>, vector<8x40xf32> -> vector<8x40xf32>
    %85 = arith.truncf %81 : vector<8x8xf32> to vector<8x8xbf16>
    %86 = tpu.concatenate %21, %42, %63, %84 in 1 : vector<8x40xf32>, vector<8x40xf32>, vector<8x40xf32>, vector<8x40xf32> -> vector<8x160xf32>
    %c0_79 = arith.constant 0 : index
    %c0_80 = arith.constant 0 : index
    %c0_81 = arith.constant 0 : index
    %87 = vector.load %arg7[%c0_79, %c0_80, %c0_81] : memref<1x8x160xf32, #tpu.memory_space<vmem>>, vector<1x8x160xf32>
    %88 = vector.shape_cast %87 : vector<1x8x160xf32> to vector<8x160xf32>
    %89 = vector.shape_cast %86 : vector<8x160xf32> to vector<1x8x160xf32>
    tpu.vector_store %arg7[%c0_79, %c0_80, %c0_81], %89 {strides = array<i32>} : memref<1x8x160xf32, #tpu.memory_space<vmem>>, vector<1x8x160xf32>,
    %90 = vector.shape_cast %22 : vector<8x8xbf16> to vector<8x1x8xbf16>
    %91 = vector.shape_cast %43 : vector<8x8xbf16> to vector<8x1x8xbf16>
    %92 = vector.shape_cast %64 : vector<8x8xbf16> to vector<8x1x8xbf16>
    %93 = vector.shape_cast %85 : vector<8x8xbf16> to vector<8x1x8xbf16>
    %94 = tpu.concatenate %90, %91, %92, %93 in 1 : vector<8x1x8xbf16>, vector<8x1x8xbf16>, vector<8x1x8xbf16>, vector<8x1x8xbf16> -> vector<8x4x8xbf16>
    %cst_82 = arith.constant dense<0.000000e+00> : vector<8x4x128xf32>
    %95 = tpu.matmul %94, %1, %cst_82 {dimension_numbers = #tpu.dot_dimension_numbers<[2], [1], [1], [2], [0, 0, 0, 1, 1, 2], [0], [0]>} : vector<8x4x8xbf16>, vector<8x8x128xbf16>, vector<8x4x128xf32> -> vector<8x4x128xf32>
    %96 = vector.shape_cast %95 : vector<8x4x128xf32> to vector<8x512xf32>
    %c0_83 = arith.constant 0 : index
    %c0_84 = arith.constant 0 : index
    %c0_85 = arith.constant 0 : index
    %97 = vector.load %arg8[%c0_83, %c0_84, %c0_85] : memref<1x8x512xf32, #tpu.memory_space<vmem>>, vector<1x8x512xf32>
    %98 = vector.shape_cast %97 : vector<1x8x512xf32> to vector<8x512xf32>
    %99 = vector.shape_cast %96 : vector<8x512xf32> to vector<1x8x512xf32>
    tpu.vector_store %arg8[%c0_83, %c0_84, %c0_85], %99 {strides = array<i32>} : memref<1x8x512xf32, #tpu.memory_space<vmem>>, vector<1x8x512xf32>,
    return
  }
  func.func @transform_0(%arg0: i32, %arg1: i32) -> (i32, i32, i32, i32) {
    %c0_i32 = arith.constant 0 : i32
    %c0_i32_0 = arith.constant 0 : i32
    %c0_i32_1 = arith.constant 0 : i32
    return %arg0, %c0_i32, %arg1, %c0_i32_0 : i32, i32, i32, i32
  }
  func.func @transform_1(%arg0: i32, %arg1: i32) -> (i32, i32, i32, i32) {
    %c0_i32 = arith.constant 0 : i32
    %c0_i32_0 = arith.constant 0 : i32
    %c0_i32_1 = arith.constant 0 : i32
    %c0_i32_2 = arith.constant 0 : i32
    return %arg0, %c0_i32, %c0_i32_0, %c0_i32_1 : i32, i32, i32, i32
  }
  func.func @transform_2(%arg0: i32, %arg1: i32) -> (i32, i32, i32, i32) {
    %c0_i32 = arith.constant 0 : i32
    %c0_i32_0 = arith.constant 0 : i32
    %c0_i32_1 = arith.constant 0 : i32
    %c0_i32_2 = arith.constant 0 : i32
    return %arg0, %c0_i32, %c0_i32_0, %c0_i32_1 : i32, i32, i32, i32
  }
  func.func @transform_3(%arg0: i32, %arg1: i32) -> (i32, i32, i32, i32) {
    %c0_i32 = arith.constant 0 : i32
    %c0_i32_0 = arith.constant 0 : i32
    %c0_i32_1 = arith.constant 0 : i32
    return %arg0, %arg1, %c0_i32, %c0_i32_0 : i32, i32, i32, i32
  }
  func.func @transform_4(%arg0: i32, %arg1: i32) -> (i32, i32, i32, i32) {
    %c0_i32 = arith.constant 0 : i32
    %c0_i32_0 = arith.constant 0 : i32
    %c0_i32_1 = arith.constant 0 : i32
    return %arg0, %c0_i32, %arg1, %c0_i32_0 : i32, i32, i32, i32
  }
  func.func @transform_5(%arg0: i32, %arg1: i32) -> (i32, i32, i32) {
    %c0_i32 = arith.constant 0 : i32
    %c0_i32_0 = arith.constant 0 : i32
    return %arg0, %arg1, %c0_i32 : i32, i32, i32
  }
  func.func @transform_6(%arg0: i32, %arg1: i32) -> (i32, i32, i32) {
    %c0_i32 = arith.constant 0 : i32
    %c0_i32_0 = arith.constant 0 : i32
    return %arg0, %arg1, %c0_i32 : i32, i32, i32
  }
}

module attributes {stable_mosaic.version = 11 : i64} {
  func.func @_linear_kernel(%arg0: i32, %arg1: memref<16x704xf32, #tpu.memory_space<vmem>>, %arg2: memref<704x384xf32, #tpu.memory_space<vmem>>, %arg3: memref<1x384xf32, #tpu.memory_space<vmem>>, %arg4: memref<16x384xf32, #tpu.memory_space<vmem>>) attributes {dimension_semantics = [#tpu.dimension_semantics<parallel>], iteration_bounds = array<i64: 1>, scalar_prefetch = 0 : i64, scratch_operands = 0 : i64, tpu.core_type = #tpu.core_type<tc>, window_params = [{transform_indices = @transform_0, window_bounds = array<i64: 16, 704>}, {pipeline_mode = #tpu.pipeline_mode<synchronous>, transform_indices = @transform_1, window_bounds = array<i64: 704, 384>}, {pipeline_mode = #tpu.pipeline_mode<synchronous>, transform_indices = @transform_2, window_bounds = array<i64: 1, 384>}, {transform_indices = @transform_3, window_bounds = array<i64: 16, 384>}]} {
    %c0 = arith.constant 0 : index
    %c0_0 = arith.constant 0 : index
    %0 = vector.load %arg1[%c0, %c0_0] : memref<16x704xf32, #tpu.memory_space<vmem>>, vector<16x704xf32>
    %c0_1 = arith.constant 0 : index
    %c0_2 = arith.constant 0 : index
    %1 = vector.load %arg2[%c0_1, %c0_2] : memref<704x384xf32, #tpu.memory_space<vmem>>, vector<704x384xf32>
    %cst = arith.constant dense<0.000000e+00> : vector<16x384xf32>
    %2 = tpu.matmul %0, %1, %cst {dimension_numbers = #tpu.dot_dimension_numbers<[1], [0], [0], [1], [0, 0, 1, 1], [], []>} : vector<16x704xf32>, vector<704x384xf32>, vector<16x384xf32> -> vector<16x384xf32>
    %c0_3 = arith.constant 0 : index
    %c0_4 = arith.constant 0 : index
    %3 = vector.load %arg3[%c0_3, %c0_4] : memref<1x384xf32, #tpu.memory_space<vmem>>, vector<1x384xf32>
    %4 = vector.broadcast %3 : vector<1x384xf32> to vector<16x384xf32>
    %5 = arith.addf %2, %4 : vector<16x384xf32>
    %c0_5 = arith.constant 0 : index
    %c0_6 = arith.constant 0 : index
    %6 = vector.load %arg4[%c0_5, %c0_6] : memref<16x384xf32, #tpu.memory_space<vmem>>, vector<16x384xf32>
    tpu.vector_store %arg4[%c0_5, %c0_6], %5 {strides = array<i32>} : memref<16x384xf32, #tpu.memory_space<vmem>>, vector<16x384xf32>,
    return
  }
  func.func @transform_0(%arg0: i32) -> (i32, i32) {
    %c0_i32 = arith.constant 0 : i32
    %c0_i32_0 = arith.constant 0 : i32
    return %arg0, %c0_i32 : i32, i32
  }
  func.func @transform_1(%arg0: i32) -> (i32, i32) {
    %c0_i32 = arith.constant 0 : i32
    %c0_i32_0 = arith.constant 0 : i32
    %c0_i32_1 = arith.constant 0 : i32
    return %c0_i32, %c0_i32_0 : i32, i32
  }
  func.func @transform_2(%arg0: i32) -> (i32, i32) {
    %c0_i32 = arith.constant 0 : i32
    %c0_i32_0 = arith.constant 0 : i32
    %c0_i32_1 = arith.constant 0 : i32
    return %c0_i32, %c0_i32_0 : i32, i32
  }
  func.func @transform_3(%arg0: i32) -> (i32, i32) {
    %c0_i32 = arith.constant 0 : i32
    %c0_i32_0 = arith.constant 0 : i32
    return %arg0, %c0_i32 : i32, i32
  }
}

module attributes {stable_mosaic.version = 11 : i64} {
  func.func @_layernorm_kernel(%arg0: i32, %arg1: memref<16x384xf32, #tpu.memory_space<vmem>>, %arg2: memref<1x384xf32, #tpu.memory_space<vmem>>, %arg3: memref<1x384xf32, #tpu.memory_space<vmem>>, %arg4: memref<16x384xf32, #tpu.memory_space<vmem>>) attributes {dimension_semantics = [#tpu.dimension_semantics<parallel>], iteration_bounds = array<i64: 1>, scalar_prefetch = 0 : i64, scratch_operands = 0 : i64, tpu.core_type = #tpu.core_type<tc>, window_params = [{transform_indices = @transform_0, window_bounds = array<i64: 16, 384>}, {pipeline_mode = #tpu.pipeline_mode<synchronous>, transform_indices = @transform_1, window_bounds = array<i64: 1, 384>}, {pipeline_mode = #tpu.pipeline_mode<synchronous>, transform_indices = @transform_2, window_bounds = array<i64: 1, 384>}, {transform_indices = @transform_3, window_bounds = array<i64: 16, 384>}]} {
    %c0 = arith.constant 0 : index
    %c0_0 = arith.constant 0 : index
    %0 = vector.load %arg1[%c0, %c0_0] : memref<16x384xf32, #tpu.memory_space<vmem>>, vector<16x384xf32>
    %cst = arith.constant dense<0.000000e+00> : vector<16xf32>
    %1 = vector.multi_reduction <add>, %0, %cst [1] : vector<16x384xf32> to vector<16xf32>
    %2 = vector.shape_cast %1 : vector<16xf32> to vector<16x1xf32>
    %cst_1 = arith.constant 3.840000e+02 : f32
    %3 = vector.broadcast %cst_1 : f32 to vector<16x1xf32>
    %4 = arith.divf %2, %3 : vector<16x1xf32>
    %5 = vector.broadcast %4 : vector<16x1xf32> to vector<16x384xf32>
    %6 = arith.subf %0, %5 : vector<16x384xf32>
    %7 = arith.mulf %6, %6 : vector<16x384xf32>
    %cst_2 = arith.constant dense<0.000000e+00> : vector<16xf32>
    %8 = vector.multi_reduction <add>, %7, %cst_2 [1] : vector<16x384xf32> to vector<16xf32>
    %9 = vector.shape_cast %8 : vector<16xf32> to vector<16x1xf32>
    %cst_3 = arith.constant 3.840000e+02 : f32
    %10 = vector.broadcast %cst_3 : f32 to vector<16x1xf32>
    %11 = arith.divf %9, %10 : vector<16x1xf32>
    %cst_4 = arith.constant 9.99999974E-6 : f32
    %12 = vector.broadcast %cst_4 : f32 to vector<16x1xf32>
    %13 = arith.addf %11, %12 : vector<16x1xf32>
    %14 = math.rsqrt %13 : vector<16x1xf32>
    %15 = vector.broadcast %14 : vector<16x1xf32> to vector<16x384xf32>
    %16 = arith.mulf %6, %15 : vector<16x384xf32>
    %c0_5 = arith.constant 0 : index
    %c0_6 = arith.constant 0 : index
    %17 = vector.load %arg2[%c0_5, %c0_6] : memref<1x384xf32, #tpu.memory_space<vmem>>, vector<1x384xf32>
    %18 = vector.broadcast %17 : vector<1x384xf32> to vector<16x384xf32>
    %19 = arith.mulf %16, %18 : vector<16x384xf32>
    %c0_7 = arith.constant 0 : index
    %c0_8 = arith.constant 0 : index
    %20 = vector.load %arg3[%c0_7, %c0_8] : memref<1x384xf32, #tpu.memory_space<vmem>>, vector<1x384xf32>
    %21 = vector.broadcast %20 : vector<1x384xf32> to vector<16x384xf32>
    %22 = arith.addf %19, %21 : vector<16x384xf32>
    %c0_9 = arith.constant 0 : index
    %c0_10 = arith.constant 0 : index
    %23 = vector.load %arg4[%c0_9, %c0_10] : memref<16x384xf32, #tpu.memory_space<vmem>>, vector<16x384xf32>
    tpu.vector_store %arg4[%c0_9, %c0_10], %22 {strides = array<i32>} : memref<16x384xf32, #tpu.memory_space<vmem>>, vector<16x384xf32>,
    return
  }
  func.func @transform_0(%arg0: i32) -> (i32, i32) {
    %c0_i32 = arith.constant 0 : i32
    %c0_i32_0 = arith.constant 0 : i32
    return %arg0, %c0_i32 : i32, i32
  }
  func.func @transform_1(%arg0: i32) -> (i32, i32) {
    %c0_i32 = arith.constant 0 : i32
    %c0_i32_0 = arith.constant 0 : i32
    %c0_i32_1 = arith.constant 0 : i32
    return %c0_i32, %c0_i32_0 : i32, i32
  }
  func.func @transform_2(%arg0: i32) -> (i32, i32) {
    %c0_i32 = arith.constant 0 : i32
    %c0_i32_0 = arith.constant 0 : i32
    %c0_i32_1 = arith.constant 0 : i32
    return %c0_i32, %c0_i32_0 : i32, i32
  }
  func.func @transform_3(%arg0: i32) -> (i32, i32) {
    %c0_i32 = arith.constant 0 : i32
    %c0_i32_0 = arith.constant 0 : i32
    return %arg0, %c0_i32 : i32, i32
  }
}

module attributes {stable_mosaic.version = 11 : i64} {
  func.func @_linear_kernel(%arg0: i32, %arg1: memref<16x384xf32, #tpu.memory_space<vmem>>, %arg2: memref<384x6xf32, #tpu.memory_space<vmem>>, %arg3: memref<1x6xf32, #tpu.memory_space<vmem>>, %arg4: memref<16x6xf32, #tpu.memory_space<vmem>>) attributes {dimension_semantics = [#tpu.dimension_semantics<parallel>], iteration_bounds = array<i64: 1>, scalar_prefetch = 0 : i64, scratch_operands = 0 : i64, tpu.core_type = #tpu.core_type<tc>, window_params = [{transform_indices = @transform_0, window_bounds = array<i64: 16, 384>}, {pipeline_mode = #tpu.pipeline_mode<synchronous>, transform_indices = @transform_1, window_bounds = array<i64: 384, 6>}, {pipeline_mode = #tpu.pipeline_mode<synchronous>, transform_indices = @transform_2, window_bounds = array<i64: 1, 6>}, {transform_indices = @transform_3, window_bounds = array<i64: 16, 6>}]} {
    %c0 = arith.constant 0 : index
    %c0_0 = arith.constant 0 : index
    %0 = vector.load %arg1[%c0, %c0_0] : memref<16x384xf32, #tpu.memory_space<vmem>>, vector<16x384xf32>
    %c0_1 = arith.constant 0 : index
    %c0_2 = arith.constant 0 : index
    %1 = vector.load %arg2[%c0_1, %c0_2] : memref<384x6xf32, #tpu.memory_space<vmem>>, vector<384x6xf32>
    %cst = arith.constant dense<0.000000e+00> : vector<16x6xf32>
    %2 = tpu.matmul %0, %1, %cst {dimension_numbers = #tpu.dot_dimension_numbers<[1], [0], [0], [1], [0, 0, 1, 1], [], []>} : vector<16x384xf32>, vector<384x6xf32>, vector<16x6xf32> -> vector<16x6xf32>
    %c0_3 = arith.constant 0 : index
    %c0_4 = arith.constant 0 : index
    %3 = vector.load %arg3[%c0_3, %c0_4] : memref<1x6xf32, #tpu.memory_space<vmem>>, vector<1x6xf32>
    %4 = vector.broadcast %3 : vector<1x6xf32> to vector<16x6xf32>
    %5 = arith.addf %2, %4 : vector<16x6xf32>
    %c0_5 = arith.constant 0 : index
    %c0_6 = arith.constant 0 : index
    %6 = vector.load %arg4[%c0_5, %c0_6] : memref<16x6xf32, #tpu.memory_space<vmem>>, vector<16x6xf32>
    tpu.vector_store %arg4[%c0_5, %c0_6], %5 {strides = array<i32>} : memref<16x6xf32, #tpu.memory_space<vmem>>, vector<16x6xf32>,
    return
  }
  func.func @transform_0(%arg0: i32) -> (i32, i32) {
    %c0_i32 = arith.constant 0 : i32
    %c0_i32_0 = arith.constant 0 : i32
    return %arg0, %c0_i32 : i32, i32
  }
  func.func @transform_1(%arg0: i32) -> (i32, i32) {
    %c0_i32 = arith.constant 0 : i32
    %c0_i32_0 = arith.constant 0 : i32
    %c0_i32_1 = arith.constant 0 : i32
    return %c0_i32, %c0_i32_0 : i32, i32
  }
  func.func @transform_2(%arg0: i32) -> (i32, i32) {
    %c0_i32 = arith.constant 0 : i32
    %c0_i32_0 = arith.constant 0 : i32
    %c0_i32_1 = arith.constant 0 : i32
    return %c0_i32, %c0_i32_0 : i32, i32
  }
  func.func @transform_3(%arg0: i32) -> (i32, i32) {
    %c0_i32 = arith.constant 0 : i32
    %c0_i32_0 = arith.constant 0 : i32
    return %arg0, %c0_i32 : i32, i32
  }
}

module attributes {stable_mosaic.version = 11 : i64} {
  func.func @_linear_kernel(%arg0: i32, %arg1: memref<16x768xf32, #tpu.memory_space<vmem>>, %arg2: memref<768x128xf32, #tpu.memory_space<vmem>>, %arg3: memref<1x128xf32, #tpu.memory_space<vmem>>, %arg4: memref<16x128xf32, #tpu.memory_space<vmem>>) attributes {dimension_semantics = [#tpu.dimension_semantics<parallel>], iteration_bounds = array<i64: 1>, scalar_prefetch = 0 : i64, scratch_operands = 0 : i64, tpu.core_type = #tpu.core_type<tc>, window_params = [{transform_indices = @transform_0, window_bounds = array<i64: 16, 768>}, {pipeline_mode = #tpu.pipeline_mode<synchronous>, transform_indices = @transform_1, window_bounds = array<i64: 768, 128>}, {pipeline_mode = #tpu.pipeline_mode<synchronous>, transform_indices = @transform_2, window_bounds = array<i64: 1, 128>}, {transform_indices = @transform_3, window_bounds = array<i64: 16, 128>}]} {
    %c0 = arith.constant 0 : index
    %c0_0 = arith.constant 0 : index
    %0 = vector.load %arg1[%c0, %c0_0] : memref<16x768xf32, #tpu.memory_space<vmem>>, vector<16x768xf32>
    %cst = arith.constant 0.000000e+00 : f32
    %1 = vector.broadcast %cst : f32 to vector<16x768xf32>
    %2 = arith.maximumf %0, %1 : vector<16x768xf32>
    %c0_1 = arith.constant 0 : index
    %c0_2 = arith.constant 0 : index
    %3 = vector.load %arg2[%c0_1, %c0_2] : memref<768x128xf32, #tpu.memory_space<vmem>>, vector<768x128xf32>
    %cst_3 = arith.constant dense<0.000000e+00> : vector<16x128xf32>
    %4 = tpu.matmul %2, %3, %cst_3 {dimension_numbers = #tpu.dot_dimension_numbers<[1], [0], [0], [1], [0, 0, 1, 1], [], []>} : vector<16x768xf32>, vector<768x128xf32>, vector<16x128xf32> -> vector<16x128xf32>
    %c0_4 = arith.constant 0 : index
    %c0_5 = arith.constant 0 : index
    %5 = vector.load %arg3[%c0_4, %c0_5] : memref<1x128xf32, #tpu.memory_space<vmem>>, vector<1x128xf32>
    %6 = vector.broadcast %5 : vector<1x128xf32> to vector<16x128xf32>
    %7 = arith.addf %4, %6 : vector<16x128xf32>
    %c0_6 = arith.constant 0 : index
    %c0_7 = arith.constant 0 : index
    %8 = vector.load %arg4[%c0_6, %c0_7] : memref<16x128xf32, #tpu.memory_space<vmem>>, vector<16x128xf32>
    tpu.vector_store %arg4[%c0_6, %c0_7], %7 {strides = array<i32>} : memref<16x128xf32, #tpu.memory_space<vmem>>, vector<16x128xf32>,
    return
  }
  func.func @transform_0(%arg0: i32) -> (i32, i32) {
    %c0_i32 = arith.constant 0 : i32
    %c0_i32_0 = arith.constant 0 : i32
    return %arg0, %c0_i32 : i32, i32
  }
  func.func @transform_1(%arg0: i32) -> (i32, i32) {
    %c0_i32 = arith.constant 0 : i32
    %c0_i32_0 = arith.constant 0 : i32
    %c0_i32_1 = arith.constant 0 : i32
    return %c0_i32, %c0_i32_0 : i32, i32
  }
  func.func @transform_2(%arg0: i32) -> (i32, i32) {
    %c0_i32 = arith.constant 0 : i32
    %c0_i32_0 = arith.constant 0 : i32
    %c0_i32_1 = arith.constant 0 : i32
    return %c0_i32, %c0_i32_0 : i32, i32
  }
  func.func @transform_3(%arg0: i32) -> (i32, i32) {
    %c0_i32 = arith.constant 0 : i32
    %c0_i32_0 = arith.constant 0 : i32
    return %arg0, %c0_i32 : i32, i32
  }
}

module attributes {stable_mosaic.version = 11 : i64} {
  func.func @_mlp2_kernel(%arg0: i32, %arg1: memref<16x128xf32, #tpu.memory_space<vmem>>, %arg2: memref<128x128xf32, #tpu.memory_space<vmem>>, %arg3: memref<1x128xf32, #tpu.memory_space<vmem>>, %arg4: memref<128x128xf32, #tpu.memory_space<vmem>>, %arg5: memref<1x128xf32, #tpu.memory_space<vmem>>, %arg6: memref<16x128xf32, #tpu.memory_space<vmem>>) attributes {dimension_semantics = [#tpu.dimension_semantics<parallel>], iteration_bounds = array<i64: 1>, scalar_prefetch = 0 : i64, scratch_operands = 0 : i64, tpu.core_type = #tpu.core_type<tc>, window_params = [{transform_indices = @transform_0, window_bounds = array<i64: 16, 128>}, {pipeline_mode = #tpu.pipeline_mode<synchronous>, transform_indices = @transform_1, window_bounds = array<i64: 128, 128>}, {pipeline_mode = #tpu.pipeline_mode<synchronous>, transform_indices = @transform_2, window_bounds = array<i64: 1, 128>}, {pipeline_mode = #tpu.pipeline_mode<synchronous>, transform_indices = @transform_3, window_bounds = array<i64: 128, 128>}, {pipeline_mode = #tpu.pipeline_mode<synchronous>, transform_indices = @transform_4, window_bounds = array<i64: 1, 128>}, {transform_indices = @transform_5, window_bounds = array<i64: 16, 128>}]} {
    %c0 = arith.constant 0 : index
    %c0_0 = arith.constant 0 : index
    %0 = vector.load %arg1[%c0, %c0_0] : memref<16x128xf32, #tpu.memory_space<vmem>>, vector<16x128xf32>
    %cst = arith.constant 0.000000e+00 : f32
    %1 = vector.broadcast %cst : f32 to vector<16x128xf32>
    %2 = arith.maximumf %0, %1 : vector<16x128xf32>
    %c0_1 = arith.constant 0 : index
    %c0_2 = arith.constant 0 : index
    %3 = vector.load %arg2[%c0_1, %c0_2] : memref<128x128xf32, #tpu.memory_space<vmem>>, vector<128x128xf32>
    %cst_3 = arith.constant dense<0.000000e+00> : vector<16x128xf32>
    %4 = tpu.matmul %2, %3, %cst_3 {dimension_numbers = #tpu.dot_dimension_numbers<[1], [0], [0], [1], [0, 0, 1, 1], [], []>} : vector<16x128xf32>, vector<128x128xf32>, vector<16x128xf32> -> vector<16x128xf32>
    %c0_4 = arith.constant 0 : index
    %c0_5 = arith.constant 0 : index
    %5 = vector.load %arg3[%c0_4, %c0_5] : memref<1x128xf32, #tpu.memory_space<vmem>>, vector<1x128xf32>
    %6 = vector.broadcast %5 : vector<1x128xf32> to vector<16x128xf32>
    %7 = arith.addf %4, %6 : vector<16x128xf32>
    %cst_6 = arith.constant 0.000000e+00 : f32
    %8 = vector.broadcast %cst_6 : f32 to vector<16x128xf32>
    %9 = arith.maximumf %7, %8 : vector<16x128xf32>
    %c0_7 = arith.constant 0 : index
    %c0_8 = arith.constant 0 : index
    %10 = vector.load %arg4[%c0_7, %c0_8] : memref<128x128xf32, #tpu.memory_space<vmem>>, vector<128x128xf32>
    %cst_9 = arith.constant dense<0.000000e+00> : vector<16x128xf32>
    %11 = tpu.matmul %9, %10, %cst_9 {dimension_numbers = #tpu.dot_dimension_numbers<[1], [0], [0], [1], [0, 0, 1, 1], [], []>} : vector<16x128xf32>, vector<128x128xf32>, vector<16x128xf32> -> vector<16x128xf32>
    %c0_10 = arith.constant 0 : index
    %c0_11 = arith.constant 0 : index
    %12 = vector.load %arg5[%c0_10, %c0_11] : memref<1x128xf32, #tpu.memory_space<vmem>>, vector<1x128xf32>
    %13 = vector.broadcast %12 : vector<1x128xf32> to vector<16x128xf32>
    %14 = arith.addf %11, %13 : vector<16x128xf32>
    %15 = arith.addf %14, %0 : vector<16x128xf32>
    %c0_12 = arith.constant 0 : index
    %c0_13 = arith.constant 0 : index
    %16 = vector.load %arg6[%c0_12, %c0_13] : memref<16x128xf32, #tpu.memory_space<vmem>>, vector<16x128xf32>
    tpu.vector_store %arg6[%c0_12, %c0_13], %15 {strides = array<i32>} : memref<16x128xf32, #tpu.memory_space<vmem>>, vector<16x128xf32>,
    return
  }
  func.func @transform_0(%arg0: i32) -> (i32, i32) {
    %c0_i32 = arith.constant 0 : i32
    %c0_i32_0 = arith.constant 0 : i32
    return %arg0, %c0_i32 : i32, i32
  }
  func.func @transform_1(%arg0: i32) -> (i32, i32) {
    %c0_i32 = arith.constant 0 : i32
    %c0_i32_0 = arith.constant 0 : i32
    %c0_i32_1 = arith.constant 0 : i32
    return %c0_i32, %c0_i32_0 : i32, i32
  }
  func.func @transform_2(%arg0: i32) -> (i32, i32) {
    %c0_i32 = arith.constant 0 : i32
    %c0_i32_0 = arith.constant 0 : i32
    %c0_i32_1 = arith.constant 0 : i32
    return %c0_i32, %c0_i32_0 : i32, i32
  }
  func.func @transform_3(%arg0: i32) -> (i32, i32) {
    %c0_i32 = arith.constant 0 : i32
    %c0_i32_0 = arith.constant 0 : i32
    %c0_i32_1 = arith.constant 0 : i32
    return %c0_i32, %c0_i32_0 : i32, i32
  }
  func.func @transform_4(%arg0: i32) -> (i32, i32) {
    %c0_i32 = arith.constant 0 : i32
    %c0_i32_0 = arith.constant 0 : i32
    %c0_i32_1 = arith.constant 0 : i32
    return %c0_i32, %c0_i32_0 : i32, i32
  }
  func.func @transform_5(%arg0: i32) -> (i32, i32) {
    %c0_i32 = arith.constant 0 : i32
    %c0_i32_0 = arith.constant 0 : i32
    return %arg0, %c0_i32 : i32, i32
  }
}

module attributes {stable_mosaic.version = 11 : i64} {
  func.func @_linear_kernel(%arg0: i32, %arg1: memref<16x128xf32, #tpu.memory_space<vmem>>, %arg2: memref<128x14xf32, #tpu.memory_space<vmem>>, %arg3: memref<1x14xf32, #tpu.memory_space<vmem>>, %arg4: memref<16x14xf32, #tpu.memory_space<vmem>>) attributes {dimension_semantics = [#tpu.dimension_semantics<parallel>], iteration_bounds = array<i64: 1>, scalar_prefetch = 0 : i64, scratch_operands = 0 : i64, tpu.core_type = #tpu.core_type<tc>, window_params = [{transform_indices = @transform_0, window_bounds = array<i64: 16, 128>}, {pipeline_mode = #tpu.pipeline_mode<synchronous>, transform_indices = @transform_1, window_bounds = array<i64: 128, 14>}, {pipeline_mode = #tpu.pipeline_mode<synchronous>, transform_indices = @transform_2, window_bounds = array<i64: 1, 14>}, {transform_indices = @transform_3, window_bounds = array<i64: 16, 14>}]} {
    %c0 = arith.constant 0 : index
    %c0_0 = arith.constant 0 : index
    %0 = vector.load %arg1[%c0, %c0_0] : memref<16x128xf32, #tpu.memory_space<vmem>>, vector<16x128xf32>
    %cst = arith.constant 0.000000e+00 : f32
    %1 = vector.broadcast %cst : f32 to vector<16x128xf32>
    %2 = arith.maximumf %0, %1 : vector<16x128xf32>
    %c0_1 = arith.constant 0 : index
    %c0_2 = arith.constant 0 : index
    %3 = vector.load %arg2[%c0_1, %c0_2] : memref<128x14xf32, #tpu.memory_space<vmem>>, vector<128x14xf32>
    %cst_3 = arith.constant dense<0.000000e+00> : vector<16x14xf32>
    %4 = tpu.matmul %2, %3, %cst_3 {dimension_numbers = #tpu.dot_dimension_numbers<[1], [0], [0], [1], [0, 0, 1, 1], [], []>} : vector<16x128xf32>, vector<128x14xf32>, vector<16x14xf32> -> vector<16x14xf32>
    %c0_4 = arith.constant 0 : index
    %c0_5 = arith.constant 0 : index
    %5 = vector.load %arg3[%c0_4, %c0_5] : memref<1x14xf32, #tpu.memory_space<vmem>>, vector<1x14xf32>
    %6 = vector.broadcast %5 : vector<1x14xf32> to vector<16x14xf32>
    %7 = arith.addf %4, %6 : vector<16x14xf32>
    %c0_6 = arith.constant 0 : index
    %c0_7 = arith.constant 0 : index
    %8 = vector.load %arg4[%c0_6, %c0_7] : memref<16x14xf32, #tpu.memory_space<vmem>>, vector<16x14xf32>
    tpu.vector_store %arg4[%c0_6, %c0_7], %7 {strides = array<i32>} : memref<16x14xf32, #tpu.memory_space<vmem>>, vector<16x14xf32>,
    return
  }
  func.func @transform_0(%arg0: i32) -> (i32, i32) {
    %c0_i32 = arith.constant 0 : i32
    %c0_i32_0 = arith.constant 0 : i32
    return %arg0, %c0_i32 : i32, i32
  }
  func.func @transform_1(%arg0: i32) -> (i32, i32) {
    %c0_i32 = arith.constant 0 : i32
    %c0_i32_0 = arith.constant 0 : i32
    %c0_i32_1 = arith.constant 0 : i32
    return %c0_i32, %c0_i32_0 : i32, i32
  }
  func.func @transform_2(%arg0: i32) -> (i32, i32) {
    %c0_i32 = arith.constant 0 : i32
    %c0_i32_0 = arith.constant 0 : i32
    %c0_i32_1 = arith.constant 0 : i32
    return %c0_i32, %c0_i32_0 : i32, i32
  }
  func.func @transform_3(%arg0: i32) -> (i32, i32) {
    %c0_i32 = arith.constant 0 : i32
    %c0_i32_0 = arith.constant 0 : i32
    return %arg0, %c0_i32 : i32, i32
  }
}

module attributes {stable_mosaic.version = 11 : i64} {
  func.func @_mlp2_kernel(%arg0: i32, %arg1: memref<16x384xf32, #tpu.memory_space<vmem>>, %arg2: memref<384x128xf32, #tpu.memory_space<vmem>>, %arg3: memref<1x128xf32, #tpu.memory_space<vmem>>, %arg4: memref<128x1xf32, #tpu.memory_space<vmem>>, %arg5: memref<1x1xf32, #tpu.memory_space<vmem>>, %arg6: memref<16x1xf32, #tpu.memory_space<vmem>>) attributes {dimension_semantics = [#tpu.dimension_semantics<parallel>], iteration_bounds = array<i64: 1>, scalar_prefetch = 0 : i64, scratch_operands = 0 : i64, tpu.core_type = #tpu.core_type<tc>, window_params = [{transform_indices = @transform_0, window_bounds = array<i64: 16, 384>}, {pipeline_mode = #tpu.pipeline_mode<synchronous>, transform_indices = @transform_1, window_bounds = array<i64: 384, 128>}, {pipeline_mode = #tpu.pipeline_mode<synchronous>, transform_indices = @transform_2, window_bounds = array<i64: 1, 128>}, {pipeline_mode = #tpu.pipeline_mode<synchronous>, transform_indices = @transform_3, window_bounds = array<i64: 128, 1>}, {pipeline_mode = #tpu.pipeline_mode<synchronous>, transform_indices = @transform_4, window_bounds = array<i64: 1, 1>}, {transform_indices = @transform_5, window_bounds = array<i64: 16, 1>}]} {
    %c0 = arith.constant 0 : index
    %c0_0 = arith.constant 0 : index
    %0 = vector.load %arg1[%c0, %c0_0] : memref<16x384xf32, #tpu.memory_space<vmem>>, vector<16x384xf32>
    %c0_1 = arith.constant 0 : index
    %c0_2 = arith.constant 0 : index
    %1 = vector.load %arg2[%c0_1, %c0_2] : memref<384x128xf32, #tpu.memory_space<vmem>>, vector<384x128xf32>
    %cst = arith.constant dense<0.000000e+00> : vector<16x128xf32>
    %2 = tpu.matmul %0, %1, %cst {dimension_numbers = #tpu.dot_dimension_numbers<[1], [0], [0], [1], [0, 0, 1, 1], [], []>} : vector<16x384xf32>, vector<384x128xf32>, vector<16x128xf32> -> vector<16x128xf32>
    %c0_3 = arith.constant 0 : index
    %c0_4 = arith.constant 0 : index
    %3 = vector.load %arg3[%c0_3, %c0_4] : memref<1x128xf32, #tpu.memory_space<vmem>>, vector<1x128xf32>
    %4 = vector.broadcast %3 : vector<1x128xf32> to vector<16x128xf32>
    %5 = arith.addf %2, %4 : vector<16x128xf32>
    %cst_5 = arith.constant 0.000000e+00 : f32
    %6 = vector.broadcast %cst_5 : f32 to vector<16x128xf32>
    %7 = arith.maximumf %5, %6 : vector<16x128xf32>
    %c0_6 = arith.constant 0 : index
    %c0_7 = arith.constant 0 : index
    %8 = vector.load %arg4[%c0_6, %c0_7] : memref<128x1xf32, #tpu.memory_space<vmem>>, vector<128x1xf32>
    %cst_8 = arith.constant dense<0.000000e+00> : vector<16x1xf32>
    %9 = tpu.matmul %7, %8, %cst_8 {dimension_numbers = #tpu.dot_dimension_numbers<[1], [0], [0], [1], [0, 0, 1, 1], [], []>} : vector<16x128xf32>, vector<128x1xf32>, vector<16x1xf32> -> vector<16x1xf32>
    %c0_9 = arith.constant 0 : index
    %c0_10 = arith.constant 0 : index
    %10 = vector.load %arg5[%c0_9, %c0_10] : memref<1x1xf32, #tpu.memory_space<vmem>>, vector<1x1xf32>
    %11 = vector.broadcast %10 : vector<1x1xf32> to vector<16x1xf32>
    %12 = arith.addf %9, %11 : vector<16x1xf32>
    %cst_11 = arith.constant 0.000000e+00 : f32
    %13 = vector.broadcast %cst_11 : f32 to vector<16x1xf32>
    %14 = arith.subf %13, %12 : vector<16x1xf32>
    %15 = math.exp %14 : vector<16x1xf32>
    %cst_12 = arith.constant 1.000000e+00 : f32
    %16 = vector.broadcast %cst_12 : f32 to vector<16x1xf32>
    %17 = arith.addf %16, %15 : vector<16x1xf32>
    %cst_13 = arith.constant 1.000000e+00 : f32
    %18 = vector.broadcast %cst_13 : f32 to vector<16x1xf32>
    %19 = arith.divf %18, %17 : vector<16x1xf32>
    %c0_14 = arith.constant 0 : index
    %c0_15 = arith.constant 0 : index
    %20 = vector.load %arg6[%c0_14, %c0_15] : memref<16x1xf32, #tpu.memory_space<vmem>>, vector<16x1xf32>
    tpu.vector_store %arg6[%c0_14, %c0_15], %19 {strides = array<i32>} : memref<16x1xf32, #tpu.memory_space<vmem>>, vector<16x1xf32>,
    return
  }
  func.func @transform_0(%arg0: i32) -> (i32, i32) {
    %c0_i32 = arith.constant 0 : i32
    %c0_i32_0 = arith.constant 0 : i32
    return %arg0, %c0_i32 : i32, i32
  }
  func.func @transform_1(%arg0: i32) -> (i32, i32) {
    %c0_i32 = arith.constant 0 : i32
    %c0_i32_0 = arith.constant 0 : i32
    %c0_i32_1 = arith.constant 0 : i32
    return %c0_i32, %c0_i32_0 : i32, i32
  }
  func.func @transform_2(%arg0: i32) -> (i32, i32) {
    %c0_i32 = arith.constant 0 : i32
    %c0_i32_0 = arith.constant 0 : i32
    %c0_i32_1 = arith.constant 0 : i32
    return %c0_i32, %c0_i32_0 : i32, i32
  }
  func.func @transform_3(%arg0: i32) -> (i32, i32) {
    %c0_i32 = arith.constant 0 : i32
    %c0_i32_0 = arith.constant 0 : i32
    %c0_i32_1 = arith.constant 0 : i32
    return %c0_i32, %c0_i32_0 : i32, i32
  }
  func.func @transform_4(%arg0: i32) -> (i32, i32) {
    %c0_i32 = arith.constant 0 : i32
    %c0_i32_0 = arith.constant 0 : i32
    %c0_i32_1 = arith.constant 0 : i32
    return %c0_i32, %c0_i32_0 : i32, i32
  }
  func.func @transform_5(%arg0: i32) -> (i32, i32) {
    %c0_i32 = arith.constant 0 : i32
    %c0_i32_0 = arith.constant 0 : i32
    return %arg0, %c0_i32 : i32, i32
  }
}

</mosaic_0001>

<llo_original>
// kernel: _lambda_.26
$region0: #{_lambda_.26}
  #allocation0 [shape = 'u32[]', space=smem, size = 0x4, offset = 0x4, fixed_abs, tag = 'smem constant byte address 0x4 - core index']
  #allocation1 [shape = 'u32[72,128]{1,0:T(1,128)}', space=vmem, size = 0x9000, scoped, tag = 'internal scratch']
  %s0 = inlined_call_operand.hbm [shape: f32[16,128], index: 0, kind: input, shape index: {}]
  %s1 = inlined_call_operand.hbm [shape: f32[128,384], index: 1, kind: input, shape index: {}]
  %s2 = inlined_call_operand.vmem [shape: f32[1,384], index: 2, kind: input, shape index: {}]
  %s3 = inlined_call_operand.vmem [shape: f32[1,384], index: 3, kind: input, shape index: {}]
  %s4 = inlined_call_operand.vmem [shape: f32[1,384], index: 4, kind: input, shape index: {}]
  %s5 = inlined_call_operand.vmem [shape: f32[16,384], index: 5, kind: output, shape index: {}]
  %s6 = sld [smem:[#allocation0]]
  $region38: #{_lambda_.26} parent=0
    _
  %s8 = ssub.s32 1, %s6
  %s9 = scalar_select 0, %s8, %s6
  $region1: #{_lambda_.26} parent=0
    #allocation2 [shape = 'u8[8192]{0}', space=vmem, size = 0x2000, scoped, tag = 'input window, operand 0, single buffered']
    #allocation3 [shape = 's32[1]{0}', space=sflag, size = 0x4, scoped, tag = 'scoped memory for _lambda_.26']
    #allocation4 [shape = 'u8[196608]{0}', space=vmem, size = 0x30000, scoped, tag = 'input window, operand 1, single buffered']
    #allocation5 [shape = 's32[1]{0}', space=sflag, size = 0x4, scoped, tag = 'scoped memory for _lambda_.26']
    %10 = vsyncpa [#allocation3], 0
    %11 = vsyncpa [#allocation5], 0
    // Predicated region
    $region2: #{_lambda_.26} parent=1 // pred_check
      _
    $region3: #{_lambda_.26} parent=1 // pred_check_branch
      %13 = sbr.rel (0) target = $region5
    $region4: #{_lambda_.26} parent=1 // pred_region
      %15 = vsyncadd [#allocation3], 0
      %s16 = sshll.u32 %s0, 4
      %s17 = int_to_ptr.hbm [resolvable:$true] %s16
      %s18 = sshll.u32 [#allocation2], 4
      %s19 = int_to_ptr.vmem [resolvable:$true] %s18
      %24 = dma.hbm_to_vmem [thread:$0]  %s17, 256, %s19, [#allocation3], 128, 128, 8
    $region5: #{_lambda_.26} parent=1 // pred_fallthru
      _
    // Predicated region
    $region6: #{_lambda_.26} parent=1 // pred_check
      _
    $region7: #{_lambda_.26} parent=1 // pred_check_branch
      %26 = sbr.rel (0) target = $region9
    $region8: #{_lambda_.26} parent=1 // pred_region
      %28 = vsyncadd [#allocation5], 0
      %s29 = sshll.u32 %s1, 4
      %s30 = int_to_ptr.hbm [resolvable:$true] %s29
      %s31 = sshll.u32 [#allocation4], 4
      %s32 = int_to_ptr.vmem [resolvable:$true] %s31
      %37 = dma.hbm_to_vmem [thread:$0]  %s30, 6144, %s32, [#allocation5], 384, 384, 24
    $region9: #{_lambda_.26} parent=1 // pred_fallthru
      _
    // Predicated region
    $region10: #{_lambda_.26} parent=1 // pred_check
      _
    $region11: #{_lambda_.26} parent=1 // pred_check_branch
      %39 = sbr.rel (0) target = $region13
    $region12: #{_lambda_.26} parent=1 // pred_region
      _
    $region13: #{_lambda_.26} parent=1 // pred_fallthru
      _
    // Predicated region
    $region14: #{_lambda_.26} parent=1 // pred_check
      _
    $region15: #{_lambda_.26} parent=1 // pred_check_branch
      %41 = sbr.rel (0) target = $region17
    $region16: #{_lambda_.26} parent=1 // pred_region
      _
    $region17: #{_lambda_.26} parent=1 // pred_fallthru
      _
    // Predicated region
    $region18: #{_lambda_.26} parent=1 // pred_check
      _
    $region19: #{_lambda_.26} parent=1 // pred_check_branch
      %43 = sbr.rel (0) target = $region21
    $region20: #{_lambda_.26} parent=1 // pred_region
      _
    $region21: #{_lambda_.26} parent=1 // pred_fallthru
      _
    // Predicated region
    $region22: #{_lambda_.26} parent=1 // pred_check
      _
    $region23: #{_lambda_.26} parent=1 // pred_check_branch
      %45 = sbr.rel (0) target = $region25
    $region24: #{_lambda_.26} parent=1 // pred_region
      %47 = dma.done [#allocation3], 256
    $region25: #{_lambda_.26} parent=1 // pred_fallthru
      _
    // Predicated region
    $region26: #{_lambda_.26} parent=1 // pred_check
      _
    $region27: #{_lambda_.26} parent=1 // pred_check_branch
      %49 = sbr.rel (0) target = $region29
    $region28: #{_lambda_.26} parent=1 // pred_region
      %51 = dma.done [#allocation5], 6144
    $region29: #{_lambda_.26} parent=1 // pred_fallthru
      _
    %v52 = vld [vmem:[#allocation2] sm:$0xff]
    %v53 = vld [vmem:[#allocation2 + $0x8] sm:$0xff]
    %v54 = vld [vmem:[#allocation4] sm:$0xff]
    %v55 = vld [vmem:[#allocation4 + $0x8] sm:$0xff]
    %v56 = vld [vmem:[#allocation4 + $0x10] sm:$0xff]
    %v57 = vld [vmem:[#allocation4 + $0x18] sm:$0xff]
    %v58 = vld [vmem:[#allocation4 + $0x20] sm:$0xff]
    %v59 = vld [vmem:[#allocation4 + $0x28] sm:$0xff]
    %v60 = vld [vmem:[#allocation4 + $0x30] sm:$0xff]
    %v61 = vld [vmem:[#allocation4 + $0x38] sm:$0xff]
    %v62 = vld [vmem:[#allocation4 + $0x40] sm:$0xff]
    %v63 = vld [vmem:[#allocation4 + $0x48] sm:$0xff]
    %v64 = vld [vmem:[#allocation4 + $0x50] sm:$0xff]
    %v65 = vld [vmem:[#allocation4 + $0x58] sm:$0xff]
    %v66 = vld [vmem:[#allocation4 + $0x60] sm:$0xff]
    %v67 = vld [vmem:[#allocation4 + $0x68] sm:$0xff]
    %v68 = vld [vmem:[#allocation4 + $0x70] sm:$0xff]
    %v69 = vld [vmem:[#allocation4 + $0x78] sm:$0xff]
    %v70 = vld [vmem:[#allocation4 + $0x80] sm:$0xff]
    %v71 = vld [vmem:[#allocation4 + $0x88] sm:$0xff]
    %v72 = vld [vmem:[#allocation4 + $0x90] sm:$0xff]
    %v73 = vld [vmem:[#allocation4 + $0x98] sm:$0xff]
    %v74 = vld [vmem:[#allocation4 + $0xa0] sm:$0xff]
    %v75 = vld [vmem:[#allocation4 + $0xa8] sm:$0xff]
    %v76 = vld [vmem:[#allocation4 + $0xb0] sm:$0xff]
    %v77 = vld [vmem:[#allocation4 + $0xb8] sm:$0xff]
    %v78 = vld [vmem:[#allocation4 + $0xc0] sm:$0xff]
    %v79 = vld [vmem:[#allocation4 + $0xc8] sm:$0xff]
    %v80 = vld [vmem:[#allocation4 + $0xd0] sm:$0xff]
    %v81 = vld [vmem:[#allocation4 + $0xd8] sm:$0xff]
    %v82 = vld [vmem:[#allocation4 + $0xe0] sm:$0xff]
    %v83 = vld [vmem:[#allocation4 + $0xe8] sm:$0xff]
    %v84 = vld [vmem:[#allocation4 + $0xf0] sm:$0xff]
    %v85 = vld [vmem:[#allocation4 + $0xf8] sm:$0xff]
    %v86 = vld [vmem:[#allocation4 + $0x100] sm:$0xff]
    %v87 = vld [vmem:[#allocation4 + $0x108] sm:$0xff]
    %v88 = vld [vmem:[#allocation4 + $0x110] sm:$0xff]
    %v89 = vld [vmem:[#allocation4 + $0x118] sm:$0xff]
    %v90 = vld [vmem:[#allocation4 + $0x120] sm:$0xff]
    %v91 = vld [vmem:[#allocation4 + $0x128] sm:$0xff]
    %v92 = vld [vmem:[#allocation4 + $0x130] sm:$0xff]
    %v93 = vld [vmem:[#allocation4 + $0x138] sm:$0xff]
    %v94 = vld [vmem:[#allocation4 + $0x140] sm:$0xff]
    %v95 = vld [vmem:[#allocation4 + $0x148] sm:$0xff]
    %v96 = vld [vmem:[#allocation4 + $0x150] sm:$0xff]
    %v97 = vld [vmem:[#allocation4 + $0x158] sm:$0xff]
    %v98 = vld [vmem:[#allocation4 + $0x160] sm:$0xff]
    %v99 = vld [vmem:[#allocation4 + $0x168] sm:$0xff]
    %v100 = vld [vmem:[#allocation4 + $0x170] sm:$0xff]
    %v101 = vld [vmem:[#allocation4 + $0x178] sm:$0xff]
    %v102 = vld [vmem:[%s2] sm:$0x7]
    %v104 = vperm.slane %v102, 0
    %v105 = vperm.slane %v102, 1
    %v106 = vperm.slane %v102, 2
    %110 = vmatpush.msra.mxu0 %v99
    %111 = vmatpush.msra.mxu0 %v96
    %112 = vmatpush.msra.mxu0 %v93
    %113 = vmatpush.msra.mxu0 %v90
    %114 = vmatpush.msra.mxu0 %v87
    %115 = vmatpush.msra.mxu0 %v84
    %116 = vmatpush.msra.mxu0 %v81
    %117 = vmatpush.msra.mxu0 %v78
    %118 = vmatpush.msra.mxu0 %v75
    %119 = vmatpush.msra.mxu0 %v72
    %120 = vmatpush.msra.mxu0 %v69
    %121 = vmatpush.msra.mxu0 %v66
    %122 = vmatpush.msra.mxu0 %v63
    %123 = vmatpush.msra.mxu0 %v60
    %124 = vmatpush.msra.mxu0 %v57
    %125 = vmatpush.msra.mxu0 %v54
    %126 = vmatmul.f32.gmra.mxu0 %v52
    %v127 = vpop.f32.mrf.mxu0
    %v128 = vadd.f32 %v104, %v127
    %129 = vmatmul.f32.gmra.mxu0 %v53
    %v130 = vpop.f32.mrf.mxu0
    %v131 = vadd.f32 %v104, %v130
    %132 = vdwg.mxu0
    %133 = vmatpush.msra.mxu0 %v100
    %134 = vmatpush.msra.mxu0 %v97
    %135 = vmatpush.msra.mxu0 %v94
    %136 = vmatpush.msra.mxu0 %v91
    %137 = vmatpush.msra.mxu0 %v88
    %138 = vmatpush.msra.mxu0 %v85
    %139 = vmatpush.msra.mxu0 %v82
    %140 = vmatpush.msra.mxu0 %v79
    %141 = vmatpush.msra.mxu0 %v76
    %142 = vmatpush.msra.mxu0 %v73
    %143 = vmatpush.msra.mxu0 %v70
    %144 = vmatpush.msra.mxu0 %v67
    %145 = vmatpush.msra.mxu0 %v64
    %146 = vmatpush.msra.mxu0 %v61
    %147 = vmatpush.msra.mxu0 %v58
    %148 = vmatpush.msra.mxu0 %v55
    %149 = vmatmul.f32.gmra.mxu0 %v52
    %v150 = vpop.f32.mrf.mxu0
    %v151 = vadd.f32 %v105, %v150
    %152 = vmatmul.f32.gmra.mxu0 %v53
    %v153 = vpop.f32.mrf.mxu0
    %v154 = vadd.f32 %v105, %v153
    %155 = vdwg.mxu0
    %156 = vmatpush.msra.mxu0 %v101
    %157 = vmatpush.msra.mxu0 %v98
    %158 = vmatpush.msra.mxu0 %v95
    %159 = vmatpush.msra.mxu0 %v92
    %160 = vmatpush.msra.mxu0 %v89
    %161 = vmatpush.msra.mxu0 %v86
    %162 = vmatpush.msra.mxu0 %v83
    %163 = vmatpush.msra.mxu0 %v80
    %164 = vmatpush.msra.mxu0 %v77
    %165 = vmatpush.msra.mxu0 %v74
    %166 = vmatpush.msra.mxu0 %v71
    %167 = vmatpush.msra.mxu0 %v68
    %168 = vmatpush.msra.mxu0 %v65
    %169 = vmatpush.msra.mxu0 %v62
    %170 = vmatpush.msra.mxu0 %v59
    %171 = vmatpush.msra.mxu0 %v56
    %172 = vmatmul.f32.gmra.mxu0 %v52
    %v173 = vpop.f32.mrf.mxu0
    %v174 = vadd.f32 %v106, %v173
    %175 = vmatmul.f32.gmra.mxu0 %v53
    %v176 = vpop.f32.mrf.mxu0
    %v177 = vadd.f32 %v106, %v176
    %178 = vdwg.mxu0
    %v179 = vadd.f32 %v128, %v151
    %v180 = vadd.f32 %v179, %v174
    %181 = vadd.xlane.f32.xlu0 %v180
    %v182 = vpop.xlane.xlu0 %181
    %v183 = vadd.f32 %v131, %v154
    %v184 = vadd.f32 %v183, %v177
    %185 = vadd.xlane.f32.xlu0 %v184
    %v186 = vpop.xlane.xlu0 %185
    %v187 = vrcp.pop 384.0
    %v188 = vmul.f32 384.0, %v187
    %v189 = vsub.f32 1.0, %v188
    %v190 = vmul.f32 %v187, %v189
    %v191 = vadd.f32 %v187, %v190
    %vm192 = vweird.f32 %v187
    %v193 = vsel %vm192, %v187, %v191
    %v194 = vmul.f32 %v182, %v193
    %v195 = vmul.f32 %v186, %v193
    %v196 = vsub.f32 %v128, %v194
    %v197 = vsub.f32 %v151, %v194
    %v198 = vsub.f32 %v174, %v194
    %v199 = vsub.f32 %v131, %v195
    %v200 = vsub.f32 %v154, %v195
    %v201 = vsub.f32 %v177, %v195
    %v202 = vmul.f32 %v196, %v196
    %v203 = vmul.f32 %v197, %v197
    %v204 = vmul.f32 %v198, %v198
    %v205 = vmul.f32 %v199, %v199
    %v206 = vmul.f32 %v200, %v200
    %v207 = vmul.f32 %v201, %v201
    %v208 = vadd.f32 %v202, %v203
    %v209 = vadd.f32 %v208, %v204
    %210 = vadd.xlane.f32.xlu0 %v209
    %v211 = vpop.xlane.xlu0 %210
    %v212 = vadd.f32 %v205, %v206
    %v213 = vadd.f32 %v212, %v207
    %214 = vadd.xlane.f32.xlu0 %v213
    %v215 = vpop.xlane.xlu0 %214
    %v216 = vmul.f32 %v211, %v193
    %v217 = vmul.f32 %v215, %v193
    %v218 = vadd.f32 %v216, 1e-05
    %v219 = vadd.f32 %v217, 1e-05
    %v220 = vrsqrt.pop %v218
    %v221 = vmul.f32 %v220, %v218
    %v222 = vmul.f32 %v221, %v220
    %v223 = vmul.f32 0.5, %v222
    %v224 = vsub.f32 1.5, %v223
    %v225 = vmul.f32 %v220, %v224
    %vm226 = vweird.f32 %v218
    %vm227 = vweird.f32 %v220
    %vm228 = vmor %vm226, %vm227
    %v229 = vsel %vm228, %v220, %v225
    %v230 = vrsqrt.pop %v219
    %v231 = vmul.f32 %v230, %v219
    %v232 = vmul.f32 %v231, %v230
    %v233 = vmul.f32 0.5, %v232
    %v234 = vsub.f32 1.5, %v233
    %v235 = vmul.f32 %v230, %v234
    %vm236 = vweird.f32 %v219
    %vm237 = vweird.f32 %v230
    %vm238 = vmor %vm236, %vm237
    %v239 = vsel %vm238, %v230, %v235
    %v240 = vmul.f32 %v196, %v229
    %v241 = vmul.f32 %v197, %v229
    %v242 = vmul.f32 %v198, %v229
    %v243 = vmul.f32 %v199, %v239
    %v244 = vmul.f32 %v200, %v239
    %v245 = vmul.f32 %v201, %v239
    %v246 = vld [vmem:[%s3] sm:$0x7]
    %v248 = vperm.slane %v246, 0
    %v249 = vperm.slane %v246, 1
    %v250 = vperm.slane %v246, 2
    %v254 = vmul.f32 %v240, %v248
    %v255 = vmul.f32 %v241, %v249
    %v256 = vmul.f32 %v242, %v250
    %v257 = vmul.f32 %v243, %v248
    %v258 = vmul.f32 %v244, %v249
    %v259 = vmul.f32 %v245, %v250
    %v260 = vld [vmem:[%s4] sm:$0x7]
    %v262 = vperm.slane %v260, 0
    %v263 = vperm.slane %v260, 1
    %v264 = vperm.slane %v260, 2
    %v268 = vadd.f32 %v254, %v262
    %v269 = vadd.f32 %v255, %v263
    %v270 = vadd.f32 %v256, %v264
    %v271 = vadd.f32 %v257, %v262
    %v272 = vadd.f32 %v258, %v263
    %v273 = vadd.f32 %v259, %v264
    %274 = vst [vmem:[%s5] sm:$0xff] %v268
    %275 = vst [vmem:[%s5 + $0x8] sm:$0xff] %v269
    %276 = vst [vmem:[%s5 + $0x10] sm:$0xff] %v270
    %277 = vst [vmem:[%s5 + $0x18] sm:$0xff] %v271
    %278 = vst [vmem:[%s5 + $0x20] sm:$0xff] %v272
    %279 = vst [vmem:[%s5 + $0x28] sm:$0xff] %v273
    // Predicated region
    $region30: #{_lambda_.26} parent=1 // pred_check
      _
    $region31: #{_lambda_.26} parent=1 // pred_check_branch
      %281 = sbr.rel (0) target = $region33
    $region32: #{_lambda_.26} parent=1 // pred_region
      _
    $region33: #{_lambda_.26} parent=1 // pred_fallthru
      _
    // Predicated region
    $region34: #{_lambda_.26} parent=1 // pred_check
      _
    $region35: #{_lambda_.26} parent=1 // pred_check_branch
      %283 = sbr.rel (0) target = $region37
    $region36: #{_lambda_.26} parent=1 // pred_region
      _
    $region37: #{_lambda_.26} parent=1 // pred_fallthru
      _
    %284 = vsyncpa [#allocation3], 1
    %285 = vsyncpa [#allocation5], 1

// kernel: _lambda_.30
$region0: #{_lambda_.30}
  #allocation0 [shape = 'u32[]', space=smem, size = 0x4, offset = 0x4, fixed_abs, tag = 'smem constant byte address 0x4 - core index']
  #allocation1 [shape = 'u32[72,128]{1,0:T(1,128)}', space=vmem, size = 0x9000, scoped, tag = 'internal scratch']
  %s0 = inlined_call_operand.vmem [shape: f32[16,384], index: 0, kind: input, shape index: {}]
  %s1 = inlined_call_operand.vmem [shape: f32[384,192], index: 1, kind: input, shape index: {}]
  %s2 = inlined_call_operand.hbm [shape: f32[1,192], index: 2, kind: input, shape index: {}]
  %s3 = inlined_call_operand.vmem [shape: f32[192,6], index: 3, kind: input, shape index: {}]
  %s4 = inlined_call_operand.hbm [shape: f32[1,6], index: 4, kind: input, shape index: {}]
  %s5 = inlined_call_operand.vmem [shape: f32[16,6], index: 5, kind: output, shape index: {}]
  %s6 = sld [smem:[#allocation0]]
  $region38: #{_lambda_.30} parent=0
    _
  %s8 = ssub.s32 1, %s6
  %s9 = scalar_select 0, %s8, %s6
  $region1: #{_lambda_.30} parent=0
    #allocation2 [shape = 'u8[1024]{0}', space=vmem, size = 0x400, scoped, tag = 'input window, operand 2, single buffered']
    #allocation3 [shape = 's32[1]{0}', space=sflag, size = 0x4, scoped, tag = 'scoped memory for _lambda_.30']
    #allocation4 [shape = 'u8[512]{0}', space=vmem, size = 0x400, scoped, tag = 'input window, operand 4, single buffered']
    #allocation5 [shape = 's32[1]{0}', space=sflag, size = 0x4, scoped, tag = 'scoped memory for _lambda_.30']
    %10 = vsyncpa [#allocation3], 0
    %11 = vsyncpa [#allocation5], 0
    // Predicated region
    $region2: #{_lambda_.30} parent=1 // pred_check
      _
    $region3: #{_lambda_.30} parent=1 // pred_check_branch
      %13 = sbr.rel (0) target = $region5
    $region4: #{_lambda_.30} parent=1 // pred_region
      _
    $region5: #{_lambda_.30} parent=1 // pred_fallthru
      _
    // Predicated region
    $region6: #{_lambda_.30} parent=1 // pred_check
      _
    $region7: #{_lambda_.30} parent=1 // pred_check_branch
      %15 = sbr.rel (0) target = $region9
    $region8: #{_lambda_.30} parent=1 // pred_region
      _
    $region9: #{_lambda_.30} parent=1 // pred_fallthru
      _
    // Predicated region
    $region10: #{_lambda_.30} parent=1 // pred_check
      _
    $region11: #{_lambda_.30} parent=1 // pred_check_branch
      %17 = sbr.rel (0) target = $region13
    $region12: #{_lambda_.30} parent=1 // pred_region
      %19 = vsyncadd [#allocation3], 0
      %s21 = sshll.u32 %s2, 4
      %s22 = int_to_ptr.hbm [resolvable:$true] %s21
      %s23 = sshll.u32 [#allocation2], 4
      %s24 = int_to_ptr.vmem [resolvable:$true] %s23
      %26 = dma.hbm_to_vmem [thread:$0]  %s22, 32, %s24, [#allocation3]
    $region13: #{_lambda_.30} parent=1 // pred_fallthru
      _
    // Predicated region
    $region14: #{_lambda_.30} parent=1 // pred_check
      _
    $region15: #{_lambda_.30} parent=1 // pred_check_branch
      %28 = sbr.rel (0) target = $region17
    $region16: #{_lambda_.30} parent=1 // pred_region
      _
    $region17: #{_lambda_.30} parent=1 // pred_fallthru
      _
    // Predicated region
    $region18: #{_lambda_.30} parent=1 // pred_check
      _
    $region19: #{_lambda_.30} parent=1 // pred_check_branch
      %30 = sbr.rel (0) target = $region21
    $region20: #{_lambda_.30} parent=1 // pred_region
      %32 = vsyncadd [#allocation5], 0
      %s34 = sshll.u32 %s4, 4
      %s35 = int_to_ptr.hbm [resolvable:$true] %s34
      %s36 = sshll.u32 [#allocation4], 4
      %s37 = int_to_ptr.vmem [resolvable:$true] %s36
      %39 = dma.hbm_to_vmem [thread:$0]  %s35, 16, %s37, [#allocation5]
    $region21: #{_lambda_.30} parent=1 // pred_fallthru
      _
    // Predicated region
    $region22: #{_lambda_.30} parent=1 // pred_check
      _
    $region23: #{_lambda_.30} parent=1 // pred_check_branch
      %41 = sbr.rel (0) target = $region25
    $region24: #{_lambda_.30} parent=1 // pred_region
      %43 = dma.done [#allocation3], 32
    $region25: #{_lambda_.30} parent=1 // pred_fallthru
      _
    // Predicated region
    $region26: #{_lambda_.30} parent=1 // pred_check
      _
    $region27: #{_lambda_.30} parent=1 // pred_check_branch
      %45 = sbr.rel (0) target = $region29
    $region28: #{_lambda_.30} parent=1 // pred_region
      %47 = dma.done [#allocation5], 16
    $region29: #{_lambda_.30} parent=1 // pred_fallthru
      _
    %v48 = vld [vmem:[%s0] sm:$0xff]
    %v49 = vld [vmem:[%s0 + $0x8] sm:$0xff]
    %v50 = vld [vmem:[%s0 + $0x10] sm:$0xff]
    %v51 = vld [vmem:[%s0 + $0x18] sm:$0xff]
    %v52 = vld [vmem:[%s0 + $0x20] sm:$0xff]
    %v53 = vld [vmem:[%s0 + $0x28] sm:$0xff]
    %v54 = vld [vmem:[%s1] sm:$0xff]
    %v55 = vld [vmem:[%s1 + $0x8] sm:$0xff]
    %v56 = vld [vmem:[%s1 + $0x10] sm:$0xff]
    %v57 = vld [vmem:[%s1 + $0x18] sm:$0xff]
    %v58 = vld [vmem:[%s1 + $0x20] sm:$0xff]
    %v59 = vld [vmem:[%s1 + $0x28] sm:$0xff]
    %v60 = vld [vmem:[%s1 + $0x30] sm:$0xff]
    %v61 = vld [vmem:[%s1 + $0x38] sm:$0xff]
    %v62 = vld [vmem:[%s1 + $0x40] sm:$0xff]
    %v63 = vld [vmem:[%s1 + $0x48] sm:$0xff]
    %v64 = vld [vmem:[%s1 + $0x50] sm:$0xff]
    %v65 = vld [vmem:[%s1 + $0x58] sm:$0xff]
    %v66 = vld [vmem:[%s1 + $0x60] sm:$0xff]
    %v67 = vld [vmem:[%s1 + $0x68] sm:$0xff]
    %v68 = vld [vmem:[%s1 + $0x70] sm:$0xff]
    %v69 = vld [vmem:[%s1 + $0x78] sm:$0xff]
    %v70 = vld [vmem:[%s1 + $0x80] sm:$0xff]
    %v71 = vld [vmem:[%s1 + $0x88] sm:$0xff]
    %v72 = vld [vmem:[%s1 + $0x90] sm:$0xff]
    %v73 = vld [vmem:[%s1 + $0x98] sm:$0xff]
    %v74 = vld [vmem:[%s1 + $0xa0] sm:$0xff]
    %v75 = vld [vmem:[%s1 + $0xa8] sm:$0xff]
    %v76 = vld [vmem:[%s1 + $0xb0] sm:$0xff]
    %v77 = vld [vmem:[%s1 + $0xb8] sm:$0xff]
    %v78 = vld [vmem:[%s1 + $0xc0] sm:$0xff]
    %v79 = vld [vmem:[%s1 + $0xc8] sm:$0xff]
    %v80 = vld [vmem:[%s1 + $0xd0] sm:$0xff]
    %v81 = vld [vmem:[%s1 + $0xd8] sm:$0xff]
    %v82 = vld [vmem:[%s1 + $0xe0] sm:$0xff]
    %v83 = vld [vmem:[%s1 + $0xe8] sm:$0xff]
    %v84 = vld [vmem:[%s1 + $0xf0] sm:$0xff]
    %v85 = vld [vmem:[%s1 + $0xf8] sm:$0xff]
    %v86 = vld [vmem:[%s1 + $0x100] sm:$0xff]
    %v87 = vld [vmem:[%s1 + $0x108] sm:$0xff]
    %v88 = vld [vmem:[%s1 + $0x110] sm:$0xff]
    %v89 = vld [vmem:[%s1 + $0x118] sm:$0xff]
    %v90 = vld [vmem:[%s1 + $0x120] sm:$0xff]
    %v91 = vld [vmem:[%s1 + $0x128] sm:$0xff]
    %v92 = vld [vmem:[%s1 + $0x130] sm:$0xff]
    %v93 = vld [vmem:[%s1 + $0x138] sm:$0xff]
    %v94 = vld [vmem:[%s1 + $0x140] sm:$0xff]
    %v95 = vld [vmem:[%s1 + $0x148] sm:$0xff]
    %v96 = vld [vmem:[%s1 + $0x150] sm:$0xff]
    %v97 = vld [vmem:[%s1 + $0x158] sm:$0xff]
    %v98 = vld [vmem:[%s1 + $0x160] sm:$0xff]
    %v99 = vld [vmem:[%s1 + $0x168] sm:$0xff]
    %v100 = vld [vmem:[%s1 + $0x170] sm:$0xff]
    %v101 = vld [vmem:[%s1 + $0x178] sm:$0xff]
    %v102 = vld [vmem:[%s1 + $0x180] sm:$0xff]
    %v103 = vld [vmem:[%s1 + $0x188] sm:$0xff]
    %v104 = vld [vmem:[%s1 + $0x190] sm:$0xff]
    %v105 = vld [vmem:[%s1 + $0x198] sm:$0xff]
    %v106 = vld [vmem:[%s1 + $0x1a0] sm:$0xff]
    %v107 = vld [vmem:[%s1 + $0x1a8] sm:$0xff]
    %v108 = vld [vmem:[%s1 + $0x1b0] sm:$0xff]
    %v109 = vld [vmem:[%s1 + $0x1b8] sm:$0xff]
    %v110 = vld [vmem:[%s1 + $0x1c0] sm:$0xff]
    %v111 = vld [vmem:[%s1 + $0x1c8] sm:$0xff]
    %v112 = vld [vmem:[%s1 + $0x1d0] sm:$0xff]
    %v113 = vld [vmem:[%s1 + $0x1d8] sm:$0xff]
    %v114 = vld [vmem:[%s1 + $0x1e0] sm:$0xff]
    %v115 = vld [vmem:[%s1 + $0x1e8] sm:$0xff]
    %v116 = vld [vmem:[%s1 + $0x1f0] sm:$0xff]
    %v117 = vld [vmem:[%s1 + $0x1f8] sm:$0xff]
    %v118 = vld [vmem:[%s1 + $0x200] sm:$0xff]
    %v119 = vld [vmem:[%s1 + $0x208] sm:$0xff]
    %v120 = vld [vmem:[%s1 + $0x210] sm:$0xff]
    %v121 = vld [vmem:[%s1 + $0x218] sm:$0xff]
    %v122 = vld [vmem:[%s1 + $0x220] sm:$0xff]
    %v123 = vld [vmem:[%s1 + $0x228] sm:$0xff]
    %v124 = vld [vmem:[%s1 + $0x230] sm:$0xff]
    %v125 = vld [vmem:[%s1 + $0x238] sm:$0xff]
    %v126 = vld [vmem:[%s1 + $0x240] sm:$0xff]
    %v127 = vld [vmem:[%s1 + $0x248] sm:$0xff]
    %v128 = vld [vmem:[%s1 + $0x250] sm:$0xff]
    %v129 = vld [vmem:[%s1 + $0x258] sm:$0xff]
    %v130 = vld [vmem:[%s1 + $0x260] sm:$0xff]
    %v131 = vld [vmem:[%s1 + $0x268] sm:$0xff]
    %v132 = vld [vmem:[%s1 + $0x270] sm:$0xff]
    %v133 = vld [vmem:[%s1 + $0x278] sm:$0xff]
    %v134 = vld [vmem:[%s1 + $0x280] sm:$0xff]
    %v135 = vld [vmem:[%s1 + $0x288] sm:$0xff]
    %v136 = vld [vmem:[%s1 + $0x290] sm:$0xff]
    %v137 = vld [vmem:[%s1 + $0x298] sm:$0xff]
    %v138 = vld [vmem:[%s1 + $0x2a0] sm:$0xff]
    %v139 = vld [vmem:[%s1 + $0x2a8] sm:$0xff]
    %v140 = vld [vmem:[%s1 + $0x2b0] sm:$0xff]
    %v141 = vld [vmem:[%s1 + $0x2b8] sm:$0xff]
    %v142 = vld [vmem:[%s1 + $0x2c0] sm:$0xff]
    %v143 = vld [vmem:[%s1 + $0x2c8] sm:$0xff]
    %v144 = vld [vmem:[%s1 + $0x2d0] sm:$0xff]
    %v145 = vld [vmem:[%s1 + $0x2d8] sm:$0xff]
    %v146 = vld [vmem:[%s1 + $0x2e0] sm:$0xff]
    %v147 = vld [vmem:[%s1 + $0x2e8] sm:$0xff]
    %v148 = vld [vmem:[%s1 + $0x2f0] sm:$0xff]
    %v149 = vld [vmem:[%s1 + $0x2f8] sm:$0xff]
    %v150 = vld [vmem:[#allocation2] sm:$0x3]
    %v152 = vperm.slane %v150, 0
    %v153 = vperm.slane %v150, 1
    %156 = vmatpush.msra.mxu0 %v84
    %157 = vmatpush.msra.mxu0 %v82
    %158 = vmatpush.msra.mxu0 %v80
    %159 = vmatpush.msra.mxu0 %v78
    %160 = vmatpush.msra.mxu0 %v76
    %161 = vmatpush.msra.mxu0 %v74
    %162 = vmatpush.msra.mxu0 %v72
    %163 = vmatpush.msra.mxu0 %v70
    %164 = vmatpush.msra.mxu0 %v68
    %165 = vmatpush.msra.mxu0 %v66
    %166 = vmatpush.msra.mxu0 %v64
    %167 = vmatpush.msra.mxu0 %v62
    %168 = vmatpush.msra.mxu0 %v60
    %169 = vmatpush.msra.mxu0 %v58
    %170 = vmatpush.msra.mxu0 %v56
    %171 = vmatpush.msra.mxu0 %v54
    %172 = vmatmul.f32.gmra.mxu0 %v48
    %v173 = vpop.f32.mrf.mxu0
    %v174 = vadd.f32 %v152, %v173
    %175 = vmatmul.f32.gmra.mxu0 %v51
    %v176 = vpop.f32.mrf.mxu0
    %v177 = vadd.f32 %v152, %v176
    %178 = vdwg.mxu0
    %179 = vmatpush.msra.mxu0 %v116
    %180 = vmatpush.msra.mxu0 %v114
    %181 = vmatpush.msra.mxu0 %v112
    %182 = vmatpush.msra.mxu0 %v110
    %183 = vmatpush.msra.mxu0 %v108
    %184 = vmatpush.msra.mxu0 %v106
    %185 = vmatpush.msra.mxu0 %v104
    %186 = vmatpush.msra.mxu0 %v102
    %187 = vmatpush.msra.mxu0 %v100
    %188 = vmatpush.msra.mxu0 %v98
    %189 = vmatpush.msra.mxu0 %v96
    %190 = vmatpush.msra.mxu0 %v94
    %191 = vmatpush.msra.mxu0 %v92
    %192 = vmatpush.msra.mxu0 %v90
    %193 = vmatpush.msra.mxu0 %v88
    %194 = vmatpush.msra.mxu0 %v86
    %195 = vmatmul.f32.gmra.mxu0 %v49
    %v196 = vpop.f32.mrf.mxu0
    %v197 = vadd.f32 %v174, %v196
    %198 = vmatmul.f32.gmra.mxu0 %v52
    %v199 = vpop.f32.mrf.mxu0
    %v200 = vadd.f32 %v177, %v199
    %201 = vdwg.mxu0
    %202 = vmatpush.msra.mxu0 %v148
    %203 = vmatpush.msra.mxu0 %v146
    %204 = vmatpush.msra.mxu0 %v144
    %205 = vmatpush.msra.mxu0 %v142
    %206 = vmatpush.msra.mxu0 %v140
    %207 = vmatpush.msra.mxu0 %v138
    %208 = vmatpush.msra.mxu0 %v136
    %209 = vmatpush.msra.mxu0 %v134
    %210 = vmatpush.msra.mxu0 %v132
    %211 = vmatpush.msra.mxu0 %v130
    %212 = vmatpush.msra.mxu0 %v128
    %213 = vmatpush.msra.mxu0 %v126
    %214 = vmatpush.msra.mxu0 %v124
    %215 = vmatpush.msra.mxu0 %v122
    %216 = vmatpush.msra.mxu0 %v120
    %217 = vmatpush.msra.mxu0 %v118
    %218 = vmatmul.f32.gmra.mxu0 %v50
    %v219 = vpop.f32.mrf.mxu0
    %v220 = vadd.f32 %v197, %v219
    %221 = vmatmul.f32.gmra.mxu0 %v53
    %v222 = vpop.f32.mrf.mxu0
    %v223 = vadd.f32 %v200, %v222
    %224 = vdwg.mxu0
    %225 = vmatpush.msra.mxu0 %v85
    %226 = vmatpush.msra.mxu0 %v83
    %227 = vmatpush.msra.mxu0 %v81
    %228 = vmatpush.msra.mxu0 %v79
    %229 = vmatpush.msra.mxu0 %v77
    %230 = vmatpush.msra.mxu0 %v75
    %231 = vmatpush.msra.mxu0 %v73
    %232 = vmatpush.msra.mxu0 %v71
    %233 = vmatpush.msra.mxu0 %v69
    %234 = vmatpush.msra.mxu0 %v67
    %235 = vmatpush.msra.mxu0 %v65
    %236 = vmatpush.msra.mxu0 %v63
    %237 = vmatpush.msra.mxu0 %v61
    %238 = vmatpush.msra.mxu0 %v59
    %239 = vmatpush.msra.mxu0 %v57
    %240 = vmatpush.msra.mxu0 %v55
    %241 = vmatmul.f32.gmra.mxu0 %v48
    %v242 = vpop.f32.mrf.mxu0
    %v243 = vadd.f32 %v153, %v242
    %244 = vmatmul.f32.gmra.mxu0 %v51
    %v245 = vpop.f32.mrf.mxu0
    %v246 = vadd.f32 %v153, %v245
    %247 = vdwg.mxu0
    %248 = vmatpush.msra.mxu0 %v117
    %249 = vmatpush.msra.mxu0 %v115
    %250 = vmatpush.msra.mxu0 %v113
    %251 = vmatpush.msra.mxu0 %v111
    %252 = vmatpush.msra.mxu0 %v109
    %253 = vmatpush.msra.mxu0 %v107
    %254 = vmatpush.msra.mxu0 %v105
    %255 = vmatpush.msra.mxu0 %v103
    %256 = vmatpush.msra.mxu0 %v101
    %257 = vmatpush.msra.mxu0 %v99
    %258 = vmatpush.msra.mxu0 %v97
    %259 = vmatpush.msra.mxu0 %v95
    %260 = vmatpush.msra.mxu0 %v93
    %261 = vmatpush.msra.mxu0 %v91
    %262 = vmatpush.msra.mxu0 %v89
    %263 = vmatpush.msra.mxu0 %v87
    %264 = vmatmul.f32.gmra.mxu0 %v49
    %v265 = vpop.f32.mrf.mxu0
    %v266 = vadd.f32 %v243, %v265
    %267 = vmatmul.f32.gmra.mxu0 %v52
    %v268 = vpop.f32.mrf.mxu0
    %v269 = vadd.f32 %v246, %v268
    %270 = vdwg.mxu0
    %271 = vmatpush.msra.mxu0 %v149
    %272 = vmatpush.msra.mxu0 %v147
    %273 = vmatpush.msra.mxu0 %v145
    %274 = vmatpush.msra.mxu0 %v143
    %275 = vmatpush.msra.mxu0 %v141
    %276 = vmatpush.msra.mxu0 %v139
    %277 = vmatpush.msra.mxu0 %v137
    %278 = vmatpush.msra.mxu0 %v135
    %279 = vmatpush.msra.mxu0 %v133
    %280 = vmatpush.msra.mxu0 %v131
    %281 = vmatpush.msra.mxu0 %v129
    %282 = vmatpush.msra.mxu0 %v127
    %283 = vmatpush.msra.mxu0 %v125
    %284 = vmatpush.msra.mxu0 %v123
    %285 = vmatpush.msra.mxu0 %v121
    %286 = vmatpush.msra.mxu0 %v119
    %287 = vmatmul.f32.gmra.mxu0 %v50
    %v288 = vpop.f32.mrf.mxu0
    %v289 = vadd.f32 %v266, %v288
    %290 = vmatmul.f32.gmra.mxu0 %v53
    %v291 = vpop.f32.mrf.mxu0
    %v292 = vadd.f32 %v269, %v291
    %293 = vdwg.mxu0
    %v294 = vmax.f32 %v220, 0.0
    %v295 = vmax.f32 %v289, 0.0
    %v296 = vmax.f32 %v223, 0.0
    %v297 = vmax.f32 %v292, 0.0
    %v298 = vld [vmem:[%s3] sm:$0xff]
    %v299 = vld [vmem:[%s3 + $0x8] sm:$0xff]
    %v300 = vld [vmem:[%s3 + $0x10] sm:$0xff]
    %v301 = vld [vmem:[%s3 + $0x18] sm:$0xff]
    %v302 = vld [vmem:[%s3 + $0x20] sm:$0xff]
    %v303 = vld [vmem:[%s3 + $0x28] sm:$0xff]
    %v304 = vld [vmem:[%s3 + $0x30] sm:$0xff]
    %v305 = vld [vmem:[%s3 + $0x38] sm:$0xff]
    %v306 = vld [vmem:[%s3 + $0x40] sm:$0xff]
    %v307 = vld [vmem:[%s3 + $0x48] sm:$0xff]
    %v308 = vld [vmem:[%s3 + $0x50] sm:$0xff]
    %v309 = vld [vmem:[%s3 + $0x58] sm:$0xff]
    %v310 = vld [vmem:[%s3 + $0x60] sm:$0xff]
    %v311 = vld [vmem:[%s3 + $0x68] sm:$0xff]
    %v312 = vld [vmem:[%s3 + $0x70] sm:$0xff]
    %v313 = vld [vmem:[%s3 + $0x78] sm:$0xff]
    %v314 = vld [vmem:[%s3 + $0x80] sm:$0xff]
    %v315 = vld [vmem:[%s3 + $0x88] sm:$0xff]
    %v316 = vld [vmem:[%s3 + $0x90] sm:$0xff]
    %v317 = vld [vmem:[%s3 + $0x98] sm:$0xff]
    %v318 = vld [vmem:[%s3 + $0xa0] sm:$0xff]
    %v319 = vld [vmem:[%s3 + $0xa8] sm:$0xff]
    %v320 = vld [vmem:[%s3 + $0xb0] sm:$0xff]
    %v321 = vld [vmem:[%s3 + $0xb8] sm:$0xff]
    %v322 = vld [vmem:[#allocation4] sm:$0x1]
    %v324 = vperm.slane %v322, 0
    %vm326 = vcmask 523264
    %v328 = vsel %vm326, %v295, 0
    %v331 = vsel %vm326, %v297, 0
    %333 = vmatpush.msra.mxu0 %v313
    %334 = vmatpush.msra.mxu0 %v312
    %335 = vmatpush.msra.mxu0 %v311
    %336 = vmatpush.msra.mxu0 %v310
    %337 = vmatpush.msra.mxu0 %v309
    %338 = vmatpush.msra.mxu0 %v308
    %339 = vmatpush.msra.mxu0 %v307
    %340 = vmatpush.msra.mxu0 %v306
    %341 = vmatpush.msra.mxu0 %v305
    %342 = vmatpush.msra.mxu0 %v304
    %343 = vmatpush.msra.mxu0 %v303
    %344 = vmatpush.msra.mxu0 %v302
    %345 = vmatpush.msra.mxu0 %v301
    %346 = vmatpush.msra.mxu0 %v300
    %347 = vmatpush.msra.mxu0 %v299
    %348 = vmatpush.msra.mxu0 %v298
    %349 = vmatmul.f32.gmra.mxu0 %v294
    %v350 = vpop.f32.mrf.mxu0
    %v351 = vadd.f32 %v324, %v350
    %352 = vmatmul.f32.gmra.mxu0 %v296
    %v353 = vpop.f32.mrf.mxu0
    %v354 = vadd.f32 %v324, %v353
    %355 = vdwg.mxu0
    %356 = vmatpush.msra.mxu0 0.0
    %357 = vmatpush.msra.mxu0 0.0
    %358 = vmatpush.msra.mxu0 0.0
    %359 = vmatpush.msra.mxu0 0.0
    %360 = vmatpush.msra.mxu0 0.0
    %361 = vmatpush.msra.mxu0 0.0
    %362 = vmatpush.msra.mxu0 0.0
    %363 = vmatpush.msra.mxu0 0.0
    %364 = vmatpush.msra.mxu0 %v321
    %365 = vmatpush.msra.mxu0 %v320
    %366 = vmatpush.msra.mxu0 %v319
    %367 = vmatpush.msra.mxu0 %v318
    %368 = vmatpush.msra.mxu0 %v317
    %369 = vmatpush.msra.mxu0 %v316
    %370 = vmatpush.msra.mxu0 %v315
    %371 = vmatpush.msra.mxu0 %v314
    %372 = vmatmul.f32.gmra.mxu0 %v328
    %v373 = vpop.f32.mrf.mxu0
    %v374 = vadd.f32 %v351, %v373
    %375 = vmatmul.f32.gmra.mxu0 %v331
    %v376 = vpop.f32.mrf.mxu0
    %v377 = vadd.f32 %v354, %v376
    %378 = vdwg.mxu0
    %vm379 = vcmask 48128
    %380 = vst.msk [vmem:[%s5] sm:$0xff] %vm379, %v374
    %381 = vst.msk [vmem:[%s5 + $0x8] sm:$0xff] %vm379, %v377
    // Predicated region
    $region30: #{_lambda_.30} parent=1 // pred_check
      _
    $region31: #{_lambda_.30} parent=1 // pred_check_branch
      %383 = sbr.rel (0) target = $region33
    $region32: #{_lambda_.30} parent=1 // pred_region
      _
    $region33: #{_lambda_.30} parent=1 // pred_fallthru
      _
    // Predicated region
    $region34: #{_lambda_.30} parent=1 // pred_check
      _
    $region35: #{_lambda_.30} parent=1 // pred_check_branch
      %385 = sbr.rel (0) target = $region37
    $region36: #{_lambda_.30} parent=1 // pred_region
      _
    $region37: #{_lambda_.30} parent=1 // pred_fallthru
      _
    %386 = vsyncpa [#allocation3], 1
    %387 = vsyncpa [#allocation5], 1

// kernel: _lambda_.31
$region0: #{_lambda_.31}
  #allocation0 [shape = 'u32[]', space=smem, size = 0x4, offset = 0x4, fixed_abs, tag = 'smem constant byte address 0x4 - core index']
  #allocation1 [shape = 'u32[72,128]{1,0:T(1,128)}', space=vmem, size = 0x9000, scoped, tag = 'internal scratch']
  %s0 = inlined_call_operand.vmem [shape: f32[16,384], index: 0, kind: input, shape index: {}]
  %s1 = inlined_call_operand.vmem [shape: f32[384,384], index: 1, kind: input, shape index: {}]
  %s2 = inlined_call_operand.vmem [shape: f32[1,384], index: 2, kind: input, shape index: {}]
  %s3 = inlined_call_operand.vmem [shape: f32[16,384], index: 3, kind: output, shape index: {}]
  %s4 = sld [smem:[#allocation0]]
  $region22: #{_lambda_.31} parent=0
    _
  %s6 = ssub.s32 1, %s4
  %s7 = scalar_select 0, %s6, %s4
  // Predicated region
  $region2: #{_lambda_.31} parent=0 // pred_check
    _
  $region3: #{_lambda_.31} parent=0 // pred_check_branch
    %9 = sbr.rel (0) target = $region5
  $region4: #{_lambda_.31} parent=0 // pred_region
    _
  $region5: #{_lambda_.31} parent=0 // pred_fallthru
    _
  // Predicated region
  $region6: #{_lambda_.31} parent=0 // pred_check
    _
  $region7: #{_lambda_.31} parent=0 // pred_check_branch
    %11 = sbr.rel (0) target = $region9
  $region8: #{_lambda_.31} parent=0 // pred_region
    _
  $region9: #{_lambda_.31} parent=0 // pred_fallthru
    _
  // Predicated region
  $region10: #{_lambda_.31} parent=0 // pred_check
    _
  $region11: #{_lambda_.31} parent=0 // pred_check_branch
    %13 = sbr.rel (0) target = $region13
  $region12: #{_lambda_.31} parent=0 // pred_region
    _
  $region13: #{_lambda_.31} parent=0 // pred_fallthru
    _
  %v14 = vld [vmem:[%s0] sm:$0xff]
  %v15 = vld [vmem:[%s0 + $0x8] sm:$0xff]
  %v16 = vld [vmem:[%s0 + $0x10] sm:$0xff]
  %v17 = vld [vmem:[%s0 + $0x18] sm:$0xff]
  %v18 = vld [vmem:[%s0 + $0x20] sm:$0xff]
  %v19 = vld [vmem:[%s0 + $0x28] sm:$0xff]
  %v20 = vld [vmem:[%s1] sm:$0xff]
  %v21 = vld [vmem:[%s1 + $0x8] sm:$0xff]
  %v22 = vld [vmem:[%s1 + $0x10] sm:$0xff]
  %v23 = vld [vmem:[%s1 + $0x18] sm:$0xff]
  %v24 = vld [vmem:[%s1 + $0x20] sm:$0xff]
  %v25 = vld [vmem:[%s1 + $0x28] sm:$0xff]
  %v26 = vld [vmem:[%s1 + $0x30] sm:$0xff]
  %v27 = vld [vmem:[%s1 + $0x38] sm:$0xff]
  %v28 = vld [vmem:[%s1 + $0x40] sm:$0xff]
  %v29 = vld [vmem:[%s1 + $0x48] sm:$0xff]
  %v30 = vld [vmem:[%s1 + $0x50] sm:$0xff]
  %v31 = vld [vmem:[%s1 + $0x58] sm:$0xff]
  %v32 = vld [vmem:[%s1 + $0x60] sm:$0xff]
  %v33 = vld [vmem:[%s1 + $0x68] sm:$0xff]
  %v34 = vld [vmem:[%s1 + $0x70] sm:$0xff]
  %v35 = vld [vmem:[%s1 + $0x78] sm:$0xff]
  %v36 = vld [vmem:[%s1 + $0x80] sm:$0xff]
  %v37 = vld [vmem:[%s1 + $0x88] sm:$0xff]
  %v38 = vld [vmem:[%s1 + $0x90] sm:$0xff]
  %v39 = vld [vmem:[%s1 + $0x98] sm:$0xff]
  %v40 = vld [vmem:[%s1 + $0xa0] sm:$0xff]
  %v41 = vld [vmem:[%s1 + $0xa8] sm:$0xff]
  %v42 = vld [vmem:[%s1 + $0xb0] sm:$0xff]
  %v43 = vld [vmem:[%s1 + $0xb8] sm:$0xff]
  %v44 = vld [vmem:[%s1 + $0xc0] sm:$0xff]
  %v45 = vld [vmem:[%s1 + $0xc8] sm:$0xff]
  %v46 = vld [vmem:[%s1 + $0xd0] sm:$0xff]
  %v47 = vld [vmem:[%s1 + $0xd8] sm:$0xff]
  %v48 = vld [vmem:[%s1 + $0xe0] sm:$0xff]
  %v49 = vld [vmem:[%s1 + $0xe8] sm:$0xff]
  %v50 = vld [vmem:[%s1 + $0xf0] sm:$0xff]
  %v51 = vld [vmem:[%s1 + $0xf8] sm:$0xff]
  %v52 = vld [vmem:[%s1 + $0x100] sm:$0xff]
  %v53 = vld [vmem:[%s1 + $0x108] sm:$0xff]
  %v54 = vld [vmem:[%s1 + $0x110] sm:$0xff]
  %v55 = vld [vmem:[%s1 + $0x118] sm:$0xff]
  %v56 = vld [vmem:[%s1 + $0x120] sm:$0xff]
  %v57 = vld [vmem:[%s1 + $0x128] sm:$0xff]
  %v58 = vld [vmem:[%s1 + $0x130] sm:$0xff]
  %v59 = vld [vmem:[%s1 + $0x138] sm:$0xff]
  %v60 = vld [vmem:[%s1 + $0x140] sm:$0xff]
  %v61 = vld [vmem:[%s1 + $0x148] sm:$0xff]
  %v62 = vld [vmem:[%s1 + $0x150] sm:$0xff]
  %v63 = vld [vmem:[%s1 + $0x158] sm:$0xff]
  %v64 = vld [vmem:[%s1 + $0x160] sm:$0xff]
  %v65 = vld [vmem:[%s1 + $0x168] sm:$0xff]
  %v66 = vld [vmem:[%s1 + $0x170] sm:$0xff]
  %v67 = vld [vmem:[%s1 + $0x178] sm:$0xff]
  %v68 = vld [vmem:[%s1 + $0x180] sm:$0xff]
  %v69 = vld [vmem:[%s1 + $0x188] sm:$0xff]
  %v70 = vld [vmem:[%s1 + $0x190] sm:$0xff]
  %v71 = vld [vmem:[%s1 + $0x198] sm:$0xff]
  %v72 = vld [vmem:[%s1 + $0x1a0] sm:$0xff]
  %v73 = vld [vmem:[%s1 + $0x1a8] sm:$0xff]
  %v74 = vld [vmem:[%s1 + $0x1b0] sm:$0xff]
  %v75 = vld [vmem:[%s1 + $0x1b8] sm:$0xff]
  %v76 = vld [vmem:[%s1 + $0x1c0] sm:$0xff]
  %v77 = vld [vmem:[%s1 + $0x1c8] sm:$0xff]
  %v78 = vld [vmem:[%s1 + $0x1d0] sm:$0xff]
  %v79 = vld [vmem:[%s1 + $0x1d8] sm:$0xff]
  %v80 = vld [vmem:[%s1 + $0x1e0] sm:$0xff]
  %v81 = vld [vmem:[%s1 + $0x1e8] sm:$0xff]
  %v82 = vld [vmem:[%s1 + $0x1f0] sm:$0xff]
  %v83 = vld [vmem:[%s1 + $0x1f8] sm:$0xff]
  %v84 = vld [vmem:[%s1 + $0x200] sm:$0xff]
  %v85 = vld [vmem:[%s1 + $0x208] sm:$0xff]
  %v86 = vld [vmem:[%s1 + $0x210] sm:$0xff]
  %v87 = vld [vmem:[%s1 + $0x218] sm:$0xff]
  %v88 = vld [vmem:[%s1 + $0x220] sm:$0xff]
  %v89 = vld [vmem:[%s1 + $0x228] sm:$0xff]
  %v90 = vld [vmem:[%s1 + $0x230] sm:$0xff]
  %v91 = vld [vmem:[%s1 + $0x238] sm:$0xff]
  %v92 = vld [vmem:[%s1 + $0x240] sm:$0xff]
  %v93 = vld [vmem:[%s1 + $0x248] sm:$0xff]
  %v94 = vld [vmem:[%s1 + $0x250] sm:$0xff]
  %v95 = vld [vmem:[%s1 + $0x258] sm:$0xff]
  %v96 = vld [vmem:[%s1 + $0x260] sm:$0xff]
  %v97 = vld [vmem:[%s1 + $0x268] sm:$0xff]
  %v98 = vld [vmem:[%s1 + $0x270] sm:$0xff]
  %v99 = vld [vmem:[%s1 + $0x278] sm:$0xff]
  %v100 = vld [vmem:[%s1 + $0x280] sm:$0xff]
  %v101 = vld [vmem:[%s1 + $0x288] sm:$0xff]
  %v102 = vld [vmem:[%s1 + $0x290] sm:$0xff]
  %v103 = vld [vmem:[%s1 + $0x298] sm:$0xff]
  %v104 = vld [vmem:[%s1 + $0x2a0] sm:$0xff]
  %v105 = vld [vmem:[%s1 + $0x2a8] sm:$0xff]
  %v106 = vld [vmem:[%s1 + $0x2b0] sm:$0xff]
  %v107 = vld [vmem:[%s1 + $0x2b8] sm:$0xff]
  %v108 = vld [vmem:[%s1 + $0x2c0] sm:$0xff]
  %v109 = vld [vmem:[%s1 + $0x2c8] sm:$0xff]
  %v110 = vld [vmem:[%s1 + $0x2d0] sm:$0xff]
  %v111 = vld [vmem:[%s1 + $0x2d8] sm:$0xff]
  %v112 = vld [vmem:[%s1 + $0x2e0] sm:$0xff]
  %v113 = vld [vmem:[%s1 + $0x2e8] sm:$0xff]
  %v114 = vld [vmem:[%s1 + $0x2f0] sm:$0xff]
  %v115 = vld [vmem:[%s1 + $0x2f8] sm:$0xff]
  %v116 = vld [vmem:[%s1 + $0x300] sm:$0xff]
  %v117 = vld [vmem:[%s1 + $0x308] sm:$0xff]
  %v118 = vld [vmem:[%s1 + $0x310] sm:$0xff]
  %v119 = vld [vmem:[%s1 + $0x318] sm:$0xff]
  %v120 = vld [vmem:[%s1 + $0x320] sm:$0xff]
  %v121 = vld [vmem:[%s1 + $0x328] sm:$0xff]
  %v122 = vld [vmem:[%s1 + $0x330] sm:$0xff]
  %v123 = vld [vmem:[%s1 + $0x338] sm:$0xff]
  %v124 = vld [vmem:[%s1 + $0x340] sm:$0xff]
  %v125 = vld [vmem:[%s1 + $0x348] sm:$0xff]
  %v126 = vld [vmem:[%s1 + $0x350] sm:$0xff]
  %v127 = vld [vmem:[%s1 + $0x358] sm:$0xff]
  %v128 = vld [vmem:[%s1 + $0x360] sm:$0xff]
  %v129 = vld [vmem:[%s1 + $0x368] sm:$0xff]
  %v130 = vld [vmem:[%s1 + $0x370] sm:$0xff]
  %v131 = vld [vmem:[%s1 + $0x378] sm:$0xff]
  %v132 = vld [vmem:[%s1 + $0x380] sm:$0xff]
  %v133 = vld [vmem:[%s1 + $0x388] sm:$0xff]
  %v134 = vld [vmem:[%s1 + $0x390] sm:$0xff]
  %v135 = vld [vmem:[%s1 + $0x398] sm:$0xff]
  %v136 = vld [vmem:[%s1 + $0x3a0] sm:$0xff]
  %v137 = vld [vmem:[%s1 + $0x3a8] sm:$0xff]
  %v138 = vld [vmem:[%s1 + $0x3b0] sm:$0xff]
  %v139 = vld [vmem:[%s1 + $0x3b8] sm:$0xff]
  %v140 = vld [vmem:[%s1 + $0x3c0] sm:$0xff]
  %v141 = vld [vmem:[%s1 + $0x3c8] sm:$0xff]
  %v142 = vld [vmem:[%s1 + $0x3d0] sm:$0xff]
  %v143 = vld [vmem:[%s1 + $0x3d8] sm:$0xff]
  %v144 = vld [vmem:[%s1 + $0x3e0] sm:$0xff]
  %v145 = vld [vmem:[%s1 + $0x3e8] sm:$0xff]
  %v146 = vld [vmem:[%s1 + $0x3f0] sm:$0xff]
  %v147 = vld [vmem:[%s1 + $0x3f8] sm:$0xff]
  %v148 = vld [vmem:[%s1 + $0x400] sm:$0xff]
  %v149 = vld [vmem:[%s1 + $0x408] sm:$0xff]
  %v150 = vld [vmem:[%s1 + $0x410] sm:$0xff]
  %v151 = vld [vmem:[%s1 + $0x418] sm:$0xff]
  %v152 = vld [vmem:[%s1 + $0x420] sm:$0xff]
  %v153 = vld [vmem:[%s1 + $0x428] sm:$0xff]
  %v154 = vld [vmem:[%s1 + $0x430] sm:$0xff]
  %v155 = vld [vmem:[%s1 + $0x438] sm:$0xff]
  %v156 = vld [vmem:[%s1 + $0x440] sm:$0xff]
  %v157 = vld [vmem:[%s1 + $0x448] sm:$0xff]
  %v158 = vld [vmem:[%s1 + $0x450] sm:$0xff]
  %v159 = vld [vmem:[%s1 + $0x458] sm:$0xff]
  %v160 = vld [vmem:[%s1 + $0x460] sm:$0xff]
  %v161 = vld [vmem:[%s1 + $0x468] sm:$0xff]
  %v162 = vld [vmem:[%s1 + $0x470] sm:$0xff]
  %v163 = vld [vmem:[%s1 + $0x478] sm:$0xff]
  %v164 = vld [vmem:[%s2] sm:$0x7]
  %v166 = vperm.slane %v164, 0
  %v167 = vperm.slane %v164, 1
  %v168 = vperm.slane %v164, 2
  %172 = vmatpush.msra.mxu0 %v65
  %173 = vmatpush.msra.mxu0 %v62
  %174 = vmatpush.msra.mxu0 %v59
  %175 = vmatpush.msra.mxu0 %v56
  %176 = vmatpush.msra.mxu0 %v53
  %177 = vmatpush.msra.mxu0 %v50
  %178 = vmatpush.msra.mxu0 %v47
  %179 = vmatpush.msra.mxu0 %v44
  %180 = vmatpush.msra.mxu0 %v41
  %181 = vmatpush.msra.mxu0 %v38
  %182 = vmatpush.msra.mxu0 %v35
  %183 = vmatpush.msra.mxu0 %v32
  %184 = vmatpush.msra.mxu0 %v29
  %185 = vmatpush.msra.mxu0 %v26
  %186 = vmatpush.msra.mxu0 %v23
  %187 = vmatpush.msra.mxu0 %v20
  %188 = vmatmul.f32.gmra.mxu0 %v14
  %v189 = vpop.f32.mrf.mxu0
  %v190 = vadd.f32 %v166, %v189
  %191 = vmatmul.f32.gmra.mxu0 %v17
  %v192 = vpop.f32.mrf.mxu0
  %v193 = vadd.f32 %v166, %v192
  %194 = vdwg.mxu0
  %195 = vmatpush.msra.mxu0 %v113
  %196 = vmatpush.msra.mxu0 %v110
  %197 = vmatpush.msra.mxu0 %v107
  %198 = vmatpush.msra.mxu0 %v104
  %199 = vmatpush.msra.mxu0 %v101
  %200 = vmatpush.msra.mxu0 %v98
  %201 = vmatpush.msra.mxu0 %v95
  %202 = vmatpush.msra.mxu0 %v92
  %203 = vmatpush.msra.mxu0 %v89
  %204 = vmatpush.msra.mxu0 %v86
  %205 = vmatpush.msra.mxu0 %v83
  %206 = vmatpush.msra.mxu0 %v80
  %207 = vmatpush.msra.mxu0 %v77
  %208 = vmatpush.msra.mxu0 %v74
  %209 = vmatpush.msra.mxu0 %v71
  %210 = vmatpush.msra.mxu0 %v68
  %211 = vmatmul.f32.gmra.mxu0 %v15
  %v212 = vpop.f32.mrf.mxu0
  %v213 = vadd.f32 %v190, %v212
  %214 = vmatmul.f32.gmra.mxu0 %v18
  %v215 = vpop.f32.mrf.mxu0
  %v216 = vadd.f32 %v193, %v215
  %217 = vdwg.mxu0
  %218 = vmatpush.msra.mxu0 %v161
  %219 = vmatpush.msra.mxu0 %v158
  %220 = vmatpush.msra.mxu0 %v155
  %221 = vmatpush.msra.mxu0 %v152
  %222 = vmatpush.msra.mxu0 %v149
  %223 = vmatpush.msra.mxu0 %v146
  %224 = vmatpush.msra.mxu0 %v143
  %225 = vmatpush.msra.mxu0 %v140
  %226 = vmatpush.msra.mxu0 %v137
  %227 = vmatpush.msra.mxu0 %v134
  %228 = vmatpush.msra.mxu0 %v131
  %229 = vmatpush.msra.mxu0 %v128
  %230 = vmatpush.msra.mxu0 %v125
  %231 = vmatpush.msra.mxu0 %v122
  %232 = vmatpush.msra.mxu0 %v119
  %233 = vmatpush.msra.mxu0 %v116
  %234 = vmatmul.f32.gmra.mxu0 %v16
  %v235 = vpop.f32.mrf.mxu0
  %v236 = vadd.f32 %v213, %v235
  %237 = vmatmul.f32.gmra.mxu0 %v19
  %v238 = vpop.f32.mrf.mxu0
  %v239 = vadd.f32 %v216, %v238
  %240 = vdwg.mxu0
  %241 = vmatpush.msra.mxu0 %v66
  %242 = vmatpush.msra.mxu0 %v63
  %243 = vmatpush.msra.mxu0 %v60
  %244 = vmatpush.msra.mxu0 %v57
  %245 = vmatpush.msra.mxu0 %v54
  %246 = vmatpush.msra.mxu0 %v51
  %247 = vmatpush.msra.mxu0 %v48
  %248 = vmatpush.msra.mxu0 %v45
  %249 = vmatpush.msra.mxu0 %v42
  %250 = vmatpush.msra.mxu0 %v39
  %251 = vmatpush.msra.mxu0 %v36
  %252 = vmatpush.msra.mxu0 %v33
  %253 = vmatpush.msra.mxu0 %v30
  %254 = vmatpush.msra.mxu0 %v27
  %255 = vmatpush.msra.mxu0 %v24
  %256 = vmatpush.msra.mxu0 %v21
  %257 = vmatmul.f32.gmra.mxu0 %v14
  %v258 = vpop.f32.mrf.mxu0
  %v259 = vadd.f32 %v167, %v258
  %260 = vmatmul.f32.gmra.mxu0 %v17
  %v261 = vpop.f32.mrf.mxu0
  %v262 = vadd.f32 %v167, %v261
  %263 = vdwg.mxu0
  %264 = vmatpush.msra.mxu0 %v114
  %265 = vmatpush.msra.mxu0 %v111
  %266 = vmatpush.msra.mxu0 %v108
  %267 = vmatpush.msra.mxu0 %v105
  %268 = vmatpush.msra.mxu0 %v102
  %269 = vmatpush.msra.mxu0 %v99
  %270 = vmatpush.msra.mxu0 %v96
  %271 = vmatpush.msra.mxu0 %v93
  %272 = vmatpush.msra.mxu0 %v90
  %273 = vmatpush.msra.mxu0 %v87
  %274 = vmatpush.msra.mxu0 %v84
  %275 = vmatpush.msra.mxu0 %v81
  %276 = vmatpush.msra.mxu0 %v78
  %277 = vmatpush.msra.mxu0 %v75
  %278 = vmatpush.msra.mxu0 %v72
  %279 = vmatpush.msra.mxu0 %v69
  %280 = vmatmul.f32.gmra.mxu0 %v15
  %v281 = vpop.f32.mrf.mxu0
  %v282 = vadd.f32 %v259, %v281
  %283 = vmatmul.f32.gmra.mxu0 %v18
  %v284 = vpop.f32.mrf.mxu0
  %v285 = vadd.f32 %v262, %v284
  %286 = vdwg.mxu0
  %287 = vmatpush.msra.mxu0 %v162
  %288 = vmatpush.msra.mxu0 %v159
  %289 = vmatpush.msra.mxu0 %v156
  %290 = vmatpush.msra.mxu0 %v153
  %291 = vmatpush.msra.mxu0 %v150
  %292 = vmatpush.msra.mxu0 %v147
  %293 = vmatpush.msra.mxu0 %v144
  %294 = vmatpush.msra.mxu0 %v141
  %295 = vmatpush.msra.mxu0 %v138
  %296 = vmatpush.msra.mxu0 %v135
  %297 = vmatpush.msra.mxu0 %v132
  %298 = vmatpush.msra.mxu0 %v129
  %299 = vmatpush.msra.mxu0 %v126
  %300 = vmatpush.msra.mxu0 %v123
  %301 = vmatpush.msra.mxu0 %v120
  %302 = vmatpush.msra.mxu0 %v117
  %303 = vmatmul.f32.gmra.mxu0 %v16
  %v304 = vpop.f32.mrf.mxu0
  %v305 = vadd.f32 %v282, %v304
  %306 = vmatmul.f32.gmra.mxu0 %v19
  %v307 = vpop.f32.mrf.mxu0
  %v308 = vadd.f32 %v285, %v307
  %309 = vdwg.mxu0
  %310 = vmatpush.msra.mxu0 %v67
  %311 = vmatpush.msra.mxu0 %v64
  %312 = vmatpush.msra.mxu0 %v61
  %313 = vmatpush.msra.mxu0 %v58
  %314 = vmatpush.msra.mxu0 %v55
  %315 = vmatpush.msra.mxu0 %v52
  %316 = vmatpush.msra.mxu0 %v49
  %317 = vmatpush.msra.mxu0 %v46
  %318 = vmatpush.msra.mxu0 %v43
  %319 = vmatpush.msra.mxu0 %v40
  %320 = vmatpush.msra.mxu0 %v37
  %321 = vmatpush.msra.mxu0 %v34
  %322 = vmatpush.msra.mxu0 %v31
  %323 = vmatpush.msra.mxu0 %v28
  %324 = vmatpush.msra.mxu0 %v25
  %325 = vmatpush.msra.mxu0 %v22
  %326 = vmatmul.f32.gmra.mxu0 %v14
  %v327 = vpop.f32.mrf.mxu0
  %v328 = vadd.f32 %v168, %v327
  %329 = vmatmul.f32.gmra.mxu0 %v17
  %v330 = vpop.f32.mrf.mxu0
  %v331 = vadd.f32 %v168, %v330
  %332 = vdwg.mxu0
  %333 = vmatpush.msra.mxu0 %v115
  %334 = vmatpush.msra.mxu0 %v112
  %335 = vmatpush.msra.mxu0 %v109
  %336 = vmatpush.msra.mxu0 %v106
  %337 = vmatpush.msra.mxu0 %v103
  %338 = vmatpush.msra.mxu0 %v100
  %339 = vmatpush.msra.mxu0 %v97
  %340 = vmatpush.msra.mxu0 %v94
  %341 = vmatpush.msra.mxu0 %v91
  %342 = vmatpush.msra.mxu0 %v88
  %343 = vmatpush.msra.mxu0 %v85
  %344 = vmatpush.msra.mxu0 %v82
  %345 = vmatpush.msra.mxu0 %v79
  %346 = vmatpush.msra.mxu0 %v76
  %347 = vmatpush.msra.mxu0 %v73
  %348 = vmatpush.msra.mxu0 %v70
  %349 = vmatmul.f32.gmra.mxu0 %v15
  %v350 = vpop.f32.mrf.mxu0
  %v351 = vadd.f32 %v328, %v350
  %352 = vmatmul.f32.gmra.mxu0 %v18
  %v353 = vpop.f32.mrf.mxu0
  %v354 = vadd.f32 %v331, %v353
  %355 = vdwg.mxu0
  %356 = vmatpush.msra.mxu0 %v163
  %357 = vmatpush.msra.mxu0 %v160
  %358 = vmatpush.msra.mxu0 %v157
  %359 = vmatpush.msra.mxu0 %v154
  %360 = vmatpush.msra.mxu0 %v151
  %361 = vmatpush.msra.mxu0 %v148
  %362 = vmatpush.msra.mxu0 %v145
  %363 = vmatpush.msra.mxu0 %v142
  %364 = vmatpush.msra.mxu0 %v139
  %365 = vmatpush.msra.mxu0 %v136
  %366 = vmatpush.msra.mxu0 %v133
  %367 = vmatpush.msra.mxu0 %v130
  %368 = vmatpush.msra.mxu0 %v127
  %369 = vmatpush.msra.mxu0 %v124
  %370 = vmatpush.msra.mxu0 %v121
  %371 = vmatpush.msra.mxu0 %v118
  %372 = vmatmul.f32.gmra.mxu0 %v16
  %v373 = vpop.f32.mrf.mxu0
  %v374 = vadd.f32 %v351, %v373
  %375 = vmatmul.f32.gmra.mxu0 %v19
  %v376 = vpop.f32.mrf.mxu0
  %v377 = vadd.f32 %v354, %v376
  %378 = vdwg.mxu0
  %379 = vst [vmem:[%s3] sm:$0xff] %v236
  %380 = vst [vmem:[%s3 + $0x8] sm:$0xff] %v305
  %381 = vst [vmem:[%s3 + $0x10] sm:$0xff] %v374
  %382 = vst [vmem:[%s3 + $0x18] sm:$0xff] %v239
  %383 = vst [vmem:[%s3 + $0x20] sm:$0xff] %v308
  %384 = vst [vmem:[%s3 + $0x28] sm:$0xff] %v377
  // Predicated region
  $region14: #{_lambda_.31} parent=0 // pred_check
    _
  $region15: #{_lambda_.31} parent=0 // pred_check_branch
    %386 = sbr.rel (0) target = $region17
  $region16: #{_lambda_.31} parent=0 // pred_region
    _
  $region17: #{_lambda_.31} parent=0 // pred_fallthru
    _
  // Predicated region
  $region18: #{_lambda_.31} parent=0 // pred_check
    _
  $region19: #{_lambda_.31} parent=0 // pred_check_branch
    %388 = sbr.rel (0) target = $region21
  $region20: #{_lambda_.31} parent=0 // pred_region
    _
  $region21: #{_lambda_.31} parent=0 // pred_fallthru
    _

// kernel: _lambda_.29
$region0: #{_lambda_.29}
  #allocation0 [shape = 'u32[]', space=smem, size = 0x4, offset = 0x4, fixed_abs, tag = 'smem constant byte address 0x4 - core index']
  #allocation1 [shape = 'u32[72,128]{1,0:T(1,128)}', space=vmem, size = 0x9000, scoped, tag = 'internal scratch']
  %s0 = inlined_call_operand.vmem [shape: f32[16,384], index: 0, kind: input, shape index: {}]
  %s1 = inlined_call_operand.vmem [shape: f32[384,192], index: 1, kind: input, shape index: {}]
  %s2 = inlined_call_operand.vmem [shape: f32[1,192], index: 2, kind: input, shape index: {}]
  %s3 = inlined_call_operand.vmem [shape: f32[192,3], index: 3, kind: input, shape index: {}]
  %s4 = inlined_call_operand.vmem [shape: f32[1,3], index: 4, kind: input, shape index: {}]
  %s5 = inlined_call_operand.vmem [shape: f32[16,3], index: 5, kind: output, shape index: {}]
  %s6 = sld [smem:[#allocation0]]
  $region30: #{_lambda_.29} parent=0
    _
  %s8 = ssub.s32 1, %s6
  %s9 = scalar_select 0, %s8, %s6
  // Predicated region
  $region2: #{_lambda_.29} parent=0 // pred_check
    _
  $region3: #{_lambda_.29} parent=0 // pred_check_branch
    %11 = sbr.rel (0) target = $region5
  $region4: #{_lambda_.29} parent=0 // pred_region
    _
  $region5: #{_lambda_.29} parent=0 // pred_fallthru
    _
  // Predicated region
  $region6: #{_lambda_.29} parent=0 // pred_check
    _
  $region7: #{_lambda_.29} parent=0 // pred_check_branch
    %13 = sbr.rel (0) target = $region9
  $region8: #{_lambda_.29} parent=0 // pred_region
    _
  $region9: #{_lambda_.29} parent=0 // pred_fallthru
    _
  // Predicated region
  $region10: #{_lambda_.29} parent=0 // pred_check
    _
  $region11: #{_lambda_.29} parent=0 // pred_check_branch
    %15 = sbr.rel (0) target = $region13
  $region12: #{_lambda_.29} parent=0 // pred_region
    _
  $region13: #{_lambda_.29} parent=0 // pred_fallthru
    _
  // Predicated region
  $region14: #{_lambda_.29} parent=0 // pred_check
    _
  $region15: #{_lambda_.29} parent=0 // pred_check_branch
    %17 = sbr.rel (0) target = $region17
  $region16: #{_lambda_.29} parent=0 // pred_region
    _
  $region17: #{_lambda_.29} parent=0 // pred_fallthru
    _
  // Predicated region
  $region18: #{_lambda_.29} parent=0 // pred_check
    _
  $region19: #{_lambda_.29} parent=0 // pred_check_branch
    %19 = sbr.rel (0) target = $region21
  $region20: #{_lambda_.29} parent=0 // pred_region
    _
  $region21: #{_lambda_.29} parent=0 // pred_fallthru
    _
  %v20 = vld [vmem:[%s0] sm:$0xff]
  %v21 = vld [vmem:[%s0 + $0x8] sm:$0xff]
  %v22 = vld [vmem:[%s0 + $0x10] sm:$0xff]
  %v23 = vld [vmem:[%s0 + $0x18] sm:$0xff]
  %v24 = vld [vmem:[%s0 + $0x20] sm:$0xff]
  %v25 = vld [vmem:[%s0 + $0x28] sm:$0xff]
  %v26 = vld [vmem:[%s1] sm:$0xff]
  %v27 = vld [vmem:[%s1 + $0x8] sm:$0xff]
  %v28 = vld [vmem:[%s1 + $0x10] sm:$0xff]
  %v29 = vld [vmem:[%s1 + $0x18] sm:$0xff]
  %v30 = vld [vmem:[%s1 + $0x20] sm:$0xff]
  %v31 = vld [vmem:[%s1 + $0x28] sm:$0xff]
  %v32 = vld [vmem:[%s1 + $0x30] sm:$0xff]
  %v33 = vld [vmem:[%s1 + $0x38] sm:$0xff]
  %v34 = vld [vmem:[%s1 + $0x40] sm:$0xff]
  %v35 = vld [vmem:[%s1 + $0x48] sm:$0xff]
  %v36 = vld [vmem:[%s1 + $0x50] sm:$0xff]
  %v37 = vld [vmem:[%s1 + $0x58] sm:$0xff]
  %v38 = vld [vmem:[%s1 + $0x60] sm:$0xff]
  %v39 = vld [vmem:[%s1 + $0x68] sm:$0xff]
  %v40 = vld [vmem:[%s1 + $0x70] sm:$0xff]
  %v41 = vld [vmem:[%s1 + $0x78] sm:$0xff]
  %v42 = vld [vmem:[%s1 + $0x80] sm:$0xff]
  %v43 = vld [vmem:[%s1 + $0x88] sm:$0xff]
  %v44 = vld [vmem:[%s1 + $0x90] sm:$0xff]
  %v45 = vld [vmem:[%s1 + $0x98] sm:$0xff]
  %v46 = vld [vmem:[%s1 + $0xa0] sm:$0xff]
  %v47 = vld [vmem:[%s1 + $0xa8] sm:$0xff]
  %v48 = vld [vmem:[%s1 + $0xb0] sm:$0xff]
  %v49 = vld [vmem:[%s1 + $0xb8] sm:$0xff]
  %v50 = vld [vmem:[%s1 + $0xc0] sm:$0xff]
  %v51 = vld [vmem:[%s1 + $0xc8] sm:$0xff]
  %v52 = vld [vmem:[%s1 + $0xd0] sm:$0xff]
  %v53 = vld [vmem:[%s1 + $0xd8] sm:$0xff]
  %v54 = vld [vmem:[%s1 + $0xe0] sm:$0xff]
  %v55 = vld [vmem:[%s1 + $0xe8] sm:$0xff]
  %v56 = vld [vmem:[%s1 + $0xf0] sm:$0xff]
  %v57 = vld [vmem:[%s1 + $0xf8] sm:$0xff]
  %v58 = vld [vmem:[%s1 + $0x100] sm:$0xff]
  %v59 = vld [vmem:[%s1 + $0x108] sm:$0xff]
  %v60 = vld [vmem:[%s1 + $0x110] sm:$0xff]
  %v61 = vld [vmem:[%s1 + $0x118] sm:$0xff]
  %v62 = vld [vmem:[%s1 + $0x120] sm:$0xff]
  %v63 = vld [vmem:[%s1 + $0x128] sm:$0xff]
  %v64 = vld [vmem:[%s1 + $0x130] sm:$0xff]
  %v65 = vld [vmem:[%s1 + $0x138] sm:$0xff]
  %v66 = vld [vmem:[%s1 + $0x140] sm:$0xff]
  %v67 = vld [vmem:[%s1 + $0x148] sm:$0xff]
  %v68 = vld [vmem:[%s1 + $0x150] sm:$0xff]
  %v69 = vld [vmem:[%s1 + $0x158] sm:$0xff]
  %v70 = vld [vmem:[%s1 + $0x160] sm:$0xff]
  %v71 = vld [vmem:[%s1 + $0x168] sm:$0xff]
  %v72 = vld [vmem:[%s1 + $0x170] sm:$0xff]
  %v73 = vld [vmem:[%s1 + $0x178] sm:$0xff]
  %v74 = vld [vmem:[%s1 + $0x180] sm:$0xff]
  %v75 = vld [vmem:[%s1 + $0x188] sm:$0xff]
  %v76 = vld [vmem:[%s1 + $0x190] sm:$0xff]
  %v77 = vld [vmem:[%s1 + $0x198] sm:$0xff]
  %v78 = vld [vmem:[%s1 + $0x1a0] sm:$0xff]
  %v79 = vld [vmem:[%s1 + $0x1a8] sm:$0xff]
  %v80 = vld [vmem:[%s1 + $0x1b0] sm:$0xff]
  %v81 = vld [vmem:[%s1 + $0x1b8] sm:$0xff]
  %v82 = vld [vmem:[%s1 + $0x1c0] sm:$0xff]
  %v83 = vld [vmem:[%s1 + $0x1c8] sm:$0xff]
  %v84 = vld [vmem:[%s1 + $0x1d0] sm:$0xff]
  %v85 = vld [vmem:[%s1 + $0x1d8] sm:$0xff]
  %v86 = vld [vmem:[%s1 + $0x1e0] sm:$0xff]
  %v87 = vld [vmem:[%s1 + $0x1e8] sm:$0xff]
  %v88 = vld [vmem:[%s1 + $0x1f0] sm:$0xff]
  %v89 = vld [vmem:[%s1 + $0x1f8] sm:$0xff]
  %v90 = vld [vmem:[%s1 + $0x200] sm:$0xff]
  %v91 = vld [vmem:[%s1 + $0x208] sm:$0xff]
  %v92 = vld [vmem:[%s1 + $0x210] sm:$0xff]
  %v93 = vld [vmem:[%s1 + $0x218] sm:$0xff]
  %v94 = vld [vmem:[%s1 + $0x220] sm:$0xff]
  %v95 = vld [vmem:[%s1 + $0x228] sm:$0xff]
  %v96 = vld [vmem:[%s1 + $0x230] sm:$0xff]
  %v97 = vld [vmem:[%s1 + $0x238] sm:$0xff]
  %v98 = vld [vmem:[%s1 + $0x240] sm:$0xff]
  %v99 = vld [vmem:[%s1 + $0x248] sm:$0xff]
  %v100 = vld [vmem:[%s1 + $0x250] sm:$0xff]
  %v101 = vld [vmem:[%s1 + $0x258] sm:$0xff]
  %v102 = vld [vmem:[%s1 + $0x260] sm:$0xff]
  %v103 = vld [vmem:[%s1 + $0x268] sm:$0xff]
  %v104 = vld [vmem:[%s1 + $0x270] sm:$0xff]
  %v105 = vld [vmem:[%s1 + $0x278] sm:$0xff]
  %v106 = vld [vmem:[%s1 + $0x280] sm:$0xff]
  %v107 = vld [vmem:[%s1 + $0x288] sm:$0xff]
  %v108 = vld [vmem:[%s1 + $0x290] sm:$0xff]
  %v109 = vld [vmem:[%s1 + $0x298] sm:$0xff]
  %v110 = vld [vmem:[%s1 + $0x2a0] sm:$0xff]
  %v111 = vld [vmem:[%s1 + $0x2a8] sm:$0xff]
  %v112 = vld [vmem:[%s1 + $0x2b0] sm:$0xff]
  %v113 = vld [vmem:[%s1 + $0x2b8] sm:$0xff]
  %v114 = vld [vmem:[%s1 + $0x2c0] sm:$0xff]
  %v115 = vld [vmem:[%s1 + $0x2c8] sm:$0xff]
  %v116 = vld [vmem:[%s1 + $0x2d0] sm:$0xff]
  %v117 = vld [vmem:[%s1 + $0x2d8] sm:$0xff]
  %v118 = vld [vmem:[%s1 + $0x2e0] sm:$0xff]
  %v119 = vld [vmem:[%s1 + $0x2e8] sm:$0xff]
  %v120 = vld [vmem:[%s1 + $0x2f0] sm:$0xff]
  %v121 = vld [vmem:[%s1 + $0x2f8] sm:$0xff]
  %v122 = vld [vmem:[%s2] sm:$0x3]
  %v124 = vperm.slane %v122, 0
  %v125 = vperm.slane %v122, 1
  %128 = vmatpush.msra.mxu0 %v56
  %129 = vmatpush.msra.mxu0 %v54
  %130 = vmatpush.msra.mxu0 %v52
  %131 = vmatpush.msra.mxu0 %v50
  %132 = vmatpush.msra.mxu0 %v48
  %133 = vmatpush.msra.mxu0 %v46
  %134 = vmatpush.msra.mxu0 %v44
  %135 = vmatpush.msra.mxu0 %v42
  %136 = vmatpush.msra.mxu0 %v40
  %137 = vmatpush.msra.mxu0 %v38
  %138 = vmatpush.msra.mxu0 %v36
  %139 = vmatpush.msra.mxu0 %v34
  %140 = vmatpush.msra.mxu0 %v32
  %141 = vmatpush.msra.mxu0 %v30
  %142 = vmatpush.msra.mxu0 %v28
  %143 = vmatpush.msra.mxu0 %v26
  %144 = vmatmul.f32.gmra.mxu0 %v20
  %v145 = vpop.f32.mrf.mxu0
  %v146 = vadd.f32 %v124, %v145
  %147 = vmatmul.f32.gmra.mxu0 %v23
  %v148 = vpop.f32.mrf.mxu0
  %v149 = vadd.f32 %v124, %v148
  %150 = vdwg.mxu0
  %151 = vmatpush.msra.mxu0 %v88
  %152 = vmatpush.msra.mxu0 %v86
  %153 = vmatpush.msra.mxu0 %v84
  %154 = vmatpush.msra.mxu0 %v82
  %155 = vmatpush.msra.mxu0 %v80
  %156 = vmatpush.msra.mxu0 %v78
  %157 = vmatpush.msra.mxu0 %v76
  %158 = vmatpush.msra.mxu0 %v74
  %159 = vmatpush.msra.mxu0 %v72
  %160 = vmatpush.msra.mxu0 %v70
  %161 = vmatpush.msra.mxu0 %v68
  %162 = vmatpush.msra.mxu0 %v66
  %163 = vmatpush.msra.mxu0 %v64
  %164 = vmatpush.msra.mxu0 %v62
  %165 = vmatpush.msra.mxu0 %v60
  %166 = vmatpush.msra.mxu0 %v58
  %167 = vmatmul.f32.gmra.mxu0 %v21
  %v168 = vpop.f32.mrf.mxu0
  %v169 = vadd.f32 %v146, %v168
  %170 = vmatmul.f32.gmra.mxu0 %v24
  %v171 = vpop.f32.mrf.mxu0
  %v172 = vadd.f32 %v149, %v171
  %173 = vdwg.mxu0
  %174 = vmatpush.msra.mxu0 %v120
  %175 = vmatpush.msra.mxu0 %v118
  %176 = vmatpush.msra.mxu0 %v116
  %177 = vmatpush.msra.mxu0 %v114
  %178 = vmatpush.msra.mxu0 %v112
  %179 = vmatpush.msra.mxu0 %v110
  %180 = vmatpush.msra.mxu0 %v108
  %181 = vmatpush.msra.mxu0 %v106
  %182 = vmatpush.msra.mxu0 %v104
  %183 = vmatpush.msra.mxu0 %v102
  %184 = vmatpush.msra.mxu0 %v100
  %185 = vmatpush.msra.mxu0 %v98
  %186 = vmatpush.msra.mxu0 %v96
  %187 = vmatpush.msra.mxu0 %v94
  %188 = vmatpush.msra.mxu0 %v92
  %189 = vmatpush.msra.mxu0 %v90
  %190 = vmatmul.f32.gmra.mxu0 %v22
  %v191 = vpop.f32.mrf.mxu0
  %v192 = vadd.f32 %v169, %v191
  %193 = vmatmul.f32.gmra.mxu0 %v25
  %v194 = vpop.f32.mrf.mxu0
  %v195 = vadd.f32 %v172, %v194
  %196 = vdwg.mxu0
  %197 = vmatpush.msra.mxu0 %v57
  %198 = vmatpush.msra.mxu0 %v55
  %199 = vmatpush.msra.mxu0 %v53
  %200 = vmatpush.msra.mxu0 %v51
  %201 = vmatpush.msra.mxu0 %v49
  %202 = vmatpush.msra.mxu0 %v47
  %203 = vmatpush.msra.mxu0 %v45
  %204 = vmatpush.msra.mxu0 %v43
  %205 = vmatpush.msra.mxu0 %v41
  %206 = vmatpush.msra.mxu0 %v39
  %207 = vmatpush.msra.mxu0 %v37
  %208 = vmatpush.msra.mxu0 %v35
  %209 = vmatpush.msra.mxu0 %v33
  %210 = vmatpush.msra.mxu0 %v31
  %211 = vmatpush.msra.mxu0 %v29
  %212 = vmatpush.msra.mxu0 %v27
  %213 = vmatmul.f32.gmra.mxu0 %v20
  %v214 = vpop.f32.mrf.mxu0
  %v215 = vadd.f32 %v125, %v214
  %216 = vmatmul.f32.gmra.mxu0 %v23
  %v217 = vpop.f32.mrf.mxu0
  %v218 = vadd.f32 %v125, %v217
  %219 = vdwg.mxu0
  %220 = vmatpush.msra.mxu0 %v89
  %221 = vmatpush.msra.mxu0 %v87
  %222 = vmatpush.msra.mxu0 %v85
  %223 = vmatpush.msra.mxu0 %v83
  %224 = vmatpush.msra.mxu0 %v81
  %225 = vmatpush.msra.mxu0 %v79
  %226 = vmatpush.msra.mxu0 %v77
  %227 = vmatpush.msra.mxu0 %v75
  %228 = vmatpush.msra.mxu0 %v73
  %229 = vmatpush.msra.mxu0 %v71
  %230 = vmatpush.msra.mxu0 %v69
  %231 = vmatpush.msra.mxu0 %v67
  %232 = vmatpush.msra.mxu0 %v65
  %233 = vmatpush.msra.mxu0 %v63
  %234 = vmatpush.msra.mxu0 %v61
  %235 = vmatpush.msra.mxu0 %v59
  %236 = vmatmul.f32.gmra.mxu0 %v21
  %v237 = vpop.f32.mrf.mxu0
  %v238 = vadd.f32 %v215, %v237
  %239 = vmatmul.f32.gmra.mxu0 %v24
  %v240 = vpop.f32.mrf.mxu0
  %v241 = vadd.f32 %v218, %v240
  %242 = vdwg.mxu0
  %243 = vmatpush.msra.mxu0 %v121
  %244 = vmatpush.msra.mxu0 %v119
  %245 = vmatpush.msra.mxu0 %v117
  %246 = vmatpush.msra.mxu0 %v115
  %247 = vmatpush.msra.mxu0 %v113
  %248 = vmatpush.msra.mxu0 %v111
  %249 = vmatpush.msra.mxu0 %v109
  %250 = vmatpush.msra.mxu0 %v107
  %251 = vmatpush.msra.mxu0 %v105
  %252 = vmatpush.msra.mxu0 %v103
  %253 = vmatpush.msra.mxu0 %v101
  %254 = vmatpush.msra.mxu0 %v99
  %255 = vmatpush.msra.mxu0 %v97
  %256 = vmatpush.msra.mxu0 %v95
  %257 = vmatpush.msra.mxu0 %v93
  %258 = vmatpush.msra.mxu0 %v91
  %259 = vmatmul.f32.gmra.mxu0 %v22
  %v260 = vpop.f32.mrf.mxu0
  %v261 = vadd.f32 %v238, %v260
  %262 = vmatmul.f32.gmra.mxu0 %v25
  %v263 = vpop.f32.mrf.mxu0
  %v264 = vadd.f32 %v241, %v263
  %265 = vdwg.mxu0
  %v266 = vmax.f32 %v192, 0.0
  %v267 = vmax.f32 %v261, 0.0
  %v268 = vmax.f32 %v195, 0.0
  %v269 = vmax.f32 %v264, 0.0
  %v270 = vld [vmem:[%s3] sm:$0xff]
  %v271 = vld [vmem:[%s3 + $0x8] sm:$0xff]
  %v272 = vld [vmem:[%s3 + $0x10] sm:$0xff]
  %v273 = vld [vmem:[%s3 + $0x18] sm:$0xff]
  %v274 = vld [vmem:[%s3 + $0x20] sm:$0xff]
  %v275 = vld [vmem:[%s3 + $0x28] sm:$0xff]
  %v276 = vld [vmem:[%s3 + $0x30] sm:$0xff]
  %v277 = vld [vmem:[%s3 + $0x38] sm:$0xff]
  %v278 = vld [vmem:[%s3 + $0x40] sm:$0xff]
  %v279 = vld [vmem:[%s3 + $0x48] sm:$0xff]
  %v280 = vld [vmem:[%s3 + $0x50] sm:$0xff]
  %v281 = vld [vmem:[%s3 + $0x58] sm:$0xff]
  %v282 = vld [vmem:[%s3 + $0x60] sm:$0xff]
  %v283 = vld [vmem:[%s3 + $0x68] sm:$0xff]
  %v284 = vld [vmem:[%s3 + $0x70] sm:$0xff]
  %v285 = vld [vmem:[%s3 + $0x78] sm:$0xff]
  %v286 = vld [vmem:[%s3 + $0x80] sm:$0xff]
  %v287 = vld [vmem:[%s3 + $0x88] sm:$0xff]
  %v288 = vld [vmem:[%s3 + $0x90] sm:$0xff]
  %v289 = vld [vmem:[%s3 + $0x98] sm:$0xff]
  %v290 = vld [vmem:[%s3 + $0xa0] sm:$0xff]
  %v291 = vld [vmem:[%s3 + $0xa8] sm:$0xff]
  %v292 = vld [vmem:[%s3 + $0xb0] sm:$0xff]
  %v293 = vld [vmem:[%s3 + $0xb8] sm:$0xff]
  %v294 = vld [vmem:[%s4] sm:$0x1]
  %v296 = vperm.slane %v294, 0
  %vm298 = vcmask 523264
  %v300 = vsel %vm298, %v267, 0
  %v303 = vsel %vm298, %v269, 0
  %305 = vmatpush.msra.mxu0 %v285
  %306 = vmatpush.msra.mxu0 %v284
  %307 = vmatpush.msra.mxu0 %v283
  %308 = vmatpush.msra.mxu0 %v282
  %309 = vmatpush.msra.mxu0 %v281
  %310 = vmatpush.msra.mxu0 %v280
  %311 = vmatpush.msra.mxu0 %v279
  %312 = vmatpush.msra.mxu0 %v278
  %313 = vmatpush.msra.mxu0 %v277
  %314 = vmatpush.msra.mxu0 %v276
  %315 = vmatpush.msra.mxu0 %v275
  %316 = vmatpush.msra.mxu0 %v274
  %317 = vmatpush.msra.mxu0 %v273
  %318 = vmatpush.msra.mxu0 %v272
  %319 = vmatpush.msra.mxu0 %v271
  %320 = vmatpush.msra.mxu0 %v270
  %321 = vmatmul.f32.gmra.mxu0 %v266
  %v322 = vpop.f32.mrf.mxu0
  %v323 = vadd.f32 %v296, %v322
  %324 = vmatmul.f32.gmra.mxu0 %v268
  %v325 = vpop.f32.mrf.mxu0
  %v326 = vadd.f32 %v296, %v325
  %327 = vdwg.mxu0
  %328 = vmatpush.msra.mxu0 0.0
  %329 = vmatpush.msra.mxu0 0.0
  %330 = vmatpush.msra.mxu0 0.0
  %331 = vmatpush.msra.mxu0 0.0
  %332 = vmatpush.msra.mxu0 0.0
  %333 = vmatpush.msra.mxu0 0.0
  %334 = vmatpush.msra.mxu0 0.0
  %335 = vmatpush.msra.mxu0 0.0
  %336 = vmatpush.msra.mxu0 %v293
  %337 = vmatpush.msra.mxu0 %v292
  %338 = vmatpush.msra.mxu0 %v291
  %339 = vmatpush.msra.mxu0 %v290
  %340 = vmatpush.msra.mxu0 %v289
  %341 = vmatpush.msra.mxu0 %v288
  %342 = vmatpush.msra.mxu0 %v287
  %343 = vmatpush.msra.mxu0 %v286
  %344 = vmatmul.f32.gmra.mxu0 %v300
  %v345 = vpop.f32.mrf.mxu0
  %v346 = vadd.f32 %v323, %v345
  %347 = vmatmul.f32.gmra.mxu0 %v303
  %v348 = vpop.f32.mrf.mxu0
  %v349 = vadd.f32 %v326, %v348
  %350 = vdwg.mxu0
  %vm351 = vcmask 23552
  %352 = vst.msk [vmem:[%s5] sm:$0xff] %vm351, %v346
  %353 = vst.msk [vmem:[%s5 + $0x8] sm:$0xff] %vm351, %v349
  // Predicated region
  $region22: #{_lambda_.29} parent=0 // pred_check
    _
  $region23: #{_lambda_.29} parent=0 // pred_check_branch
    %355 = sbr.rel (0) target = $region25
  $region24: #{_lambda_.29} parent=0 // pred_region
    _
  $region25: #{_lambda_.29} parent=0 // pred_fallthru
    _
  // Predicated region
  $region26: #{_lambda_.29} parent=0 // pred_check
    _
  $region27: #{_lambda_.29} parent=0 // pred_check_branch
    %357 = sbr.rel (0) target = $region29
  $region28: #{_lambda_.29} parent=0 // pred_region
    _
  $region29: #{_lambda_.29} parent=0 // pred_fallthru
    _

// kernel: _lambda_.28
$region0: #{_lambda_.28}
  #allocation0 [shape = 'u32[]', space=smem, size = 0x4, offset = 0x4, fixed_abs, tag = 'smem constant byte address 0x4 - core index']
  #allocation1 [shape = 'u32[72,128]{1,0:T(1,128)}', space=vmem, size = 0x9000, scoped, tag = 'internal scratch']
  %s0 = inlined_call_operand.vmem [shape: bf16[128,128], index: 0, kind: input, shape index: {}]
  %s1 = inlined_call_operand.vmem [shape: f32[128,4], index: 1, kind: input, shape index: {}]
  %s2 = inlined_call_operand.vmem [shape: f32[1,4], index: 2, kind: input, shape index: {}]
  %s3 = inlined_call_operand.vmem [shape: f32[128,4], index: 3, kind: output, shape index: {}]
  %s4 = sld [smem:[#allocation0]]
  $region22: #{_lambda_.28} parent=0
    _
  %s6 = ssub.s32 1, %s4
  %s7 = scalar_select 0, %s6, %s4
  // Predicated region
  $region2: #{_lambda_.28} parent=0 // pred_check
    _
  $region3: #{_lambda_.28} parent=0 // pred_check_branch
    %9 = sbr.rel (0) target = $region5
  $region4: #{_lambda_.28} parent=0 // pred_region
    _
  $region5: #{_lambda_.28} parent=0 // pred_fallthru
    _
  // Predicated region
  $region6: #{_lambda_.28} parent=0 // pred_check
    _
  $region7: #{_lambda_.28} parent=0 // pred_check_branch
    %11 = sbr.rel (0) target = $region9
  $region8: #{_lambda_.28} parent=0 // pred_region
    _
  $region9: #{_lambda_.28} parent=0 // pred_fallthru
    _
  // Predicated region
  $region10: #{_lambda_.28} parent=0 // pred_check
    _
  $region11: #{_lambda_.28} parent=0 // pred_check_branch
    %13 = sbr.rel (0) target = $region13
  $region12: #{_lambda_.28} parent=0 // pred_region
    _
  $region13: #{_lambda_.28} parent=0 // pred_fallthru
    _
  %v14 = vld [vmem:[%s0] sm:$0xf]
  %v15 = vld [vmem:[%s0 + $0x4] sm:$0xf]
  %v16 = vld [vmem:[%s0 + $0x8] sm:$0xf]
  %v17 = vld [vmem:[%s0 + $0xc] sm:$0xf]
  %v18 = vld [vmem:[%s0 + $0x10] sm:$0xf]
  %v19 = vld [vmem:[%s0 + $0x14] sm:$0xf]
  %v20 = vld [vmem:[%s0 + $0x18] sm:$0xf]
  %v21 = vld [vmem:[%s0 + $0x1c] sm:$0xf]
  %v22 = vld [vmem:[%s0 + $0x20] sm:$0xf]
  %v23 = vld [vmem:[%s0 + $0x24] sm:$0xf]
  %v24 = vld [vmem:[%s0 + $0x28] sm:$0xf]
  %v25 = vld [vmem:[%s0 + $0x2c] sm:$0xf]
  %v26 = vld [vmem:[%s0 + $0x30] sm:$0xf]
  %v27 = vld [vmem:[%s0 + $0x34] sm:$0xf]
  %v28 = vld [vmem:[%s0 + $0x38] sm:$0xf]
  %v29 = vld [vmem:[%s0 + $0x3c] sm:$0xf]
  %v30 = vunpack.c.l.bf16 %v14
  %v31 = vunpack.c.l.bf16 %v15
  %v32 = vunpack.c.l.bf16 %v16
  %v33 = vunpack.c.l.bf16 %v17
  %v34 = vunpack.c.l.bf16 %v18
  %v35 = vunpack.c.l.bf16 %v19
  %v36 = vunpack.c.l.bf16 %v20
  %v37 = vunpack.c.l.bf16 %v21
  %v38 = vunpack.c.l.bf16 %v22
  %v39 = vunpack.c.l.bf16 %v23
  %v40 = vunpack.c.l.bf16 %v24
  %v41 = vunpack.c.l.bf16 %v25
  %v42 = vunpack.c.l.bf16 %v26
  %v43 = vunpack.c.l.bf16 %v27
  %v44 = vunpack.c.l.bf16 %v28
  %v45 = vunpack.c.l.bf16 %v29
  %v46 = vld [vmem:[%s1] sm:$0xff]
  %v47 = vld [vmem:[%s1 + $0x8] sm:$0xff]
  %v48 = vld [vmem:[%s1 + $0x10] sm:$0xff]
  %v49 = vld [vmem:[%s1 + $0x18] sm:$0xff]
  %v50 = vld [vmem:[%s1 + $0x20] sm:$0xff]
  %v51 = vld [vmem:[%s1 + $0x28] sm:$0xff]
  %v52 = vld [vmem:[%s1 + $0x30] sm:$0xff]
  %v53 = vld [vmem:[%s1 + $0x38] sm:$0xff]
  %v54 = vld [vmem:[%s1 + $0x40] sm:$0xff]
  %v55 = vld [vmem:[%s1 + $0x48] sm:$0xff]
  %v56 = vld [vmem:[%s1 + $0x50] sm:$0xff]
  %v57 = vld [vmem:[%s1 + $0x58] sm:$0xff]
  %v58 = vld [vmem:[%s1 + $0x60] sm:$0xff]
  %v59 = vld [vmem:[%s1 + $0x68] sm:$0xff]
  %v60 = vld [vmem:[%s1 + $0x70] sm:$0xff]
  %v61 = vld [vmem:[%s1 + $0x78] sm:$0xff]
  %v62 = vld [vmem:[%s2] sm:$0x1]
  %v64 = vperm.slane %v62, 0
  %66 = vmatpush.msra.mxu0 %v61
  %67 = vmatpush.msra.mxu0 %v60
  %68 = vmatpush.msra.mxu0 %v59
  %69 = vmatpush.msra.mxu0 %v58
  %70 = vmatpush.msra.mxu0 %v57
  %71 = vmatpush.msra.mxu0 %v56
  %72 = vmatpush.msra.mxu0 %v55
  %73 = vmatpush.msra.mxu0 %v54
  %74 = vmatpush.msra.mxu0 %v53
  %75 = vmatpush.msra.mxu0 %v52
  %76 = vmatpush.msra.mxu0 %v51
  %77 = vmatpush.msra.mxu0 %v50
  %78 = vmatpush.msra.mxu0 %v49
  %79 = vmatpush.msra.mxu0 %v48
  %80 = vmatpush.msra.mxu0 %v47
  %81 = vmatpush.msra.mxu0 %v46
  %82 = vmatmul.f32.gmra.mxu0 %v30
  %v83 = vpop.f32.mrf.mxu0
  %v84 = vadd.f32 %v64, %v83
  %85 = vmatmul.f32.gmra.mxu0 %v31
  %v86 = vpop.f32.mrf.mxu0
  %v87 = vadd.f32 %v64, %v86
  %88 = vmatmul.f32.gmra.mxu0 %v32
  %v89 = vpop.f32.mrf.mxu0
  %v90 = vadd.f32 %v64, %v89
  %91 = vmatmul.f32.gmra.mxu0 %v33
  %v92 = vpop.f32.mrf.mxu0
  %v93 = vadd.f32 %v64, %v92
  %94 = vmatmul.f32.gmra.mxu0 %v34
  %v95 = vpop.f32.mrf.mxu0
  %v96 = vadd.f32 %v64, %v95
  %97 = vmatmul.f32.gmra.mxu0 %v35
  %v98 = vpop.f32.mrf.mxu0
  %v99 = vadd.f32 %v64, %v98
  %100 = vmatmul.f32.gmra.mxu0 %v36
  %v101 = vpop.f32.mrf.mxu0
  %v102 = vadd.f32 %v64, %v101
  %103 = vmatmul.f32.gmra.mxu0 %v37
  %v104 = vpop.f32.mrf.mxu0
  %v105 = vadd.f32 %v64, %v104
  %106 = vmatmul.f32.gmra.mxu0 %v38
  %v107 = vpop.f32.mrf.mxu0
  %v108 = vadd.f32 %v64, %v107
  %109 = vmatmul.f32.gmra.mxu0 %v39
  %v110 = vpop.f32.mrf.mxu0
  %v111 = vadd.f32 %v64, %v110
  %112 = vmatmul.f32.gmra.mxu0 %v40
  %v113 = vpop.f32.mrf.mxu0
  %v114 = vadd.f32 %v64, %v113
  %115 = vmatmul.f32.gmra.mxu0 %v41
  %v116 = vpop.f32.mrf.mxu0
  %v117 = vadd.f32 %v64, %v116
  %118 = vmatmul.f32.gmra.mxu0 %v42
  %v119 = vpop.f32.mrf.mxu0
  %v120 = vadd.f32 %v64, %v119
  %121 = vmatmul.f32.gmra.mxu0 %v43
  %v122 = vpop.f32.mrf.mxu0
  %v123 = vadd.f32 %v64, %v122
  %124 = vmatmul.f32.gmra.mxu0 %v44
  %v125 = vpop.f32.mrf.mxu0
  %v126 = vadd.f32 %v64, %v125
  %127 = vmatmul.f32.gmra.mxu0 %v45
  %v128 = vpop.f32.mrf.mxu0
  %v129 = vadd.f32 %v64, %v128
  %130 = vdwg.mxu0
  %vm131 = vcmask 31744
  %132 = vst.msk [vmem:[%s3] sm:$0xff] %vm131, %v84
  %133 = vst.msk [vmem:[%s3 + $0x8] sm:$0xff] %vm131, %v87
  %134 = vst.msk [vmem:[%s3 + $0x10] sm:$0xff] %vm131, %v90
  %135 = vst.msk [vmem:[%s3 + $0x18] sm:$0xff] %vm131, %v93
  %136 = vst.msk [vmem:[%s3 + $0x20] sm:$0xff] %vm131, %v96
  %137 = vst.msk [vmem:[%s3 + $0x28] sm:$0xff] %vm131, %v99
  %138 = vst.msk [vmem:[%s3 + $0x30] sm:$0xff] %vm131, %v102
  %139 = vst.msk [vmem:[%s3 + $0x38] sm:$0xff] %vm131, %v105
  %140 = vst.msk [vmem:[%s3 + $0x40] sm:$0xff] %vm131, %v108
  %141 = vst.msk [vmem:[%s3 + $0x48] sm:$0xff] %vm131, %v111
  %142 = vst.msk [vmem:[%s3 + $0x50] sm:$0xff] %vm131, %v114
  %143 = vst.msk [vmem:[%s3 + $0x58] sm:$0xff] %vm131, %v117
  %144 = vst.msk [vmem:[%s3 + $0x60] sm:$0xff] %vm131, %v120
  %145 = vst.msk [vmem:[%s3 + $0x68] sm:$0xff] %vm131, %v123
  %146 = vst.msk [vmem:[%s3 + $0x70] sm:$0xff] %vm131, %v126
  %147 = vst.msk [vmem:[%s3 + $0x78] sm:$0xff] %vm131, %v129
  // Predicated region
  $region14: #{_lambda_.28} parent=0 // pred_check
    _
  $region15: #{_lambda_.28} parent=0 // pred_check_branch
    %149 = sbr.rel (0) target = $region17
  $region16: #{_lambda_.28} parent=0 // pred_region
    _
  $region17: #{_lambda_.28} parent=0 // pred_fallthru
    _
  // Predicated region
  $region18: #{_lambda_.28} parent=0 // pred_check
    _
  $region19: #{_lambda_.28} parent=0 // pred_check_branch
    %151 = sbr.rel (0) target = $region21
  $region20: #{_lambda_.28} parent=0 // pred_region
    _
  $region21: #{_lambda_.28} parent=0 // pred_fallthru
    _

// kernel: _lambda_.27
$region0: #{_lambda_.27}
  #allocation0 [shape = 'u32[]', space=smem, size = 0x4, offset = 0x4, fixed_abs, tag = 'smem constant byte address 0x4 - core index']
  #allocation1 [shape = 'u32[72,128]{1,0:T(1,128)}', space=vmem, size = 0x9000, scoped, tag = 'internal scratch']
  %s0 = inlined_call_operand.vmem [shape: f32[128,64], index: 0, kind: input, shape index: {}]
  %s1 = inlined_call_operand.vmem [shape: f32[64,128], index: 1, kind: input, shape index: {}]
  %s2 = inlined_call_operand.vmem [shape: f32[1,128], index: 2, kind: input, shape index: {}]
  %s3 = inlined_call_operand.vmem [shape: f32[1,128], index: 3, kind: input, shape index: {}]
  %s4 = inlined_call_operand.vmem [shape: f32[1,128], index: 4, kind: input, shape index: {}]
  %s5 = inlined_call_operand.vmem [shape: bf16[128,128], index: 5, kind: output, shape index: {}]
  %s6 = sld [smem:[#allocation0]]
  $region30: #{_lambda_.27} parent=0
    _
  %s8 = ssub.s32 1, %s6
  %s9 = scalar_select 0, %s8, %s6
  // Predicated region
  $region2: #{_lambda_.27} parent=0 // pred_check
    _
  $region3: #{_lambda_.27} parent=0 // pred_check_branch
    %11 = sbr.rel (0) target = $region5
  $region4: #{_lambda_.27} parent=0 // pred_region
    _
  $region5: #{_lambda_.27} parent=0 // pred_fallthru
    _
  // Predicated region
  $region6: #{_lambda_.27} parent=0 // pred_check
    _
  $region7: #{_lambda_.27} parent=0 // pred_check_branch
    %13 = sbr.rel (0) target = $region9
  $region8: #{_lambda_.27} parent=0 // pred_region
    _
  $region9: #{_lambda_.27} parent=0 // pred_fallthru
    _
  // Predicated region
  $region10: #{_lambda_.27} parent=0 // pred_check
    _
  $region11: #{_lambda_.27} parent=0 // pred_check_branch
    %15 = sbr.rel (0) target = $region13
  $region12: #{_lambda_.27} parent=0 // pred_region
    _
  $region13: #{_lambda_.27} parent=0 // pred_fallthru
    _
  // Predicated region
  $region14: #{_lambda_.27} parent=0 // pred_check
    _
  $region15: #{_lambda_.27} parent=0 // pred_check_branch
    %17 = sbr.rel (0) target = $region17
  $region16: #{_lambda_.27} parent=0 // pred_region
    _
  $region17: #{_lambda_.27} parent=0 // pred_fallthru
    _
  // Predicated region
  $region18: #{_lambda_.27} parent=0 // pred_check
    _
  $region19: #{_lambda_.27} parent=0 // pred_check_branch
    %19 = sbr.rel (0) target = $region21
  $region20: #{_lambda_.27} parent=0 // pred_region
    _
  $region21: #{_lambda_.27} parent=0 // pred_fallthru
    _
  %v20 = vld [vmem:[%s0] sm:$0xff]
  %v21 = vld [vmem:[%s0 + $0x8] sm:$0xff]
  %v22 = vld [vmem:[%s0 + $0x10] sm:$0xff]
  %v23 = vld [vmem:[%s0 + $0x18] sm:$0xff]
  %v24 = vld [vmem:[%s0 + $0x20] sm:$0xff]
  %v25 = vld [vmem:[%s0 + $0x28] sm:$0xff]
  %v26 = vld [vmem:[%s0 + $0x30] sm:$0xff]
  %v27 = vld [vmem:[%s0 + $0x38] sm:$0xff]
  %v28 = vld [vmem:[%s0 + $0x40] sm:$0xff]
  %v29 = vld [vmem:[%s0 + $0x48] sm:$0xff]
  %v30 = vld [vmem:[%s0 + $0x50] sm:$0xff]
  %v31 = vld [vmem:[%s0 + $0x58] sm:$0xff]
  %v32 = vld [vmem:[%s0 + $0x60] sm:$0xff]
  %v33 = vld [vmem:[%s0 + $0x68] sm:$0xff]
  %v34 = vld [vmem:[%s0 + $0x70] sm:$0xff]
  %v35 = vld [vmem:[%s0 + $0x78] sm:$0xff]
  %v36 = vld [vmem:[%s1] sm:$0xff]
  %v37 = vld [vmem:[%s1 + $0x8] sm:$0xff]
  %v38 = vld [vmem:[%s1 + $0x10] sm:$0xff]
  %v39 = vld [vmem:[%s1 + $0x18] sm:$0xff]
  %v40 = vld [vmem:[%s1 + $0x20] sm:$0xff]
  %v41 = vld [vmem:[%s1 + $0x28] sm:$0xff]
  %v42 = vld [vmem:[%s1 + $0x30] sm:$0xff]
  %v43 = vld [vmem:[%s1 + $0x38] sm:$0xff]
  %v44 = vld [vmem:[%s2] sm:$0x1]
  %v46 = vperm.slane %v44, 0
  %vm48 = vcmask 523264
  %v50 = vsel %vm48, %v20, 0
  %v53 = vsel %vm48, %v21, 0
  %v56 = vsel %vm48, %v22, 0
  %v59 = vsel %vm48, %v23, 0
  %v62 = vsel %vm48, %v24, 0
  %v65 = vsel %vm48, %v25, 0
  %v68 = vsel %vm48, %v26, 0
  %v71 = vsel %vm48, %v27, 0
  %v74 = vsel %vm48, %v28, 0
  %v77 = vsel %vm48, %v29, 0
  %v80 = vsel %vm48, %v30, 0
  %v83 = vsel %vm48, %v31, 0
  %v86 = vsel %vm48, %v32, 0
  %v89 = vsel %vm48, %v33, 0
  %v92 = vsel %vm48, %v34, 0
  %v95 = vsel %vm48, %v35, 0
  %97 = vmatpush.msra.mxu0 0.0
  %98 = vmatpush.msra.mxu0 0.0
  %99 = vmatpush.msra.mxu0 0.0
  %100 = vmatpush.msra.mxu0 0.0
  %101 = vmatpush.msra.mxu0 0.0
  %102 = vmatpush.msra.mxu0 0.0
  %103 = vmatpush.msra.mxu0 0.0
  %104 = vmatpush.msra.mxu0 0.0
  %105 = vmatpush.msra.mxu0 %v43
  %106 = vmatpush.msra.mxu0 %v42
  %107 = vmatpush.msra.mxu0 %v41
  %108 = vmatpush.msra.mxu0 %v40
  %109 = vmatpush.msra.mxu0 %v39
  %110 = vmatpush.msra.mxu0 %v38
  %111 = vmatpush.msra.mxu0 %v37
  %112 = vmatpush.msra.mxu0 %v36
  %113 = vmatmul.f32.gmra.mxu0 %v50
  %v114 = vpop.f32.mrf.mxu0
  %v115 = vadd.f32 %v46, %v114
  %116 = vmatmul.f32.gmra.mxu0 %v53
  %v117 = vpop.f32.mrf.mxu0
  %v118 = vadd.f32 %v46, %v117
  %119 = vmatmul.f32.gmra.mxu0 %v56
  %v120 = vpop.f32.mrf.mxu0
  %v121 = vadd.f32 %v46, %v120
  %122 = vmatmul.f32.gmra.mxu0 %v59
  %v123 = vpop.f32.mrf.mxu0
  %v124 = vadd.f32 %v46, %v123
  %125 = vmatmul.f32.gmra.mxu0 %v62
  %v126 = vpop.f32.mrf.mxu0
  %v127 = vadd.f32 %v46, %v126
  %128 = vmatmul.f32.gmra.mxu0 %v65
  %v129 = vpop.f32.mrf.mxu0
  %v130 = vadd.f32 %v46, %v129
  %131 = vmatmul.f32.gmra.mxu0 %v68
  %v132 = vpop.f32.mrf.mxu0
  %v133 = vadd.f32 %v46, %v132
  %134 = vmatmul.f32.gmra.mxu0 %v71
  %v135 = vpop.f32.mrf.mxu0
  %v136 = vadd.f32 %v46, %v135
  %137 = vmatmul.f32.gmra.mxu0 %v74
  %v138 = vpop.f32.mrf.mxu0
  %v139 = vadd.f32 %v46, %v138
  %140 = vmatmul.f32.gmra.mxu0 %v77
  %v141 = vpop.f32.mrf.mxu0
  %v142 = vadd.f32 %v46, %v141
  %143 = vmatmul.f32.gmra.mxu0 %v80
  %v144 = vpop.f32.mrf.mxu0
  %v145 = vadd.f32 %v46, %v144
  %146 = vmatmul.f32.gmra.mxu0 %v83
  %v147 = vpop.f32.mrf.mxu0
  %v148 = vadd.f32 %v46, %v147
  %149 = vmatmul.f32.gmra.mxu0 %v86
  %v150 = vpop.f32.mrf.mxu0
  %v151 = vadd.f32 %v46, %v150
  %152 = vmatmul.f32.gmra.mxu0 %v89
  %v153 = vpop.f32.mrf.mxu0
  %v154 = vadd.f32 %v46, %v153
  %155 = vmatmul.f32.gmra.mxu0 %v92
  %v156 = vpop.f32.mrf.mxu0
  %v157 = vadd.f32 %v46, %v156
  %158 = vmatmul.f32.gmra.mxu0 %v95
  %v159 = vpop.f32.mrf.mxu0
  %v160 = vadd.f32 %v46, %v159
  %161 = vdwg.mxu0
  %162 = vadd.xlane.f32.xlu0 %v115
  %v163 = vpop.xlane.xlu0 %162
  %164 = vadd.xlane.f32.xlu0 %v118
  %v165 = vpop.xlane.xlu0 %164
  %166 = vadd.xlane.f32.xlu0 %v121
  %v167 = vpop.xlane.xlu0 %166
  %168 = vadd.xlane.f32.xlu0 %v124
  %v169 = vpop.xlane.xlu0 %168
  %170 = vadd.xlane.f32.xlu0 %v127
  %v171 = vpop.xlane.xlu0 %170
  %172 = vadd.xlane.f32.xlu0 %v130
  %v173 = vpop.xlane.xlu0 %172
  %174 = vadd.xlane.f32.xlu0 %v133
  %v175 = vpop.xlane.xlu0 %174
  %176 = vadd.xlane.f32.xlu0 %v136
  %v177 = vpop.xlane.xlu0 %176
  %178 = vadd.xlane.f32.xlu0 %v139
  %v179 = vpop.xlane.xlu0 %178
  %180 = vadd.xlane.f32.xlu0 %v142
  %v181 = vpop.xlane.xlu0 %180
  %182 = vadd.xlane.f32.xlu0 %v145
  %v183 = vpop.xlane.xlu0 %182
  %184 = vadd.xlane.f32.xlu0 %v148
  %v185 = vpop.xlane.xlu0 %184
  %186 = vadd.xlane.f32.xlu0 %v151
  %v187 = vpop.xlane.xlu0 %186
  %188 = vadd.xlane.f32.xlu0 %v154
  %v189 = vpop.xlane.xlu0 %188
  %190 = vadd.xlane.f32.xlu0 %v157
  %v191 = vpop.xlane.xlu0 %190
  %192 = vadd.xlane.f32.xlu0 %v160
  %v193 = vpop.xlane.xlu0 %192
  %v194 = vrcp.pop 128.0
  %v195 = vmul.f32 128.0, %v194
  %v196 = vsub.f32 1.0, %v195
  %v197 = vmul.f32 %v194, %v196
  %v198 = vadd.f32 %v194, %v197
  %vm199 = vweird.f32 %v194
  %v200 = vsel %vm199, %v194, %v198
  %v201 = vmul.f32 %v163, %v200
  %v202 = vmul.f32 %v165, %v200
  %v203 = vmul.f32 %v167, %v200
  %v204 = vmul.f32 %v169, %v200
  %v205 = vmul.f32 %v171, %v200
  %v206 = vmul.f32 %v173, %v200
  %v207 = vmul.f32 %v175, %v200
  %v208 = vmul.f32 %v177, %v200
  %v209 = vmul.f32 %v179, %v200
  %v210 = vmul.f32 %v181, %v200
  %v211 = vmul.f32 %v183, %v200
  %v212 = vmul.f32 %v185, %v200
  %v213 = vmul.f32 %v187, %v200
  %v214 = vmul.f32 %v189, %v200
  %v215 = vmul.f32 %v191, %v200
  %v216 = vmul.f32 %v193, %v200
  %v217 = vsub.f32 %v115, %v201
  %v218 = vsub.f32 %v118, %v202
  %v219 = vsub.f32 %v121, %v203
  %v220 = vsub.f32 %v124, %v204
  %v221 = vsub.f32 %v127, %v205
  %v222 = vsub.f32 %v130, %v206
  %v223 = vsub.f32 %v133, %v207
  %v224 = vsub.f32 %v136, %v208
  %v225 = vsub.f32 %v139, %v209
  %v226 = vsub.f32 %v142, %v210
  %v227 = vsub.f32 %v145, %v211
  %v228 = vsub.f32 %v148, %v212
  %v229 = vsub.f32 %v151, %v213
  %v230 = vsub.f32 %v154, %v214
  %v231 = vsub.f32 %v157, %v215
  %v232 = vsub.f32 %v160, %v216
  %v233 = vmul.f32 %v217, %v217
  %v234 = vmul.f32 %v218, %v218
  %v235 = vmul.f32 %v219, %v219
  %v236 = vmul.f32 %v220, %v220
  %v237 = vmul.f32 %v221, %v221
  %v238 = vmul.f32 %v222, %v222
  %v239 = vmul.f32 %v223, %v223
  %v240 = vmul.f32 %v224, %v224
  %v241 = vmul.f32 %v225, %v225
  %v242 = vmul.f32 %v226, %v226
  %v243 = vmul.f32 %v227, %v227
  %v244 = vmul.f32 %v228, %v228
  %v245 = vmul.f32 %v229, %v229
  %v246 = vmul.f32 %v230, %v230
  %v247 = vmul.f32 %v231, %v231
  %v248 = vmul.f32 %v232, %v232
  %249 = vadd.xlane.f32.xlu0 %v233
  %v250 = vpop.xlane.xlu0 %249
  %251 = vadd.xlane.f32.xlu0 %v234
  %v252 = vpop.xlane.xlu0 %251
  %253 = vadd.xlane.f32.xlu0 %v235
  %v254 = vpop.xlane.xlu0 %253
  %255 = vadd.xlane.f32.xlu0 %v236
  %v256 = vpop.xlane.xlu0 %255
  %257 = vadd.xlane.f32.xlu0 %v237
  %v258 = vpop.xlane.xlu0 %257
  %259 = vadd.xlane.f32.xlu0 %v238
  %v260 = vpop.xlane.xlu0 %259
  %261 = vadd.xlane.f32.xlu0 %v239
  %v262 = vpop.xlane.xlu0 %261
  %263 = vadd.xlane.f32.xlu0 %v240
  %v264 = vpop.xlane.xlu0 %263
  %265 = vadd.xlane.f32.xlu0 %v241
  %v266 = vpop.xlane.xlu0 %265
  %267 = vadd.xlane.f32.xlu0 %v242
  %v268 = vpop.xlane.xlu0 %267
  %269 = vadd.xlane.f32.xlu0 %v243
  %v270 = vpop.xlane.xlu0 %269
  %271 = vadd.xlane.f32.xlu0 %v244
  %v272 = vpop.xlane.xlu0 %271
  %273 = vadd.xlane.f32.xlu0 %v245
  %v274 = vpop.xlane.xlu0 %273
  %275 = vadd.xlane.f32.xlu0 %v246
  %v276 = vpop.xlane.xlu0 %275
  %277 = vadd.xlane.f32.xlu0 %v247
  %v278 = vpop.xlane.xlu0 %277
  %279 = vadd.xlane.f32.xlu0 %v248
  %v280 = vpop.xlane.xlu0 %279
  %v281 = vmul.f32 %v250, %v200
  %v282 = vmul.f32 %v252, %v200
  %v283 = vmul.f32 %v254, %v200
  %v284 = vmul.f32 %v256, %v200
  %v285 = vmul.f32 %v258, %v200
  %v286 = vmul.f32 %v260, %v200
  %v287 = vmul.f32 %v262, %v200
  %v288 = vmul.f32 %v264, %v200
  %v289 = vmul.f32 %v266, %v200
  %v290 = vmul.f32 %v268, %v200
  %v291 = vmul.f32 %v270, %v200
  %v292 = vmul.f32 %v272, %v200
  %v293 = vmul.f32 %v274, %v200
  %v294 = vmul.f32 %v276, %v200
  %v295 = vmul.f32 %v278, %v200
  %v296 = vmul.f32 %v280, %v200
  %v297 = vadd.f32 %v281, 1e-05
  %v298 = vadd.f32 %v282, 1e-05
  %v299 = vadd.f32 %v283, 1e-05
  %v300 = vadd.f32 %v284, 1e-05
  %v301 = vadd.f32 %v285, 1e-05
  %v302 = vadd.f32 %v286, 1e-05
  %v303 = vadd.f32 %v287, 1e-05
  %v304 = vadd.f32 %v288, 1e-05
  %v305 = vadd.f32 %v289, 1e-05
  %v306 = vadd.f32 %v290, 1e-05
  %v307 = vadd.f32 %v291, 1e-05
  %v308 = vadd.f32 %v292, 1e-05
  %v309 = vadd.f32 %v293, 1e-05
  %v310 = vadd.f32 %v294, 1e-05
  %v311 = vadd.f32 %v295, 1e-05
  %v312 = vadd.f32 %v296, 1e-05
  %v313 = vrsqrt.pop %v297
  %v314 = vmul.f32 %v313, %v297
  %v315 = vmul.f32 %v314, %v313
  %v316 = vmul.f32 0.5, %v315
  %v317 = vsub.f32 1.5, %v316
  %v318 = vmul.f32 %v313, %v317
  %vm319 = vweird.f32 %v297
  %vm320 = vweird.f32 %v313
  %vm321 = vmor %vm319, %vm320
  %v322 = vsel %vm321, %v313, %v318
  %v323 = vrsqrt.pop %v298
  %v324 = vmul.f32 %v323, %v298
  %v325 = vmul.f32 %v324, %v323
  %v326 = vmul.f32 0.5, %v325
  %v327 = vsub.f32 1.5, %v326
  %v328 = vmul.f32 %v323, %v327
  %vm329 = vweird.f32 %v298
  %vm330 = vweird.f32 %v323
  %vm331 = vmor %vm329, %vm330
  %v332 = vsel %vm331, %v323, %v328
  %v333 = vrsqrt.pop %v299
  %v334 = vmul.f32 %v333, %v299
  %v335 = vmul.f32 %v334, %v333
  %v336 = vmul.f32 0.5, %v335
  %v337 = vsub.f32 1.5, %v336
  %v338 = vmul.f32 %v333, %v337
  %vm339 = vweird.f32 %v299
  %vm340 = vweird.f32 %v333
  %vm341 = vmor %vm339, %vm340
  %v342 = vsel %vm341, %v333, %v338
  %v343 = vrsqrt.pop %v300
  %v344 = vmul.f32 %v343, %v300
  %v345 = vmul.f32 %v344, %v343
  %v346 = vmul.f32 0.5, %v345
  %v347 = vsub.f32 1.5, %v346
  %v348 = vmul.f32 %v343, %v347
  %vm349 = vweird.f32 %v300
  %vm350 = vweird.f32 %v343
  %vm351 = vmor %vm349, %vm350
  %v352 = vsel %vm351, %v343, %v348
  %v353 = vrsqrt.pop %v301
  %v354 = vmul.f32 %v353, %v301
  %v355 = vmul.f32 %v354, %v353
  %v356 = vmul.f32 0.5, %v355
  %v357 = vsub.f32 1.5, %v356
  %v358 = vmul.f32 %v353, %v357
  %vm359 = vweird.f32 %v301
  %vm360 = vweird.f32 %v353
  %vm361 = vmor %vm359, %vm360
  %v362 = vsel %vm361, %v353, %v358
  %v363 = vrsqrt.pop %v302
  %v364 = vmul.f32 %v363, %v302
  %v365 = vmul.f32 %v364, %v363
  %v366 = vmul.f32 0.5, %v365
  %v367 = vsub.f32 1.5, %v366
  %v368 = vmul.f32 %v363, %v367
  %vm369 = vweird.f32 %v302
  %vm370 = vweird.f32 %v363
  %vm371 = vmor %vm369, %vm370
  %v372 = vsel %vm371, %v363, %v368
  %v373 = vrsqrt.pop %v303
  %v374 = vmul.f32 %v373, %v303
  %v375 = vmul.f32 %v374, %v373
  %v376 = vmul.f32 0.5, %v375
  %v377 = vsub.f32 1.5, %v376
  %v378 = vmul.f32 %v373, %v377
  %vm379 = vweird.f32 %v303
  %vm380 = vweird.f32 %v373
  %vm381 = vmor %vm379, %vm380
  %v382 = vsel %vm381, %v373, %v378
  %v383 = vrsqrt.pop %v304
  %v384 = vmul.f32 %v383, %v304
  %v385 = vmul.f32 %v384, %v383
  %v386 = vmul.f32 0.5, %v385
  %v387 = vsub.f32 1.5, %v386
  %v388 = vmul.f32 %v383, %v387
  %vm389 = vweird.f32 %v304
  %vm390 = vweird.f32 %v383
  %vm391 = vmor %vm389, %vm390
  %v392 = vsel %vm391, %v383, %v388
  %v393 = vrsqrt.pop %v305
  %v394 = vmul.f32 %v393, %v305
  %v395 = vmul.f32 %v394, %v393
  %v396 = vmul.f32 0.5, %v395
  %v397 = vsub.f32 1.5, %v396
  %v398 = vmul.f32 %v393, %v397
  %vm399 = vweird.f32 %v305
  %vm400 = vweird.f32 %v393
  %vm401 = vmor %vm399, %vm400
  %v402 = vsel %vm401, %v393, %v398
  %v403 = vrsqrt.pop %v306
  %v404 = vmul.f32 %v403, %v306
  %v405 = vmul.f32 %v404, %v403
  %v406 = vmul.f32 0.5, %v405
  %v407 = vsub.f32 1.5, %v406
  %v408 = vmul.f32 %v403, %v407
  %vm409 = vweird.f32 %v306
  %vm410 = vweird.f32 %v403
  %vm411 = vmor %vm409, %vm410
  %v412 = vsel %vm411, %v403, %v408
  %v413 = vrsqrt.pop %v307
  %v414 = vmul.f32 %v413, %v307
  %v415 = vmul.f32 %v414, %v413
  %v416 = vmul.f32 0.5, %v415
  %v417 = vsub.f32 1.5, %v416
  %v418 = vmul.f32 %v413, %v417
  %vm419 = vweird.f32 %v307
  %vm420 = vweird.f32 %v413
  %vm421 = vmor %vm419, %vm420
  %v422 = vsel %vm421, %v413, %v418
  %v423 = vrsqrt.pop %v308
  %v424 = vmul.f32 %v423, %v308
  %v425 = vmul.f32 %v424, %v423
  %v426 = vmul.f32 0.5, %v425
  %v427 = vsub.f32 1.5, %v426
  %v428 = vmul.f32 %v423, %v427
  %vm429 = vweird.f32 %v308
  %vm430 = vweird.f32 %v423
  %vm431 = vmor %vm429, %vm430
  %v432 = vsel %vm431, %v423, %v428
  %v433 = vrsqrt.pop %v309
  %v434 = vmul.f32 %v433, %v309
  %v435 = vmul.f32 %v434, %v433
  %v436 = vmul.f32 0.5, %v435
  %v437 = vsub.f32 1.5, %v436
  %v438 = vmul.f32 %v433, %v437
  %vm439 = vweird.f32 %v309
  %vm440 = vweird.f32 %v433
  %vm441 = vmor %vm439, %vm440
  %v442 = vsel %vm441, %v433, %v438
  %v443 = vrsqrt.pop %v310
  %v444 = vmul.f32 %v443, %v310
  %v445 = vmul.f32 %v444, %v443
  %v446 = vmul.f32 0.5, %v445
  %v447 = vsub.f32 1.5, %v446
  %v448 = vmul.f32 %v443, %v447
  %vm449 = vweird.f32 %v310
  %vm450 = vweird.f32 %v443
  %vm451 = vmor %vm449, %vm450
  %v452 = vsel %vm451, %v443, %v448
  %v453 = vrsqrt.pop %v311
  %v454 = vmul.f32 %v453, %v311
  %v455 = vmul.f32 %v454, %v453
  %v456 = vmul.f32 0.5, %v455
  %v457 = vsub.f32 1.5, %v456
  %v458 = vmul.f32 %v453, %v457
  %vm459 = vweird.f32 %v311
  %vm460 = vweird.f32 %v453
  %vm461 = vmor %vm459, %vm460
  %v462 = vsel %vm461, %v453, %v458
  %v463 = vrsqrt.pop %v312
  %v464 = vmul.f32 %v463, %v312
  %v465 = vmul.f32 %v464, %v463
  %v466 = vmul.f32 0.5, %v465
  %v467 = vsub.f32 1.5, %v466
  %v468 = vmul.f32 %v463, %v467
  %vm469 = vweird.f32 %v312
  %vm470 = vweird.f32 %v463
  %vm471 = vmor %vm469, %vm470
  %v472 = vsel %vm471, %v463, %v468
  %v473 = vmul.f32 %v217, %v322
  %v474 = vmul.f32 %v218, %v332
  %v475 = vmul.f32 %v219, %v342
  %v476 = vmul.f32 %v220, %v352
  %v477 = vmul.f32 %v221, %v362
  %v478 = vmul.f32 %v222, %v372
  %v479 = vmul.f32 %v223, %v382
  %v480 = vmul.f32 %v224, %v392
  %v481 = vmul.f32 %v225, %v402
  %v482 = vmul.f32 %v226, %v412
  %v483 = vmul.f32 %v227, %v422
  %v484 = vmul.f32 %v228, %v432
  %v485 = vmul.f32 %v229, %v442
  %v486 = vmul.f32 %v230, %v452
  %v487 = vmul.f32 %v231, %v462
  %v488 = vmul.f32 %v232, %v472
  %v489 = vld [vmem:[%s3] sm:$0x1]
  %v491 = vperm.slane %v489, 0
  %v493 = vmul.f32 %v473, %v491
  %v494 = vmul.f32 %v474, %v491
  %v495 = vmul.f32 %v475, %v491
  %v496 = vmul.f32 %v476, %v491
  %v497 = vmul.f32 %v477, %v491
  %v498 = vmul.f32 %v478, %v491
  %v499 = vmul.f32 %v479, %v491
  %v500 = vmul.f32 %v480, %v491
  %v501 = vmul.f32 %v481, %v491
  %v502 = vmul.f32 %v482, %v491
  %v503 = vmul.f32 %v483, %v491
  %v504 = vmul.f32 %v484, %v491
  %v505 = vmul.f32 %v485, %v491
  %v506 = vmul.f32 %v486, %v491
  %v507 = vmul.f32 %v487, %v491
  %v508 = vmul.f32 %v488, %v491
  %v509 = vld [vmem:[%s4] sm:$0x1]
  %v511 = vperm.slane %v509, 0
  %v513 = vadd.f32 %v493, %v511
  %v514 = vadd.f32 %v494, %v511
  %v515 = vadd.f32 %v495, %v511
  %v516 = vadd.f32 %v496, %v511
  %v517 = vadd.f32 %v497, %v511
  %v518 = vadd.f32 %v498, %v511
  %v519 = vadd.f32 %v499, %v511
  %v520 = vadd.f32 %v500, %v511
  %v521 = vadd.f32 %v501, %v511
  %v522 = vadd.f32 %v502, %v511
  %v523 = vadd.f32 %v503, %v511
  %v524 = vadd.f32 %v504, %v511
  %v525 = vadd.f32 %v505, %v511
  %v526 = vadd.f32 %v506, %v511
  %v527 = vadd.f32 %v507, %v511
  %v528 = vadd.f32 %v508, %v511
  %v529 = vpack.c.bf16 %v513, %v513
  %v530 = vpack.c.bf16 %v514, %v514
  %v531 = vpack.c.bf16 %v515, %v515
  %v532 = vpack.c.bf16 %v516, %v516
  %v533 = vpack.c.bf16 %v517, %v517
  %v534 = vpack.c.bf16 %v518, %v518
  %v535 = vpack.c.bf16 %v519, %v519
  %v536 = vpack.c.bf16 %v520, %v520
  %v537 = vpack.c.bf16 %v521, %v521
  %v538 = vpack.c.bf16 %v522, %v522
  %v539 = vpack.c.bf16 %v523, %v523
  %v540 = vpack.c.bf16 %v524, %v524
  %v541 = vpack.c.bf16 %v525, %v525
  %v542 = vpack.c.bf16 %v526, %v526
  %v543 = vpack.c.bf16 %v527, %v527
  %v544 = vpack.c.bf16 %v528, %v528
  %545 = vst [vmem:[%s5] sm:$0xf] %v529
  %546 = vst [vmem:[%s5 + $0x4] sm:$0xf] %v530
  %547 = vst [vmem:[%s5 + $0x8] sm:$0xf] %v531
  %548 = vst [vmem:[%s5 + $0xc] sm:$0xf] %v532
  %549 = vst [vmem:[%s5 + $0x10] sm:$0xf] %v533
  %550 = vst [vmem:[%s5 + $0x14] sm:$0xf] %v534
  %551 = vst [vmem:[%s5 + $0x18] sm:$0xf] %v535
  %552 = vst [vmem:[%s5 + $0x1c] sm:$0xf] %v536
  %553 = vst [vmem:[%s5 + $0x20] sm:$0xf] %v537
  %554 = vst [vmem:[%s5 + $0x24] sm:$0xf] %v538
  %555 = vst [vmem:[%s5 + $0x28] sm:$0xf] %v539
  %556 = vst [vmem:[%s5 + $0x2c] sm:$0xf] %v540
  %557 = vst [vmem:[%s5 + $0x30] sm:$0xf] %v541
  %558 = vst [vmem:[%s5 + $0x34] sm:$0xf] %v542
  %559 = vst [vmem:[%s5 + $0x38] sm:$0xf] %v543
  %560 = vst [vmem:[%s5 + $0x3c] sm:$0xf] %v544
  // Predicated region
  $region22: #{_lambda_.27} parent=0 // pred_check
    _
  $region23: #{_lambda_.27} parent=0 // pred_check_branch
    %562 = sbr.rel (0) target = $region25
  $region24: #{_lambda_.27} parent=0 // pred_region
    _
  $region25: #{_lambda_.27} parent=0 // pred_fallthru
    _
  // Predicated region
  $region26: #{_lambda_.27} parent=0 // pred_check
    _
  $region27: #{_lambda_.27} parent=0 // pred_check_branch
    %564 = sbr.rel (0) target = $region29
  $region28: #{_lambda_.27} parent=0 // pred_region
    _
  $region29: #{_lambda_.27} parent=0 // pred_fallthru
    _

// kernel: _lambda_.32
$region0: #{_lambda_.32}
  #allocation0 [shape = 'u32[]', space=smem, size = 0x4, offset = 0x4, fixed_abs, tag = 'smem constant byte address 0x4 - core index']
  #allocation1 [shape = 'u32[72,128]{1,0:T(1,128)}', space=vmem, size = 0x9000, scoped, tag = 'internal scratch']
  %s0 = inlined_call_operand.vmem [shape: f32[2,4,8,32], index: 0, kind: input, shape index: {}]
  %s1 = inlined_call_operand.vmem [shape: f32[2,4,32,8], index: 1, kind: input, shape index: {}]
  %s2 = inlined_call_operand.vmem [shape: f32[2,4,8,40], index: 2, kind: input, shape index: {}]
  %s3 = inlined_call_operand.vmem [shape: bf16[2,8,8,128], index: 3, kind: input, shape index: {}]
  %s4 = inlined_call_operand.vmem [shape: f32[2,4,8,8], index: 4, kind: input, shape index: {}]
  %s5 = inlined_call_operand.vmem [shape: f32[2,8,160], index: 5, kind: output, shape index: {0}]
  %s6 = inlined_call_operand.vmem [shape: f32[2,8,512], index: 6, kind: output, shape index: {1}]
  %7 = xla_tuple %s5, %s6
  %s8 = sld [smem:[#allocation0]]
  $region61: #{_lambda_.32} parent=0
    _
  %s10 = ssub.s32 1, %s8
  %s11 = scalar_select 0, %s10, %s8
  loop: start=0, step=1, limit=4
  $region2: #{_lambda_.32} parent=0 // loop_pre_header
    _
  $region3: #{_lambda_.32} parent=0 // loop_header
    %s13 = sphi 0, %s17
    %p14 = scmp.ge.s32.totalorder %s13, 4
    %s20 = sphi 0, %s32
    %s21 = sphi 0, %s28
    %s22 = sphi 0, %s20
    %s23 = sphi 0, %s21
    %s24 = sphi 0, %s22
    %s25 = sphi 0, %s23
    %s37 = sphi 0, %s39
    %s40 = sphi 0, %s37
    %s41 = sphi 0, %s40
    %s57 = sphi 0, %s41
    %s63 = sphi 0, %s65
    %s66 = sphi 0, %s63
    %s67 = sphi 0, %s66
    %s83 = sphi 0, %s67
    %s89 = sphi 0, %s91
    %s92 = sphi 0, %s89
    %s93 = sphi 0, %s92
    %s109 = sphi 0, %s93
    %s117 = sphi 0, %s119
    %s120 = sphi 0, %s117
    %s121 = sphi 0, %s120
    %s137 = sphi 0, %s121
    %s145 = sphi 0, %s147
    %s148 = sphi 0, %s145
    %s149 = sphi 0, %s148
    %s165 = sphi 0, %s149
    %s173 = sphi 0, %s175
    %s176 = sphi 0, %s173
    %s177 = sphi 0, %s176
    %s193 = sphi 0, %s177
    %s201 = sphi 0, %s203
    %s204 = sphi 0, %s201
    %s205 = sphi 0, %s204
    %s221 = sphi 0, %s205
  $region4: #{_lambda_.32} parent=0 // loop_header_branch
    %16 = sbr.rel (%p14) target = $region8
  $region5: #{_lambda_.32} parent=0 // loop_body
    %s18 = ssub.s32 %s13, 1
    %s19 = ssub.s32 %s13, 2
    %s26 = sadd.s32 1, %s21
    %p27 = scmp.ge.s32.totalorder %s26, 1
    %s28 = scalar_select %p27, 0, %s26
    %s29 = sadd.s32 1, %s20
    %s30 = scalar_select %p27, %s29, %s20
    %p31 = scmp.ge.s32.totalorder %s30, 2
    %s32 = scalar_select %p31, 0, %s30
    %s33 = ssub.s32 %s20, %s32
    %s34 = ssub.s32 %s21, %s28
    %s35 = sor.u32 %s33, %s34
    %p36 = scmp.eq.s32.totalorder %s35, 0
    %s38 = sadd.s32 %s37, 1
    %s39 = scalar_select %p36, %s37, %s38
    %p42 = pneg %p36
    %p43 = scmp.eq.s32.totalorder %s13, 1
    %p44 = por %p42, %p43
    %p45 = scmp.ne.s32.totalorder %s37, %s40
    %p46 = scmp.eq.s32.totalorder %s13, 0
    %p47 = por %p45, %p46
    %p48 = scmp.ne.s32.totalorder %s37, %s40
    %p49 = scmp.eq.s32.totalorder %s18, 1
    %p50 = por %p48, %p49
    %p51 = scmp.ne.s32.totalorder %s40, %s41
    %p52 = scmp.eq.s32.totalorder %s18, 0
    %p53 = por %p51, %p52
    %p54 = scmp.ne.s32.totalorder %s40, %s41
    %p55 = scmp.eq.s32.totalorder %s19, 1
    %p56 = por %p54, %p55
    %p58 = scmp.ne.s32.totalorder %s41, %s57
    %p59 = scmp.eq.s32.totalorder %s19, 0
    %p60 = por %p58, %p59
    %s61 = ssub.s32 %s20, %s32
    %p62 = scmp.eq.s32.totalorder %s61, 0
    %s64 = sadd.s32 %s63, 1
    %s65 = scalar_select %p62, %s63, %s64
    %p68 = pneg %p62
    %p69 = scmp.eq.s32.totalorder %s13, 1
    %p70 = por %p68, %p69
    %p71 = scmp.ne.s32.totalorder %s63, %s66
    %p72 = scmp.eq.s32.totalorder %s13, 0
    %p73 = por %p71, %p72
    %p74 = scmp.ne.s32.totalorder %s63, %s66
    %p75 = scmp.eq.s32.totalorder %s18, 1
    %p76 = por %p74, %p75
    %p77 = scmp.ne.s32.totalorder %s66, %s67
    %p78 = scmp.eq.s32.totalorder %s18, 0
    %p79 = por %p77, %p78
    %p80 = scmp.ne.s32.totalorder %s66, %s67
    %p81 = scmp.eq.s32.totalorder %s19, 1
    %p82 = por %p80, %p81
    %p84 = scmp.ne.s32.totalorder %s67, %s83
    %p85 = scmp.eq.s32.totalorder %s19, 0
    %p86 = por %p84, %p85
    %s87 = ssub.s32 %s20, %s32
    %p88 = scmp.eq.s32.totalorder %s87, 0
    %s90 = sadd.s32 %s89, 1
    %s91 = scalar_select %p88, %s89, %s90
    %p94 = pneg %p88
    %p95 = scmp.eq.s32.totalorder %s13, 1
    %p96 = por %p94, %p95
    %p97 = scmp.ne.s32.totalorder %s89, %s92
    %p98 = scmp.eq.s32.totalorder %s13, 0
    %p99 = por %p97, %p98
    %p100 = scmp.ne.s32.totalorder %s89, %s92
    %p101 = scmp.eq.s32.totalorder %s18, 1
    %p102 = por %p100, %p101
    %p103 = scmp.ne.s32.totalorder %s92, %s93
    %p104 = scmp.eq.s32.totalorder %s18, 0
    %p105 = por %p103, %p104
    %p106 = scmp.ne.s32.totalorder %s92, %s93
    %p107 = scmp.eq.s32.totalorder %s19, 1
    %p108 = por %p106, %p107
    %p110 = scmp.ne.s32.totalorder %s93, %s109
    %p111 = scmp.eq.s32.totalorder %s19, 0
    %p112 = por %p110, %p111
    %s113 = ssub.s32 %s20, %s32
    %s114 = ssub.s32 %s21, %s28
    %s115 = sor.u32 %s113, %s114
    %p116 = scmp.eq.s32.totalorder %s115, 0
    %s118 = sadd.s32 %s117, 1
    %s119 = scalar_select %p116, %s117, %s118
    %p122 = pneg %p116
    %p123 = scmp.eq.s32.totalorder %s13, 1
    %p124 = por %p122, %p123
    %p125 = scmp.ne.s32.totalorder %s117, %s120
    %p126 = scmp.eq.s32.totalorder %s13, 0
    %p127 = por %p125, %p126
    %p128 = scmp.ne.s32.totalorder %s117, %s120
    %p129 = scmp.eq.s32.totalorder %s18, 1
    %p130 = por %p128, %p129
    %p131 = scmp.ne.s32.totalorder %s120, %s121
    %p132 = scmp.eq.s32.totalorder %s18, 0
    %p133 = por %p131, %p132
    %p134 = scmp.ne.s32.totalorder %s120, %s121
    %p135 = scmp.eq.s32.totalorder %s19, 1
    %p136 = por %p134, %p135
    %p138 = scmp.ne.s32.totalorder %s121, %s137
    %p139 = scmp.eq.s32.totalorder %s19, 0
    %p140 = por %p138, %p139
    %s141 = ssub.s32 %s20, %s32
    %s142 = ssub.s32 %s21, %s28
    %s143 = sor.u32 %s141, %s142
    %p144 = scmp.eq.s32.totalorder %s143, 0
    %s146 = sadd.s32 %s145, 1
    %s147 = scalar_select %p144, %s145, %s146
    %p150 = pneg %p144
    %p151 = scmp.eq.s32.totalorder %s13, 1
    %p152 = por %p150, %p151
    %p153 = scmp.ne.s32.totalorder %s145, %s148
    %p154 = scmp.eq.s32.totalorder %s13, 0
    %p155 = por %p153, %p154
    %p156 = scmp.ne.s32.totalorder %s145, %s148
    %p157 = scmp.eq.s32.totalorder %s18, 1
    %p158 = por %p156, %p157
    %p159 = scmp.ne.s32.totalorder %s148, %s149
    %p160 = scmp.eq.s32.totalorder %s18, 0
    %p161 = por %p159, %p160
    %p162 = scmp.ne.s32.totalorder %s148, %s149
    %p163 = scmp.eq.s32.totalorder %s19, 1
    %p164 = por %p162, %p163
    %p166 = scmp.ne.s32.totalorder %s149, %s165
    %p167 = scmp.eq.s32.totalorder %s19, 0
    %p168 = por %p166, %p167
    %s169 = ssub.s32 %s20, %s32
    %s170 = ssub.s32 %s21, %s28
    %s171 = sor.u32 %s169, %s170
    %p172 = scmp.eq.s32.totalorder %s171, 0
    %s174 = sadd.s32 %s173, 1
    %s175 = scalar_select %p172, %s173, %s174
    %p178 = pneg %p172
    %p179 = scmp.eq.s32.totalorder %s13, 1
    %p180 = por %p178, %p179
    %p181 = scmp.ne.s32.totalorder %s173, %s176
    %p182 = scmp.eq.s32.totalorder %s13, 0
    %p183 = por %p181, %p182
    %p184 = scmp.ne.s32.totalorder %s173, %s176
    %p185 = scmp.eq.s32.totalorder %s18, 1
    %p186 = por %p184, %p185
    %p187 = scmp.ne.s32.totalorder %s176, %s177
    %p188 = scmp.eq.s32.totalorder %s18, 0
    %p189 = por %p187, %p188
    %p190 = scmp.ne.s32.totalorder %s176, %s177
    %p191 = scmp.eq.s32.totalorder %s19, 1
    %p192 = por %p190, %p191
    %p194 = scmp.ne.s32.totalorder %s177, %s193
    %p195 = scmp.eq.s32.totalorder %s19, 0
    %p196 = por %p194, %p195
    %s197 = ssub.s32 %s20, %s32
    %s198 = ssub.s32 %s21, %s28
    %s199 = sor.u32 %s197, %s198
    %p200 = scmp.eq.s32.totalorder %s199, 0
    %s202 = sadd.s32 %s201, 1
    %s203 = scalar_select %p200, %s201, %s202
    %p206 = pneg %p200
    %p207 = scmp.eq.s32.totalorder %s13, 1
    %p208 = por %p206, %p207
    %p209 = scmp.ne.s32.totalorder %s201, %s204
    %p210 = scmp.eq.s32.totalorder %s13, 0
    %p211 = por %p209, %p210
    %p212 = scmp.ne.s32.totalorder %s201, %s204
    %p213 = scmp.eq.s32.totalorder %s18, 1
    %p214 = por %p212, %p213
    %p215 = scmp.ne.s32.totalorder %s204, %s205
    %p216 = scmp.eq.s32.totalorder %s18, 0
    %p217 = por %p215, %p216
    %p218 = scmp.ne.s32.totalorder %s204, %s205
    %p219 = scmp.eq.s32.totalorder %s19, 1
    %p220 = por %p218, %p219
    %p222 = scmp.ne.s32.totalorder %s205, %s221
    %p223 = scmp.eq.s32.totalorder %s19, 0
    %p224 = por %p222, %p223
    %p225 = scmp.le.s32.totalorder 1, %s13
    %p226 = scmp.lt.s32.totalorder %s13, 3
    %p227 = pnand %p225, %p226
    %p228 = pneg %p227
    // Predicated region
    $region9: #{_lambda_.32} parent=5 // pred_check
      _
    $region10: #{_lambda_.32} parent=5 // pred_check_branch
      %230 = sbr.rel (%p227) target = $region12
    $region11: #{_lambda_.32} parent=5 // pred_region
      %s231 = ssub.s32 %s13, 1
    $region12: #{_lambda_.32} parent=5 // pred_fallthru
      _
    %p232 = scmp.lt.s32.totalorder %s13, 2
    // Predicated region
    $region13: #{_lambda_.32} parent=5 // pred_check
      %p233 = pneg %p232
    $region14: #{_lambda_.32} parent=5 // pred_check_branch
      %235 = sbr.rel (%p233) target = $region16
    $region15: #{_lambda_.32} parent=5 // pred_region
      // Predicated region
      $region17: #{_lambda_.32} parent=15 // pred_check
        %p236 = pneg %p47
      $region18: #{_lambda_.32} parent=15 // pred_check_branch
        %238 = sbr.rel (%p236) target = $region20
      $region19: #{_lambda_.32} parent=15 // pred_region
        %p239 = scmp.lt.s32.totalorder %s20, 1
        %s240 = scalar_select %p239, %s20, 1
        %p241 = scmp.lt.s32.totalorder %s21, 0
        %s242 = scalar_select %p241, %s21, 0
        %s243 = smul.addr %s240, 4
        %s244 = sadd.s32 %s242, %s243
        %s245 = smul.addr %s244, 8
        %s246 = scalar_lea.vmem %s0, %s245
      $region20: #{_lambda_.32} parent=15 // pred_fallthru
        _
      // Predicated region
      $region21: #{_lambda_.32} parent=15 // pred_check
        %p247 = pneg %p73
      $region22: #{_lambda_.32} parent=15 // pred_check_branch
        %249 = sbr.rel (%p247) target = $region24
      $region23: #{_lambda_.32} parent=15 // pred_region
        %p250 = scmp.lt.s32.totalorder %s20, 1
        %s251 = scalar_select %p250, %s20, 1
        %s252 = smul.addr %s251, 16
        %s253 = smul.addr %s252, 8
        %s254 = scalar_lea.vmem %s1, %s253
      $region24: #{_lambda_.32} parent=15 // pred_fallthru
        _
      // Predicated region
      $region25: #{_lambda_.32} parent=15 // pred_check
        %p255 = pneg %p99
      $region26: #{_lambda_.32} parent=15 // pred_check_branch
        %257 = sbr.rel (%p255) target = $region28
      $region27: #{_lambda_.32} parent=15 // pred_region
        %p258 = scmp.lt.s32.totalorder %s20, 1
        %s259 = scalar_select %p258, %s20, 1
        %s260 = smul.addr %s259, 4
        %s261 = smul.addr %s260, 8
        %s262 = scalar_lea.vmem %s2, %s261
      $region28: #{_lambda_.32} parent=15 // pred_fallthru
        _
      // Predicated region
      $region29: #{_lambda_.32} parent=15 // pred_check
        %p263 = pneg %p127
      $region30: #{_lambda_.32} parent=15 // pred_check_branch
        %265 = sbr.rel (%p263) target = $region32
      $region31: #{_lambda_.32} parent=15 // pred_region
        %s266 = smul.u32 8, %s21
        %p267 = scmp.lt.s32.totalorder %s20, 1
        %s268 = scalar_select %p267, %s20, 1
        %p269 = scmp.lt.s32.totalorder %s266, 7
        %s270 = scalar_select %p269, %s266, 7
        %s271 = smul.addr %s268, 8
        %s272 = sadd.s32 %s270, %s271
        %s273 = smul.addr %s272, 4
        %s274 = scalar_lea.vmem %s3, %s273
        %s275 = smul.u32 8, %s21
      $region32: #{_lambda_.32} parent=15 // pred_fallthru
        _
      // Predicated region
      $region33: #{_lambda_.32} parent=15 // pred_check
        %p276 = pneg %p155
      $region34: #{_lambda_.32} parent=15 // pred_check_branch
        %278 = sbr.rel (%p276) target = $region36
      $region35: #{_lambda_.32} parent=15 // pred_region
        %p279 = scmp.lt.s32.totalorder %s20, 1
        %s280 = scalar_select %p279, %s20, 1
        %p281 = scmp.lt.s32.totalorder %s21, 0
        %s282 = scalar_select %p281, %s21, 0
        %s283 = smul.addr %s280, 4
        %s284 = sadd.s32 %s282, %s283
        %s285 = smul.addr %s284, 8
        %s286 = scalar_lea.vmem %s4, %s285
      $region36: #{_lambda_.32} parent=15 // pred_fallthru
        _
    $region16: #{_lambda_.32} parent=5 // pred_fallthru
      _
    %p287 = scmp.le.s32.totalorder 1, %s13
    %p288 = scmp.lt.s32.totalorder %s13, 3
    %p289 = pnand %p287, %p288
    %p290 = pneg %p289
    // Predicated region
    $region37: #{_lambda_.32} parent=5 // pred_check
      _
    $region38: #{_lambda_.32} parent=5 // pred_check_branch
      %292 = sbr.rel (%p289) target = $region40
    $region39: #{_lambda_.32} parent=5 // pred_region
      %s293 = ssub.s32 %s13, 1
      %p294 = scmp.lt.s32.totalorder %s22, 1
      %s295 = scalar_select %p294, %s22, 1
      %p296 = scmp.lt.s32.totalorder %s23, 0
      %s297 = scalar_select %p296, %s23, 0
      %s298 = smul.addr %s295, 4
      %s299 = sadd.s32 %s297, %s298
      %s300 = smul.addr %s299, 8
      %s301 = scalar_lea.vmem %s0, %s300
      %p302 = pneg %p53
      %p303 = pneg %p50
      %p304 = scmp.lt.s32.totalorder %s22, 1
      %s305 = scalar_select %p304, %s22, 1
      %s306 = smul.addr %s305, 16
      %s307 = smul.addr %s306, 8
      %s308 = scalar_lea.vmem %s1, %s307
      %p309 = pneg %p79
      %p310 = pneg %p76
      %p311 = scmp.lt.s32.totalorder %s22, 1
      %s312 = scalar_select %p311, %s22, 1
      %s313 = smul.addr %s312, 4
      %s314 = smul.addr %s313, 8
      %s315 = scalar_lea.vmem %s2, %s314
      %p316 = pneg %p105
      %p317 = pneg %p102
      %s318 = smul.u32 8, %s23
      %p319 = scmp.lt.s32.totalorder %s22, 1
      %s320 = scalar_select %p319, %s22, 1
      %p321 = scmp.lt.s32.totalorder %s318, 7
      %s322 = scalar_select %p321, %s318, 7
      %s323 = smul.addr %s320, 8
      %s324 = sadd.s32 %s322, %s323
      %s325 = smul.addr %s324, 4
      %s326 = scalar_lea.vmem %s3, %s325
      %p327 = pneg %p133
      %p328 = pneg %p130
      %p329 = scmp.lt.s32.totalorder %s22, 1
      %s330 = scalar_select %p329, %s22, 1
      %p331 = scmp.lt.s32.totalorder %s23, 0
      %s332 = scalar_select %p331, %s23, 0
      %s333 = smul.addr %s330, 4
      %s334 = sadd.s32 %s332, %s333
      %s335 = smul.addr %s334, 8
      %s336 = scalar_lea.vmem %s4, %s335
      %p337 = pneg %p161
      %p338 = pneg %p158
      %p339 = pneg %p189
      %p340 = pneg %p186
      %p341 = scmp.lt.s32.totalorder %s22, 1
      %s342 = scalar_select %p341, %s22, 1
      %p343 = scmp.lt.s32.totalorder %s23, 0
      %s344 = scalar_select %p343, %s23, 0
      %s345 = smul.addr %s344, 2
      %s346 = smul.addr %s342, 2
      %s347 = sadd.s32 %s345, %s346
      %s348 = smul.addr %s347, 8
      %s349 = scalar_lea.vmem %s5, %s348
      %p350 = pneg %p217
      %p351 = pneg %p214
      %p352 = scmp.lt.s32.totalorder %s22, 1
      %s353 = scalar_select %p352, %s22, 1
      %p354 = scmp.lt.s32.totalorder %s23, 0
      %s355 = scalar_select %p354, %s23, 0
      %s356 = smul.addr %s355, 4
      %s357 = smul.addr %s353, 4
      %s358 = sadd.s32 %s356, %s357
      %s359 = smul.addr %s358, 8
      %s360 = scalar_lea.vmem %s6, %s359
      %p361 = scmp.lt.s32.totalorder %s22, 1
      %s362 = scalar_select %p361, %s22, 1
      %p363 = scmp.lt.s32.totalorder %s23, 0
      %s364 = scalar_select %p363, %s23, 0
      %s365 = smul.addr %s362, 4
      %s366 = sadd.s32 %s364, %s365
      %s367 = smul.addr %s366, 8
      %s368 = scalar_lea.vmem %s0, %s367
      %p369 = scmp.lt.s32.totalorder %s22, 1
      %s370 = scalar_select %p369, %s22, 1
      %s371 = smul.addr %s370, 16
      %s372 = smul.addr %s371, 8
      %s373 = scalar_lea.vmem %s1, %s372
      %p374 = scmp.lt.s32.totalorder %s22, 1
      %s375 = scalar_select %p374, %s22, 1
      %s376 = smul.addr %s375, 4
      %s377 = smul.addr %s376, 8
      %s378 = scalar_lea.vmem %s2, %s377
      %s379 = smul.u32 8, %s23
      %p380 = scmp.lt.s32.totalorder %s22, 1
      %s381 = scalar_select %p380, %s22, 1
      %p382 = scmp.lt.s32.totalorder %s379, 7
      %s383 = scalar_select %p382, %s379, 7
      %s384 = smul.addr %s381, 8
      %s385 = sadd.s32 %s383, %s384
      %s386 = smul.addr %s385, 4
      %s387 = scalar_lea.vmem %s3, %s386
      %s388 = smul.u32 8, %s23
      %p389 = scmp.lt.s32.totalorder %s22, 1
      %s390 = scalar_select %p389, %s22, 1
      %p391 = scmp.lt.s32.totalorder %s23, 0
      %s392 = scalar_select %p391, %s23, 0
      %s393 = smul.addr %s390, 4
      %s394 = sadd.s32 %s392, %s393
      %s395 = smul.addr %s394, 8
      %s396 = scalar_lea.vmem %s4, %s395
      %p397 = scmp.lt.s32.totalorder %s22, 1
      %s398 = scalar_select %p397, %s22, 1
      %p399 = scmp.lt.s32.totalorder %s23, 0
      %s400 = scalar_select %p399, %s23, 0
      %s401 = smul.addr %s400, 2
      %s402 = smul.addr %s398, 2
      %s403 = sadd.s32 %s401, %s402
      %s404 = smul.addr %s403, 8
      %s405 = scalar_lea.vmem %s5, %s404
      %p406 = scmp.lt.s32.totalorder %s22, 1
      %s407 = scalar_select %p406, %s22, 1
      %p408 = scmp.lt.s32.totalorder %s23, 0
      %s409 = scalar_select %p408, %s23, 0
      %s410 = smul.addr %s409, 4
      %s411 = smul.addr %s407, 4
      %s412 = sadd.s32 %s410, %s411
      %s413 = smul.addr %s412, 8
      %s414 = scalar_lea.vmem %s6, %s413
      %v416 = vld [vmem:[%s387] sm:$0xf]
      %v417 = vld [vmem:[%s387 + $0x4] sm:$0xf]
      %v418 = vld [vmem:[%s387 + $0x8] sm:$0xf]
      %v419 = vld [vmem:[%s387 + $0xc] sm:$0xf]
      %v420 = vld [vmem:[%s387 + $0x10] sm:$0xf]
      %v421 = vld [vmem:[%s387 + $0x14] sm:$0xf]
      %v422 = vld [vmem:[%s387 + $0x18] sm:$0xf]
      %v423 = vld [vmem:[%s387 + $0x1c] sm:$0xf]
      %v424 = vld [vmem:[%s368] sm:$0xff]
      %v425 = vld [vmem:[%s373] sm:$0xff]
      %v426 = vld [vmem:[%s373 + $0x8] sm:$0xff]
      %v427 = vld [vmem:[%s373 + $0x10] sm:$0xff]
      %v428 = vld [vmem:[%s373 + $0x18] sm:$0xff]
      %v429 = vld [vmem:[%s396] sm:$0xff]
      %vm430 = vcmask 261120
      %v432 = vsel %vm430, %v424, 0
      %434 = vmatpush.msra.mxu0 0.0
      %435 = vmatpush.msra.mxu0 0.0
      %436 = vmatpush.msra.mxu0 0.0
      %437 = vmatpush.msra.mxu0 0.0
      %438 = vmatpush.msra.mxu0 0.0
      %439 = vmatpush.msra.mxu0 0.0
      %440 = vmatpush.msra.mxu0 0.0
      %441 = vmatpush.msra.mxu0 0.0
      %442 = vmatpush.msra.mxu0 0.0
      %443 = vmatpush.msra.mxu0 0.0
      %444 = vmatpush.msra.mxu0 0.0
      %445 = vmatpush.msra.mxu0 0.0
      %446 = vmatpush.msra.mxu0 %v428
      %447 = vmatpush.msra.mxu0 %v427
      %448 = vmatpush.msra.mxu0 %v426
      %449 = vmatpush.msra.mxu0 %v425
      %450 = vmatmul.f32.gmra.mxu0 %v432
      %v451 = vpop.f32.mrf.mxu0
      %v452 = vadd.f32 %v429, %v451
      %453 = vdwg.mxu0
      %vm454 = vcmask 64512
      %v455 = vsel %vm454, %v452, -inf
      %456 = vmax.xlane.f32.xlu0 %v455
      %v457 = vpop.xlane.xlu0 %456
      %v458 = vsub.f32 %v452, %v457
      %v459 = vmul.f32 %v458, 1.442695
      %v460 = vpow.pop %v459
      %v461 = vsel %vm454, %v460, 0.0
      %462 = vadd.xlane.f32.xlu0 %v461
      %v463 = vpop.xlane.xlu0 %462
      %v464 = vrcp.pop %v463
      %v465 = vmul.f32 %v463, %v464
      %v466 = vsub.f32 1.0, %v465
      %v467 = vmul.f32 %v464, %v466
      %v468 = vadd.f32 %v464, %v467
      %vm469 = vweird.f32 %v463
      %vm470 = vweird.f32 %v464
      %vm471 = vmor %vm469, %vm470
      %v472 = vsel %vm471, %v464, %v468
      %v473 = vand.u32 2147483647, %v463
      %vm474 = vcmp.eq.f32.partialorder %v473, 8.507059e+37
      %v475 = vand.u32 %v463, 2147483648
      %v476 = vor.u32 1.1754944e-38, %v475
      %v477 = vsel %vm474, %v476, %v472
      %v478 = vmul.f32 %v460, %v477
      %v479 = vld [vmem:[%s378] sm:$0xff]
      %v481 = vsel %vm454, %v478, 0
      %483 = vmatpush.msra.mxu0 0.0
      %484 = vmatpush.msra.mxu0 0.0
      %485 = vmatpush.msra.mxu0 0.0
      %486 = vmatpush.msra.mxu0 0.0
      %487 = vmatpush.msra.mxu0 0.0
      %488 = vmatpush.msra.mxu0 0.0
      %489 = vmatpush.msra.mxu0 0.0
      %490 = vmatpush.msra.mxu0 0.0
      %491 = vmatpush.msra.mxu0 0.0
      %492 = vmatpush.msra.mxu0 0.0
      %493 = vmatpush.msra.mxu0 0.0
      %494 = vmatpush.msra.mxu0 0.0
      %495 = vmatpush.msra.mxu0 0.0
      %496 = vmatpush.msra.mxu0 0.0
      %497 = vmatpush.msra.mxu0 0.0
      %498 = vmatpush.msra.mxu0 %v479
      %499 = vmatmul.f32.gmra.mxu0 %v481
      %v500 = vpop.f32.mrf.mxu0
      %v501 = vadd.f32 0.0, %v500
      %502 = vdwg.mxu0
      %v503 = vpack.c.bf16 %v478, %v478
      %s504 = scalar_lea.vmem %s368, 8
      %v505 = vld [vmem:[%s504] sm:$0xff]
      %s506 = scalar_lea.vmem %s373, 32
      %v507 = vld [vmem:[%s506] sm:$0xff]
      %v508 = vld [vmem:[%s506 + $0x8] sm:$0xff]
      %v509 = vld [vmem:[%s506 + $0x10] sm:$0xff]
      %v510 = vld [vmem:[%s506 + $0x18] sm:$0xff]
      %s511 = scalar_lea.vmem %s396, 8
      %v512 = vld [vmem:[%s511] sm:$0xff]
      %v514 = vsel %vm430, %v505, 0
      %516 = vmatpush.msra.mxu0 0.0
      %517 = vmatpush.msra.mxu0 0.0
      %518 = vmatpush.msra.mxu0 0.0
      %519 = vmatpush.msra.mxu0 0.0
      %520 = vmatpush.msra.mxu0 0.0
      %521 = vmatpush.msra.mxu0 0.0
      %522 = vmatpush.msra.mxu0 0.0
      %523 = vmatpush.msra.mxu0 0.0
      %524 = vmatpush.msra.mxu0 0.0
      %525 = vmatpush.msra.mxu0 0.0
      %526 = vmatpush.msra.mxu0 0.0
      %527 = vmatpush.msra.mxu0 0.0
      %528 = vmatpush.msra.mxu0 %v510
      %529 = vmatpush.msra.mxu0 %v509
      %530 = vmatpush.msra.mxu0 %v508
      %531 = vmatpush.msra.mxu0 %v507
      %532 = vmatmul.f32.gmra.mxu0 %v514
      %v533 = vpop.f32.mrf.mxu0
      %v534 = vadd.f32 %v512, %v533
      %535 = vdwg.mxu0
      %v536 = vsel %vm454, %v534, -inf
      %537 = vmax.xlane.f32.xlu0 %v536
      %v538 = vpop.xlane.xlu0 %537
      %v539 = vsub.f32 %v534, %v538
      %v540 = vmul.f32 %v539, 1.442695
      %v541 = vpow.pop %v540
      %v542 = vsel %vm454, %v541, 0.0
      %543 = vadd.xlane.f32.xlu0 %v542
      %v544 = vpop.xlane.xlu0 %543
      %v545 = vrcp.pop %v544
      %v546 = vmul.f32 %v544, %v545
      %v547 = vsub.f32 1.0, %v546
      %v548 = vmul.f32 %v545, %v547
      %v549 = vadd.f32 %v545, %v548
      %vm550 = vweird.f32 %v544
      %vm551 = vweird.f32 %v545
      %vm552 = vmor %vm550, %vm551
      %v553 = vsel %vm552, %v545, %v549
      %v554 = vand.u32 2147483647, %v544
      %vm555 = vcmp.eq.f32.partialorder %v554, 8.507059e+37
      %v556 = vand.u32 %v544, 2147483648
      %v557 = vor.u32 1.1754944e-38, %v556
      %v558 = vsel %vm555, %v557, %v553
      %v559 = vmul.f32 %v541, %v558
      %s560 = scalar_lea.vmem %s378, 8
      %v561 = vld [vmem:[%s560] sm:$0xff]
      %v563 = vsel %vm454, %v559, 0
      %565 = vmatpush.msra.mxu0 0.0
      %566 = vmatpush.msra.mxu0 0.0
      %567 = vmatpush.msra.mxu0 0.0
      %568 = vmatpush.msra.mxu0 0.0
      %569 = vmatpush.msra.mxu0 0.0
      %570 = vmatpush.msra.mxu0 0.0
      %571 = vmatpush.msra.mxu0 0.0
      %572 = vmatpush.msra.mxu0 0.0
      %573 = vmatpush.msra.mxu0 0.0
      %574 = vmatpush.msra.mxu0 0.0
      %575 = vmatpush.msra.mxu0 0.0
      %576 = vmatpush.msra.mxu0 0.0
      %577 = vmatpush.msra.mxu0 0.0
      %578 = vmatpush.msra.mxu0 0.0
      %579 = vmatpush.msra.mxu0 0.0
      %580 = vmatpush.msra.mxu0 %v561
      %581 = vmatmul.f32.gmra.mxu0 %v563
      %v582 = vpop.f32.mrf.mxu0
      %v583 = vadd.f32 0.0, %v582
      %584 = vdwg.mxu0
      %v585 = vpack.c.bf16 %v559, %v559
      %s586 = scalar_lea.vmem %s368, 16
      %v587 = vld [vmem:[%s586] sm:$0xff]
      %s588 = scalar_lea.vmem %s373, 64
      %v589 = vld [vmem:[%s588] sm:$0xff]
      %v590 = vld [vmem:[%s588 + $0x8] sm:$0xff]
      %v591 = vld [vmem:[%s588 + $0x10] sm:$0xff]
      %v592 = vld [vmem:[%s588 + $0x18] sm:$0xff]
      %s593 = scalar_lea.vmem %s396, 16
      %v594 = vld [vmem:[%s593] sm:$0xff]
      %v596 = vsel %vm430, %v587, 0
      %598 = vmatpush.msra.mxu0 0.0
      %599 = vmatpush.msra.mxu0 0.0
      %600 = vmatpush.msra.mxu0 0.0
      %601 = vmatpush.msra.mxu0 0.0
      %602 = vmatpush.msra.mxu0 0.0
      %603 = vmatpush.msra.mxu0 0.0
      %604 = vmatpush.msra.mxu0 0.0
      %605 = vmatpush.msra.mxu0 0.0
      %606 = vmatpush.msra.mxu0 0.0
      %607 = vmatpush.msra.mxu0 0.0
      %608 = vmatpush.msra.mxu0 0.0
      %609 = vmatpush.msra.mxu0 0.0
      %610 = vmatpush.msra.mxu0 %v592
      %611 = vmatpush.msra.mxu0 %v591
      %612 = vmatpush.msra.mxu0 %v590
      %613 = vmatpush.msra.mxu0 %v589
      %614 = vmatmul.f32.gmra.mxu0 %v596
      %v615 = vpop.f32.mrf.mxu0
      %v616 = vadd.f32 %v594, %v615
      %617 = vdwg.mxu0
      %v618 = vsel %vm454, %v616, -inf
      %619 = vmax.xlane.f32.xlu0 %v618
      %v620 = vpop.xlane.xlu0 %619
      %v621 = vsub.f32 %v616, %v620
      %v622 = vmul.f32 %v621, 1.442695
      %v623 = vpow.pop %v622
      %v624 = vsel %vm454, %v623, 0.0
      %625 = vadd.xlane.f32.xlu0 %v624
      %v626 = vpop.xlane.xlu0 %625
      %v627 = vrcp.pop %v626
      %v628 = vmul.f32 %v626, %v627
      %v629 = vsub.f32 1.0, %v628
      %v630 = vmul.f32 %v627, %v629
      %v631 = vadd.f32 %v627, %v630
      %vm632 = vweird.f32 %v626
      %vm633 = vweird.f32 %v627
      %vm634 = vmor %vm632, %vm633
      %v635 = vsel %vm634, %v627, %v631
      %v636 = vand.u32 2147483647, %v626
      %vm637 = vcmp.eq.f32.partialorder %v636, 8.507059e+37
      %v638 = vand.u32 %v626, 2147483648
      %v639 = vor.u32 1.1754944e-38, %v638
      %v640 = vsel %vm637, %v639, %v635
      %v641 = vmul.f32 %v623, %v640
      %s642 = scalar_lea.vmem %s378, 16
      %v643 = vld [vmem:[%s642] sm:$0xff]
      %v645 = vsel %vm454, %v641, 0
      %647 = vmatpush.msra.mxu0 0.0
      %648 = vmatpush.msra.mxu0 0.0
      %649 = vmatpush.msra.mxu0 0.0
      %650 = vmatpush.msra.mxu0 0.0
      %651 = vmatpush.msra.mxu0 0.0
      %652 = vmatpush.msra.mxu0 0.0
      %653 = vmatpush.msra.mxu0 0.0
      %654 = vmatpush.msra.mxu0 0.0
      %655 = vmatpush.msra.mxu0 0.0
      %656 = vmatpush.msra.mxu0 0.0
      %657 = vmatpush.msra.mxu0 0.0
      %658 = vmatpush.msra.mxu0 0.0
      %659 = vmatpush.msra.mxu0 0.0
      %660 = vmatpush.msra.mxu0 0.0
      %661 = vmatpush.msra.mxu0 0.0
      %662 = vmatpush.msra.mxu0 %v643
      %663 = vmatmul.f32.gmra.mxu0 %v645
      %v664 = vpop.f32.mrf.mxu0
      %v665 = vadd.f32 0.0, %v664
      %666 = vdwg.mxu0
      %v667 = vpack.c.bf16 %v641, %v641
      %s668 = scalar_lea.vmem %s368, 24
      %v669 = vld [vmem:[%s668] sm:$0xff]
      %s670 = scalar_lea.vmem %s373, 96
      %v671 = vld [vmem:[%s670] sm:$0xff]
      %v672 = vld [vmem:[%s670 + $0x8] sm:$0xff]
      %v673 = vld [vmem:[%s670 + $0x10] sm:$0xff]
      %v674 = vld [vmem:[%s670 + $0x18] sm:$0xff]
      %s675 = scalar_lea.vmem %s396, 24
      %v676 = vld [vmem:[%s675] sm:$0xff]
      %v678 = vsel %vm430, %v669, 0
      %680 = vmatpush.msra.mxu0 0.0
      %681 = vmatpush.msra.mxu0 0.0
      %682 = vmatpush.msra.mxu0 0.0
      %683 = vmatpush.msra.mxu0 0.0
      %684 = vmatpush.msra.mxu0 0.0
      %685 = vmatpush.msra.mxu0 0.0
      %686 = vmatpush.msra.mxu0 0.0
      %687 = vmatpush.msra.mxu0 0.0
      %688 = vmatpush.msra.mxu0 0.0
      %689 = vmatpush.msra.mxu0 0.0
      %690 = vmatpush.msra.mxu0 0.0
      %691 = vmatpush.msra.mxu0 0.0
      %692 = vmatpush.msra.mxu0 %v674
      %693 = vmatpush.msra.mxu0 %v673
      %694 = vmatpush.msra.mxu0 %v672
      %695 = vmatpush.msra.mxu0 %v671
      %696 = vmatmul.f32.gmra.mxu0 %v678
      %v697 = vpop.f32.mrf.mxu0
      %v698 = vadd.f32 %v676, %v697
      %699 = vdwg.mxu0
      %v700 = vsel %vm454, %v698, -inf
      %701 = vmax.xlane.f32.xlu0 %v700
      %v702 = vpop.xlane.xlu0 %701
      %v703 = vsub.f32 %v698, %v702
      %v704 = vmul.f32 %v703, 1.442695
      %v705 = vpow.pop %v704
      %v706 = vsel %vm454, %v705, 0.0
      %707 = vadd.xlane.f32.xlu0 %v706
      %v708 = vpop.xlane.xlu0 %707
      %v709 = vrcp.pop %v708
      %v710 = vmul.f32 %v708, %v709
      %v711 = vsub.f32 1.0, %v710
      %v712 = vmul.f32 %v709, %v711
      %v713 = vadd.f32 %v709, %v712
      %vm714 = vweird.f32 %v708
      %vm715 = vweird.f32 %v709
      %vm716 = vmor %vm714, %vm715
      %v717 = vsel %vm716, %v709, %v713
      %v718 = vand.u32 2147483647, %v708
      %vm719 = vcmp.eq.f32.partialorder %v718, 8.507059e+37
      %v720 = vand.u32 %v708, 2147483648
      %v721 = vor.u32 1.1754944e-38, %v720
      %v722 = vsel %vm719, %v721, %v717
      %v723 = vmul.f32 %v705, %v722
      %s724 = scalar_lea.vmem %s378, 24
      %v725 = vld [vmem:[%s724] sm:$0xff]
      %v727 = vsel %vm454, %v723, 0
      %729 = vmatpush.msra.mxu0 0.0
      %730 = vmatpush.msra.mxu0 0.0
      %731 = vmatpush.msra.mxu0 0.0
      %732 = vmatpush.msra.mxu0 0.0
      %733 = vmatpush.msra.mxu0 0.0
      %734 = vmatpush.msra.mxu0 0.0
      %735 = vmatpush.msra.mxu0 0.0
      %736 = vmatpush.msra.mxu0 0.0
      %737 = vmatpush.msra.mxu0 0.0
      %738 = vmatpush.msra.mxu0 0.0
      %739 = vmatpush.msra.mxu0 0.0
      %740 = vmatpush.msra.mxu0 0.0
      %741 = vmatpush.msra.mxu0 0.0
      %742 = vmatpush.msra.mxu0 0.0
      %743 = vmatpush.msra.mxu0 0.0
      %744 = vmatpush.msra.mxu0 %v725
      %745 = vmatmul.f32.gmra.mxu0 %v727
      %v746 = vpop.f32.mrf.mxu0
      %v747 = vadd.f32 0.0, %v746
      %748 = vdwg.mxu0
      %v749 = vpack.c.bf16 %v723, %v723
      %751 = vrot.lane.b32.xlu0 %v583, 40
      %v752 = vpop.permute.xlu0 %751
      %755 = vrot.lane.b32.xlu0 %v665, 80
      %v756 = vpop.permute.xlu0 %755
      %759 = vrot.lane.b32.xlu0 %v747, 120
      %v760 = vpop.permute.xlu0 %759
      %vm762 = vcmask 326656
      %v763 = vsel %vm762, %v501, %v752
      %vm764 = vcmask 654336
      %v765 = vsel %vm764, %v763, %v756
      %vm766 = vcmask 982016
      %v767 = vsel %vm766, %v765, %v760
      %768 = vst [vmem:[%s405] sm:$0xff] %v767
      %769 = vst.msk [vmem:[%s405 + $0x8] sm:$0xff] %vm430, %v760
      %v771 = vrot.slane %v503, 3
      %vm772 = vcmask 1040384
      %v775 = vsel %vm772, %v503, %v771
      %vm777 = vcmask 1041409
      %v778 = vsel %vm777, %v503, %v771
      %v780 = vrot.slane %v778, 1
      %vm781 = vcmask 1042434
      %v782 = vsel %vm781, %v503, %v771
      %v784 = vrot.slane %v782, 2
      %vm785 = vcmask 1043459
      %v786 = vsel %vm785, %v503, %v771
      %v788 = vrot.slane %v786, 3
      %v789 = vunpack.i.l.s16 %v775
      %v790 = vunpack.i.h.s16 %v775
      %v791 = vunpack.i.l.s16 %v780
      %v792 = vunpack.i.h.s16 %v780
      %v793 = vunpack.i.l.s16 %v784
      %v794 = vunpack.i.h.s16 %v784
      %v795 = vunpack.i.l.s16 %v788
      %v796 = vunpack.i.h.s16 %v788
      %v798 = vrot.slane %v585, 3
      %v801 = vsel %vm772, %v585, %v798
      %v803 = vsel %vm777, %v585, %v798
      %v805 = vrot.slane %v803, 1
      %v806 = vsel %vm781, %v585, %v798
      %v808 = vrot.slane %v806, 2
      %v809 = vsel %vm785, %v585, %v798
      %v811 = vrot.slane %v809, 3
      %v812 = vunpack.i.l.s16 %v801
      %v813 = vunpack.i.h.s16 %v801
      %v814 = vunpack.i.l.s16 %v805
      %v815 = vunpack.i.h.s16 %v805
      %v816 = vunpack.i.l.s16 %v808
      %v817 = vunpack.i.h.s16 %v808
      %v818 = vunpack.i.l.s16 %v811
      %v819 = vunpack.i.h.s16 %v811
      %v821 = vrot.slane %v667, 3
      %v824 = vsel %vm772, %v667, %v821
      %v826 = vsel %vm777, %v667, %v821
      %v828 = vrot.slane %v826, 1
      %v829 = vsel %vm781, %v667, %v821
      %v831 = vrot.slane %v829, 2
      %v832 = vsel %vm785, %v667, %v821
      %v834 = vrot.slane %v832, 3
      %v835 = vunpack.i.l.s16 %v824
      %v836 = vunpack.i.h.s16 %v824
      %v837 = vunpack.i.l.s16 %v828
      %v838 = vunpack.i.h.s16 %v828
      %v839 = vunpack.i.l.s16 %v831
      %v840 = vunpack.i.h.s16 %v831
      %v841 = vunpack.i.l.s16 %v834
      %v842 = vunpack.i.h.s16 %v834
      %v844 = vrot.slane %v749, 3
      %v847 = vsel %vm772, %v749, %v844
      %v849 = vsel %vm777, %v749, %v844
      %v851 = vrot.slane %v849, 1
      %v852 = vsel %vm781, %v749, %v844
      %v854 = vrot.slane %v852, 2
      %v855 = vsel %vm785, %v749, %v844
      %v857 = vrot.slane %v855, 3
      %v858 = vunpack.i.l.s16 %v847
      %v859 = vunpack.i.h.s16 %v847
      %v860 = vunpack.i.l.s16 %v851
      %v861 = vunpack.i.h.s16 %v851
      %v862 = vunpack.i.l.s16 %v854
      %v863 = vunpack.i.h.s16 %v854
      %v864 = vunpack.i.l.s16 %v857
      %v865 = vunpack.i.h.s16 %v857
      %v866 = vpack.i.b16 %v789, %v789
      %v867 = vpack.i.b16 %v790, %v790
      %v868 = vpack.i.b16 %v791, %v791
      %v869 = vpack.i.b16 %v792, %v792
      %v870 = vpack.i.b16 %v793, %v793
      %v871 = vpack.i.b16 %v794, %v794
      %v872 = vpack.i.b16 %v795, %v795
      %v873 = vpack.i.b16 %v796, %v796
      %v874 = vperm.slane %v866, 0
      %v875 = vperm.slane %v867, 0
      %v876 = vperm.slane %v868, 0
      %v877 = vperm.slane %v869, 0
      %v878 = vperm.slane %v870, 0
      %v879 = vperm.slane %v871, 0
      %v880 = vperm.slane %v872, 0
      %v881 = vperm.slane %v873, 0
      %v890 = vpack.i.b16 %v812, %v812
      %v891 = vpack.i.b16 %v813, %v813
      %v892 = vpack.i.b16 %v814, %v814
      %v893 = vpack.i.b16 %v815, %v815
      %v894 = vpack.i.b16 %v816, %v816
      %v895 = vpack.i.b16 %v817, %v817
      %v896 = vpack.i.b16 %v818, %v818
      %v897 = vpack.i.b16 %v819, %v819
      %v898 = vperm.slane %v890, 0
      %v899 = vperm.slane %v891, 0
      %v900 = vperm.slane %v892, 0
      %v901 = vperm.slane %v893, 0
      %v902 = vperm.slane %v894, 0
      %v903 = vperm.slane %v895, 0
      %v904 = vperm.slane %v896, 0
      %v905 = vperm.slane %v897, 0
      %v914 = vpack.i.b16 %v835, %v835
      %v915 = vpack.i.b16 %v836, %v836
      %v916 = vpack.i.b16 %v837, %v837
      %v917 = vpack.i.b16 %v838, %v838
      %v918 = vpack.i.b16 %v839, %v839
      %v919 = vpack.i.b16 %v840, %v840
      %v920 = vpack.i.b16 %v841, %v841
      %v921 = vpack.i.b16 %v842, %v842
      %v922 = vperm.slane %v914, 0
      %v923 = vperm.slane %v915, 0
      %v924 = vperm.slane %v916, 0
      %v925 = vperm.slane %v917, 0
      %v926 = vperm.slane %v918, 0
      %v927 = vperm.slane %v919, 0
      %v928 = vperm.slane %v920, 0
      %v929 = vperm.slane %v921, 0
      %v930 = vpack.i.b16 %v858, %v858
      %v931 = vpack.i.b16 %v859, %v859
      %v932 = vpack.i.b16 %v860, %v860
      %v933 = vpack.i.b16 %v861, %v861
      %v934 = vpack.i.b16 %v862, %v862
      %v935 = vpack.i.b16 %v863, %v863
      %v936 = vpack.i.b16 %v864, %v864
      %v937 = vpack.i.b16 %v865, %v865
      %v938 = vperm.slane %v930, 0
      %v939 = vperm.slane %v931, 0
      %v940 = vperm.slane %v932, 0
      %v941 = vperm.slane %v933, 0
      %v942 = vperm.slane %v934, 0
      %v943 = vperm.slane %v935, 0
      %v944 = vperm.slane %v936, 0
      %v945 = vperm.slane %v937, 0
      %vm954 = vcmask 1040384
      %vm955 = vsmask.f32 256
      %vm956 = vmand %vm954, %vm955
      %v957 = vsel %vm956, %v874, %v898
      %v958 = vsel %vm956, %v875, %v899
      %v959 = vsel %vm956, %v876, %v900
      %v960 = vsel %vm956, %v877, %v901
      %v961 = vsel %vm956, %v878, %v902
      %v962 = vsel %vm956, %v879, %v903
      %v963 = vsel %vm956, %v880, %v904
      %v964 = vsel %vm956, %v881, %v905
      %v967 = vsel %vm772, %v957, %v922
      %v971 = vsel %vm772, %v958, %v923
      %v975 = vsel %vm772, %v959, %v924
      %v979 = vsel %vm772, %v960, %v925
      %v983 = vsel %vm772, %v961, %v926
      %v987 = vsel %vm772, %v962, %v927
      %v991 = vsel %vm772, %v963, %v928
      %v995 = vsel %vm772, %v964, %v929
      %vm997 = vcmask 1041408
      %vm998 = vsmask.f32 1280
      %vm999 = vmand %vm997, %vm998
      %v1000 = vsel %vm999, %v967, %v938
      %v1001 = vsel %vm999, %v971, %v939
      %v1002 = vsel %vm999, %v975, %v940
      %v1003 = vsel %vm999, %v979, %v941
      %v1004 = vsel %vm999, %v983, %v942
      %v1005 = vsel %vm999, %v987, %v943
      %v1006 = vsel %vm999, %v991, %v944
      %v1007 = vsel %vm999, %v995, %v945
      %v1009 = vsel %vm454, %v1000, 0
      %vm1011 = vcmask 1043456
      %v1013 = vsel %vm1011, %v416, 0
      %1015 = vmatpush.bf16.msra.mxu0 0
      %1016 = vmatpush.bf16.msra.mxu0 0
      %1017 = vmatpush.bf16.msra.mxu0 0
      %1018 = vmatpush.bf16.msra.mxu0 0
      %1019 = vmatpush.bf16.msra.mxu0 0
      %1020 = vmatpush.bf16.msra.mxu0 0
      %1021 = vmatpush.bf16.msra.mxu0 0
      %1022 = vmatpush.bf16.msra.mxu0 %v1013
      %1023 = vmatmul.bf16.gmra.mxu0 %v1009
      %v1024 = vpop.f32.mrf.mxu0
      %v1025 = vadd.f32 0.0, %v1024
      %v1026 = vpop.f32.mrf.mxu0
      %1027 = vdwg.mxu0
      %v1029 = vsel %vm454, %v1001, 0
      %v1032 = vsel %vm1011, %v417, 0
      %1034 = vmatpush.bf16.msra.mxu0 0
      %1035 = vmatpush.bf16.msra.mxu0 0
      %1036 = vmatpush.bf16.msra.mxu0 0
      %1037 = vmatpush.bf16.msra.mxu0 0
      %1038 = vmatpush.bf16.msra.mxu0 0
      %1039 = vmatpush.bf16.msra.mxu0 0
      %1040 = vmatpush.bf16.msra.mxu0 0
      %1041 = vmatpush.bf16.msra.mxu0 %v1032
      %1042 = vmatmul.bf16.gmra.mxu0 %v1029
      %v1043 = vpop.f32.mrf.mxu0
      %v1044 = vadd.f32 0.0, %v1043
      %v1045 = vpop.f32.mrf.mxu0
      %1046 = vdwg.mxu0
      %v1048 = vsel %vm454, %v1002, 0
      %v1051 = vsel %vm1011, %v418, 0
      %1053 = vmatpush.bf16.msra.mxu0 0
      %1054 = vmatpush.bf16.msra.mxu0 0
      %1055 = vmatpush.bf16.msra.mxu0 0
      %1056 = vmatpush.bf16.msra.mxu0 0
      %1057 = vmatpush.bf16.msra.mxu0 0
      %1058 = vmatpush.bf16.msra.mxu0 0
      %1059 = vmatpush.bf16.msra.mxu0 0
      %1060 = vmatpush.bf16.msra.mxu0 %v1051
      %1061 = vmatmul.bf16.gmra.mxu0 %v1048
      %v1062 = vpop.f32.mrf.mxu0
      %v1063 = vadd.f32 0.0, %v1062
      %v1064 = vpop.f32.mrf.mxu0
      %1065 = vdwg.mxu0
      %v1067 = vsel %vm454, %v1003, 0
      %v1070 = vsel %vm1011, %v419, 0
      %1072 = vmatpush.bf16.msra.mxu0 0
      %1073 = vmatpush.bf16.msra.mxu0 0
      %1074 = vmatpush.bf16.msra.mxu0 0
      %1075 = vmatpush.bf16.msra.mxu0 0
      %1076 = vmatpush.bf16.msra.mxu0 0
      %1077 = vmatpush.bf16.msra.mxu0 0
      %1078 = vmatpush.bf16.msra.mxu0 0
      %1079 = vmatpush.bf16.msra.mxu0 %v1070
      %1080 = vmatmul.bf16.gmra.mxu0 %v1067
      %v1081 = vpop.f32.mrf.mxu0
      %v1082 = vadd.f32 0.0, %v1081
      %v1083 = vpop.f32.mrf.mxu0
      %1084 = vdwg.mxu0
      %v1086 = vsel %vm454, %v1004, 0
      %v1089 = vsel %vm1011, %v420, 0
      %1091 = vmatpush.bf16.msra.mxu0 0
      %1092 = vmatpush.bf16.msra.mxu0 0
      %1093 = vmatpush.bf16.msra.mxu0 0
      %1094 = vmatpush.bf16.msra.mxu0 0
      %1095 = vmatpush.bf16.msra.mxu0 0
      %1096 = vmatpush.bf16.msra.mxu0 0
      %1097 = vmatpush.bf16.msra.mxu0 0
      %1098 = vmatpush.bf16.msra.mxu0 %v1089
      %1099 = vmatmul.bf16.gmra.mxu0 %v1086
      %v1100 = vpop.f32.mrf.mxu0
      %v1101 = vadd.f32 0.0, %v1100
      %v1102 = vpop.f32.mrf.mxu0
      %1103 = vdwg.mxu0
      %v1105 = vsel %vm454, %v1005, 0
      %v1108 = vsel %vm1011, %v421, 0
      %1110 = vmatpush.bf16.msra.mxu0 0
      %1111 = vmatpush.bf16.msra.mxu0 0
      %1112 = vmatpush.bf16.msra.mxu0 0
      %1113 = vmatpush.bf16.msra.mxu0 0
      %1114 = vmatpush.bf16.msra.mxu0 0
      %1115 = vmatpush.bf16.msra.mxu0 0
      %1116 = vmatpush.bf16.msra.mxu0 0
      %1117 = vmatpush.bf16.msra.mxu0 %v1108
      %1118 = vmatmul.bf16.gmra.mxu0 %v1105
      %v1119 = vpop.f32.mrf.mxu0
      %v1120 = vadd.f32 0.0, %v1119
      %v1121 = vpop.f32.mrf.mxu0
      %1122 = vdwg.mxu0
      %v1124 = vsel %vm454, %v1006, 0
      %v1127 = vsel %vm1011, %v422, 0
      %1129 = vmatpush.bf16.msra.mxu0 0
      %1130 = vmatpush.bf16.msra.mxu0 0
      %1131 = vmatpush.bf16.msra.mxu0 0
      %1132 = vmatpush.bf16.msra.mxu0 0
      %1133 = vmatpush.bf16.msra.mxu0 0
      %1134 = vmatpush.bf16.msra.mxu0 0
      %1135 = vmatpush.bf16.msra.mxu0 0
      %1136 = vmatpush.bf16.msra.mxu0 %v1127
      %1137 = vmatmul.bf16.gmra.mxu0 %v1124
      %v1138 = vpop.f32.mrf.mxu0
      %v1139 = vadd.f32 0.0, %v1138
      %v1140 = vpop.f32.mrf.mxu0
      %1141 = vdwg.mxu0
      %v1143 = vsel %vm454, %v1007, 0
      %v1146 = vsel %vm1011, %v423, 0
      %1148 = vmatpush.bf16.msra.mxu0 0
      %1149 = vmatpush.bf16.msra.mxu0 0
      %1150 = vmatpush.bf16.msra.mxu0 0
      %1151 = vmatpush.bf16.msra.mxu0 0
      %1152 = vmatpush.bf16.msra.mxu0 0
      %1153 = vmatpush.bf16.msra.mxu0 0
      %1154 = vmatpush.bf16.msra.mxu0 0
      %1155 = vmatpush.bf16.msra.mxu0 %v1146
      %1156 = vmatmul.bf16.gmra.mxu0 %v1143
      %v1157 = vpop.f32.mrf.mxu0
      %v1158 = vadd.f32 0.0, %v1157
      %v1159 = vpop.f32.mrf.mxu0
      %1160 = vdwg.mxu0
      %v1161 = vrot.slane %v1063, 4
      %vm1162 = vcmask 1047556
      %v1163 = vsel %vm1162, %v1161, %v1025
      %v1165 = vunpack.c.l.s4 1983009808
      %v1166 = vunpack.c.0.s8 %v1165
      %v1167 = vperm.slane %v1163, %v1166
      %v1168 = vrot.slane %v1082, 4
      %v1169 = vsel %vm1162, %v1168, %v1044
      %v1171 = vunpack.c.l.s4 1983009808
      %v1172 = vunpack.c.0.s8 %v1171
      %v1173 = vperm.slane %v1169, %v1172
      %v1174 = vrot.slane %v1139, 4
      %v1175 = vsel %vm1162, %v1174, %v1101
      %v1177 = vunpack.c.l.s4 1983009808
      %v1178 = vunpack.c.0.s8 %v1177
      %v1179 = vperm.slane %v1175, %v1178
      %v1180 = vrot.slane %v1158, 4
      %v1181 = vsel %vm1162, %v1180, %v1120
      %v1183 = vunpack.c.l.s4 1983009808
      %v1184 = vunpack.c.0.s8 %v1183
      %v1185 = vperm.slane %v1181, %v1184
      %v1186 = vrot.slane %v1173, 4
      %v1187 = vsel %vm1162, %v1186, %v1167
      %v1188 = vrot.slane %v1167, 4
      %v1189 = vsel %vm1162, %v1173, %v1188
      %v1191 = vunpack.c.l.s4 1934713408
      %v1192 = vunpack.c.0.s8 %v1191
      %v1193 = vperm.slane %v1187, %v1192
      %v1195 = vunpack.c.l.s4 1934713408
      %v1196 = vunpack.c.0.s8 %v1195
      %v1197 = vperm.slane %v1189, %v1196
      %v1198 = vrot.slane %v1185, 4
      %v1199 = vsel %vm1162, %v1198, %v1179
      %v1200 = vrot.slane %v1179, 4
      %v1201 = vsel %vm1162, %v1185, %v1200
      %v1203 = vunpack.c.l.s4 1934713408
      %v1204 = vunpack.c.0.s8 %v1203
      %v1205 = vperm.slane %v1199, %v1204
      %v1207 = vunpack.c.l.s4 1934713408
      %v1208 = vunpack.c.0.s8 %v1207
      %v1209 = vperm.slane %v1201, %v1208
      %v1210 = vrot.slane %v1205, 4
      %v1211 = vsel %vm1162, %v1210, %v1193
      %v1212 = vrot.slane %v1193, 4
      %v1213 = vsel %vm1162, %v1205, %v1212
      %v1214 = vrot.slane %v1209, 4
      %v1215 = vsel %vm1162, %v1214, %v1197
      %v1216 = vrot.slane %v1197, 4
      %v1217 = vsel %vm1162, %v1209, %v1216
      %1218 = vst [vmem:[%s414] sm:$0xff] %v1211
      %1219 = vst [vmem:[%s414 + $0x8] sm:$0xff] %v1213
      %1220 = vst [vmem:[%s414 + $0x10] sm:$0xff] %v1215
      %1221 = vst [vmem:[%s414 + $0x18] sm:$0xff] %v1217
      %p1222 = scmp.lt.s32.totalorder %s22, 1
      %s1223 = scalar_select %p1222, %s22, 1
      %p1224 = scmp.lt.s32.totalorder %s23, 0
      %s1225 = scalar_select %p1224, %s23, 0
      %s1226 = smul.addr %s1225, 2
      %s1227 = smul.addr %s1223, 2
      %s1228 = sadd.s32 %s1226, %s1227
      %s1229 = smul.addr %s1228, 8
      %s1230 = scalar_lea.vmem %s5, %s1229
      %p1231 = scmp.lt.s32.totalorder %s22, 1
      %s1232 = scalar_select %p1231, %s22, 1
      %p1233 = scmp.lt.s32.totalorder %s23, 0
      %s1234 = scalar_select %p1233, %s23, 0
      %s1235 = smul.addr %s1234, 4
      %s1236 = smul.addr %s1232, 4
      %s1237 = sadd.s32 %s1235, %s1236
      %s1238 = smul.addr %s1237, 8
      %s1239 = scalar_lea.vmem %s6, %s1238
      // Predicated region
      $region41: #{_lambda_.32} parent=39 // pred_check
        %p1240 = pneg %p186
      $region42: #{_lambda_.32} parent=39 // pred_check_branch
        %1242 = sbr.rel (%p1240) target = $region44
      $region43: #{_lambda_.32} parent=39 // pred_region
        _
      $region44: #{_lambda_.32} parent=39 // pred_fallthru
        _
      // Predicated region
      $region45: #{_lambda_.32} parent=39 // pred_check
        %p1243 = pneg %p214
      $region46: #{_lambda_.32} parent=39 // pred_check_branch
        %1245 = sbr.rel (%p1243) target = $region48
      $region47: #{_lambda_.32} parent=39 // pred_region
        _
      $region48: #{_lambda_.32} parent=39 // pred_fallthru
        _
    $region40: #{_lambda_.32} parent=5 // pred_fallthru
      _
    %p1246 = scmp.le.s32.totalorder 2, %s13
    // Predicated region
    $region49: #{_lambda_.32} parent=5 // pred_check
      %p1247 = pneg %p1246
    $region50: #{_lambda_.32} parent=5 // pred_check_branch
      %1249 = sbr.rel (%p1247) target = $region52
    $region51: #{_lambda_.32} parent=5 // pred_region
      %s1250 = ssub.s32 %s13, 2
      // Predicated region
      $region53: #{_lambda_.32} parent=51 // pred_check
        %p1251 = pneg %p192
      $region54: #{_lambda_.32} parent=51 // pred_check_branch
        %1253 = sbr.rel (%p1251) target = $region56
      $region55: #{_lambda_.32} parent=51 // pred_region
        %p1254 = scmp.lt.s32.totalorder %s24, 1
        %s1255 = scalar_select %p1254, %s24, 1
        %p1256 = scmp.lt.s32.totalorder %s25, 0
        %s1257 = scalar_select %p1256, %s25, 0
        %s1258 = smul.addr %s1257, 2
        %s1259 = smul.addr %s1255, 2
        %s1260 = sadd.s32 %s1258, %s1259
        %s1261 = smul.addr %s1260, 8
        %s1262 = scalar_lea.vmem %s5, %s1261
      $region56: #{_lambda_.32} parent=51 // pred_fallthru
        _
      // Predicated region
      $region57: #{_lambda_.32} parent=51 // pred_check
        %p1263 = pneg %p220
      $region58: #{_lambda_.32} parent=51 // pred_check_branch
        %1265 = sbr.rel (%p1263) target = $region60
      $region59: #{_lambda_.32} parent=51 // pred_region
        %p1266 = scmp.lt.s32.totalorder %s24, 1
        %s1267 = scalar_select %p1266, %s24, 1
        %p1268 = scmp.lt.s32.totalorder %s25, 0
        %s1269 = scalar_select %p1268, %s25, 0
        %s1270 = smul.addr %s1269, 4
        %s1271 = smul.addr %s1267, 4
        %s1272 = sadd.s32 %s1270, %s1271
        %s1273 = smul.addr %s1272, 8
        %s1274 = scalar_lea.vmem %s6, %s1273
      $region60: #{_lambda_.32} parent=51 // pred_fallthru
        _
    $region52: #{_lambda_.32} parent=5 // pred_fallthru
      _
  $region6: #{_lambda_.32} parent=0 // loop_footer
    %s17 = sadd.s32 1, %s13
  $region7: #{_lambda_.32} parent=0 // loop_footer_branch
    %12 = sbr.rel target = $region3
  $region8: #{_lambda_.32} parent=0 // loop_exit
    _

// kernel: _lambda_.34
$region0: #{_lambda_.34}
  #allocation0 [shape = 'u32[]', space=smem, size = 0x4, offset = 0x4, fixed_abs, tag = 'smem constant byte address 0x4 - core index']
  #allocation1 [shape = 'u32[72,128]{1,0:T(1,128)}', space=vmem, size = 0x9000, scoped, tag = 'internal scratch']
  %s0 = inlined_call_operand.vmem [shape: f32[16,384], index: 0, kind: input, shape index: {}]
  %s1 = inlined_call_operand.vmem [shape: f32[1,384], index: 1, kind: input, shape index: {}]
  %s2 = inlined_call_operand.vmem [shape: f32[1,384], index: 2, kind: input, shape index: {}]
  %s3 = inlined_call_operand.vmem [shape: f32[16,384], index: 3, kind: output, shape index: {}]
  %s4 = sld [smem:[#allocation0]]
  $region22: #{_lambda_.34} parent=0
    _
  %s6 = ssub.s32 1, %s4
  %s7 = scalar_select 0, %s6, %s4
  // Predicated region
  $region2: #{_lambda_.34} parent=0 // pred_check
    _
  $region3: #{_lambda_.34} parent=0 // pred_check_branch
    %9 = sbr.rel (0) target = $region5
  $region4: #{_lambda_.34} parent=0 // pred_region
    _
  $region5: #{_lambda_.34} parent=0 // pred_fallthru
    _
  // Predicated region
  $region6: #{_lambda_.34} parent=0 // pred_check
    _
  $region7: #{_lambda_.34} parent=0 // pred_check_branch
    %11 = sbr.rel (0) target = $region9
  $region8: #{_lambda_.34} parent=0 // pred_region
    _
  $region9: #{_lambda_.34} parent=0 // pred_fallthru
    _
  // Predicated region
  $region10: #{_lambda_.34} parent=0 // pred_check
    _
  $region11: #{_lambda_.34} parent=0 // pred_check_branch
    %13 = sbr.rel (0) target = $region13
  $region12: #{_lambda_.34} parent=0 // pred_region
    _
  $region13: #{_lambda_.34} parent=0 // pred_fallthru
    _
  %v14 = vld [vmem:[%s0] sm:$0xff]
  %v15 = vld [vmem:[%s0 + $0x8] sm:$0xff]
  %v16 = vld [vmem:[%s0 + $0x10] sm:$0xff]
  %v17 = vld [vmem:[%s0 + $0x18] sm:$0xff]
  %v18 = vld [vmem:[%s0 + $0x20] sm:$0xff]
  %v19 = vld [vmem:[%s0 + $0x28] sm:$0xff]
  %v20 = vadd.f32 %v14, %v15
  %v21 = vadd.f32 %v20, %v16
  %22 = vadd.xlane.f32.xlu0 %v21
  %v23 = vpop.xlane.xlu0 %22
  %v24 = vadd.f32 %v17, %v18
  %v25 = vadd.f32 %v24, %v19
  %26 = vadd.xlane.f32.xlu0 %v25
  %v27 = vpop.xlane.xlu0 %26
  %v28 = vrcp.pop 384.0
  %v29 = vmul.f32 384.0, %v28
  %v30 = vsub.f32 1.0, %v29
  %v31 = vmul.f32 %v28, %v30
  %v32 = vadd.f32 %v28, %v31
  %vm33 = vweird.f32 %v28
  %v34 = vsel %vm33, %v28, %v32
  %v35 = vmul.f32 %v23, %v34
  %v36 = vmul.f32 %v27, %v34
  %v37 = vsub.f32 %v14, %v35
  %v38 = vsub.f32 %v15, %v35
  %v39 = vsub.f32 %v16, %v35
  %v40 = vsub.f32 %v17, %v36
  %v41 = vsub.f32 %v18, %v36
  %v42 = vsub.f32 %v19, %v36
  %v43 = vmul.f32 %v37, %v37
  %v44 = vmul.f32 %v38, %v38
  %v45 = vmul.f32 %v39, %v39
  %v46 = vmul.f32 %v40, %v40
  %v47 = vmul.f32 %v41, %v41
  %v48 = vmul.f32 %v42, %v42
  %v49 = vadd.f32 %v43, %v44
  %v50 = vadd.f32 %v49, %v45
  %51 = vadd.xlane.f32.xlu0 %v50
  %v52 = vpop.xlane.xlu0 %51
  %v53 = vadd.f32 %v46, %v47
  %v54 = vadd.f32 %v53, %v48
  %55 = vadd.xlane.f32.xlu0 %v54
  %v56 = vpop.xlane.xlu0 %55
  %v57 = vmul.f32 %v52, %v34
  %v58 = vmul.f32 %v56, %v34
  %v59 = vadd.f32 %v57, 1e-05
  %v60 = vadd.f32 %v58, 1e-05
  %v61 = vrsqrt.pop %v59
  %v62 = vmul.f32 %v61, %v59
  %v63 = vmul.f32 %v62, %v61
  %v64 = vmul.f32 0.5, %v63
  %v65 = vsub.f32 1.5, %v64
  %v66 = vmul.f32 %v61, %v65
  %vm67 = vweird.f32 %v59
  %vm68 = vweird.f32 %v61
  %vm69 = vmor %vm67, %vm68
  %v70 = vsel %vm69, %v61, %v66
  %v71 = vrsqrt.pop %v60
  %v72 = vmul.f32 %v71, %v60
  %v73 = vmul.f32 %v72, %v71
  %v74 = vmul.f32 0.5, %v73
  %v75 = vsub.f32 1.5, %v74
  %v76 = vmul.f32 %v71, %v75
  %vm77 = vweird.f32 %v60
  %vm78 = vweird.f32 %v71
  %vm79 = vmor %vm77, %vm78
  %v80 = vsel %vm79, %v71, %v76
  %v81 = vmul.f32 %v37, %v70
  %v82 = vmul.f32 %v38, %v70
  %v83 = vmul.f32 %v39, %v70
  %v84 = vmul.f32 %v40, %v80
  %v85 = vmul.f32 %v41, %v80
  %v86 = vmul.f32 %v42, %v80
  %v87 = vld [vmem:[%s1] sm:$0x7]
  %v89 = vperm.slane %v87, 0
  %v90 = vperm.slane %v87, 1
  %v91 = vperm.slane %v87, 2
  %v95 = vmul.f32 %v81, %v89
  %v96 = vmul.f32 %v82, %v90
  %v97 = vmul.f32 %v83, %v91
  %v98 = vmul.f32 %v84, %v89
  %v99 = vmul.f32 %v85, %v90
  %v100 = vmul.f32 %v86, %v91
  %v101 = vld [vmem:[%s2] sm:$0x7]
  %v103 = vperm.slane %v101, 0
  %v104 = vperm.slane %v101, 1
  %v105 = vperm.slane %v101, 2
  %v109 = vadd.f32 %v95, %v103
  %v110 = vadd.f32 %v96, %v104
  %v111 = vadd.f32 %v97, %v105
  %v112 = vadd.f32 %v98, %v103
  %v113 = vadd.f32 %v99, %v104
  %v114 = vadd.f32 %v100, %v105
  %115 = vst [vmem:[%s3] sm:$0xff] %v109
  %116 = vst [vmem:[%s3 + $0x8] sm:$0xff] %v110
  %117 = vst [vmem:[%s3 + $0x10] sm:$0xff] %v111
  %118 = vst [vmem:[%s3 + $0x18] sm:$0xff] %v112
  %119 = vst [vmem:[%s3 + $0x20] sm:$0xff] %v113
  %120 = vst [vmem:[%s3 + $0x28] sm:$0xff] %v114
  // Predicated region
  $region14: #{_lambda_.34} parent=0 // pred_check
    _
  $region15: #{_lambda_.34} parent=0 // pred_check_branch
    %122 = sbr.rel (0) target = $region17
  $region16: #{_lambda_.34} parent=0 // pred_region
    _
  $region17: #{_lambda_.34} parent=0 // pred_fallthru
    _
  // Predicated region
  $region18: #{_lambda_.34} parent=0 // pred_check
    _
  $region19: #{_lambda_.34} parent=0 // pred_check_branch
    %124 = sbr.rel (0) target = $region21
  $region20: #{_lambda_.34} parent=0 // pred_region
    _
  $region21: #{_lambda_.34} parent=0 // pred_fallthru
    _

// kernel: custom-call.2
$region0: #{custom-call.2}
  %s0 = inlined_call_operand.vmem [shape: f32[2,8,2,2], index: 0, kind: input, shape index: {}]
  %s1 = inlined_call_operand.vmem [shape: f32[2,8,2,2], index: 1, kind: input, shape index: {}]
  %s2 = inlined_call_operand.vmem [shape: f32[2,8,2,2], index: 2, kind: input, shape index: {}]
  %s3 = inlined_call_operand.vmem [shape: f32[2,8,2,2], index: 3, kind: input, shape index: {}]
  %s4 = inlined_call_operand.vmem [shape: f32[2,8,2], index: 4, kind: output, shape index: {0}]
  %s5 = inlined_call_operand.vmem [shape: f32[2,8,2], index: 5, kind: output, shape index: {1}]
  %s6 = inlined_call_operand.vmem [shape: f32[2,8,2,2], index: 6, kind: output, shape index: {2}]
  %s7 = inlined_call_operand.vmem [shape: f32[2,8,2,2], index: 7, kind: output, shape index: {3}]
  %s8 = inlined_call_operand.vmem [shape: f32[2,8,2,2], index: 8, kind: output, shape index: {4}]
  %s9 = inlined_call_operand.vmem [shape: f32[2,8,2,2], index: 9, kind: output, shape index: {5}]
  %10 = xla_tuple %s4, %s5, %s6, %s7, %s8, %s9
  $region1: #{custom-call.2} parent=0
    #allocation0 [shape = 'u8[4096]{0}', space=vmem, size = 0x1000, scoped, tag = 'operand span for operand 0']
    #allocation1 [shape = 'u8[2048]{0}', space=vmem, size = 0x800, scoped, tag = 'packed  for operand 0']
    #allocation2 [shape = 'u8[4096]{0}', space=vmem, size = 0x1000, scoped, tag = 'operand span for operand 1']
    #allocation3 [shape = 'u8[2048]{0}', space=vmem, size = 0x800, scoped, tag = 'packed  for operand 1']
    #allocation4 [shape = 'u8[4096]{0}', space=vmem, size = 0x1000, scoped, tag = 'operand span for operand 2']
    #allocation5 [shape = 'u8[2048]{0}', space=vmem, size = 0x800, scoped, tag = 'packed  for operand 2']
    #allocation6 [shape = 'u8[4096]{0}', space=vmem, size = 0x1000, scoped, tag = 'operand span for operand 3']
    #allocation7 [shape = 'u8[2048]{0}', space=vmem, size = 0x800, scoped, tag = 'packed  for operand 3']
    #allocation8 [shape = 'u8[8192]{0}', space=vmem, size = 0x2000, scoped, tag = 'operand span for operand 4']
    #allocation9 [shape = 'u8[8192]{0}', space=vmem, size = 0x2000, scoped, tag = 'operand span for operand 5']
    #allocation10 [shape = 'u8[4096]{0}', space=vmem, size = 0x1000, scoped, tag = 'operand span for operand 6']
    #allocation11 [shape = 'u8[2048]{0}', space=vmem, size = 0x800, scoped, tag = 'packed  for operand 6']
    #allocation12 [shape = 'u8[4096]{0}', space=vmem, size = 0x1000, scoped, tag = 'operand span for operand 7']
    #allocation13 [shape = 'u8[2048]{0}', space=vmem, size = 0x800, scoped, tag = 'packed  for operand 7']
    #allocation14 [shape = 'u8[4096]{0}', space=vmem, size = 0x1000, scoped, tag = 'operand span for operand 8']
    #allocation15 [shape = 'u8[2048]{0}', space=vmem, size = 0x800, scoped, tag = 'packed  for operand 8']
    #allocation16 [shape = 'u8[4096]{0}', space=vmem, size = 0x1000, scoped, tag = 'operand span for operand 9']
    #allocation17 [shape = 'u8[2048]{0}', space=vmem, size = 0x800, scoped, tag = 'packed  for operand 9']
    loop: start=0, step=1, limit=18
    $region2: #{custom-call.2} parent=1 // loop_pre_header
      _
    $region3: #{custom-call.2} parent=1 // loop_header
      %s12 = sphi 0, %s16
      %p13 = scmp.ge.s32.totalorder %s12, 18
      %s19 = sphi 0, %s31
      %s20 = sphi 0, %s27
      %s21 = sphi 0, %s19
      %s22 = sphi 0, %s20
      %s23 = sphi 0, %s21
      %s24 = sphi 0, %s22
      %s38 = sphi 0, %s40
      %s41 = sphi 0, %s38
      %s42 = sphi 0, %s41
      %s58 = sphi 0, %s42
      %s68 = sphi 0, %s70
      %s71 = sphi 0, %s68
      %s72 = sphi 0, %s71
      %s88 = sphi 0, %s72
    $region4: #{custom-call.2} parent=1 // loop_header_branch
      %15 = sbr.rel (%p13) target = $region8
    $region5: #{custom-call.2} parent=1 // loop_body
      %s17 = ssub.s32 %s12, 1
      %s18 = ssub.s32 %s12, 2
      %s25 = sadd.s32 1, %s20
      %p26 = scmp.ge.s32.totalorder %s25, 8
      %s27 = scalar_select %p26, 0, %s25
      %s28 = sadd.s32 1, %s19
      %s29 = scalar_select %p26, %s28, %s19
      %p30 = scmp.ge.s32.totalorder %s29, 2
      %s31 = scalar_select %p30, 0, %s29
      %s32 = sshrl.u32 %s20, 3
      %s33 = sshrl.u32 %s27, 3
      %s34 = ssub.s32 %s19, %s31
      %s35 = ssub.s32 %s32, %s33
      %s36 = sor.u32 %s34, %s35
      %p37 = scmp.eq.s32.totalorder %s36, 0
      %s39 = sadd.s32 %s38, 1
      %s40 = scalar_select %p37, %s38, %s39
      %p43 = pneg %p37
      %p44 = scmp.eq.s32.totalorder %s12, 15
      %p45 = por %p43, %p44
      %p46 = scmp.ne.s32.totalorder %s38, %s41
      %p47 = scmp.eq.s32.totalorder %s12, 0
      %p48 = por %p46, %p47
      %p49 = scmp.ne.s32.totalorder %s38, %s41
      %p50 = scmp.eq.s32.totalorder %s17, 15
      %p51 = por %p49, %p50
      %p52 = scmp.ne.s32.totalorder %s41, %s42
      %p53 = scmp.eq.s32.totalorder %s17, 0
      %p54 = por %p52, %p53
      %p55 = scmp.ne.s32.totalorder %s41, %s42
      %p56 = scmp.eq.s32.totalorder %s18, 15
      %p57 = por %p55, %p56
      %p59 = scmp.ne.s32.totalorder %s42, %s58
      %p60 = scmp.eq.s32.totalorder %s18, 0
      %p61 = por %p59, %p60
      %s62 = sshrl.u32 %s20, 3
      %s63 = sshrl.u32 %s27, 3
      %s64 = ssub.s32 %s19, %s31
      %s65 = ssub.s32 %s62, %s63
      %s66 = sor.u32 %s64, %s65
      %p67 = scmp.eq.s32.totalorder %s66, 0
      %s69 = sadd.s32 %s68, 1
      %s70 = scalar_select %p67, %s68, %s69
      %p73 = pneg %p67
      %p74 = scmp.eq.s32.totalorder %s12, 15
      %p75 = por %p73, %p74
      %p76 = scmp.ne.s32.totalorder %s68, %s71
      %p77 = scmp.eq.s32.totalorder %s12, 0
      %p78 = por %p76, %p77
      %p79 = scmp.ne.s32.totalorder %s68, %s71
      %p80 = scmp.eq.s32.totalorder %s17, 15
      %p81 = por %p79, %p80
      %p82 = scmp.ne.s32.totalorder %s71, %s72
      %p83 = scmp.eq.s32.totalorder %s17, 0
      %p84 = por %p82, %p83
      %p85 = scmp.ne.s32.totalorder %s71, %s72
      %p86 = scmp.eq.s32.totalorder %s18, 15
      %p87 = por %p85, %p86
      %p89 = scmp.ne.s32.totalorder %s72, %s88
      %p90 = scmp.eq.s32.totalorder %s18, 0
      %p91 = por %p89, %p90
      %p92 = scmp.le.s32.totalorder 1, %s12
      %p93 = scmp.lt.s32.totalorder %s12, 17
      %p94 = pnand %p92, %p93
      %p95 = pneg %p94
      // Predicated region
      $region9: #{custom-call.2} parent=5 // pred_check
        _
      $region10: #{custom-call.2} parent=5 // pred_check_branch
        %97 = sbr.rel (%p94) target = $region12
      $region11: #{custom-call.2} parent=5 // pred_region
        %s98 = ssub.s32 %s12, 1
      $region12: #{custom-call.2} parent=5 // pred_fallthru
        _
      %p99 = scmp.lt.s32.totalorder %s12, 16
      // Predicated region
      $region13: #{custom-call.2} parent=5 // pred_check
        %p100 = pneg %p99
      $region14: #{custom-call.2} parent=5 // pred_check_branch
        %102 = sbr.rel (%p100) target = $region16
      $region15: #{custom-call.2} parent=5 // pred_region
        %s103 = sand.u32 %s12, 1
        %s104 = sand.u32 %s12, 1
        %s105 = smul.addr %s104, 2
        %s106 = scalar_lea.vmem [#allocation1], %s105
        %s107 = smul.addr %s19, 8
        %s108 = sadd.s32 %s20, %s107
        %s109 = smul.addr %s108, 2
        %s110 = scalar_lea.vmem %s0, %s109
        // Predicated region
        $region17: #{custom-call.2} parent=15 // pred_check
          _
        $region18: #{custom-call.2} parent=15 // pred_check_branch
          %112 = sbr.rel (0) target = $region20
        $region19: #{custom-call.2} parent=15 // pred_region
          // Predicated region
          $region21: #{custom-call.2} parent=19 // pred_check
            _
          $region22: #{custom-call.2} parent=19 // pred_check_branch
            %114 = sbr.rel target = $region24
          $region23: #{custom-call.2} parent=19 // pred_region
            // Predicated region
            $region36: #{custom-call.2} parent=23 // pred_check
              _
            $region37: #{custom-call.2} parent=23 // pred_check_branch
              %130 = sbr.rel (0) target = $region39
            $region38: #{custom-call.2} parent=23 // pred_region
              %s132 = ssub.s32 4, 1
              loop: start=0, step=1, limit=1
              $region40: #{custom-call.2} parent=38 // loop_pre_header
                _
              $region41: #{custom-call.2} parent=38 // loop_header
                %s134 = sphi 0, %s138
                %p135 = scmp.ge.s32.totalorder %s134, 1
                %s139 = sphi %s110, %s110
                %s140 = sphi %s106, %s106
              $region42: #{custom-call.2} parent=38 // loop_header_branch
                %137 = sbr.rel (%p135) target = $region46
              $region43: #{custom-call.2} parent=38 // loop_body
                %v141 = vld [vmem:[%s139] sm:%s132]
                %142 = vst [vmem:[%s140] sm:%s132] %v141
              $region44: #{custom-call.2} parent=38 // loop_footer
                %s138 = sadd.s32 1, %s134
              $region45: #{custom-call.2} parent=38 // loop_footer_branch
                %133 = sbr.rel target = $region41
              $region46: #{custom-call.2} parent=38 // loop_exit
                _
            $region39: #{custom-call.2} parent=23 // pred_fallthru
              _
          $region24: #{custom-call.2} parent=19 // pred_fallthru
            _
          // Predicated region
          $region25: #{custom-call.2} parent=19 // pred_check
            _
          $region26: #{custom-call.2} parent=19 // pred_check_branch
            %116 = sbr.rel (0) target = $region28
          $region27: #{custom-call.2} parent=19 // pred_region
            %s118 = ssub.s32 4, 1
            loop: start=0, step=1, limit=1
            $region29: #{custom-call.2} parent=27 // loop_pre_header
              _
            $region30: #{custom-call.2} parent=27 // loop_header
              %s120 = sphi 0, %s124
              %p121 = scmp.ge.s32.totalorder %s120, 1
              %s125 = sphi %s110, %s110
              %s126 = sphi %s106, %s106
            $region31: #{custom-call.2} parent=27 // loop_header_branch
              %123 = sbr.rel (%p121) target = $region35
            $region32: #{custom-call.2} parent=27 // loop_body
              %v127 = vld [vmem:[%s125] sm:%s118]
              %128 = vst [vmem:[%s126] sm:%s118] %v127
            $region33: #{custom-call.2} parent=27 // loop_footer
              %s124 = sadd.s32 1, %s120
            $region34: #{custom-call.2} parent=27 // loop_footer_branch
              %119 = sbr.rel target = $region30
            $region35: #{custom-call.2} parent=27 // loop_exit
              _
          $region28: #{custom-call.2} parent=19 // pred_fallthru
            _
        $region20: #{custom-call.2} parent=15 // pred_fallthru
          _
        %143 = vnop
        %s144 = sand.u32 %s12, 1
        %s145 = sand.u32 %s12, 1
        %s146 = smul.addr %s145, 2
        %s147 = scalar_lea.vmem [#allocation3], %s146
        %s148 = smul.addr %s19, 8
        %s149 = sadd.s32 %s20, %s148
        %s150 = smul.addr %s149, 2
        %s151 = scalar_lea.vmem %s1, %s150
        // Predicated region
        $region47: #{custom-call.2} parent=15 // pred_check
          _
        $region48: #{custom-call.2} parent=15 // pred_check_branch
          %153 = sbr.rel (0) target = $region50
        $region49: #{custom-call.2} parent=15 // pred_region
          // Predicated region
          $region51: #{custom-call.2} parent=49 // pred_check
            _
          $region52: #{custom-call.2} parent=49 // pred_check_branch
            %155 = sbr.rel target = $region54
          $region53: #{custom-call.2} parent=49 // pred_region
            // Predicated region
            $region66: #{custom-call.2} parent=53 // pred_check
              _
            $region67: #{custom-call.2} parent=53 // pred_check_branch
              %171 = sbr.rel (0) target = $region69
            $region68: #{custom-call.2} parent=53 // pred_region
              %s173 = ssub.s32 4, 1
              loop: start=0, step=1, limit=1
              $region70: #{custom-call.2} parent=68 // loop_pre_header
                _
              $region71: #{custom-call.2} parent=68 // loop_header
                %s175 = sphi 0, %s179
                %p176 = scmp.ge.s32.totalorder %s175, 1
                %s180 = sphi %s151, %s151
                %s181 = sphi %s147, %s147
              $region72: #{custom-call.2} parent=68 // loop_header_branch
                %178 = sbr.rel (%p176) target = $region76
              $region73: #{custom-call.2} parent=68 // loop_body
                %v182 = vld [vmem:[%s180] sm:%s173]
                %183 = vst [vmem:[%s181] sm:%s173] %v182
              $region74: #{custom-call.2} parent=68 // loop_footer
                %s179 = sadd.s32 1, %s175
              $region75: #{custom-call.2} parent=68 // loop_footer_branch
                %174 = sbr.rel target = $region71
              $region76: #{custom-call.2} parent=68 // loop_exit
                _
            $region69: #{custom-call.2} parent=53 // pred_fallthru
              _
          $region54: #{custom-call.2} parent=49 // pred_fallthru
            _
          // Predicated region
          $region55: #{custom-call.2} parent=49 // pred_check
            _
          $region56: #{custom-call.2} parent=49 // pred_check_branch
            %157 = sbr.rel (0) target = $region58
          $region57: #{custom-call.2} parent=49 // pred_region
            %s159 = ssub.s32 4, 1
            loop: start=0, step=1, limit=1
            $region59: #{custom-call.2} parent=57 // loop_pre_header
              _
            $region60: #{custom-call.2} parent=57 // loop_header
              %s161 = sphi 0, %s165
              %p162 = scmp.ge.s32.totalorder %s161, 1
              %s166 = sphi %s151, %s151
              %s167 = sphi %s147, %s147
            $region61: #{custom-call.2} parent=57 // loop_header_branch
              %164 = sbr.rel (%p162) target = $region65
            $region62: #{custom-call.2} parent=57 // loop_body
              %v168 = vld [vmem:[%s166] sm:%s159]
              %169 = vst [vmem:[%s167] sm:%s159] %v168
            $region63: #{custom-call.2} parent=57 // loop_footer
              %s165 = sadd.s32 1, %s161
            $region64: #{custom-call.2} parent=57 // loop_footer_branch
              %160 = sbr.rel target = $region60
            $region65: #{custom-call.2} parent=57 // loop_exit
              _
          $region58: #{custom-call.2} parent=49 // pred_fallthru
            _
        $region50: #{custom-call.2} parent=15 // pred_fallthru
          _
        %184 = vnop
        %s185 = sand.u32 %s12, 1
        %s186 = sand.u32 %s12, 1
        %s187 = smul.addr %s186, 2
        %s188 = scalar_lea.vmem [#allocation5], %s187
        %s189 = smul.addr %s19, 8
        %s190 = sadd.s32 %s20, %s189
        %s191 = smul.addr %s190, 2
        %s192 = scalar_lea.vmem %s2, %s191
        // Predicated region
        $region77: #{custom-call.2} parent=15 // pred_check
          _
        $region78: #{custom-call.2} parent=15 // pred_check_branch
          %194 = sbr.rel (0) target = $region80
        $region79: #{custom-call.2} parent=15 // pred_region
          // Predicated region
          $region81: #{custom-call.2} parent=79 // pred_check
            _
          $region82: #{custom-call.2} parent=79 // pred_check_branch
            %196 = sbr.rel target = $region84
          $region83: #{custom-call.2} parent=79 // pred_region
            // Predicated region
            $region96: #{custom-call.2} parent=83 // pred_check
              _
            $region97: #{custom-call.2} parent=83 // pred_check_branch
              %212 = sbr.rel (0) target = $region99
            $region98: #{custom-call.2} parent=83 // pred_region
              %s214 = ssub.s32 4, 1
              loop: start=0, step=1, limit=1
              $region100: #{custom-call.2} parent=98 // loop_pre_header
                _
              $region101: #{custom-call.2} parent=98 // loop_header
                %s216 = sphi 0, %s220
                %p217 = scmp.ge.s32.totalorder %s216, 1
                %s221 = sphi %s192, %s192
                %s222 = sphi %s188, %s188
              $region102: #{custom-call.2} parent=98 // loop_header_branch
                %219 = sbr.rel (%p217) target = $region106
              $region103: #{custom-call.2} parent=98 // loop_body
                %v223 = vld [vmem:[%s221] sm:%s214]
                %224 = vst [vmem:[%s222] sm:%s214] %v223
              $region104: #{custom-call.2} parent=98 // loop_footer
                %s220 = sadd.s32 1, %s216
              $region105: #{custom-call.2} parent=98 // loop_footer_branch
                %215 = sbr.rel target = $region101
              $region106: #{custom-call.2} parent=98 // loop_exit
                _
            $region99: #{custom-call.2} parent=83 // pred_fallthru
              _
          $region84: #{custom-call.2} parent=79 // pred_fallthru
            _
          // Predicated region
          $region85: #{custom-call.2} parent=79 // pred_check
            _
          $region86: #{custom-call.2} parent=79 // pred_check_branch
            %198 = sbr.rel (0) target = $region88
          $region87: #{custom-call.2} parent=79 // pred_region
            %s200 = ssub.s32 4, 1
            loop: start=0, step=1, limit=1
            $region89: #{custom-call.2} parent=87 // loop_pre_header
              _
            $region90: #{custom-call.2} parent=87 // loop_header
              %s202 = sphi 0, %s206
              %p203 = scmp.ge.s32.totalorder %s202, 1
              %s207 = sphi %s192, %s192
              %s208 = sphi %s188, %s188
            $region91: #{custom-call.2} parent=87 // loop_header_branch
              %205 = sbr.rel (%p203) target = $region95
            $region92: #{custom-call.2} parent=87 // loop_body
              %v209 = vld [vmem:[%s207] sm:%s200]
              %210 = vst [vmem:[%s208] sm:%s200] %v209
            $region93: #{custom-call.2} parent=87 // loop_footer
              %s206 = sadd.s32 1, %s202
            $region94: #{custom-call.2} parent=87 // loop_footer_branch
              %201 = sbr.rel target = $region90
            $region95: #{custom-call.2} parent=87 // loop_exit
              _
          $region88: #{custom-call.2} parent=79 // pred_fallthru
            _
        $region80: #{custom-call.2} parent=15 // pred_fallthru
          _
        %225 = vnop
        %s226 = sand.u32 %s12, 1
        %s227 = sand.u32 %s12, 1
        %s228 = smul.addr %s227, 2
        %s229 = scalar_lea.vmem [#allocation7], %s228
        %s230 = smul.addr %s19, 8
        %s231 = sadd.s32 %s20, %s230
        %s232 = smul.addr %s231, 2
        %s233 = scalar_lea.vmem %s3, %s232
        // Predicated region
        $region107: #{custom-call.2} parent=15 // pred_check
          _
        $region108: #{custom-call.2} parent=15 // pred_check_branch
          %235 = sbr.rel (0) target = $region110
        $region109: #{custom-call.2} parent=15 // pred_region
          // Predicated region
          $region111: #{custom-call.2} parent=109 // pred_check
            _
          $region112: #{custom-call.2} parent=109 // pred_check_branch
            %237 = sbr.rel target = $region114
          $region113: #{custom-call.2} parent=109 // pred_region
            // Predicated region
            $region126: #{custom-call.2} parent=113 // pred_check
              _
            $region127: #{custom-call.2} parent=113 // pred_check_branch
              %253 = sbr.rel (0) target = $region129
            $region128: #{custom-call.2} parent=113 // pred_region
              %s255 = ssub.s32 4, 1
              loop: start=0, step=1, limit=1
              $region130: #{custom-call.2} parent=128 // loop_pre_header
                _
              $region131: #{custom-call.2} parent=128 // loop_header
                %s257 = sphi 0, %s261
                %p258 = scmp.ge.s32.totalorder %s257, 1
                %s262 = sphi %s233, %s233
                %s263 = sphi %s229, %s229
              $region132: #{custom-call.2} parent=128 // loop_header_branch
                %260 = sbr.rel (%p258) target = $region136
              $region133: #{custom-call.2} parent=128 // loop_body
                %v264 = vld [vmem:[%s262] sm:%s255]
                %265 = vst [vmem:[%s263] sm:%s255] %v264
              $region134: #{custom-call.2} parent=128 // loop_footer
                %s261 = sadd.s32 1, %s257
              $region135: #{custom-call.2} parent=128 // loop_footer_branch
                %256 = sbr.rel target = $region131
              $region136: #{custom-call.2} parent=128 // loop_exit
                _
            $region129: #{custom-call.2} parent=113 // pred_fallthru
              _
          $region114: #{custom-call.2} parent=109 // pred_fallthru
            _
          // Predicated region
          $region115: #{custom-call.2} parent=109 // pred_check
            _
          $region116: #{custom-call.2} parent=109 // pred_check_branch
            %239 = sbr.rel (0) target = $region118
          $region117: #{custom-call.2} parent=109 // pred_region
            %s241 = ssub.s32 4, 1
            loop: start=0, step=1, limit=1
            $region119: #{custom-call.2} parent=117 // loop_pre_header
              _
            $region120: #{custom-call.2} parent=117 // loop_header
              %s243 = sphi 0, %s247
              %p244 = scmp.ge.s32.totalorder %s243, 1
              %s248 = sphi %s233, %s233
              %s249 = sphi %s229, %s229
            $region121: #{custom-call.2} parent=117 // loop_header_branch
              %246 = sbr.rel (%p244) target = $region125
            $region122: #{custom-call.2} parent=117 // loop_body
              %v250 = vld [vmem:[%s248] sm:%s241]
              %251 = vst [vmem:[%s249] sm:%s241] %v250
            $region123: #{custom-call.2} parent=117 // loop_footer
              %s247 = sadd.s32 1, %s243
            $region124: #{custom-call.2} parent=117 // loop_footer_branch
              %242 = sbr.rel target = $region120
            $region125: #{custom-call.2} parent=117 // loop_exit
              _
          $region118: #{custom-call.2} parent=109 // pred_fallthru
            _
        $region110: #{custom-call.2} parent=15 // pred_fallthru
          _
        %266 = vnop
      $region16: #{custom-call.2} parent=5 // pred_fallthru
        _
      %p267 = scmp.le.s32.totalorder 1, %s12
      %p268 = scmp.lt.s32.totalorder %s12, 17
      %p269 = pnand %p267, %p268
      %p270 = pneg %p269
      // Predicated region
      $region137: #{custom-call.2} parent=5 // pred_check
        _
      $region138: #{custom-call.2} parent=5 // pred_check_branch
        %272 = sbr.rel (%p269) target = $region140
      $region139: #{custom-call.2} parent=5 // pred_region
        #allocation18 [shape = 'f32[2,2]{1,0}', space=vmem, size = 0x1000, scoped, tag = 'a top-left matrix']
        #allocation19 [shape = 'f32[2,2]{1,0}', space=vmem, size = 0x1000, scoped, tag = 'a top-right matrix']
        #allocation20 [shape = 'f32[2,2]{1,0}', space=vmem, size = 0x1000, scoped, tag = 'a bottom-left matrix']
        #allocation21 [shape = 'f32[2,2]{1,0}', space=vmem, size = 0x1000, scoped, tag = 'a bottom-right matrix']
        %s273 = ssub.s32 %s12, 1
        %s274 = sand.u32 %s17, 1
        %s275 = sand.u32 %s17, 1
        %s276 = smul.addr %s275, 2
        %s277 = scalar_lea.vmem [#allocation1], %s276
        %s278 = sand.u32 %s17, 1
        %s279 = sand.u32 %s17, 1
        %s280 = smul.addr %s279, 2
        %s281 = scalar_lea.vmem [#allocation3], %s280
        %s282 = sand.u32 %s17, 1
        %s283 = sand.u32 %s17, 1
        %s284 = smul.addr %s283, 2
        %s285 = scalar_lea.vmem [#allocation5], %s284
        %s286 = sand.u32 %s17, 1
        %s287 = sand.u32 %s17, 1
        %s288 = smul.addr %s287, 2
        %s289 = scalar_lea.vmem [#allocation7], %s288
        %s290 = sand.u32 %s17, 1
        %s291 = sand.u32 %s17, 1
        %s292 = smul.addr %s291, 2
        %s293 = scalar_lea.vmem [#allocation1], %s292
        %s294 = sand.u32 %s17, 1
        %s295 = sand.u32 %s17, 1
        %s296 = smul.addr %s295, 2
        %s297 = scalar_lea.vmem [#allocation3], %s296
        %s298 = sand.u32 %s17, 1
        %s299 = sand.u32 %s17, 1
        %s300 = smul.addr %s299, 2
        %s301 = scalar_lea.vmem [#allocation5], %s300
        %s302 = sand.u32 %s17, 1
        %s303 = sand.u32 %s17, 1
        %s304 = smul.addr %s303, 2
        %s305 = scalar_lea.vmem [#allocation7], %s304
        %p306 = pneg %p54
        %p307 = pneg %p51
        %s308 = sand.u32 %s41, 1
        %s309 = sand.u32 %s41, 1
        %s310 = smul.addr %s309, 8
        %s311 = scalar_lea.vmem [#allocation8], %s310
        %p312 = pneg %p84
        %p313 = pneg %p81
        %s314 = sand.u32 %s71, 1
        %s315 = sand.u32 %s71, 1
        %s316 = smul.addr %s315, 8
        %s317 = scalar_lea.vmem [#allocation9], %s316
        %s318 = sand.u32 %s17, 1
        %s319 = sand.u32 %s17, 1
        %s320 = smul.addr %s319, 2
        %s321 = scalar_lea.vmem [#allocation11], %s320
        %s322 = sand.u32 %s17, 1
        %s323 = sand.u32 %s17, 1
        %s324 = smul.addr %s323, 2
        %s325 = scalar_lea.vmem [#allocation13], %s324
        %s326 = sand.u32 %s17, 1
        %s327 = sand.u32 %s17, 1
        %s328 = smul.addr %s327, 2
        %s329 = scalar_lea.vmem [#allocation15], %s328
        %s330 = sand.u32 %s17, 1
        %s331 = sand.u32 %s17, 1
        %s332 = smul.addr %s331, 2
        %s333 = scalar_lea.vmem [#allocation17], %s332
        %s335 = ssub.s32 4, 1
        %v336 = vld [vmem:[%s293] sm:%s335]
        %337 = vst [vmem:[#allocation0] sm:%s335] %v336
        %s339 = ssub.s32 4, 1
        %v340 = vld [vmem:[%s297] sm:%s339]
        %341 = vst [vmem:[#allocation2] sm:%s339] %v340
        %s343 = ssub.s32 4, 1
        %v344 = vld [vmem:[%s301] sm:%s343]
        %345 = vst [vmem:[#allocation4] sm:%s343] %v344
        %s347 = ssub.s32 4, 1
        %v348 = vld [vmem:[%s305] sm:%s347]
        %349 = vst [vmem:[#allocation6] sm:%s347] %v348
        %s350 = sshrl.u32 %s22, 3
        %s351 = sshrl.u32 %s22, 3
        %s352 = smov [#allocation18]
        %v353 = vld [vmem:[#allocation0] sm:$0xff]
        %354 = vst [vmem:[%s352] sm:$0xff] %v353
        %s355 = smov [#allocation19]
        %v356 = vld [vmem:[#allocation2] sm:$0xff]
        %357 = vst [vmem:[%s355] sm:$0xff] %v356
        %s358 = smov [#allocation20]
        %v359 = vld [vmem:[#allocation4] sm:$0xff]
        %360 = vst [vmem:[%s358] sm:$0xff] %v359
        %s361 = smov [#allocation21]
        %v362 = vld [vmem:[#allocation6] sm:$0xff]
        %363 = vst [vmem:[%s361] sm:$0xff] %v362
        %364 = vst [vmem:[#allocation10] sm:$0xff] 0.0
        %365 = vst [vmem:[#allocation12] sm:$0xff] 0.0
        %366 = vst [vmem:[#allocation14] sm:$0xff] 0.0
        %367 = vst [vmem:[#allocation16] sm:$0xff] 0.0
        %s368 = smov [#allocation10]
        %v369 = vlaneseq
        %v370 = vand.u32 %v369, 127
        %v371 = vmov %v370
        %v372 = vlaneseq
        %v373 = vshrl.u32 %v372, 7
        %v374 = vmov %v373
        %v375 = vld [vmem:[%s368] sm:$0x3]
        %vm378 = vcmp.eq.s32.totalorder %v374, %v371
        %v379 = vsel %vm378, 1.0, %v375
        %380 = vst [vmem:[%s368] sm:$0x3] %v379
        %s381 = smov [#allocation16]
        %v382 = vlaneseq
        %v383 = vand.u32 %v382, 127
        %v384 = vmov %v383
        %v385 = vlaneseq
        %v386 = vshrl.u32 %v385, 7
        %v387 = vmov %v386
        %v388 = vld [vmem:[%s381] sm:$0x3]
        %vm391 = vcmp.eq.s32.totalorder %v387, %v384
        %v392 = vsel %vm391, 1.0, %v388
        %393 = vst [vmem:[%s381] sm:$0x3] %v392
        // While loop
        $region141: #{custom-call.2} parent=139 // loop_pre_header
          _
        $region142: #{custom-call.2} parent=139 // loop_header
          %s395 = sphi 0, %s977
          %v396 = vlaneseq
          %v397 = vand.u32 %v396, 127
          %v398 = vmov %v397
          %v399 = vlaneseq
          %v400 = vshrl.u32 %v399, 7
          %v401 = vmov %v400
          %s402 = smov [#allocation18]
          %v403 = vlaneseq
          %v404 = vand.u32 %v403, 127
          %vm405 = vcmp.ge.s32.totalorder %v404, 0
          %vm406 = vcmp.lt.s32.totalorder %v404, 2
          %vm407 = vmand %vm405, %vm406
          %v408 = vld [vmem:[%s402] sm:$0x3]
          %v409 = vsel %vm407, %v408, 0.0
          %v410 = vmul.f32 %v409, %v409
          %vm413 = vcmp.eq.s32.totalorder %v401, %v398
          %v414 = vsel %vm413, 0.0, %v410
          %v415 = vlaneseq
          %v416 = vand.u32 %v415, 127
          %v417 = vmov %v416
          %v418 = vlaneseq
          %v419 = vshrl.u32 %v418, 7
          %v420 = vmov %v419
          %s421 = smov [#allocation19]
          %v422 = vlaneseq
          %v423 = vand.u32 %v422, 127
          %vm424 = vcmp.ge.s32.totalorder %v423, 0
          %vm425 = vcmp.lt.s32.totalorder %v423, 2
          %vm426 = vmand %vm424, %vm425
          %v427 = vld [vmem:[%s421] sm:$0x3]
          %v428 = vsel %vm426, %v427, 0.0
          %v429 = vmul.f32 %v428, %v428
          %v430 = vadd.f32 %v414, %v429
          %v431 = vadd.f32 %v410, %v429
          %v432 = vlaneseq
          %v433 = vand.u32 %v432, 127
          %v434 = vmov %v433
          %v435 = vlaneseq
          %v436 = vshrl.u32 %v435, 7
          %v437 = vmov %v436
          %s438 = smov [#allocation20]
          %v439 = vlaneseq
          %v440 = vand.u32 %v439, 127
          %vm441 = vcmp.ge.s32.totalorder %v440, 0
          %vm442 = vcmp.lt.s32.totalorder %v440, 2
          %vm443 = vmand %vm441, %vm442
          %v444 = vld [vmem:[%s438] sm:$0x3]
          %v445 = vsel %vm443, %v444, 0.0
          %v446 = vmul.f32 %v445, %v445
          %v447 = vadd.f32 %v430, %v446
          %v448 = vadd.f32 %v431, %v446
          %v449 = vlaneseq
          %v450 = vand.u32 %v449, 127
          %v451 = vmov %v450
          %v452 = vlaneseq
          %v453 = vshrl.u32 %v452, 7
          %v454 = vmov %v453
          %s455 = smov [#allocation21]
          %v456 = vlaneseq
          %v457 = vand.u32 %v456, 127
          %vm458 = vcmp.ge.s32.totalorder %v457, 0
          %vm459 = vcmp.lt.s32.totalorder %v457, 2
          %vm460 = vmand %vm458, %vm459
          %v461 = vld [vmem:[%s455] sm:$0x3]
          %v462 = vsel %vm460, %v461, 0.0
          %v463 = vmul.f32 %v462, %v462
          %vm466 = vcmp.eq.s32.totalorder %v454, %v451
          %v467 = vsel %vm466, 0.0, %v463
          %v468 = vadd.f32 %v447, %v467
          %v469 = vadd.f32 %v448, %v463
          %470 = vadd.xlane.f32.xlu0 %v469
          %v471 = vpop.xlane.xlu0 %470
          %v472 = vrot.slane %v471, 4
          %v473 = vadd.f32 %v471, %v472
          %v474 = vrot.slane %v473, 2
          %v475 = vadd.f32 %v473, %v474
          %v476 = vrot.slane %v475, 1
          %v477 = vadd.f32 %v475, %v476
          %478 = vadd.xlane.f32.xlu0 %v468
          %v479 = vpop.xlane.xlu0 %478
          %v480 = vrot.slane %v479, 4
          %v481 = vadd.f32 %v479, %v480
          %v482 = vrot.slane %v481, 2
          %v483 = vadd.f32 %v481, %v482
          %v484 = vrot.slane %v483, 1
          %v485 = vadd.f32 %v483, %v484
          %s486 = vtos %v485
          %s487 = vtos %v477
          %s488 = smul.f32 1e-10, %s487
          %p489 = scmp.le.f32.partialorder %s486, %s488
          %p490 = scmp.ge.s32.totalorder %s395, 15
          %p491 = por %p489, %p490
        $region143: #{custom-call.2} parent=139 // loop_header_branch
          %979 = sbr.rel (%p491) target = $region147
        $region144: #{custom-call.2} parent=139 // loop_body
          loop: start=0, step=1, limit=3
          $region148: #{custom-call.2} parent=144 // loop_pre_header
            _
          $region149: #{custom-call.2} parent=144 // loop_header
            %s493 = sphi 0, %s497
            %p494 = scmp.ge.s32.totalorder %s493, 3
          $region150: #{custom-call.2} parent=144 // loop_header_branch
            %496 = sbr.rel (%p494) target = $region154
          $region151: #{custom-call.2} parent=144 // loop_body
            #allocation22 [shape = 'f32[1024]{0}', space=vmem, size = 0x1000, scoped, tag = 'a_tl_diag vmem']
            #allocation23 [shape = 'f32[1024]{0}', space=vmem, size = 0x1000, scoped, tag = 'a_tr_diag vmem']
            #allocation24 [shape = 'f32[1024]{0}', space=vmem, size = 0x1000, scoped, tag = 'a_br_diag vmem']
            #allocation25 [shape = 'f32[1024]{0}', space=vmem, size = 0x1000, scoped, tag = 'rt1 vmem']
            #allocation26 [shape = 'f32[1024]{0}', space=vmem, size = 0x1000, scoped, tag = 'rt2 vmem']
            #allocation27 [shape = 'f32[1024]{0}', space=vmem, size = 0x1000, scoped, tag = 'c vmem']
            #allocation28 [shape = 'f32[1024]{0}', space=vmem, size = 0x1000, scoped, tag = 's vmem']
            #allocation29 [shape = 'f32[4096]{0}', space=vmem, size = 0x4000, scoped, tag = 'c broadcast']
            #allocation30 [shape = 'f32[4096]{0}', space=vmem, size = 0x4000, scoped, tag = 's broadcast']
            %s498 = smov [#allocation18]
            %s499 = smov [#allocation22]
            %v500 = vlaneseq
            %v501 = vand.u32 %v500, 127
            %v502 = vmov %v501
            %v503 = vlaneseq
            %v504 = vshrl.u32 %v503, 7
            %v505 = vmov %v504
            %v506 = vld [vmem:[%s498] sm:$0x3]
            %vm509 = vcmp.eq.s32.totalorder %v505, %v502
            %v510 = vsel %vm509, %v506, 0.0
            %v511 = vrot.slane %v510, 4
            %v512 = vadd.f32 %v510, %v511
            %v513 = vrot.slane %v512, 2
            %v514 = vadd.f32 %v512, %v513
            %v515 = vrot.slane %v514, 1
            %v516 = vadd.f32 %v514, %v515
            %517 = vst [vmem:[%s499] sm:$0x1] %v516
            %s518 = smov [#allocation19]
            %s519 = smov [#allocation23]
            %v520 = vlaneseq
            %v521 = vand.u32 %v520, 127
            %v522 = vmov %v521
            %v523 = vlaneseq
            %v524 = vshrl.u32 %v523, 7
            %v525 = vmov %v524
            %v526 = vld [vmem:[%s518] sm:$0x3]
            %vm529 = vcmp.eq.s32.totalorder %v525, %v522
            %v530 = vsel %vm529, %v526, 0.0
            %v531 = vrot.slane %v530, 4
            %v532 = vadd.f32 %v530, %v531
            %v533 = vrot.slane %v532, 2
            %v534 = vadd.f32 %v532, %v533
            %v535 = vrot.slane %v534, 1
            %v536 = vadd.f32 %v534, %v535
            %537 = vst [vmem:[%s519] sm:$0x1] %v536
            %s538 = smov [#allocation21]
            %s539 = smov [#allocation24]
            %v540 = vlaneseq
            %v541 = vand.u32 %v540, 127
            %v542 = vmov %v541
            %v543 = vlaneseq
            %v544 = vshrl.u32 %v543, 7
            %v545 = vmov %v544
            %v546 = vld [vmem:[%s538] sm:$0x3]
            %vm549 = vcmp.eq.s32.totalorder %v545, %v542
            %v550 = vsel %vm549, %v546, 0.0
            %v551 = vrot.slane %v550, 4
            %v552 = vadd.f32 %v550, %v551
            %v553 = vrot.slane %v552, 2
            %v554 = vadd.f32 %v552, %v553
            %v555 = vrot.slane %v554, 1
            %v556 = vadd.f32 %v554, %v555
            %557 = vst [vmem:[%s539] sm:$0x1] %v556
            %s558 = smov [#allocation27]
            %s559 = smov [#allocation28]
            %s560 = smov [#allocation22]
            %v561 = vld [vmem:[%s560] sm:$0xff]
            %s562 = smov [#allocation23]
            %v563 = vld [vmem:[%s562] sm:$0xff]
            %s564 = smov [#allocation24]
            %v565 = vld [vmem:[%s564] sm:$0xff]
            %v566 = vsub.f32 %v565, %v561
            %v567 = vmul.f32 2.0, %v563
            %v568 = vrcp.pop %v567
            %v569 = vmul.f32 %v567, %v568
            %v570 = vsub.f32 1.0, %v569
            %v571 = vmul.f32 %v568, %v570
            %v572 = vadd.f32 %v568, %v571
            %vm573 = vweird.f32 %v567
            %vm574 = vweird.f32 %v568
            %vm575 = vmor %vm573, %vm574
            %v576 = vsel %vm575, %v568, %v572
            %v577 = vand.u32 2147483647, %v567
            %vm578 = vcmp.eq.f32.partialorder %v577, 8.507059e+37
            %v579 = vand.u32 %v567, 2147483648
            %v580 = vor.u32 1.1754944e-38, %v579
            %v581 = vsel %vm578, %v580, %v576
            %v582 = vmul.f32 %v566, %v581
            %vm583 = vcmp.ge.f32.partialorder %v582, 0.0
            %v584 = vmul.f32 %v582, %v582
            %v585 = vadd.f32 1.0, %v584
            %v586 = vrsqrt.pop %v585
            %v587 = vmul.f32 %v586, %v585
            %v588 = vmul.f32 %v587, %v586
            %v589 = vmul.f32 0.5, %v588
            %v590 = vsub.f32 1.5, %v589
            %v591 = vmul.f32 %v586, %v590
            %v592 = vmul.f32 %v585, %v591
            %vm593 = vcmp.eq.f32.partialorder %v585, inf
            %v594 = vsel %vm593, %v585, %v592
            %vm595 = vcmp.eq.f32.partialorder %v585, 0.0
            %v596 = vand.u32 %v585, 2147483648
            %v597 = vsel %vm595, %v596, %v594
            %v598 = vxor.u32 %v597, 2147483648
            %v599 = vsel %vm583, %v597, %v598
            %v600 = vadd.f32 %v582, %v599
            %v601 = vrcp.pop %v600
            %v602 = vmul.f32 %v600, %v601
            %v603 = vsub.f32 1.0, %v602
            %v604 = vmul.f32 %v601, %v603
            %v605 = vadd.f32 %v601, %v604
            %vm606 = vweird.f32 %v600
            %vm607 = vweird.f32 %v601
            %vm608 = vmor %vm606, %vm607
            %v609 = vsel %vm608, %v601, %v605
            %v610 = vand.u32 2147483647, %v600
            %vm611 = vcmp.eq.f32.partialorder %v610, 8.507059e+37
            %v612 = vand.u32 %v600, 2147483648
            %v613 = vor.u32 1.1754944e-38, %v612
            %v614 = vsel %vm611, %v613, %v609
            %v615 = vand.u32 2147483647, %v561
            %v616 = vand.u32 2147483647, %v563
            %v617 = vand.u32 2147483647, %v565
            %v618 = vmin.f32 %v615, %v617
            %v619 = vmul.f32 1.1920929e-08, %v618
            %vm620 = vcmp.le.f32.partialorder %v616, %v619
            %v621 = vsel %vm620, 0.0, %v614
            %v622 = vmul.f32 %v621, %v621
            %v623 = vadd.f32 1.0, %v622
            %v624 = vrsqrt.pop %v623
            %v625 = vmul.f32 %v624, %v623
            %v626 = vmul.f32 %v625, %v624
            %v627 = vmul.f32 0.5, %v626
            %v628 = vsub.f32 1.5, %v627
            %v629 = vmul.f32 %v624, %v628
            %vm630 = vweird.f32 %v623
            %vm631 = vweird.f32 %v624
            %vm632 = vmor %vm630, %vm631
            %v633 = vsel %vm632, %v624, %v629
            %v634 = vmul.f32 %v621, %v633
            %v635 = vmul.f32 %v621, %v563
            %v636 = vsub.f32 %v561, %v635
            %v637 = vmul.f32 %v621, %v563
            %v638 = vadd.f32 %v565, %v637
            %s639 = smov [#allocation25]
            %640 = vst [vmem:[%s639] sm:$0xff] %v636
            %s641 = smov [#allocation26]
            %642 = vst [vmem:[%s641] sm:$0xff] %v638
            %s643 = smov %s558
            %644 = vst [vmem:[%s643] sm:$0xff] %v633
            %s645 = smov %s559
            %646 = vst [vmem:[%s645] sm:$0xff] %v634
            %s647 = smov [#allocation27]
            %v648 = vld [vmem:[%s647] ss:$0 sm:$0xff]
            %v649 = vlaneseq
            %v650 = vand.u32 %v649, 127
            %v651 = vmov %v650
            %v652 = vlaneseq
            %v653 = vshrl.u32 %v652, 7
            %v654 = vmov %v653
            %vm656 = vcmp.eq.s32.totalorder %v654, %v651
            %v657 = vsel %vm656, %v648, 0.0
            %658 = vadd.xlane.f32.xlu0 %v657
            %v659 = vpop.xlane.xlu0 %658
            %s660 = smov [#allocation29]
            %661 = vst [vmem:[%s660] sm:$0xff] %v659
            %s662 = smov [#allocation28]
            %v663 = vld [vmem:[%s662] ss:$0 sm:$0xff]
            %v664 = vlaneseq
            %v665 = vand.u32 %v664, 127
            %v666 = vmov %v665
            %v667 = vlaneseq
            %v668 = vshrl.u32 %v667, 7
            %v669 = vmov %v668
            %vm671 = vcmp.eq.s32.totalorder %v669, %v666
            %v672 = vsel %vm671, %v663, 0.0
            %673 = vadd.xlane.f32.xlu0 %v672
            %v674 = vpop.xlane.xlu0 %673
            %s675 = smov [#allocation30]
            %676 = vst [vmem:[%s675] sm:$0xff] %v674
            %s677 = smov [#allocation29]
            %v678 = vld [vmem:[%s677] sm:$0xff]
            %s679 = smov [#allocation30]
            %v680 = vld [vmem:[%s679] sm:$0xff]
            %s681 = smov [#allocation18]
            %s682 = smov [#allocation19]
            %s683 = smov [#allocation20]
            %s684 = smov [#allocation21]
            %v685 = vld [vmem:[%s681] sm:$0x3]
            %v686 = vld [vmem:[%s682] sm:$0x3]
            %v687 = vld [vmem:[%s683] sm:$0x3]
            %v688 = vld [vmem:[%s684] sm:$0x3]
            %v689 = vmul.f32 %v678, %v685
            %v690 = vmul.f32 %v680, %v687
            %v691 = vsub.f32 %v689, %v690
            %v692 = vmul.f32 %v678, %v686
            %v693 = vmul.f32 %v680, %v688
            %v694 = vsub.f32 %v692, %v693
            %v695 = vmul.f32 %v680, %v685
            %v696 = vmul.f32 %v678, %v687
            %v697 = vadd.f32 %v695, %v696
            %v698 = vmul.f32 %v680, %v686
            %v699 = vmul.f32 %v678, %v688
            %v700 = vadd.f32 %v698, %v699
            %701 = vst [vmem:[%s681] sm:$0x3] %v691
            %702 = vst [vmem:[%s682] sm:$0x3] %v694
            %703 = vst [vmem:[%s683] sm:$0x3] %v697
            %704 = vst [vmem:[%s684] sm:$0x3] %v700
            %s705 = smov [#allocation27]
            %v706 = vld [vmem:[%s705] ss:$0 sm:$0xff]
            %s707 = smov [#allocation28]
            %v708 = vld [vmem:[%s707] ss:$0 sm:$0xff]
            %s709 = smov [#allocation18]
            %s710 = smov [#allocation19]
            %s711 = smov [#allocation20]
            %s712 = smov [#allocation21]
            %v713 = vld [vmem:[%s709] sm:$0x3]
            %v714 = vld [vmem:[%s710] sm:$0x3]
            %v715 = vld [vmem:[%s711] sm:$0x3]
            %v716 = vld [vmem:[%s712] sm:$0x3]
            %v717 = vmul.f32 %v706, %v713
            %v718 = vmul.f32 %v708, %v714
            %v719 = vsub.f32 %v717, %v718
            %v720 = vmul.f32 %v708, %v713
            %v721 = vmul.f32 %v706, %v714
            %v722 = vadd.f32 %v720, %v721
            %v723 = vmul.f32 %v706, %v715
            %v724 = vmul.f32 %v708, %v716
            %v725 = vsub.f32 %v723, %v724
            %v726 = vmul.f32 %v708, %v715
            %v727 = vmul.f32 %v706, %v716
            %v728 = vadd.f32 %v726, %v727
            %729 = vst [vmem:[%s709] sm:$0x3] %v719
            %730 = vst [vmem:[%s710] sm:$0x3] %v722
            %731 = vst [vmem:[%s711] sm:$0x3] %v725
            %732 = vst [vmem:[%s712] sm:$0x3] %v728
            %s733 = smov [#allocation18]
            %s734 = smov [#allocation25]
            %v735 = vlaneseq
            %v736 = vand.u32 %v735, 127
            %v737 = vmov %v736
            %v738 = vlaneseq
            %v739 = vshrl.u32 %v738, 7
            %v740 = vmov %v739
            %v741 = vld [vmem:[%s734] ss:$0 sm:$0xff]
            %v742 = vld [vmem:[%s733] sm:$0x3]
            %vm745 = vcmp.eq.s32.totalorder %v740, %v737
            %v746 = vsel %vm745, %v741, %v742
            %747 = vst [vmem:[%s733] sm:$0x3] %v746
            %s748 = smov [#allocation19]
            %v749 = vlaneseq
            %v750 = vand.u32 %v749, 127
            %v751 = vmov %v750
            %v752 = vlaneseq
            %v753 = vshrl.u32 %v752, 7
            %v754 = vmov %v753
            %v755 = vld [vmem:[%s748] sm:$0x3]
            %vm758 = vcmp.eq.s32.totalorder %v754, %v751
            %v759 = vsel %vm758, 0.0, %v755
            %760 = vst [vmem:[%s748] sm:$0x3] %v759
            %s761 = smov [#allocation20]
            %v762 = vlaneseq
            %v763 = vand.u32 %v762, 127
            %v764 = vmov %v763
            %v765 = vlaneseq
            %v766 = vshrl.u32 %v765, 7
            %v767 = vmov %v766
            %v768 = vld [vmem:[%s761] sm:$0x3]
            %vm771 = vcmp.eq.s32.totalorder %v767, %v764
            %v772 = vsel %vm771, 0.0, %v768
            %773 = vst [vmem:[%s761] sm:$0x3] %v772
            %s774 = smov [#allocation21]
            %s775 = smov [#allocation26]
            %v776 = vlaneseq
            %v777 = vand.u32 %v776, 127
            %v778 = vmov %v777
            %v779 = vlaneseq
            %v780 = vshrl.u32 %v779, 7
            %v781 = vmov %v780
            %v782 = vld [vmem:[%s775] ss:$0 sm:$0xff]
            %v783 = vld [vmem:[%s774] sm:$0x3]
            %vm786 = vcmp.eq.s32.totalorder %v781, %v778
            %v787 = vsel %vm786, %v782, %v783
            %788 = vst [vmem:[%s774] sm:$0x3] %v787
            %s789 = smov [#allocation18]
            %s790 = smov [#allocation19]
            %v791 = vld [vmem:[%s790] sm:$0x3]
            %792 = vrot.lane.b32.xlu0 %v791, 1
            %v793 = vpop.permute.xlu0 %792
            %v794 = vld [vmem:[%s789] sm:$0x3]
            %v795 = vld [vmem:[%s789] sm:$0x3]
            %796 = vrot.lane.b32.xlu0 %v795, 1
            %v797 = vpop.permute.xlu0 %796
            %v798 = vlaneseq
            %v799 = vand.u32 %v798, 127
            %vm800 = vcmp.eq.s32.totalorder %v799, 0
            %v801 = vsel %vm800, %v795, %v797
            %v802 = vlaneseq
            %v803 = vand.u32 %v802, 127
            %vm804 = vcmp.eq.s32.totalorder %v803, 1
            %v805 = vsel %vm804, %v793, %v801
            %v806 = vlaneseq
            %v807 = vand.u32 %v806, 127
            %vm808 = vcmp.ge.s32.totalorder %v807, 0
            %vm809 = vcmp.lt.s32.totalorder %v807, 2
            %vm810 = vmand %vm808, %vm809
            %v811 = vsel %vm810, %v805, 0.0
            %v812 = vld [vmem:[%s790] sm:$0x3]
            %813 = vrot.lane.b32.xlu0 %v812, 127
            %v814 = vpop.permute.xlu0 %813
            %v815 = vlaneseq
            %v816 = vand.u32 %v815, 127
            %vm817 = vcmp.eq.s32.totalorder %v816, 1
            %v818 = vsel %vm817, %v794, %v814
            %819 = vst [vmem:[%s789] sm:$0x3] %v811
            %820 = vst [vmem:[%s790] sm:$0x3] %v818
            %s821 = smov [#allocation20]
            %s822 = smov [#allocation21]
            %v823 = vld [vmem:[%s822] sm:$0x3]
            %824 = vrot.lane.b32.xlu0 %v823, 1
            %v825 = vpop.permute.xlu0 %824
            %v826 = vld [vmem:[%s821] sm:$0x3]
            %v827 = vld [vmem:[%s821] sm:$0x3]
            %828 = vrot.lane.b32.xlu0 %v827, 1
            %v829 = vpop.permute.xlu0 %828
            %v830 = vlaneseq
            %v831 = vand.u32 %v830, 127
            %vm832 = vcmp.eq.s32.totalorder %v831, 0
            %v833 = vsel %vm832, %v827, %v829
            %v834 = vlaneseq
            %v835 = vand.u32 %v834, 127
            %vm836 = vcmp.eq.s32.totalorder %v835, 1
            %v837 = vsel %vm836, %v825, %v833
            %v838 = vlaneseq
            %v839 = vand.u32 %v838, 127
            %vm840 = vcmp.ge.s32.totalorder %v839, 0
            %vm841 = vcmp.lt.s32.totalorder %v839, 2
            %vm842 = vmand %vm840, %vm841
            %v843 = vsel %vm842, %v837, 0.0
            %v844 = vld [vmem:[%s822] sm:$0x3]
            %845 = vrot.lane.b32.xlu0 %v844, 127
            %v846 = vpop.permute.xlu0 %845
            %v847 = vlaneseq
            %v848 = vand.u32 %v847, 127
            %vm849 = vcmp.eq.s32.totalorder %v848, 1
            %v850 = vsel %vm849, %v826, %v846
            %851 = vst [vmem:[%s821] sm:$0x3] %v843
            %852 = vst [vmem:[%s822] sm:$0x3] %v850
            %s853 = smov [#allocation18]
            %s854 = smov [#allocation20]
            %v855 = vld [vmem:[%s853] ss:$0 sm:$0xff]
            %s857 = scalar_lea.vmem %s853, 4294967295
            %v858 = vld [vmem:[%s857] sm:$0x2]
            %v859 = vlaneseq
            %v860 = vshrl.u32 %v859, 7
            %vm861 = vcmp.eq.s32.totalorder %v860, 0
            %v862 = vsel %vm861, %v855, %v858
            %s863 = scalar_lea.vmem %s853, 1
            %v864 = vld [vmem:[%s863] ss:$0 sm:$0xff]
            %865 = vst [vmem:[%s853] sm:$0x3] %v862
            %v866 = vld [vmem:[%s854] ss:$0 sm:$0xff]
            %s867 = scalar_lea.vmem %s853, 1
            %868 = vst [vmem:[%s867] sm:$0x1] %v866
            %s869 = scalar_lea.vmem %s854, 1
            %v870 = vld [vmem:[%s869] sm:$0x1]
            %v871 = vlaneseq
            %v872 = vshrl.u32 %v871, 7
            %vm873 = vcmp.eq.s32.totalorder %v872, 1
            %v874 = vsel %vm873, %v864, %v870
            %v875 = vld [vmem:[%s854] ss:$0 sm:$0xff]
            %876 = vst [vmem:[%s854] sm:$0x3] %v874
            %s877 = smov [#allocation19]
            %s878 = smov [#allocation21]
            %v879 = vld [vmem:[%s877] ss:$0 sm:$0xff]
            %s881 = scalar_lea.vmem %s877, 4294967295
            %v882 = vld [vmem:[%s881] sm:$0x2]
            %v883 = vlaneseq
            %v884 = vshrl.u32 %v883, 7
            %vm885 = vcmp.eq.s32.totalorder %v884, 0
            %v886 = vsel %vm885, %v879, %v882
            %s887 = scalar_lea.vmem %s877, 1
            %v888 = vld [vmem:[%s887] ss:$0 sm:$0xff]
            %889 = vst [vmem:[%s877] sm:$0x3] %v886
            %v890 = vld [vmem:[%s878] ss:$0 sm:$0xff]
            %s891 = scalar_lea.vmem %s877, 1
            %892 = vst [vmem:[%s891] sm:$0x1] %v890
            %s893 = scalar_lea.vmem %s878, 1
            %v894 = vld [vmem:[%s893] sm:$0x1]
            %v895 = vlaneseq
            %v896 = vshrl.u32 %v895, 7
            %vm897 = vcmp.eq.s32.totalorder %v896, 1
            %v898 = vsel %vm897, %v888, %v894
            %v899 = vld [vmem:[%s878] ss:$0 sm:$0xff]
            %900 = vst [vmem:[%s878] sm:$0x3] %v898
            %s901 = smov [#allocation29]
            %v902 = vld [vmem:[%s901] sm:$0xff]
            %s903 = smov [#allocation30]
            %v904 = vld [vmem:[%s903] sm:$0xff]
            %s905 = smov [#allocation10]
            %s906 = smov [#allocation12]
            %s907 = smov [#allocation14]
            %s908 = smov [#allocation16]
            %v909 = vld [vmem:[%s905] sm:$0x3]
            %v910 = vld [vmem:[%s906] sm:$0x3]
            %v911 = vld [vmem:[%s907] sm:$0x3]
            %v912 = vld [vmem:[%s908] sm:$0x3]
            %v913 = vmul.f32 %v902, %v909
            %v914 = vmul.f32 %v904, %v911
            %v915 = vsub.f32 %v913, %v914
            %v916 = vmul.f32 %v902, %v910
            %v917 = vmul.f32 %v904, %v912
            %v918 = vsub.f32 %v916, %v917
            %v919 = vmul.f32 %v904, %v909
            %v920 = vmul.f32 %v902, %v911
            %v921 = vadd.f32 %v919, %v920
            %v922 = vmul.f32 %v904, %v910
            %v923 = vmul.f32 %v902, %v912
            %v924 = vadd.f32 %v922, %v923
            %925 = vst [vmem:[%s905] sm:$0x3] %v915
            %926 = vst [vmem:[%s906] sm:$0x3] %v918
            %927 = vst [vmem:[%s907] sm:$0x3] %v921
            %928 = vst [vmem:[%s908] sm:$0x3] %v924
            %s929 = smov [#allocation10]
            %s930 = smov [#allocation14]
            %v931 = vld [vmem:[%s929] ss:$0 sm:$0xff]
            %s933 = scalar_lea.vmem %s929, 4294967295
            %v934 = vld [vmem:[%s933] sm:$0x2]
            %v935 = vlaneseq
            %v936 = vshrl.u32 %v935, 7
            %vm937 = vcmp.eq.s32.totalorder %v936, 0
            %v938 = vsel %vm937, %v931, %v934
            %s939 = scalar_lea.vmem %s929, 1
            %v940 = vld [vmem:[%s939] ss:$0 sm:$0xff]
            %941 = vst [vmem:[%s929] sm:$0x3] %v938
            %v942 = vld [vmem:[%s930] ss:$0 sm:$0xff]
            %s943 = scalar_lea.vmem %s929, 1
            %944 = vst [vmem:[%s943] sm:$0x1] %v942
            %s945 = scalar_lea.vmem %s930, 1
            %v946 = vld [vmem:[%s945] sm:$0x1]
            %v947 = vlaneseq
            %v948 = vshrl.u32 %v947, 7
            %vm949 = vcmp.eq.s32.totalorder %v948, 1
            %v950 = vsel %vm949, %v940, %v946
            %v951 = vld [vmem:[%s930] ss:$0 sm:$0xff]
            %952 = vst [vmem:[%s930] sm:$0x3] %v950
            %s953 = smov [#allocation12]
            %s954 = smov [#allocation16]
            %v955 = vld [vmem:[%s953] ss:$0 sm:$0xff]
            %s957 = scalar_lea.vmem %s953, 4294967295
            %v958 = vld [vmem:[%s957] sm:$0x2]
            %v959 = vlaneseq
            %v960 = vshrl.u32 %v959, 7
            %vm961 = vcmp.eq.s32.totalorder %v960, 0
            %v962 = vsel %vm961, %v955, %v958
            %s963 = scalar_lea.vmem %s953, 1
            %v964 = vld [vmem:[%s963] ss:$0 sm:$0xff]
            %965 = vst [vmem:[%s953] sm:$0x3] %v962
            %v966 = vld [vmem:[%s954] ss:$0 sm:$0xff]
            %s967 = scalar_lea.vmem %s953, 1
            %968 = vst [vmem:[%s967] sm:$0x1] %v966
            %s969 = scalar_lea.vmem %s954, 1
            %v970 = vld [vmem:[%s969] sm:$0x1]
            %v971 = vlaneseq
            %v972 = vshrl.u32 %v971, 7
            %vm973 = vcmp.eq.s32.totalorder %v972, 1
            %v974 = vsel %vm973, %v964, %v970
            %v975 = vld [vmem:[%s954] ss:$0 sm:$0xff]
            %976 = vst [vmem:[%s954] sm:$0x3] %v974
          $region152: #{custom-call.2} parent=144 // loop_footer
            %s497 = sadd.s32 1, %s493
          $region153: #{custom-call.2} parent=144 // loop_footer_branch
            %492 = sbr.rel target = $region149
          $region154: #{custom-call.2} parent=144 // loop_exit
            _
          %s977 = sadd.s32 %s395, 1
        $region145: #{custom-call.2} parent=139 // loop_footer
          _
        $region146: #{custom-call.2} parent=139 // loop_footer_branch
          %394 = sbr.rel target = $region142
        $region147: #{custom-call.2} parent=139 // loop_exit
          _
        %s980 = sand.u32 %s22, 7
        %s981 = scalar_lea.vmem %s311, %s980 [#allocation8]
        %s982 = sand.u32 %s22, 7
        %s983 = scalar_lea.vmem %s317, %s982 [#allocation9]
        %s984 = smov [#allocation18]
        %s985 = smov %s981
        %v986 = vlaneseq
        %v987 = vand.u32 %v986, 127
        %v988 = vmov %v987
        %v989 = vlaneseq
        %v990 = vshrl.u32 %v989, 7
        %v991 = vmov %v990
        %v992 = vld [vmem:[%s984] sm:$0x3]
        %vm995 = vcmp.eq.s32.totalorder %v991, %v988
        %v996 = vsel %vm995, %v992, 0.0
        %v997 = vrot.slane %v996, 4
        %v998 = vadd.f32 %v996, %v997
        %v999 = vrot.slane %v998, 2
        %v1000 = vadd.f32 %v998, %v999
        %v1001 = vrot.slane %v1000, 1
        %v1002 = vadd.f32 %v1000, %v1001
        %1003 = vst [vmem:[%s985] sm:$0x1] %v1002
        %s1004 = smov [#allocation21]
        %s1005 = smov %s983
        %v1006 = vlaneseq
        %v1007 = vand.u32 %v1006, 127
        %v1008 = vmov %v1007
        %v1009 = vlaneseq
        %v1010 = vshrl.u32 %v1009, 7
        %v1011 = vmov %v1010
        %v1012 = vld [vmem:[%s1004] sm:$0x3]
        %vm1015 = vcmp.eq.s32.totalorder %v1011, %v1008
        %v1016 = vsel %vm1015, %v1012, 0.0
        %v1017 = vrot.slane %v1016, 4
        %v1018 = vadd.f32 %v1016, %v1017
        %v1019 = vrot.slane %v1018, 2
        %v1020 = vadd.f32 %v1018, %v1019
        %v1021 = vrot.slane %v1020, 1
        %v1022 = vadd.f32 %v1020, %v1021
        %1023 = vst [vmem:[%s1005] sm:$0x1] %v1022
        %s1025 = ssub.s32 4, 1
        %v1026 = vld [vmem:[#allocation10] sm:%s1025]
        %s1028 = ssub.s32 4, 1
        %1029 = vst [vmem:[%s321] sm:%s1028] %v1026
        %s1031 = ssub.s32 4, 1
        %v1032 = vld [vmem:[#allocation12] sm:%s1031]
        %s1034 = ssub.s32 4, 1
        %1035 = vst [vmem:[%s325] sm:%s1034] %v1032
        %s1037 = ssub.s32 4, 1
        %v1038 = vld [vmem:[#allocation14] sm:%s1037]
        %s1040 = ssub.s32 4, 1
        %1041 = vst [vmem:[%s329] sm:%s1040] %v1038
        %s1043 = ssub.s32 4, 1
        %v1044 = vld [vmem:[#allocation16] sm:%s1043]
        %s1046 = ssub.s32 4, 1
        %1047 = vst [vmem:[%s333] sm:%s1046] %v1044
        %s1048 = sand.u32 %s41, 1
        %s1049 = sand.u32 %s41, 1
        %s1050 = smul.addr %s1049, 8
        %s1051 = scalar_lea.vmem [#allocation8], %s1050
        %s1052 = sand.u32 %s71, 1
        %s1053 = sand.u32 %s71, 1
        %s1054 = smul.addr %s1053, 8
        %s1055 = scalar_lea.vmem [#allocation9], %s1054
        %s1056 = sand.u32 %s17, 1
        %s1057 = sand.u32 %s17, 1
        %s1058 = smul.addr %s1057, 2
        %s1059 = scalar_lea.vmem [#allocation11], %s1058
        %s1060 = sand.u32 %s17, 1
        %s1061 = sand.u32 %s17, 1
        %s1062 = smul.addr %s1061, 2
        %s1063 = scalar_lea.vmem [#allocation13], %s1062
        %s1064 = sand.u32 %s17, 1
        %s1065 = sand.u32 %s17, 1
        %s1066 = smul.addr %s1065, 2
        %s1067 = scalar_lea.vmem [#allocation15], %s1066
        %s1068 = sand.u32 %s17, 1
        %s1069 = sand.u32 %s17, 1
        %s1070 = smul.addr %s1069, 2
        %s1071 = scalar_lea.vmem [#allocation17], %s1070
        // Predicated region
        $region155: #{custom-call.2} parent=139 // pred_check
          %p1072 = pneg %p51
        $region156: #{custom-call.2} parent=139 // pred_check_branch
          %1074 = sbr.rel (%p1072) target = $region158
        $region157: #{custom-call.2} parent=139 // pred_region
          %s1075 = sshrl.u32 %s22, 3
          %s1076 = sadd.s32 %s1075, %s21
          %s1077 = smul.addr %s1076, 8
          %s1078 = scalar_lea.vmem %s4, %s1077
          // Predicated region
          $region159: #{custom-call.2} parent=157 // pred_check
            _
          $region160: #{custom-call.2} parent=157 // pred_check_branch
            %1080 = sbr.rel (0) target = $region162
          $region161: #{custom-call.2} parent=157 // pred_region
            // Predicated region
            $region163: #{custom-call.2} parent=161 // pred_check
              _
            $region164: #{custom-call.2} parent=161 // pred_check_branch
              %1082 = sbr.rel (0) target = $region166
            $region165: #{custom-call.2} parent=161 // pred_region
              // Predicated region
              $region178: #{custom-call.2} parent=165 // pred_check
                _
              $region179: #{custom-call.2} parent=165 // pred_check_branch
                %1098 = sbr.rel (0) target = $region181
              $region180: #{custom-call.2} parent=165 // pred_region
                loop: start=0, step=1, limit=1
                $region182: #{custom-call.2} parent=180 // loop_pre_header
                  _
                $region183: #{custom-call.2} parent=180 // loop_header
                  %s1100 = sphi 0, %s1104
                  %p1101 = scmp.ge.s32.totalorder %s1100, 1
                  %s1105 = sphi %s1051, %s1051
                  %s1106 = sphi %s1078, %s1078
                $region184: #{custom-call.2} parent=180 // loop_header_branch
                  %1103 = sbr.rel (%p1101) target = $region188
                $region185: #{custom-call.2} parent=180 // loop_body
                  %v1107 = vld [vmem:[%s1105] sm:$0xff]
                  %1108 = vst [vmem:[%s1106] sm:$0xff] %v1107
                $region186: #{custom-call.2} parent=180 // loop_footer
                  %s1104 = sadd.s32 1, %s1100
                $region187: #{custom-call.2} parent=180 // loop_footer_branch
                  %1099 = sbr.rel target = $region183
                $region188: #{custom-call.2} parent=180 // loop_exit
                  _
              $region181: #{custom-call.2} parent=165 // pred_fallthru
                _
              // Predicated region
              $region189: #{custom-call.2} parent=165 // pred_check
                _
              $region190: #{custom-call.2} parent=165 // pred_check_branch
                %1110 = sbr.rel target = $region192
              $region191: #{custom-call.2} parent=165 // pred_region
                _
              $region192: #{custom-call.2} parent=165 // pred_fallthru
                _
            $region166: #{custom-call.2} parent=161 // pred_fallthru
              _
            // Predicated region
            $region167: #{custom-call.2} parent=161 // pred_check
              _
            $region168: #{custom-call.2} parent=161 // pred_check_branch
              %1084 = sbr.rel target = $region170
            $region169: #{custom-call.2} parent=161 // pred_region
              %s1086 = ssub.s32 256, 1
              loop: start=0, step=1, limit=1
              $region171: #{custom-call.2} parent=169 // loop_pre_header
                _
              $region172: #{custom-call.2} parent=169 // loop_header
                %s1088 = sphi 0, %s1092
                %p1089 = scmp.ge.s32.totalorder %s1088, 1
                %s1093 = sphi %s1051, %s1051
                %s1094 = sphi %s1078, %s1078
              $region173: #{custom-call.2} parent=169 // loop_header_branch
                %1091 = sbr.rel (%p1089) target = $region177
              $region174: #{custom-call.2} parent=169 // loop_body
                %v1095 = vld [vmem:[%s1093] sm:%s1086]
                %1096 = vst [vmem:[%s1094] sm:%s1086] %v1095
              $region175: #{custom-call.2} parent=169 // loop_footer
                %s1092 = sadd.s32 1, %s1088
              $region176: #{custom-call.2} parent=169 // loop_footer_branch
                %1087 = sbr.rel target = $region172
              $region177: #{custom-call.2} parent=169 // loop_exit
                _
            $region170: #{custom-call.2} parent=161 // pred_fallthru
              _
          $region162: #{custom-call.2} parent=157 // pred_fallthru
            _
          %1111 = vnop
        $region158: #{custom-call.2} parent=139 // pred_fallthru
          _
        // Predicated region
        $region193: #{custom-call.2} parent=139 // pred_check
          %p1112 = pneg %p81
        $region194: #{custom-call.2} parent=139 // pred_check_branch
          %1114 = sbr.rel (%p1112) target = $region196
        $region195: #{custom-call.2} parent=139 // pred_region
          %s1115 = sshrl.u32 %s22, 3
          %s1116 = sadd.s32 %s1115, %s21
          %s1117 = smul.addr %s1116, 8
          %s1118 = scalar_lea.vmem %s5, %s1117
          // Predicated region
          $region197: #{custom-call.2} parent=195 // pred_check
            _
          $region198: #{custom-call.2} parent=195 // pred_check_branch
            %1120 = sbr.rel (0) target = $region200
          $region199: #{custom-call.2} parent=195 // pred_region
            // Predicated region
            $region201: #{custom-call.2} parent=199 // pred_check
              _
            $region202: #{custom-call.2} parent=199 // pred_check_branch
              %1122 = sbr.rel (0) target = $region204
            $region203: #{custom-call.2} parent=199 // pred_region
              // Predicated region
              $region216: #{custom-call.2} parent=203 // pred_check
                _
              $region217: #{custom-call.2} parent=203 // pred_check_branch
                %1138 = sbr.rel (0) target = $region219
              $region218: #{custom-call.2} parent=203 // pred_region
                loop: start=0, step=1, limit=1
                $region220: #{custom-call.2} parent=218 // loop_pre_header
                  _
                $region221: #{custom-call.2} parent=218 // loop_header
                  %s1140 = sphi 0, %s1144
                  %p1141 = scmp.ge.s32.totalorder %s1140, 1
                  %s1145 = sphi %s1055, %s1055
                  %s1146 = sphi %s1118, %s1118
                $region222: #{custom-call.2} parent=218 // loop_header_branch
                  %1143 = sbr.rel (%p1141) target = $region226
                $region223: #{custom-call.2} parent=218 // loop_body
                  %v1147 = vld [vmem:[%s1145] sm:$0xff]
                  %1148 = vst [vmem:[%s1146] sm:$0xff] %v1147
                $region224: #{custom-call.2} parent=218 // loop_footer
                  %s1144 = sadd.s32 1, %s1140
                $region225: #{custom-call.2} parent=218 // loop_footer_branch
                  %1139 = sbr.rel target = $region221
                $region226: #{custom-call.2} parent=218 // loop_exit
                  _
              $region219: #{custom-call.2} parent=203 // pred_fallthru
                _
              // Predicated region
              $region227: #{custom-call.2} parent=203 // pred_check
                _
              $region228: #{custom-call.2} parent=203 // pred_check_branch
                %1150 = sbr.rel target = $region230
              $region229: #{custom-call.2} parent=203 // pred_region
                _
              $region230: #{custom-call.2} parent=203 // pred_fallthru
                _
            $region204: #{custom-call.2} parent=199 // pred_fallthru
              _
            // Predicated region
            $region205: #{custom-call.2} parent=199 // pred_check
              _
            $region206: #{custom-call.2} parent=199 // pred_check_branch
              %1124 = sbr.rel target = $region208
            $region207: #{custom-call.2} parent=199 // pred_region
              %s1126 = ssub.s32 256, 1
              loop: start=0, step=1, limit=1
              $region209: #{custom-call.2} parent=207 // loop_pre_header
                _
              $region210: #{custom-call.2} parent=207 // loop_header
                %s1128 = sphi 0, %s1132
                %p1129 = scmp.ge.s32.totalorder %s1128, 1
                %s1133 = sphi %s1055, %s1055
                %s1134 = sphi %s1118, %s1118
              $region211: #{custom-call.2} parent=207 // loop_header_branch
                %1131 = sbr.rel (%p1129) target = $region215
              $region212: #{custom-call.2} parent=207 // loop_body
                %v1135 = vld [vmem:[%s1133] sm:%s1126]
                %1136 = vst [vmem:[%s1134] sm:%s1126] %v1135
              $region213: #{custom-call.2} parent=207 // loop_footer
                %s1132 = sadd.s32 1, %s1128
              $region214: #{custom-call.2} parent=207 // loop_footer_branch
                %1127 = sbr.rel target = $region210
              $region215: #{custom-call.2} parent=207 // loop_exit
                _
            $region208: #{custom-call.2} parent=199 // pred_fallthru
              _
          $region200: #{custom-call.2} parent=195 // pred_fallthru
            _
          %1151 = vnop
        $region196: #{custom-call.2} parent=139 // pred_fallthru
          _
        %s1152 = smul.addr %s21, 8
        %s1153 = sadd.s32 %s22, %s1152
        %s1154 = smul.addr %s1153, 2
        %s1155 = scalar_lea.vmem %s6, %s1154
        // Predicated region
        $region231: #{custom-call.2} parent=139 // pred_check
          _
        $region232: #{custom-call.2} parent=139 // pred_check_branch
          %1157 = sbr.rel (0) target = $region234
        $region233: #{custom-call.2} parent=139 // pred_region
          // Predicated region
          $region235: #{custom-call.2} parent=233 // pred_check
            _
          $region236: #{custom-call.2} parent=233 // pred_check_branch
            %1159 = sbr.rel target = $region238
          $region237: #{custom-call.2} parent=233 // pred_region
            // Predicated region
            $region250: #{custom-call.2} parent=237 // pred_check
              _
            $region251: #{custom-call.2} parent=237 // pred_check_branch
              %1175 = sbr.rel (0) target = $region253
            $region252: #{custom-call.2} parent=237 // pred_region
              %s1177 = ssub.s32 4, 1
              loop: start=0, step=1, limit=1
              $region254: #{custom-call.2} parent=252 // loop_pre_header
                _
              $region255: #{custom-call.2} parent=252 // loop_header
                %s1179 = sphi 0, %s1183
                %p1180 = scmp.ge.s32.totalorder %s1179, 1
                %s1184 = sphi %s1059, %s1059
                %s1185 = sphi %s1155, %s1155
              $region256: #{custom-call.2} parent=252 // loop_header_branch
                %1182 = sbr.rel (%p1180) target = $region260
              $region257: #{custom-call.2} parent=252 // loop_body
                %v1186 = vld [vmem:[%s1184] sm:%s1177]
                %1187 = vst [vmem:[%s1185] sm:%s1177] %v1186
              $region258: #{custom-call.2} parent=252 // loop_footer
                %s1183 = sadd.s32 1, %s1179
              $region259: #{custom-call.2} parent=252 // loop_footer_branch
                %1178 = sbr.rel target = $region255
              $region260: #{custom-call.2} parent=252 // loop_exit
                _
            $region253: #{custom-call.2} parent=237 // pred_fallthru
              _
          $region238: #{custom-call.2} parent=233 // pred_fallthru
            _
          // Predicated region
          $region239: #{custom-call.2} parent=233 // pred_check
            _
          $region240: #{custom-call.2} parent=233 // pred_check_branch
            %1161 = sbr.rel (0) target = $region242
          $region241: #{custom-call.2} parent=233 // pred_region
            %s1163 = ssub.s32 4, 1
            loop: start=0, step=1, limit=1
            $region243: #{custom-call.2} parent=241 // loop_pre_header
              _
            $region244: #{custom-call.2} parent=241 // loop_header
              %s1165 = sphi 0, %s1169
              %p1166 = scmp.ge.s32.totalorder %s1165, 1
              %s1170 = sphi %s1059, %s1059
              %s1171 = sphi %s1155, %s1155
            $region245: #{custom-call.2} parent=241 // loop_header_branch
              %1168 = sbr.rel (%p1166) target = $region249
            $region246: #{custom-call.2} parent=241 // loop_body
              %v1172 = vld [vmem:[%s1170] sm:%s1163]
              %1173 = vst [vmem:[%s1171] sm:%s1163] %v1172
            $region247: #{custom-call.2} parent=241 // loop_footer
              %s1169 = sadd.s32 1, %s1165
            $region248: #{custom-call.2} parent=241 // loop_footer_branch
              %1164 = sbr.rel target = $region244
            $region249: #{custom-call.2} parent=241 // loop_exit
              _
          $region242: #{custom-call.2} parent=233 // pred_fallthru
            _
        $region234: #{custom-call.2} parent=139 // pred_fallthru
          _
        %1188 = vnop
        %s1189 = smul.addr %s21, 8
        %s1190 = sadd.s32 %s22, %s1189
        %s1191 = smul.addr %s1190, 2
        %s1192 = scalar_lea.vmem %s7, %s1191
        // Predicated region
        $region261: #{custom-call.2} parent=139 // pred_check
          _
        $region262: #{custom-call.2} parent=139 // pred_check_branch
          %1194 = sbr.rel (0) target = $region264
        $region263: #{custom-call.2} parent=139 // pred_region
          // Predicated region
          $region265: #{custom-call.2} parent=263 // pred_check
            _
          $region266: #{custom-call.2} parent=263 // pred_check_branch
            %1196 = sbr.rel target = $region268
          $region267: #{custom-call.2} parent=263 // pred_region
            // Predicated region
            $region280: #{custom-call.2} parent=267 // pred_check
              _
            $region281: #{custom-call.2} parent=267 // pred_check_branch
              %1212 = sbr.rel (0) target = $region283
            $region282: #{custom-call.2} parent=267 // pred_region
              %s1214 = ssub.s32 4, 1
              loop: start=0, step=1, limit=1
              $region284: #{custom-call.2} parent=282 // loop_pre_header
                _
              $region285: #{custom-call.2} parent=282 // loop_header
                %s1216 = sphi 0, %s1220
                %p1217 = scmp.ge.s32.totalorder %s1216, 1
                %s1221 = sphi %s1063, %s1063
                %s1222 = sphi %s1192, %s1192
              $region286: #{custom-call.2} parent=282 // loop_header_branch
                %1219 = sbr.rel (%p1217) target = $region290
              $region287: #{custom-call.2} parent=282 // loop_body
                %v1223 = vld [vmem:[%s1221] sm:%s1214]
                %1224 = vst [vmem:[%s1222] sm:%s1214] %v1223
              $region288: #{custom-call.2} parent=282 // loop_footer
                %s1220 = sadd.s32 1, %s1216
              $region289: #{custom-call.2} parent=282 // loop_footer_branch
                %1215 = sbr.rel target = $region285
              $region290: #{custom-call.2} parent=282 // loop_exit
                _
            $region283: #{custom-call.2} parent=267 // pred_fallthru
              _
          $region268: #{custom-call.2} parent=263 // pred_fallthru
            _
          // Predicated region
          $region269: #{custom-call.2} parent=263 // pred_check
            _
          $region270: #{custom-call.2} parent=263 // pred_check_branch
            %1198 = sbr.rel (0) target = $region272
          $region271: #{custom-call.2} parent=263 // pred_region
            %s1200 = ssub.s32 4, 1
            loop: start=0, step=1, limit=1
            $region273: #{custom-call.2} parent=271 // loop_pre_header
              _
            $region274: #{custom-call.2} parent=271 // loop_header
              %s1202 = sphi 0, %s1206
              %p1203 = scmp.ge.s32.totalorder %s1202, 1
              %s1207 = sphi %s1063, %s1063
              %s1208 = sphi %s1192, %s1192
            $region275: #{custom-call.2} parent=271 // loop_header_branch
              %1205 = sbr.rel (%p1203) target = $region279
            $region276: #{custom-call.2} parent=271 // loop_body
              %v1209 = vld [vmem:[%s1207] sm:%s1200]
              %1210 = vst [vmem:[%s1208] sm:%s1200] %v1209
            $region277: #{custom-call.2} parent=271 // loop_footer
              %s1206 = sadd.s32 1, %s1202
            $region278: #{custom-call.2} parent=271 // loop_footer_branch
              %1201 = sbr.rel target = $region274
            $region279: #{custom-call.2} parent=271 // loop_exit
              _
          $region272: #{custom-call.2} parent=263 // pred_fallthru
            _
        $region264: #{custom-call.2} parent=139 // pred_fallthru
          _
        %1225 = vnop
        %s1226 = smul.addr %s21, 8
        %s1227 = sadd.s32 %s22, %s1226
        %s1228 = smul.addr %s1227, 2
        %s1229 = scalar_lea.vmem %s8, %s1228
        // Predicated region
        $region291: #{custom-call.2} parent=139 // pred_check
          _
        $region292: #{custom-call.2} parent=139 // pred_check_branch
          %1231 = sbr.rel (0) target = $region294
        $region293: #{custom-call.2} parent=139 // pred_region
          // Predicated region
          $region295: #{custom-call.2} parent=293 // pred_check
            _
          $region296: #{custom-call.2} parent=293 // pred_check_branch
            %1233 = sbr.rel target = $region298
          $region297: #{custom-call.2} parent=293 // pred_region
            // Predicated region
            $region310: #{custom-call.2} parent=297 // pred_check
              _
            $region311: #{custom-call.2} parent=297 // pred_check_branch
              %1249 = sbr.rel (0) target = $region313
            $region312: #{custom-call.2} parent=297 // pred_region
              %s1251 = ssub.s32 4, 1
              loop: start=0, step=1, limit=1
              $region314: #{custom-call.2} parent=312 // loop_pre_header
                _
              $region315: #{custom-call.2} parent=312 // loop_header
                %s1253 = sphi 0, %s1257
                %p1254 = scmp.ge.s32.totalorder %s1253, 1
                %s1258 = sphi %s1067, %s1067
                %s1259 = sphi %s1229, %s1229
              $region316: #{custom-call.2} parent=312 // loop_header_branch
                %1256 = sbr.rel (%p1254) target = $region320
              $region317: #{custom-call.2} parent=312 // loop_body
                %v1260 = vld [vmem:[%s1258] sm:%s1251]
                %1261 = vst [vmem:[%s1259] sm:%s1251] %v1260
              $region318: #{custom-call.2} parent=312 // loop_footer
                %s1257 = sadd.s32 1, %s1253
              $region319: #{custom-call.2} parent=312 // loop_footer_branch
                %1252 = sbr.rel target = $region315
              $region320: #{custom-call.2} parent=312 // loop_exit
                _
            $region313: #{custom-call.2} parent=297 // pred_fallthru
              _
          $region298: #{custom-call.2} parent=293 // pred_fallthru
            _
          // Predicated region
          $region299: #{custom-call.2} parent=293 // pred_check
            _
          $region300: #{custom-call.2} parent=293 // pred_check_branch
            %1235 = sbr.rel (0) target = $region302
          $region301: #{custom-call.2} parent=293 // pred_region
            %s1237 = ssub.s32 4, 1
            loop: start=0, step=1, limit=1
            $region303: #{custom-call.2} parent=301 // loop_pre_header
              _
            $region304: #{custom-call.2} parent=301 // loop_header
              %s1239 = sphi 0, %s1243
              %p1240 = scmp.ge.s32.totalorder %s1239, 1
              %s1244 = sphi %s1067, %s1067
              %s1245 = sphi %s1229, %s1229
            $region305: #{custom-call.2} parent=301 // loop_header_branch
              %1242 = sbr.rel (%p1240) target = $region309
            $region306: #{custom-call.2} parent=301 // loop_body
              %v1246 = vld [vmem:[%s1244] sm:%s1237]
              %1247 = vst [vmem:[%s1245] sm:%s1237] %v1246
            $region307: #{custom-call.2} parent=301 // loop_footer
              %s1243 = sadd.s32 1, %s1239
            $region308: #{custom-call.2} parent=301 // loop_footer_branch
              %1238 = sbr.rel target = $region304
            $region309: #{custom-call.2} parent=301 // loop_exit
              _
          $region302: #{custom-call.2} parent=293 // pred_fallthru
            _
        $region294: #{custom-call.2} parent=139 // pred_fallthru
          _
        %1262 = vnop
        %s1263 = smul.addr %s21, 8
        %s1264 = sadd.s32 %s22, %s1263
        %s1265 = smul.addr %s1264, 2
        %s1266 = scalar_lea.vmem %s9, %s1265
        // Predicated region
        $region321: #{custom-call.2} parent=139 // pred_check
          _
        $region322: #{custom-call.2} parent=139 // pred_check_branch
          %1268 = sbr.rel (0) target = $region324
        $region323: #{custom-call.2} parent=139 // pred_region
          // Predicated region
          $region325: #{custom-call.2} parent=323 // pred_check
            _
          $region326: #{custom-call.2} parent=323 // pred_check_branch
            %1270 = sbr.rel target = $region328
          $region327: #{custom-call.2} parent=323 // pred_region
            // Predicated region
            $region340: #{custom-call.2} parent=327 // pred_check
              _
            $region341: #{custom-call.2} parent=327 // pred_check_branch
              %1286 = sbr.rel (0) target = $region343
            $region342: #{custom-call.2} parent=327 // pred_region
              %s1288 = ssub.s32 4, 1
              loop: start=0, step=1, limit=1
              $region344: #{custom-call.2} parent=342 // loop_pre_header
                _
              $region345: #{custom-call.2} parent=342 // loop_header
                %s1290 = sphi 0, %s1294
                %p1291 = scmp.ge.s32.totalorder %s1290, 1
                %s1295 = sphi %s1071, %s1071
                %s1296 = sphi %s1266, %s1266
              $region346: #{custom-call.2} parent=342 // loop_header_branch
                %1293 = sbr.rel (%p1291) target = $region350
              $region347: #{custom-call.2} parent=342 // loop_body
                %v1297 = vld [vmem:[%s1295] sm:%s1288]
                %1298 = vst [vmem:[%s1296] sm:%s1288] %v1297
              $region348: #{custom-call.2} parent=342 // loop_footer
                %s1294 = sadd.s32 1, %s1290
              $region349: #{custom-call.2} parent=342 // loop_footer_branch
                %1289 = sbr.rel target = $region345
              $region350: #{custom-call.2} parent=342 // loop_exit
                _
            $region343: #{custom-call.2} parent=327 // pred_fallthru
              _
          $region328: #{custom-call.2} parent=323 // pred_fallthru
            _
          // Predicated region
          $region329: #{custom-call.2} parent=323 // pred_check
            _
          $region330: #{custom-call.2} parent=323 // pred_check_branch
            %1272 = sbr.rel (0) target = $region332
          $region331: #{custom-call.2} parent=323 // pred_region
            %s1274 = ssub.s32 4, 1
            loop: start=0, step=1, limit=1
            $region333: #{custom-call.2} parent=331 // loop_pre_header
              _
            $region334: #{custom-call.2} parent=331 // loop_header
              %s1276 = sphi 0, %s1280
              %p1277 = scmp.ge.s32.totalorder %s1276, 1
              %s1281 = sphi %s1071, %s1071
              %s1282 = sphi %s1266, %s1266
            $region335: #{custom-call.2} parent=331 // loop_header_branch
              %1279 = sbr.rel (%p1277) target = $region339
            $region336: #{custom-call.2} parent=331 // loop_body
              %v1283 = vld [vmem:[%s1281] sm:%s1274]
              %1284 = vst [vmem:[%s1282] sm:%s1274] %v1283
            $region337: #{custom-call.2} parent=331 // loop_footer
              %s1280 = sadd.s32 1, %s1276
            $region338: #{custom-call.2} parent=331 // loop_footer_branch
              %1275 = sbr.rel target = $region334
            $region339: #{custom-call.2} parent=331 // loop_exit
              _
          $region332: #{custom-call.2} parent=323 // pred_fallthru
            _
        $region324: #{custom-call.2} parent=139 // pred_fallthru
          _
        %1299 = vnop
      $region140: #{custom-call.2} parent=5 // pred_fallthru
        _
      %p1300 = scmp.le.s32.totalorder 2, %s12
      // Predicated region
      $region351: #{custom-call.2} parent=5 // pred_check
        %p1301 = pneg %p1300
      $region352: #{custom-call.2} parent=5 // pred_check_branch
        %1303 = sbr.rel (%p1301) target = $region354
      $region353: #{custom-call.2} parent=5 // pred_region
        %s1304 = ssub.s32 %s12, 2
        // Predicated region
        $region355: #{custom-call.2} parent=353 // pred_check
          %p1305 = pneg %p57
        $region356: #{custom-call.2} parent=353 // pred_check_branch
          %1307 = sbr.rel (%p1305) target = $region358
        $region357: #{custom-call.2} parent=353 // pred_region
          %s1308 = sand.u32 %s42, 1
          %s1309 = sand.u32 %s42, 1
          %s1310 = smul.addr %s1309, 8
          %s1311 = scalar_lea.vmem [#allocation8], %s1310
        $region358: #{custom-call.2} parent=353 // pred_fallthru
          _
        // Predicated region
        $region359: #{custom-call.2} parent=353 // pred_check
          %p1312 = pneg %p87
        $region360: #{custom-call.2} parent=353 // pred_check_branch
          %1314 = sbr.rel (%p1312) target = $region362
        $region361: #{custom-call.2} parent=353 // pred_region
          %s1315 = sand.u32 %s72, 1
          %s1316 = sand.u32 %s72, 1
          %s1317 = smul.addr %s1316, 8
          %s1318 = scalar_lea.vmem [#allocation9], %s1317
        $region362: #{custom-call.2} parent=353 // pred_fallthru
          _
        %s1319 = sand.u32 %s18, 1
        %s1320 = sand.u32 %s18, 1
        %s1321 = smul.addr %s1320, 2
        %s1322 = scalar_lea.vmem [#allocation11], %s1321
        %s1323 = sand.u32 %s18, 1
        %s1324 = sand.u32 %s18, 1
        %s1325 = smul.addr %s1324, 2
        %s1326 = scalar_lea.vmem [#allocation13], %s1325
        %s1327 = sand.u32 %s18, 1
        %s1328 = sand.u32 %s18, 1
        %s1329 = smul.addr %s1328, 2
        %s1330 = scalar_lea.vmem [#allocation15], %s1329
        %s1331 = sand.u32 %s18, 1
        %s1332 = sand.u32 %s18, 1
        %s1333 = smul.addr %s1332, 2
        %s1334 = scalar_lea.vmem [#allocation17], %s1333
      $region354: #{custom-call.2} parent=5 // pred_fallthru
        _
    $region6: #{custom-call.2} parent=1 // loop_footer
      %s16 = sadd.s32 1, %s12
    $region7: #{custom-call.2} parent=1 // loop_footer_branch
      %11 = sbr.rel target = $region3
    $region8: #{custom-call.2} parent=1 // loop_exit
      _

// kernel: _lambda_.33
$region0: #{_lambda_.33}
  #allocation0 [shape = 'u32[]', space=smem, size = 0x4, offset = 0x4, fixed_abs, tag = 'smem constant byte address 0x4 - core index']
  #allocation1 [shape = 'u32[72,128]{1,0:T(1,128)}', space=vmem, size = 0x9000, scoped, tag = 'internal scratch']
  %s0 = inlined_call_operand.vmem [shape: f32[16,704], index: 0, kind: input, shape index: {}]
  %s1 = inlined_call_operand.vmem [shape: f32[704,384], index: 1, kind: input, shape index: {}]
  %s2 = inlined_call_operand.vmem [shape: f32[1,384], index: 2, kind: input, shape index: {}]
  %s3 = inlined_call_operand.vmem [shape: f32[16,384], index: 3, kind: output, shape index: {}]
  %s4 = sld [smem:[#allocation0]]
  $region22: #{_lambda_.33} parent=0
    _
  %s6 = ssub.s32 1, %s4
  %s7 = scalar_select 0, %s6, %s4
  // Predicated region
  $region2: #{_lambda_.33} parent=0 // pred_check
    _
  $region3: #{_lambda_.33} parent=0 // pred_check_branch
    %9 = sbr.rel (0) target = $region5
  $region4: #{_lambda_.33} parent=0 // pred_region
    _
  $region5: #{_lambda_.33} parent=0 // pred_fallthru
    _
  // Predicated region
  $region6: #{_lambda_.33} parent=0 // pred_check
    _
  $region7: #{_lambda_.33} parent=0 // pred_check_branch
    %11 = sbr.rel (0) target = $region9
  $region8: #{_lambda_.33} parent=0 // pred_region
    _
  $region9: #{_lambda_.33} parent=0 // pred_fallthru
    _
  // Predicated region
  $region10: #{_lambda_.33} parent=0 // pred_check
    _
  $region11: #{_lambda_.33} parent=0 // pred_check_branch
    %13 = sbr.rel (0) target = $region13
  $region12: #{_lambda_.33} parent=0 // pred_region
    _
  $region13: #{_lambda_.33} parent=0 // pred_fallthru
    _
  %v14 = vld [vmem:[%s0] sm:$0xff]
  %v15 = vld [vmem:[%s0 + $0x8] sm:$0xff]
  %v16 = vld [vmem:[%s0 + $0x10] sm:$0xff]
  %v17 = vld [vmem:[%s0 + $0x18] sm:$0xff]
  %v18 = vld [vmem:[%s0 + $0x20] sm:$0xff]
  %v19 = vld [vmem:[%s0 + $0x28] sm:$0xff]
  %v20 = vld [vmem:[%s0 + $0x30] sm:$0xff]
  %v21 = vld [vmem:[%s0 + $0x38] sm:$0xff]
  %v22 = vld [vmem:[%s0 + $0x40] sm:$0xff]
  %v23 = vld [vmem:[%s0 + $0x48] sm:$0xff]
  %v24 = vld [vmem:[%s0 + $0x50] sm:$0xff]
  %v25 = vld [vmem:[%s0 + $0x58] sm:$0xff]
  %v26 = vld [vmem:[%s1] sm:$0xff]
  %v27 = vld [vmem:[%s1 + $0x8] sm:$0xff]
  %v28 = vld [vmem:[%s1 + $0x10] sm:$0xff]
  %v29 = vld [vmem:[%s1 + $0x18] sm:$0xff]
  %v30 = vld [vmem:[%s1 + $0x20] sm:$0xff]
  %v31 = vld [vmem:[%s1 + $0x28] sm:$0xff]
  %v32 = vld [vmem:[%s1 + $0x30] sm:$0xff]
  %v33 = vld [vmem:[%s1 + $0x38] sm:$0xff]
  %v34 = vld [vmem:[%s1 + $0x40] sm:$0xff]
  %v35 = vld [vmem:[%s1 + $0x48] sm:$0xff]
  %v36 = vld [vmem:[%s1 + $0x50] sm:$0xff]
  %v37 = vld [vmem:[%s1 + $0x58] sm:$0xff]
  %v38 = vld [vmem:[%s1 + $0x60] sm:$0xff]
  %v39 = vld [vmem:[%s1 + $0x68] sm:$0xff]
  %v40 = vld [vmem:[%s1 + $0x70] sm:$0xff]
  %v41 = vld [vmem:[%s1 + $0x78] sm:$0xff]
  %v42 = vld [vmem:[%s1 + $0x80] sm:$0xff]
  %v43 = vld [vmem:[%s1 + $0x88] sm:$0xff]
  %v44 = vld [vmem:[%s1 + $0x90] sm:$0xff]
  %v45 = vld [vmem:[%s1 + $0x98] sm:$0xff]
  %v46 = vld [vmem:[%s1 + $0xa0] sm:$0xff]
  %v47 = vld [vmem:[%s1 + $0xa8] sm:$0xff]
  %v48 = vld [vmem:[%s1 + $0xb0] sm:$0xff]
  %v49 = vld [vmem:[%s1 + $0xb8] sm:$0xff]
  %v50 = vld [vmem:[%s1 + $0xc0] sm:$0xff]
  %v51 = vld [vmem:[%s1 + $0xc8] sm:$0xff]
  %v52 = vld [vmem:[%s1 + $0xd0] sm:$0xff]
  %v53 = vld [vmem:[%s1 + $0xd8] sm:$0xff]
  %v54 = vld [vmem:[%s1 + $0xe0] sm:$0xff]
  %v55 = vld [vmem:[%s1 + $0xe8] sm:$0xff]
  %v56 = vld [vmem:[%s1 + $0xf0] sm:$0xff]
  %v57 = vld [vmem:[%s1 + $0xf8] sm:$0xff]
  %v58 = vld [vmem:[%s1 + $0x100] sm:$0xff]
  %v59 = vld [vmem:[%s1 + $0x108] sm:$0xff]
  %v60 = vld [vmem:[%s1 + $0x110] sm:$0xff]
  %v61 = vld [vmem:[%s1 + $0x118] sm:$0xff]
  %v62 = vld [vmem:[%s1 + $0x120] sm:$0xff]
  %v63 = vld [vmem:[%s1 + $0x128] sm:$0xff]
  %v64 = vld [vmem:[%s1 + $0x130] sm:$0xff]
  %v65 = vld [vmem:[%s1 + $0x138] sm:$0xff]
  %v66 = vld [vmem:[%s1 + $0x140] sm:$0xff]
  %v67 = vld [vmem:[%s1 + $0x148] sm:$0xff]
  %v68 = vld [vmem:[%s1 + $0x150] sm:$0xff]
  %v69 = vld [vmem:[%s1 + $0x158] sm:$0xff]
  %v70 = vld [vmem:[%s1 + $0x160] sm:$0xff]
  %v71 = vld [vmem:[%s1 + $0x168] sm:$0xff]
  %v72 = vld [vmem:[%s1 + $0x170] sm:$0xff]
  %v73 = vld [vmem:[%s1 + $0x178] sm:$0xff]
  %v74 = vld [vmem:[%s1 + $0x180] sm:$0xff]
  %v75 = vld [vmem:[%s1 + $0x188] sm:$0xff]
  %v76 = vld [vmem:[%s1 + $0x190] sm:$0xff]
  %v77 = vld [vmem:[%s1 + $0x198] sm:$0xff]
  %v78 = vld [vmem:[%s1 + $0x1a0] sm:$0xff]
  %v79 = vld [vmem:[%s1 + $0x1a8] sm:$0xff]
  %v80 = vld [vmem:[%s1 + $0x1b0] sm:$0xff]
  %v81 = vld [vmem:[%s1 + $0x1b8] sm:$0xff]
  %v82 = vld [vmem:[%s1 + $0x1c0] sm:$0xff]
  %v83 = vld [vmem:[%s1 + $0x1c8] sm:$0xff]
  %v84 = vld [vmem:[%s1 + $0x1d0] sm:$0xff]
  %v85 = vld [vmem:[%s1 + $0x1d8] sm:$0xff]
  %v86 = vld [vmem:[%s1 + $0x1e0] sm:$0xff]
  %v87 = vld [vmem:[%s1 + $0x1e8] sm:$0xff]
  %v88 = vld [vmem:[%s1 + $0x1f0] sm:$0xff]
  %v89 = vld [vmem:[%s1 + $0x1f8] sm:$0xff]
  %v90 = vld [vmem:[%s1 + $0x200] sm:$0xff]
  %v91 = vld [vmem:[%s1 + $0x208] sm:$0xff]
  %v92 = vld [vmem:[%s1 + $0x210] sm:$0xff]
  %v93 = vld [vmem:[%s1 + $0x218] sm:$0xff]
  %v94 = vld [vmem:[%s1 + $0x220] sm:$0xff]
  %v95 = vld [vmem:[%s1 + $0x228] sm:$0xff]
  %v96 = vld [vmem:[%s1 + $0x230] sm:$0xff]
  %v97 = vld [vmem:[%s1 + $0x238] sm:$0xff]
  %v98 = vld [vmem:[%s1 + $0x240] sm:$0xff]
  %v99 = vld [vmem:[%s1 + $0x248] sm:$0xff]
  %v100 = vld [vmem:[%s1 + $0x250] sm:$0xff]
  %v101 = vld [vmem:[%s1 + $0x258] sm:$0xff]
  %v102 = vld [vmem:[%s1 + $0x260] sm:$0xff]
  %v103 = vld [vmem:[%s1 + $0x268] sm:$0xff]
  %v104 = vld [vmem:[%s1 + $0x270] sm:$0xff]
  %v105 = vld [vmem:[%s1 + $0x278] sm:$0xff]
  %v106 = vld [vmem:[%s1 + $0x280] sm:$0xff]
  %v107 = vld [vmem:[%s1 + $0x288] sm:$0xff]
  %v108 = vld [vmem:[%s1 + $0x290] sm:$0xff]
  %v109 = vld [vmem:[%s1 + $0x298] sm:$0xff]
  %v110 = vld [vmem:[%s1 + $0x2a0] sm:$0xff]
  %v111 = vld [vmem:[%s1 + $0x2a8] sm:$0xff]
  %v112 = vld [vmem:[%s1 + $0x2b0] sm:$0xff]
  %v113 = vld [vmem:[%s1 + $0x2b8] sm:$0xff]
  %v114 = vld [vmem:[%s1 + $0x2c0] sm:$0xff]
  %v115 = vld [vmem:[%s1 + $0x2c8] sm:$0xff]
  %v116 = vld [vmem:[%s1 + $0x2d0] sm:$0xff]
  %v117 = vld [vmem:[%s1 + $0x2d8] sm:$0xff]
  %v118 = vld [vmem:[%s1 + $0x2e0] sm:$0xff]
  %v119 = vld [vmem:[%s1 + $0x2e8] sm:$0xff]
  %v120 = vld [vmem:[%s1 + $0x2f0] sm:$0xff]
  %v121 = vld [vmem:[%s1 + $0x2f8] sm:$0xff]
  %v122 = vld [vmem:[%s1 + $0x300] sm:$0xff]
  %v123 = vld [vmem:[%s1 + $0x308] sm:$0xff]
  %v124 = vld [vmem:[%s1 + $0x310] sm:$0xff]
  %v125 = vld [vmem:[%s1 + $0x318] sm:$0xff]
  %v126 = vld [vmem:[%s1 + $0x320] sm:$0xff]
  %v127 = vld [vmem:[%s1 + $0x328] sm:$0xff]
  %v128 = vld [vmem:[%s1 + $0x330] sm:$0xff]
  %v129 = vld [vmem:[%s1 + $0x338] sm:$0xff]
  %v130 = vld [vmem:[%s1 + $0x340] sm:$0xff]
  %v131 = vld [vmem:[%s1 + $0x348] sm:$0xff]
  %v132 = vld [vmem:[%s1 + $0x350] sm:$0xff]
  %v133 = vld [vmem:[%s1 + $0x358] sm:$0xff]
  %v134 = vld [vmem:[%s1 + $0x360] sm:$0xff]
  %v135 = vld [vmem:[%s1 + $0x368] sm:$0xff]
  %v136 = vld [vmem:[%s1 + $0x370] sm:$0xff]
  %v137 = vld [vmem:[%s1 + $0x378] sm:$0xff]
  %v138 = vld [vmem:[%s1 + $0x380] sm:$0xff]
  %v139 = vld [vmem:[%s1 + $0x388] sm:$0xff]
  %v140 = vld [vmem:[%s1 + $0x390] sm:$0xff]
  %v141 = vld [vmem:[%s1 + $0x398] sm:$0xff]
  %v142 = vld [vmem:[%s1 + $0x3a0] sm:$0xff]
  %v143 = vld [vmem:[%s1 + $0x3a8] sm:$0xff]
  %v144 = vld [vmem:[%s1 + $0x3b0] sm:$0xff]
  %v145 = vld [vmem:[%s1 + $0x3b8] sm:$0xff]
  %v146 = vld [vmem:[%s1 + $0x3c0] sm:$0xff]
  %v147 = vld [vmem:[%s1 + $0x3c8] sm:$0xff]
  %v148 = vld [vmem:[%s1 + $0x3d0] sm:$0xff]
  %v149 = vld [vmem:[%s1 + $0x3d8] sm:$0xff]
  %v150 = vld [vmem:[%s1 + $0x3e0] sm:$0xff]
  %v151 = vld [vmem:[%s1 + $0x3e8] sm:$0xff]
  %v152 = vld [vmem:[%s1 + $0x3f0] sm:$0xff]
  %v153 = vld [vmem:[%s1 + $0x3f8] sm:$0xff]
  %v154 = vld [vmem:[%s1 + $0x400] sm:$0xff]
  %v155 = vld [vmem:[%s1 + $0x408] sm:$0xff]
  %v156 = vld [vmem:[%s1 + $0x410] sm:$0xff]
  %v157 = vld [vmem:[%s1 + $0x418] sm:$0xff]
  %v158 = vld [vmem:[%s1 + $0x420] sm:$0xff]
  %v159 = vld [vmem:[%s1 + $0x428] sm:$0xff]
  %v160 = vld [vmem:[%s1 + $0x430] sm:$0xff]
  %v161 = vld [vmem:[%s1 + $0x438] sm:$0xff]
  %v162 = vld [vmem:[%s1 + $0x440] sm:$0xff]
  %v163 = vld [vmem:[%s1 + $0x448] sm:$0xff]
  %v164 = vld [vmem:[%s1 + $0x450] sm:$0xff]
  %v165 = vld [vmem:[%s1 + $0x458] sm:$0xff]
  %v166 = vld [vmem:[%s1 + $0x460] sm:$0xff]
  %v167 = vld [vmem:[%s1 + $0x468] sm:$0xff]
  %v168 = vld [vmem:[%s1 + $0x470] sm:$0xff]
  %v169 = vld [vmem:[%s1 + $0x478] sm:$0xff]
  %v170 = vld [vmem:[%s1 + $0x480] sm:$0xff]
  %v171 = vld [vmem:[%s1 + $0x488] sm:$0xff]
  %v172 = vld [vmem:[%s1 + $0x490] sm:$0xff]
  %v173 = vld [vmem:[%s1 + $0x498] sm:$0xff]
  %v174 = vld [vmem:[%s1 + $0x4a0] sm:$0xff]
  %v175 = vld [vmem:[%s1 + $0x4a8] sm:$0xff]
  %v176 = vld [vmem:[%s1 + $0x4b0] sm:$0xff]
  %v177 = vld [vmem:[%s1 + $0x4b8] sm:$0xff]
  %v178 = vld [vmem:[%s1 + $0x4c0] sm:$0xff]
  %v179 = vld [vmem:[%s1 + $0x4c8] sm:$0xff]
  %v180 = vld [vmem:[%s1 + $0x4d0] sm:$0xff]
  %v181 = vld [vmem:[%s1 + $0x4d8] sm:$0xff]
  %v182 = vld [vmem:[%s1 + $0x4e0] sm:$0xff]
  %v183 = vld [vmem:[%s1 + $0x4e8] sm:$0xff]
  %v184 = vld [vmem:[%s1 + $0x4f0] sm:$0xff]
  %v185 = vld [vmem:[%s1 + $0x4f8] sm:$0xff]
  %v186 = vld [vmem:[%s1 + $0x500] sm:$0xff]
  %v187 = vld [vmem:[%s1 + $0x508] sm:$0xff]
  %v188 = vld [vmem:[%s1 + $0x510] sm:$0xff]
  %v189 = vld [vmem:[%s1 + $0x518] sm:$0xff]
  %v190 = vld [vmem:[%s1 + $0x520] sm:$0xff]
  %v191 = vld [vmem:[%s1 + $0x528] sm:$0xff]
  %v192 = vld [vmem:[%s1 + $0x530] sm:$0xff]
  %v193 = vld [vmem:[%s1 + $0x538] sm:$0xff]
  %v194 = vld [vmem:[%s1 + $0x540] sm:$0xff]
  %v195 = vld [vmem:[%s1 + $0x548] sm:$0xff]
  %v196 = vld [vmem:[%s1 + $0x550] sm:$0xff]
  %v197 = vld [vmem:[%s1 + $0x558] sm:$0xff]
  %v198 = vld [vmem:[%s1 + $0x560] sm:$0xff]
  %v199 = vld [vmem:[%s1 + $0x568] sm:$0xff]
  %v200 = vld [vmem:[%s1 + $0x570] sm:$0xff]
  %v201 = vld [vmem:[%s1 + $0x578] sm:$0xff]
  %v202 = vld [vmem:[%s1 + $0x580] sm:$0xff]
  %v203 = vld [vmem:[%s1 + $0x588] sm:$0xff]
  %v204 = vld [vmem:[%s1 + $0x590] sm:$0xff]
  %v205 = vld [vmem:[%s1 + $0x598] sm:$0xff]
  %v206 = vld [vmem:[%s1 + $0x5a0] sm:$0xff]
  %v207 = vld [vmem:[%s1 + $0x5a8] sm:$0xff]
  %v208 = vld [vmem:[%s1 + $0x5b0] sm:$0xff]
  %v209 = vld [vmem:[%s1 + $0x5b8] sm:$0xff]
  %v210 = vld [vmem:[%s1 + $0x5c0] sm:$0xff]
  %v211 = vld [vmem:[%s1 + $0x5c8] sm:$0xff]
  %v212 = vld [vmem:[%s1 + $0x5d0] sm:$0xff]
  %v213 = vld [vmem:[%s1 + $0x5d8] sm:$0xff]
  %v214 = vld [vmem:[%s1 + $0x5e0] sm:$0xff]
  %v215 = vld [vmem:[%s1 + $0x5e8] sm:$0xff]
  %v216 = vld [vmem:[%s1 + $0x5f0] sm:$0xff]
  %v217 = vld [vmem:[%s1 + $0x5f8] sm:$0xff]
  %v218 = vld [vmem:[%s1 + $0x600] sm:$0xff]
  %v219 = vld [vmem:[%s1 + $0x608] sm:$0xff]
  %v220 = vld [vmem:[%s1 + $0x610] sm:$0xff]
  %v221 = vld [vmem:[%s1 + $0x618] sm:$0xff]
  %v222 = vld [vmem:[%s1 + $0x620] sm:$0xff]
  %v223 = vld [vmem:[%s1 + $0x628] sm:$0xff]
  %v224 = vld [vmem:[%s1 + $0x630] sm:$0xff]
  %v225 = vld [vmem:[%s1 + $0x638] sm:$0xff]
  %v226 = vld [vmem:[%s1 + $0x640] sm:$0xff]
  %v227 = vld [vmem:[%s1 + $0x648] sm:$0xff]
  %v228 = vld [vmem:[%s1 + $0x650] sm:$0xff]
  %v229 = vld [vmem:[%s1 + $0x658] sm:$0xff]
  %v230 = vld [vmem:[%s1 + $0x660] sm:$0xff]
  %v231 = vld [vmem:[%s1 + $0x668] sm:$0xff]
  %v232 = vld [vmem:[%s1 + $0x670] sm:$0xff]
  %v233 = vld [vmem:[%s1 + $0x678] sm:$0xff]
  %v234 = vld [vmem:[%s1 + $0x680] sm:$0xff]
  %v235 = vld [vmem:[%s1 + $0x688] sm:$0xff]
  %v236 = vld [vmem:[%s1 + $0x690] sm:$0xff]
  %v237 = vld [vmem:[%s1 + $0x698] sm:$0xff]
  %v238 = vld [vmem:[%s1 + $0x6a0] sm:$0xff]
  %v239 = vld [vmem:[%s1 + $0x6a8] sm:$0xff]
  %v240 = vld [vmem:[%s1 + $0x6b0] sm:$0xff]
  %v241 = vld [vmem:[%s1 + $0x6b8] sm:$0xff]
  %v242 = vld [vmem:[%s1 + $0x6c0] sm:$0xff]
  %v243 = vld [vmem:[%s1 + $0x6c8] sm:$0xff]
  %v244 = vld [vmem:[%s1 + $0x6d0] sm:$0xff]
  %v245 = vld [vmem:[%s1 + $0x6d8] sm:$0xff]
  %v246 = vld [vmem:[%s1 + $0x6e0] sm:$0xff]
  %v247 = vld [vmem:[%s1 + $0x6e8] sm:$0xff]
  %v248 = vld [vmem:[%s1 + $0x6f0] sm:$0xff]
  %v249 = vld [vmem:[%s1 + $0x6f8] sm:$0xff]
  %v250 = vld [vmem:[%s1 + $0x700] sm:$0xff]
  %v251 = vld [vmem:[%s1 + $0x708] sm:$0xff]
  %v252 = vld [vmem:[%s1 + $0x710] sm:$0xff]
  %v253 = vld [vmem:[%s1 + $0x718] sm:$0xff]
  %v254 = vld [vmem:[%s1 + $0x720] sm:$0xff]
  %v255 = vld [vmem:[%s1 + $0x728] sm:$0xff]
  %v256 = vld [vmem:[%s1 + $0x730] sm:$0xff]
  %v257 = vld [vmem:[%s1 + $0x738] sm:$0xff]
  %v258 = vld [vmem:[%s1 + $0x740] sm:$0xff]
  %v259 = vld [vmem:[%s1 + $0x748] sm:$0xff]
  %v260 = vld [vmem:[%s1 + $0x750] sm:$0xff]
  %v261 = vld [vmem:[%s1 + $0x758] sm:$0xff]
  %v262 = vld [vmem:[%s1 + $0x760] sm:$0xff]
  %v263 = vld [vmem:[%s1 + $0x768] sm:$0xff]
  %v264 = vld [vmem:[%s1 + $0x770] sm:$0xff]
  %v265 = vld [vmem:[%s1 + $0x778] sm:$0xff]
  %v266 = vld [vmem:[%s1 + $0x780] sm:$0xff]
  %v267 = vld [vmem:[%s1 + $0x788] sm:$0xff]
  %v268 = vld [vmem:[%s1 + $0x790] sm:$0xff]
  %v269 = vld [vmem:[%s1 + $0x798] sm:$0xff]
  %v270 = vld [vmem:[%s1 + $0x7a0] sm:$0xff]
  %v271 = vld [vmem:[%s1 + $0x7a8] sm:$0xff]
  %v272 = vld [vmem:[%s1 + $0x7b0] sm:$0xff]
  %v273 = vld [vmem:[%s1 + $0x7b8] sm:$0xff]
  %v274 = vld [vmem:[%s1 + $0x7c0] sm:$0xff]
  %v275 = vld [vmem:[%s1 + $0x7c8] sm:$0xff]
  %v276 = vld [vmem:[%s1 + $0x7d0] sm:$0xff]
  %v277 = vld [vmem:[%s1 + $0x7d8] sm:$0xff]
  %v278 = vld [vmem:[%s1 + $0x7e0] sm:$0xff]
  %v279 = vld [vmem:[%s1 + $0x7e8] sm:$0xff]
  %v280 = vld [vmem:[%s1 + $0x7f0] sm:$0xff]
  %v281 = vld [vmem:[%s1 + $0x7f8] sm:$0xff]
  %v282 = vld [vmem:[%s1 + $0x800] sm:$0xff]
  %v283 = vld [vmem:[%s1 + $0x808] sm:$0xff]
  %v284 = vld [vmem:[%s1 + $0x810] sm:$0xff]
  %v285 = vld [vmem:[%s1 + $0x818] sm:$0xff]
  %v286 = vld [vmem:[%s1 + $0x820] sm:$0xff]
  %v287 = vld [vmem:[%s1 + $0x828] sm:$0xff]
  %v288 = vld [vmem:[%s1 + $0x830] sm:$0xff]
  %v289 = vld [vmem:[%s1 + $0x838] sm:$0xff]
  %v290 = vld [vmem:[%s2] sm:$0x7]
  %v292 = vperm.slane %v290, 0
  %v293 = vperm.slane %v290, 1
  %v294 = vperm.slane %v290, 2
  %vm298 = vcmask 523264
  %v300 = vsel %vm298, %v19, 0
  %v303 = vsel %vm298, %v25, 0
  %305 = vmatpush.msra.mxu0 %v71
  %306 = vmatpush.msra.mxu0 %v68
  %307 = vmatpush.msra.mxu0 %v65
  %308 = vmatpush.msra.mxu0 %v62
  %309 = vmatpush.msra.mxu0 %v59
  %310 = vmatpush.msra.mxu0 %v56
  %311 = vmatpush.msra.mxu0 %v53
  %312 = vmatpush.msra.mxu0 %v50
  %313 = vmatpush.msra.mxu0 %v47
  %314 = vmatpush.msra.mxu0 %v44
  %315 = vmatpush.msra.mxu0 %v41
  %316 = vmatpush.msra.mxu0 %v38
  %317 = vmatpush.msra.mxu0 %v35
  %318 = vmatpush.msra.mxu0 %v32
  %319 = vmatpush.msra.mxu0 %v29
  %320 = vmatpush.msra.mxu0 %v26
  %321 = vmatmul.f32.gmra.mxu0 %v14
  %v322 = vpop.f32.mrf.mxu0
  %v323 = vadd.f32 %v292, %v322
  %324 = vmatmul.f32.gmra.mxu0 %v20
  %v325 = vpop.f32.mrf.mxu0
  %v326 = vadd.f32 %v292, %v325
  %327 = vdwg.mxu0
  %328 = vmatpush.msra.mxu0 %v119
  %329 = vmatpush.msra.mxu0 %v116
  %330 = vmatpush.msra.mxu0 %v113
  %331 = vmatpush.msra.mxu0 %v110
  %332 = vmatpush.msra.mxu0 %v107
  %333 = vmatpush.msra.mxu0 %v104
  %334 = vmatpush.msra.mxu0 %v101
  %335 = vmatpush.msra.mxu0 %v98
  %336 = vmatpush.msra.mxu0 %v95
  %337 = vmatpush.msra.mxu0 %v92
  %338 = vmatpush.msra.mxu0 %v89
  %339 = vmatpush.msra.mxu0 %v86
  %340 = vmatpush.msra.mxu0 %v83
  %341 = vmatpush.msra.mxu0 %v80
  %342 = vmatpush.msra.mxu0 %v77
  %343 = vmatpush.msra.mxu0 %v74
  %344 = vmatmul.f32.gmra.mxu0 %v15
  %v345 = vpop.f32.mrf.mxu0
  %v346 = vadd.f32 %v323, %v345
  %347 = vmatmul.f32.gmra.mxu0 %v21
  %v348 = vpop.f32.mrf.mxu0
  %v349 = vadd.f32 %v326, %v348
  %350 = vdwg.mxu0
  %351 = vmatpush.msra.mxu0 %v167
  %352 = vmatpush.msra.mxu0 %v164
  %353 = vmatpush.msra.mxu0 %v161
  %354 = vmatpush.msra.mxu0 %v158
  %355 = vmatpush.msra.mxu0 %v155
  %356 = vmatpush.msra.mxu0 %v152
  %357 = vmatpush.msra.mxu0 %v149
  %358 = vmatpush.msra.mxu0 %v146
  %359 = vmatpush.msra.mxu0 %v143
  %360 = vmatpush.msra.mxu0 %v140
  %361 = vmatpush.msra.mxu0 %v137
  %362 = vmatpush.msra.mxu0 %v134
  %363 = vmatpush.msra.mxu0 %v131
  %364 = vmatpush.msra.mxu0 %v128
  %365 = vmatpush.msra.mxu0 %v125
  %366 = vmatpush.msra.mxu0 %v122
  %367 = vmatmul.f32.gmra.mxu0 %v16
  %v368 = vpop.f32.mrf.mxu0
  %v369 = vadd.f32 %v346, %v368
  %370 = vmatmul.f32.gmra.mxu0 %v22
  %v371 = vpop.f32.mrf.mxu0
  %v372 = vadd.f32 %v349, %v371
  %373 = vdwg.mxu0
  %374 = vmatpush.msra.mxu0 %v215
  %375 = vmatpush.msra.mxu0 %v212
  %376 = vmatpush.msra.mxu0 %v209
  %377 = vmatpush.msra.mxu0 %v206
  %378 = vmatpush.msra.mxu0 %v203
  %379 = vmatpush.msra.mxu0 %v200
  %380 = vmatpush.msra.mxu0 %v197
  %381 = vmatpush.msra.mxu0 %v194
  %382 = vmatpush.msra.mxu0 %v191
  %383 = vmatpush.msra.mxu0 %v188
  %384 = vmatpush.msra.mxu0 %v185
  %385 = vmatpush.msra.mxu0 %v182
  %386 = vmatpush.msra.mxu0 %v179
  %387 = vmatpush.msra.mxu0 %v176
  %388 = vmatpush.msra.mxu0 %v173
  %389 = vmatpush.msra.mxu0 %v170
  %390 = vmatmul.f32.gmra.mxu0 %v17
  %v391 = vpop.f32.mrf.mxu0
  %v392 = vadd.f32 %v369, %v391
  %393 = vmatmul.f32.gmra.mxu0 %v23
  %v394 = vpop.f32.mrf.mxu0
  %v395 = vadd.f32 %v372, %v394
  %396 = vdwg.mxu0
  %397 = vmatpush.msra.mxu0 %v263
  %398 = vmatpush.msra.mxu0 %v260
  %399 = vmatpush.msra.mxu0 %v257
  %400 = vmatpush.msra.mxu0 %v254
  %401 = vmatpush.msra.mxu0 %v251
  %402 = vmatpush.msra.mxu0 %v248
  %403 = vmatpush.msra.mxu0 %v245
  %404 = vmatpush.msra.mxu0 %v242
  %405 = vmatpush.msra.mxu0 %v239
  %406 = vmatpush.msra.mxu0 %v236
  %407 = vmatpush.msra.mxu0 %v233
  %408 = vmatpush.msra.mxu0 %v230
  %409 = vmatpush.msra.mxu0 %v227
  %410 = vmatpush.msra.mxu0 %v224
  %411 = vmatpush.msra.mxu0 %v221
  %412 = vmatpush.msra.mxu0 %v218
  %413 = vmatmul.f32.gmra.mxu0 %v18
  %v414 = vpop.f32.mrf.mxu0
  %v415 = vadd.f32 %v392, %v414
  %416 = vmatmul.f32.gmra.mxu0 %v24
  %v417 = vpop.f32.mrf.mxu0
  %v418 = vadd.f32 %v395, %v417
  %419 = vdwg.mxu0
  %420 = vmatpush.msra.mxu0 0.0
  %421 = vmatpush.msra.mxu0 0.0
  %422 = vmatpush.msra.mxu0 0.0
  %423 = vmatpush.msra.mxu0 0.0
  %424 = vmatpush.msra.mxu0 0.0
  %425 = vmatpush.msra.mxu0 0.0
  %426 = vmatpush.msra.mxu0 0.0
  %427 = vmatpush.msra.mxu0 0.0
  %428 = vmatpush.msra.mxu0 %v287
  %429 = vmatpush.msra.mxu0 %v284
  %430 = vmatpush.msra.mxu0 %v281
  %431 = vmatpush.msra.mxu0 %v278
  %432 = vmatpush.msra.mxu0 %v275
  %433 = vmatpush.msra.mxu0 %v272
  %434 = vmatpush.msra.mxu0 %v269
  %435 = vmatpush.msra.mxu0 %v266
  %436 = vmatmul.f32.gmra.mxu0 %v300
  %v437 = vpop.f32.mrf.mxu0
  %v438 = vadd.f32 %v415, %v437
  %439 = vmatmul.f32.gmra.mxu0 %v303
  %v440 = vpop.f32.mrf.mxu0
  %v441 = vadd.f32 %v418, %v440
  %442 = vdwg.mxu0
  %443 = vmatpush.msra.mxu0 %v72
  %444 = vmatpush.msra.mxu0 %v69
  %445 = vmatpush.msra.mxu0 %v66
  %446 = vmatpush.msra.mxu0 %v63
  %447 = vmatpush.msra.mxu0 %v60
  %448 = vmatpush.msra.mxu0 %v57
  %449 = vmatpush.msra.mxu0 %v54
  %450 = vmatpush.msra.mxu0 %v51
  %451 = vmatpush.msra.mxu0 %v48
  %452 = vmatpush.msra.mxu0 %v45
  %453 = vmatpush.msra.mxu0 %v42
  %454 = vmatpush.msra.mxu0 %v39
  %455 = vmatpush.msra.mxu0 %v36
  %456 = vmatpush.msra.mxu0 %v33
  %457 = vmatpush.msra.mxu0 %v30
  %458 = vmatpush.msra.mxu0 %v27
  %459 = vmatmul.f32.gmra.mxu0 %v14
  %v460 = vpop.f32.mrf.mxu0
  %v461 = vadd.f32 %v293, %v460
  %462 = vmatmul.f32.gmra.mxu0 %v20
  %v463 = vpop.f32.mrf.mxu0
  %v464 = vadd.f32 %v293, %v463
  %465 = vdwg.mxu0
  %466 = vmatpush.msra.mxu0 %v120
  %467 = vmatpush.msra.mxu0 %v117
  %468 = vmatpush.msra.mxu0 %v114
  %469 = vmatpush.msra.mxu0 %v111
  %470 = vmatpush.msra.mxu0 %v108
  %471 = vmatpush.msra.mxu0 %v105
  %472 = vmatpush.msra.mxu0 %v102
  %473 = vmatpush.msra.mxu0 %v99
  %474 = vmatpush.msra.mxu0 %v96
  %475 = vmatpush.msra.mxu0 %v93
  %476 = vmatpush.msra.mxu0 %v90
  %477 = vmatpush.msra.mxu0 %v87
  %478 = vmatpush.msra.mxu0 %v84
  %479 = vmatpush.msra.mxu0 %v81
  %480 = vmatpush.msra.mxu0 %v78
  %481 = vmatpush.msra.mxu0 %v75
  %482 = vmatmul.f32.gmra.mxu0 %v15
  %v483 = vpop.f32.mrf.mxu0
  %v484 = vadd.f32 %v461, %v483
  %485 = vmatmul.f32.gmra.mxu0 %v21
  %v486 = vpop.f32.mrf.mxu0
  %v487 = vadd.f32 %v464, %v486
  %488 = vdwg.mxu0
  %489 = vmatpush.msra.mxu0 %v168
  %490 = vmatpush.msra.mxu0 %v165
  %491 = vmatpush.msra.mxu0 %v162
  %492 = vmatpush.msra.mxu0 %v159
  %493 = vmatpush.msra.mxu0 %v156
  %494 = vmatpush.msra.mxu0 %v153
  %495 = vmatpush.msra.mxu0 %v150
  %496 = vmatpush.msra.mxu0 %v147
  %497 = vmatpush.msra.mxu0 %v144
  %498 = vmatpush.msra.mxu0 %v141
  %499 = vmatpush.msra.mxu0 %v138
  %500 = vmatpush.msra.mxu0 %v135
  %501 = vmatpush.msra.mxu0 %v132
  %502 = vmatpush.msra.mxu0 %v129
  %503 = vmatpush.msra.mxu0 %v126
  %504 = vmatpush.msra.mxu0 %v123
  %505 = vmatmul.f32.gmra.mxu0 %v16
  %v506 = vpop.f32.mrf.mxu0
  %v507 = vadd.f32 %v484, %v506
  %508 = vmatmul.f32.gmra.mxu0 %v22
  %v509 = vpop.f32.mrf.mxu0
  %v510 = vadd.f32 %v487, %v509
  %511 = vdwg.mxu0
  %512 = vmatpush.msra.mxu0 %v216
  %513 = vmatpush.msra.mxu0 %v213
  %514 = vmatpush.msra.mxu0 %v210
  %515 = vmatpush.msra.mxu0 %v207
  %516 = vmatpush.msra.mxu0 %v204
  %517 = vmatpush.msra.mxu0 %v201
  %518 = vmatpush.msra.mxu0 %v198
  %519 = vmatpush.msra.mxu0 %v195
  %520 = vmatpush.msra.mxu0 %v192
  %521 = vmatpush.msra.mxu0 %v189
  %522 = vmatpush.msra.mxu0 %v186
  %523 = vmatpush.msra.mxu0 %v183
  %524 = vmatpush.msra.mxu0 %v180
  %525 = vmatpush.msra.mxu0 %v177
  %526 = vmatpush.msra.mxu0 %v174
  %527 = vmatpush.msra.mxu0 %v171
  %528 = vmatmul.f32.gmra.mxu0 %v17
  %v529 = vpop.f32.mrf.mxu0
  %v530 = vadd.f32 %v507, %v529
  %531 = vmatmul.f32.gmra.mxu0 %v23
  %v532 = vpop.f32.mrf.mxu0
  %v533 = vadd.f32 %v510, %v532
  %534 = vdwg.mxu0
  %535 = vmatpush.msra.mxu0 %v264
  %536 = vmatpush.msra.mxu0 %v261
  %537 = vmatpush.msra.mxu0 %v258
  %538 = vmatpush.msra.mxu0 %v255
  %539 = vmatpush.msra.mxu0 %v252
  %540 = vmatpush.msra.mxu0 %v249
  %541 = vmatpush.msra.mxu0 %v246
  %542 = vmatpush.msra.mxu0 %v243
  %543 = vmatpush.msra.mxu0 %v240
  %544 = vmatpush.msra.mxu0 %v237
  %545 = vmatpush.msra.mxu0 %v234
  %546 = vmatpush.msra.mxu0 %v231
  %547 = vmatpush.msra.mxu0 %v228
  %548 = vmatpush.msra.mxu0 %v225
  %549 = vmatpush.msra.mxu0 %v222
  %550 = vmatpush.msra.mxu0 %v219
  %551 = vmatmul.f32.gmra.mxu0 %v18
  %v552 = vpop.f32.mrf.mxu0
  %v553 = vadd.f32 %v530, %v552
  %554 = vmatmul.f32.gmra.mxu0 %v24
  %v555 = vpop.f32.mrf.mxu0
  %v556 = vadd.f32 %v533, %v555
  %557 = vdwg.mxu0
  %558 = vmatpush.msra.mxu0 0.0
  %559 = vmatpush.msra.mxu0 0.0
  %560 = vmatpush.msra.mxu0 0.0
  %561 = vmatpush.msra.mxu0 0.0
  %562 = vmatpush.msra.mxu0 0.0
  %563 = vmatpush.msra.mxu0 0.0
  %564 = vmatpush.msra.mxu0 0.0
  %565 = vmatpush.msra.mxu0 0.0
  %566 = vmatpush.msra.mxu0 %v288
  %567 = vmatpush.msra.mxu0 %v285
  %568 = vmatpush.msra.mxu0 %v282
  %569 = vmatpush.msra.mxu0 %v279
  %570 = vmatpush.msra.mxu0 %v276
  %571 = vmatpush.msra.mxu0 %v273
  %572 = vmatpush.msra.mxu0 %v270
  %573 = vmatpush.msra.mxu0 %v267
  %574 = vmatmul.f32.gmra.mxu0 %v300
  %v575 = vpop.f32.mrf.mxu0
  %v576 = vadd.f32 %v553, %v575
  %577 = vmatmul.f32.gmra.mxu0 %v303
  %v578 = vpop.f32.mrf.mxu0
  %v579 = vadd.f32 %v556, %v578
  %580 = vdwg.mxu0
  %581 = vmatpush.msra.mxu0 %v73
  %582 = vmatpush.msra.mxu0 %v70
  %583 = vmatpush.msra.mxu0 %v67
  %584 = vmatpush.msra.mxu0 %v64
  %585 = vmatpush.msra.mxu0 %v61
  %586 = vmatpush.msra.mxu0 %v58
  %587 = vmatpush.msra.mxu0 %v55
  %588 = vmatpush.msra.mxu0 %v52
  %589 = vmatpush.msra.mxu0 %v49
  %590 = vmatpush.msra.mxu0 %v46
  %591 = vmatpush.msra.mxu0 %v43
  %592 = vmatpush.msra.mxu0 %v40
  %593 = vmatpush.msra.mxu0 %v37
  %594 = vmatpush.msra.mxu0 %v34
  %595 = vmatpush.msra.mxu0 %v31
  %596 = vmatpush.msra.mxu0 %v28
  %597 = vmatmul.f32.gmra.mxu0 %v14
  %v598 = vpop.f32.mrf.mxu0
  %v599 = vadd.f32 %v294, %v598
  %600 = vmatmul.f32.gmra.mxu0 %v20
  %v601 = vpop.f32.mrf.mxu0
  %v602 = vadd.f32 %v294, %v601
  %603 = vdwg.mxu0
  %604 = vmatpush.msra.mxu0 %v121
  %605 = vmatpush.msra.mxu0 %v118
  %606 = vmatpush.msra.mxu0 %v115
  %607 = vmatpush.msra.mxu0 %v112
  %608 = vmatpush.msra.mxu0 %v109
  %609 = vmatpush.msra.mxu0 %v106
  %610 = vmatpush.msra.mxu0 %v103
  %611 = vmatpush.msra.mxu0 %v100
  %612 = vmatpush.msra.mxu0 %v97
  %613 = vmatpush.msra.mxu0 %v94
  %614 = vmatpush.msra.mxu0 %v91
  %615 = vmatpush.msra.mxu0 %v88
  %616 = vmatpush.msra.mxu0 %v85
  %617 = vmatpush.msra.mxu0 %v82
  %618 = vmatpush.msra.mxu0 %v79
  %619 = vmatpush.msra.mxu0 %v76
  %620 = vmatmul.f32.gmra.mxu0 %v15
  %v621 = vpop.f32.mrf.mxu0
  %v622 = vadd.f32 %v599, %v621
  %623 = vmatmul.f32.gmra.mxu0 %v21
  %v624 = vpop.f32.mrf.mxu0
  %v625 = vadd.f32 %v602, %v624
  %626 = vdwg.mxu0
  %627 = vmatpush.msra.mxu0 %v169
  %628 = vmatpush.msra.mxu0 %v166
  %629 = vmatpush.msra.mxu0 %v163
  %630 = vmatpush.msra.mxu0 %v160
  %631 = vmatpush.msra.mxu0 %v157
  %632 = vmatpush.msra.mxu0 %v154
  %633 = vmatpush.msra.mxu0 %v151
  %634 = vmatpush.msra.mxu0 %v148
  %635 = vmatpush.msra.mxu0 %v145
  %636 = vmatpush.msra.mxu0 %v142
  %637 = vmatpush.msra.mxu0 %v139
  %638 = vmatpush.msra.mxu0 %v136
  %639 = vmatpush.msra.mxu0 %v133
  %640 = vmatpush.msra.mxu0 %v130
  %641 = vmatpush.msra.mxu0 %v127
  %642 = vmatpush.msra.mxu0 %v124
  %643 = vmatmul.f32.gmra.mxu0 %v16
  %v644 = vpop.f32.mrf.mxu0
  %v645 = vadd.f32 %v622, %v644
  %646 = vmatmul.f32.gmra.mxu0 %v22
  %v647 = vpop.f32.mrf.mxu0
  %v648 = vadd.f32 %v625, %v647
  %649 = vdwg.mxu0
  %650 = vmatpush.msra.mxu0 %v217
  %651 = vmatpush.msra.mxu0 %v214
  %652 = vmatpush.msra.mxu0 %v211
  %653 = vmatpush.msra.mxu0 %v208
  %654 = vmatpush.msra.mxu0 %v205
  %655 = vmatpush.msra.mxu0 %v202
  %656 = vmatpush.msra.mxu0 %v199
  %657 = vmatpush.msra.mxu0 %v196
  %658 = vmatpush.msra.mxu0 %v193
  %659 = vmatpush.msra.mxu0 %v190
  %660 = vmatpush.msra.mxu0 %v187
  %661 = vmatpush.msra.mxu0 %v184
  %662 = vmatpush.msra.mxu0 %v181
  %663 = vmatpush.msra.mxu0 %v178
  %664 = vmatpush.msra.mxu0 %v175
  %665 = vmatpush.msra.mxu0 %v172
  %666 = vmatmul.f32.gmra.mxu0 %v17
  %v667 = vpop.f32.mrf.mxu0
  %v668 = vadd.f32 %v645, %v667
  %669 = vmatmul.f32.gmra.mxu0 %v23
  %v670 = vpop.f32.mrf.mxu0
  %v671 = vadd.f32 %v648, %v670
  %672 = vdwg.mxu0
  %673 = vmatpush.msra.mxu0 %v265
  %674 = vmatpush.msra.mxu0 %v262
  %675 = vmatpush.msra.mxu0 %v259
  %676 = vmatpush.msra.mxu0 %v256
  %677 = vmatpush.msra.mxu0 %v253
  %678 = vmatpush.msra.mxu0 %v250
  %679 = vmatpush.msra.mxu0 %v247
  %680 = vmatpush.msra.mxu0 %v244
  %681 = vmatpush.msra.mxu0 %v241
  %682 = vmatpush.msra.mxu0 %v238
  %683 = vmatpush.msra.mxu0 %v235
  %684 = vmatpush.msra.mxu0 %v232
  %685 = vmatpush.msra.mxu0 %v229
  %686 = vmatpush.msra.mxu0 %v226
  %687 = vmatpush.msra.mxu0 %v223
  %688 = vmatpush.msra.mxu0 %v220
  %689 = vmatmul.f32.gmra.mxu0 %v18
  %v690 = vpop.f32.mrf.mxu0
  %v691 = vadd.f32 %v668, %v690
  %692 = vmatmul.f32.gmra.mxu0 %v24
  %v693 = vpop.f32.mrf.mxu0
  %v694 = vadd.f32 %v671, %v693
  %695 = vdwg.mxu0
  %696 = vmatpush.msra.mxu0 0.0
  %697 = vmatpush.msra.mxu0 0.0
  %698 = vmatpush.msra.mxu0 0.0
  %699 = vmatpush.msra.mxu0 0.0
  %700 = vmatpush.msra.mxu0 0.0
  %701 = vmatpush.msra.mxu0 0.0
  %702 = vmatpush.msra.mxu0 0.0
  %703 = vmatpush.msra.mxu0 0.0
  %704 = vmatpush.msra.mxu0 %v289
  %705 = vmatpush.msra.mxu0 %v286
  %706 = vmatpush.msra.mxu0 %v283
  %707 = vmatpush.msra.mxu0 %v280
  %708 = vmatpush.msra.mxu0 %v277
  %709 = vmatpush.msra.mxu0 %v274
  %710 = vmatpush.msra.mxu0 %v271
  %711 = vmatpush.msra.mxu0 %v268
  %712 = vmatmul.f32.gmra.mxu0 %v300
  %v713 = vpop.f32.mrf.mxu0
  %v714 = vadd.f32 %v691, %v713
  %715 = vmatmul.f32.gmra.mxu0 %v303
  %v716 = vpop.f32.mrf.mxu0
  %v717 = vadd.f32 %v694, %v716
  %718 = vdwg.mxu0
  %719 = vst [vmem:[%s3] sm:$0xff] %v438
  %720 = vst [vmem:[%s3 + $0x8] sm:$0xff] %v576
  %721 = vst [vmem:[%s3 + $0x10] sm:$0xff] %v714
  %722 = vst [vmem:[%s3 + $0x18] sm:$0xff] %v441
  %723 = vst [vmem:[%s3 + $0x20] sm:$0xff] %v579
  %724 = vst [vmem:[%s3 + $0x28] sm:$0xff] %v717
  // Predicated region
  $region14: #{_lambda_.33} parent=0 // pred_check
    _
  $region15: #{_lambda_.33} parent=0 // pred_check_branch
    %726 = sbr.rel (0) target = $region17
  $region16: #{_lambda_.33} parent=0 // pred_region
    _
  $region17: #{_lambda_.33} parent=0 // pred_fallthru
    _
  // Predicated region
  $region18: #{_lambda_.33} parent=0 // pred_check
    _
  $region19: #{_lambda_.33} parent=0 // pred_check_branch
    %728 = sbr.rel (0) target = $region21
  $region20: #{_lambda_.33} parent=0 // pred_region
    _
  $region21: #{_lambda_.33} parent=0 // pred_fallthru
    _

// kernel: _lambda_.35
$region0: #{_lambda_.35}
  #allocation0 [shape = 'u32[]', space=smem, size = 0x4, offset = 0x4, fixed_abs, tag = 'smem constant byte address 0x4 - core index']
  #allocation1 [shape = 'u32[72,128]{1,0:T(1,128)}', space=vmem, size = 0x9000, scoped, tag = 'internal scratch']
  %s0 = inlined_call_operand.vmem [shape: f32[16,384], index: 0, kind: input, shape index: {}]
  %s1 = inlined_call_operand.vmem [shape: f32[384,6], index: 1, kind: input, shape index: {}]
  %s2 = inlined_call_operand.vmem [shape: f32[1,6], index: 2, kind: input, shape index: {}]
  %s3 = inlined_call_operand.vmem [shape: f32[16,6], index: 3, kind: output, shape index: {}]
  %s4 = sld [smem:[#allocation0]]
  $region22: #{_lambda_.35} parent=0
    _
  %s6 = ssub.s32 1, %s4
  %s7 = scalar_select 0, %s6, %s4
  // Predicated region
  $region2: #{_lambda_.35} parent=0 // pred_check
    _
  $region3: #{_lambda_.35} parent=0 // pred_check_branch
    %9 = sbr.rel (0) target = $region5
  $region4: #{_lambda_.35} parent=0 // pred_region
    _
  $region5: #{_lambda_.35} parent=0 // pred_fallthru
    _
  // Predicated region
  $region6: #{_lambda_.35} parent=0 // pred_check
    _
  $region7: #{_lambda_.35} parent=0 // pred_check_branch
    %11 = sbr.rel (0) target = $region9
  $region8: #{_lambda_.35} parent=0 // pred_region
    _
  $region9: #{_lambda_.35} parent=0 // pred_fallthru
    _
  // Predicated region
  $region10: #{_lambda_.35} parent=0 // pred_check
    _
  $region11: #{_lambda_.35} parent=0 // pred_check_branch
    %13 = sbr.rel (0) target = $region13
  $region12: #{_lambda_.35} parent=0 // pred_region
    _
  $region13: #{_lambda_.35} parent=0 // pred_fallthru
    _
  %v14 = vld [vmem:[%s0] sm:$0xff]
  %v15 = vld [vmem:[%s0 + $0x8] sm:$0xff]
  %v16 = vld [vmem:[%s0 + $0x10] sm:$0xff]
  %v17 = vld [vmem:[%s0 + $0x18] sm:$0xff]
  %v18 = vld [vmem:[%s0 + $0x20] sm:$0xff]
  %v19 = vld [vmem:[%s0 + $0x28] sm:$0xff]
  %v20 = vld [vmem:[%s1] sm:$0xff]
  %v21 = vld [vmem:[%s1 + $0x8] sm:$0xff]
  %v22 = vld [vmem:[%s1 + $0x10] sm:$0xff]
  %v23 = vld [vmem:[%s1 + $0x18] sm:$0xff]
  %v24 = vld [vmem:[%s1 + $0x20] sm:$0xff]
  %v25 = vld [vmem:[%s1 + $0x28] sm:$0xff]
  %v26 = vld [vmem:[%s1 + $0x30] sm:$0xff]
  %v27 = vld [vmem:[%s1 + $0x38] sm:$0xff]
  %v28 = vld [vmem:[%s1 + $0x40] sm:$0xff]
  %v29 = vld [vmem:[%s1 + $0x48] sm:$0xff]
  %v30 = vld [vmem:[%s1 + $0x50] sm:$0xff]
  %v31 = vld [vmem:[%s1 + $0x58] sm:$0xff]
  %v32 = vld [vmem:[%s1 + $0x60] sm:$0xff]
  %v33 = vld [vmem:[%s1 + $0x68] sm:$0xff]
  %v34 = vld [vmem:[%s1 + $0x70] sm:$0xff]
  %v35 = vld [vmem:[%s1 + $0x78] sm:$0xff]
  %v36 = vld [vmem:[%s1 + $0x80] sm:$0xff]
  %v37 = vld [vmem:[%s1 + $0x88] sm:$0xff]
  %v38 = vld [vmem:[%s1 + $0x90] sm:$0xff]
  %v39 = vld [vmem:[%s1 + $0x98] sm:$0xff]
  %v40 = vld [vmem:[%s1 + $0xa0] sm:$0xff]
  %v41 = vld [vmem:[%s1 + $0xa8] sm:$0xff]
  %v42 = vld [vmem:[%s1 + $0xb0] sm:$0xff]
  %v43 = vld [vmem:[%s1 + $0xb8] sm:$0xff]
  %v44 = vld [vmem:[%s1 + $0xc0] sm:$0xff]
  %v45 = vld [vmem:[%s1 + $0xc8] sm:$0xff]
  %v46 = vld [vmem:[%s1 + $0xd0] sm:$0xff]
  %v47 = vld [vmem:[%s1 + $0xd8] sm:$0xff]
  %v48 = vld [vmem:[%s1 + $0xe0] sm:$0xff]
  %v49 = vld [vmem:[%s1 + $0xe8] sm:$0xff]
  %v50 = vld [vmem:[%s1 + $0xf0] sm:$0xff]
  %v51 = vld [vmem:[%s1 + $0xf8] sm:$0xff]
  %v52 = vld [vmem:[%s1 + $0x100] sm:$0xff]
  %v53 = vld [vmem:[%s1 + $0x108] sm:$0xff]
  %v54 = vld [vmem:[%s1 + $0x110] sm:$0xff]
  %v55 = vld [vmem:[%s1 + $0x118] sm:$0xff]
  %v56 = vld [vmem:[%s1 + $0x120] sm:$0xff]
  %v57 = vld [vmem:[%s1 + $0x128] sm:$0xff]
  %v58 = vld [vmem:[%s1 + $0x130] sm:$0xff]
  %v59 = vld [vmem:[%s1 + $0x138] sm:$0xff]
  %v60 = vld [vmem:[%s1 + $0x140] sm:$0xff]
  %v61 = vld [vmem:[%s1 + $0x148] sm:$0xff]
  %v62 = vld [vmem:[%s1 + $0x150] sm:$0xff]
  %v63 = vld [vmem:[%s1 + $0x158] sm:$0xff]
  %v64 = vld [vmem:[%s1 + $0x160] sm:$0xff]
  %v65 = vld [vmem:[%s1 + $0x168] sm:$0xff]
  %v66 = vld [vmem:[%s1 + $0x170] sm:$0xff]
  %v67 = vld [vmem:[%s1 + $0x178] sm:$0xff]
  %v68 = vld [vmem:[%s2] sm:$0x1]
  %v70 = vperm.slane %v68, 0
  %72 = vmatpush.msra.mxu0 %v35
  %73 = vmatpush.msra.mxu0 %v34
  %74 = vmatpush.msra.mxu0 %v33
  %75 = vmatpush.msra.mxu0 %v32
  %76 = vmatpush.msra.mxu0 %v31
  %77 = vmatpush.msra.mxu0 %v30
  %78 = vmatpush.msra.mxu0 %v29
  %79 = vmatpush.msra.mxu0 %v28
  %80 = vmatpush.msra.mxu0 %v27
  %81 = vmatpush.msra.mxu0 %v26
  %82 = vmatpush.msra.mxu0 %v25
  %83 = vmatpush.msra.mxu0 %v24
  %84 = vmatpush.msra.mxu0 %v23
  %85 = vmatpush.msra.mxu0 %v22
  %86 = vmatpush.msra.mxu0 %v21
  %87 = vmatpush.msra.mxu0 %v20
  %88 = vmatmul.f32.gmra.mxu0 %v14
  %v89 = vpop.f32.mrf.mxu0
  %v90 = vadd.f32 %v70, %v89
  %91 = vmatmul.f32.gmra.mxu0 %v17
  %v92 = vpop.f32.mrf.mxu0
  %v93 = vadd.f32 %v70, %v92
  %94 = vdwg.mxu0
  %95 = vmatpush.msra.mxu0 %v51
  %96 = vmatpush.msra.mxu0 %v50
  %97 = vmatpush.msra.mxu0 %v49
  %98 = vmatpush.msra.mxu0 %v48
  %99 = vmatpush.msra.mxu0 %v47
  %100 = vmatpush.msra.mxu0 %v46
  %101 = vmatpush.msra.mxu0 %v45
  %102 = vmatpush.msra.mxu0 %v44
  %103 = vmatpush.msra.mxu0 %v43
  %104 = vmatpush.msra.mxu0 %v42
  %105 = vmatpush.msra.mxu0 %v41
  %106 = vmatpush.msra.mxu0 %v40
  %107 = vmatpush.msra.mxu0 %v39
  %108 = vmatpush.msra.mxu0 %v38
  %109 = vmatpush.msra.mxu0 %v37
  %110 = vmatpush.msra.mxu0 %v36
  %111 = vmatmul.f32.gmra.mxu0 %v15
  %v112 = vpop.f32.mrf.mxu0
  %v113 = vadd.f32 %v90, %v112
  %114 = vmatmul.f32.gmra.mxu0 %v18
  %v115 = vpop.f32.mrf.mxu0
  %v116 = vadd.f32 %v93, %v115
  %117 = vdwg.mxu0
  %118 = vmatpush.msra.mxu0 %v67
  %119 = vmatpush.msra.mxu0 %v66
  %120 = vmatpush.msra.mxu0 %v65
  %121 = vmatpush.msra.mxu0 %v64
  %122 = vmatpush.msra.mxu0 %v63
  %123 = vmatpush.msra.mxu0 %v62
  %124 = vmatpush.msra.mxu0 %v61
  %125 = vmatpush.msra.mxu0 %v60
  %126 = vmatpush.msra.mxu0 %v59
  %127 = vmatpush.msra.mxu0 %v58
  %128 = vmatpush.msra.mxu0 %v57
  %129 = vmatpush.msra.mxu0 %v56
  %130 = vmatpush.msra.mxu0 %v55
  %131 = vmatpush.msra.mxu0 %v54
  %132 = vmatpush.msra.mxu0 %v53
  %133 = vmatpush.msra.mxu0 %v52
  %134 = vmatmul.f32.gmra.mxu0 %v16
  %v135 = vpop.f32.mrf.mxu0
  %v136 = vadd.f32 %v113, %v135
  %137 = vmatmul.f32.gmra.mxu0 %v19
  %v138 = vpop.f32.mrf.mxu0
  %v139 = vadd.f32 %v116, %v138
  %140 = vdwg.mxu0
  %vm141 = vcmask 48128
  %142 = vst.msk [vmem:[%s3] sm:$0xff] %vm141, %v136
  %143 = vst.msk [vmem:[%s3 + $0x8] sm:$0xff] %vm141, %v139
  // Predicated region
  $region14: #{_lambda_.35} parent=0 // pred_check
    _
  $region15: #{_lambda_.35} parent=0 // pred_check_branch
    %145 = sbr.rel (0) target = $region17
  $region16: #{_lambda_.35} parent=0 // pred_region
    _
  $region17: #{_lambda_.35} parent=0 // pred_fallthru
    _
  // Predicated region
  $region18: #{_lambda_.35} parent=0 // pred_check
    _
  $region19: #{_lambda_.35} parent=0 // pred_check_branch
    %147 = sbr.rel (0) target = $region21
  $region20: #{_lambda_.35} parent=0 // pred_region
    _
  $region21: #{_lambda_.35} parent=0 // pred_fallthru
    _

// kernel: _lambda_.46
$region0: #{_lambda_.46}
  #allocation0 [shape = 'u32[]', space=smem, size = 0x4, offset = 0x4, fixed_abs, tag = 'smem constant byte address 0x4 - core index']
  #allocation1 [shape = 'u32[72,128]{1,0:T(1,128)}', space=vmem, size = 0x9000, scoped, tag = 'internal scratch']
  %s0 = inlined_call_operand.vmem [shape: f32[16,768], index: 0, kind: input, shape index: {}]
  %s1 = inlined_call_operand.vmem [shape: f32[768,128], index: 1, kind: input, shape index: {}]
  %s2 = inlined_call_operand.vmem [shape: f32[1,128], index: 2, kind: input, shape index: {}]
  %s3 = inlined_call_operand.vmem [shape: f32[16,128], index: 3, kind: output, shape index: {}]
  %s4 = sld [smem:[#allocation0]]
  $region22: #{_lambda_.46} parent=0
    _
  %s6 = ssub.s32 1, %s4
  %s7 = scalar_select 0, %s6, %s4
  // Predicated region
  $region2: #{_lambda_.46} parent=0 // pred_check
    _
  $region3: #{_lambda_.46} parent=0 // pred_check_branch
    %9 = sbr.rel (0) target = $region5
  $region4: #{_lambda_.46} parent=0 // pred_region
    _
  $region5: #{_lambda_.46} parent=0 // pred_fallthru
    _
  // Predicated region
  $region6: #{_lambda_.46} parent=0 // pred_check
    _
  $region7: #{_lambda_.46} parent=0 // pred_check_branch
    %11 = sbr.rel (0) target = $region9
  $region8: #{_lambda_.46} parent=0 // pred_region
    _
  $region9: #{_lambda_.46} parent=0 // pred_fallthru
    _
  // Predicated region
  $region10: #{_lambda_.46} parent=0 // pred_check
    _
  $region11: #{_lambda_.46} parent=0 // pred_check_branch
    %13 = sbr.rel (0) target = $region13
  $region12: #{_lambda_.46} parent=0 // pred_region
    _
  $region13: #{_lambda_.46} parent=0 // pred_fallthru
    _
  %v14 = vld [vmem:[%s0] sm:$0xff]
  %v15 = vld [vmem:[%s0 + $0x8] sm:$0xff]
  %v16 = vld [vmem:[%s0 + $0x10] sm:$0xff]
  %v17 = vld [vmem:[%s0 + $0x18] sm:$0xff]
  %v18 = vld [vmem:[%s0 + $0x20] sm:$0xff]
  %v19 = vld [vmem:[%s0 + $0x28] sm:$0xff]
  %v20 = vld [vmem:[%s0 + $0x30] sm:$0xff]
  %v21 = vld [vmem:[%s0 + $0x38] sm:$0xff]
  %v22 = vld [vmem:[%s0 + $0x40] sm:$0xff]
  %v23 = vld [vmem:[%s0 + $0x48] sm:$0xff]
  %v24 = vld [vmem:[%s0 + $0x50] sm:$0xff]
  %v25 = vld [vmem:[%s0 + $0x58] sm:$0xff]
  %v26 = vmax.f32 %v14, 0.0
  %v27 = vmax.f32 %v15, 0.0
  %v28 = vmax.f32 %v16, 0.0
  %v29 = vmax.f32 %v17, 0.0
  %v30 = vmax.f32 %v18, 0.0
  %v31 = vmax.f32 %v19, 0.0
  %v32 = vmax.f32 %v20, 0.0
  %v33 = vmax.f32 %v21, 0.0
  %v34 = vmax.f32 %v22, 0.0
  %v35 = vmax.f32 %v23, 0.0
  %v36 = vmax.f32 %v24, 0.0
  %v37 = vmax.f32 %v25, 0.0
  %v38 = vld [vmem:[%s1] sm:$0xff]
  %v39 = vld [vmem:[%s1 + $0x8] sm:$0xff]
  %v40 = vld [vmem:[%s1 + $0x10] sm:$0xff]
  %v41 = vld [vmem:[%s1 + $0x18] sm:$0xff]
  %v42 = vld [vmem:[%s1 + $0x20] sm:$0xff]
  %v43 = vld [vmem:[%s1 + $0x28] sm:$0xff]
  %v44 = vld [vmem:[%s1 + $0x30] sm:$0xff]
  %v45 = vld [vmem:[%s1 + $0x38] sm:$0xff]
  %v46 = vld [vmem:[%s1 + $0x40] sm:$0xff]
  %v47 = vld [vmem:[%s1 + $0x48] sm:$0xff]
  %v48 = vld [vmem:[%s1 + $0x50] sm:$0xff]
  %v49 = vld [vmem:[%s1 + $0x58] sm:$0xff]
  %v50 = vld [vmem:[%s1 + $0x60] sm:$0xff]
  %v51 = vld [vmem:[%s1 + $0x68] sm:$0xff]
  %v52 = vld [vmem:[%s1 + $0x70] sm:$0xff]
  %v53 = vld [vmem:[%s1 + $0x78] sm:$0xff]
  %v54 = vld [vmem:[%s1 + $0x80] sm:$0xff]
  %v55 = vld [vmem:[%s1 + $0x88] sm:$0xff]
  %v56 = vld [vmem:[%s1 + $0x90] sm:$0xff]
  %v57 = vld [vmem:[%s1 + $0x98] sm:$0xff]
  %v58 = vld [vmem:[%s1 + $0xa0] sm:$0xff]
  %v59 = vld [vmem:[%s1 + $0xa8] sm:$0xff]
  %v60 = vld [vmem:[%s1 + $0xb0] sm:$0xff]
  %v61 = vld [vmem:[%s1 + $0xb8] sm:$0xff]
  %v62 = vld [vmem:[%s1 + $0xc0] sm:$0xff]
  %v63 = vld [vmem:[%s1 + $0xc8] sm:$0xff]
  %v64 = vld [vmem:[%s1 + $0xd0] sm:$0xff]
  %v65 = vld [vmem:[%s1 + $0xd8] sm:$0xff]
  %v66 = vld [vmem:[%s1 + $0xe0] sm:$0xff]
  %v67 = vld [vmem:[%s1 + $0xe8] sm:$0xff]
  %v68 = vld [vmem:[%s1 + $0xf0] sm:$0xff]
  %v69 = vld [vmem:[%s1 + $0xf8] sm:$0xff]
  %v70 = vld [vmem:[%s1 + $0x100] sm:$0xff]
  %v71 = vld [vmem:[%s1 + $0x108] sm:$0xff]
  %v72 = vld [vmem:[%s1 + $0x110] sm:$0xff]
  %v73 = vld [vmem:[%s1 + $0x118] sm:$0xff]
  %v74 = vld [vmem:[%s1 + $0x120] sm:$0xff]
  %v75 = vld [vmem:[%s1 + $0x128] sm:$0xff]
  %v76 = vld [vmem:[%s1 + $0x130] sm:$0xff]
  %v77 = vld [vmem:[%s1 + $0x138] sm:$0xff]
  %v78 = vld [vmem:[%s1 + $0x140] sm:$0xff]
  %v79 = vld [vmem:[%s1 + $0x148] sm:$0xff]
  %v80 = vld [vmem:[%s1 + $0x150] sm:$0xff]
  %v81 = vld [vmem:[%s1 + $0x158] sm:$0xff]
  %v82 = vld [vmem:[%s1 + $0x160] sm:$0xff]
  %v83 = vld [vmem:[%s1 + $0x168] sm:$0xff]
  %v84 = vld [vmem:[%s1 + $0x170] sm:$0xff]
  %v85 = vld [vmem:[%s1 + $0x178] sm:$0xff]
  %v86 = vld [vmem:[%s1 + $0x180] sm:$0xff]
  %v87 = vld [vmem:[%s1 + $0x188] sm:$0xff]
  %v88 = vld [vmem:[%s1 + $0x190] sm:$0xff]
  %v89 = vld [vmem:[%s1 + $0x198] sm:$0xff]
  %v90 = vld [vmem:[%s1 + $0x1a0] sm:$0xff]
  %v91 = vld [vmem:[%s1 + $0x1a8] sm:$0xff]
  %v92 = vld [vmem:[%s1 + $0x1b0] sm:$0xff]
  %v93 = vld [vmem:[%s1 + $0x1b8] sm:$0xff]
  %v94 = vld [vmem:[%s1 + $0x1c0] sm:$0xff]
  %v95 = vld [vmem:[%s1 + $0x1c8] sm:$0xff]
  %v96 = vld [vmem:[%s1 + $0x1d0] sm:$0xff]
  %v97 = vld [vmem:[%s1 + $0x1d8] sm:$0xff]
  %v98 = vld [vmem:[%s1 + $0x1e0] sm:$0xff]
  %v99 = vld [vmem:[%s1 + $0x1e8] sm:$0xff]
  %v100 = vld [vmem:[%s1 + $0x1f0] sm:$0xff]
  %v101 = vld [vmem:[%s1 + $0x1f8] sm:$0xff]
  %v102 = vld [vmem:[%s1 + $0x200] sm:$0xff]
  %v103 = vld [vmem:[%s1 + $0x208] sm:$0xff]
  %v104 = vld [vmem:[%s1 + $0x210] sm:$0xff]
  %v105 = vld [vmem:[%s1 + $0x218] sm:$0xff]
  %v106 = vld [vmem:[%s1 + $0x220] sm:$0xff]
  %v107 = vld [vmem:[%s1 + $0x228] sm:$0xff]
  %v108 = vld [vmem:[%s1 + $0x230] sm:$0xff]
  %v109 = vld [vmem:[%s1 + $0x238] sm:$0xff]
  %v110 = vld [vmem:[%s1 + $0x240] sm:$0xff]
  %v111 = vld [vmem:[%s1 + $0x248] sm:$0xff]
  %v112 = vld [vmem:[%s1 + $0x250] sm:$0xff]
  %v113 = vld [vmem:[%s1 + $0x258] sm:$0xff]
  %v114 = vld [vmem:[%s1 + $0x260] sm:$0xff]
  %v115 = vld [vmem:[%s1 + $0x268] sm:$0xff]
  %v116 = vld [vmem:[%s1 + $0x270] sm:$0xff]
  %v117 = vld [vmem:[%s1 + $0x278] sm:$0xff]
  %v118 = vld [vmem:[%s1 + $0x280] sm:$0xff]
  %v119 = vld [vmem:[%s1 + $0x288] sm:$0xff]
  %v120 = vld [vmem:[%s1 + $0x290] sm:$0xff]
  %v121 = vld [vmem:[%s1 + $0x298] sm:$0xff]
  %v122 = vld [vmem:[%s1 + $0x2a0] sm:$0xff]
  %v123 = vld [vmem:[%s1 + $0x2a8] sm:$0xff]
  %v124 = vld [vmem:[%s1 + $0x2b0] sm:$0xff]
  %v125 = vld [vmem:[%s1 + $0x2b8] sm:$0xff]
  %v126 = vld [vmem:[%s1 + $0x2c0] sm:$0xff]
  %v127 = vld [vmem:[%s1 + $0x2c8] sm:$0xff]
  %v128 = vld [vmem:[%s1 + $0x2d0] sm:$0xff]
  %v129 = vld [vmem:[%s1 + $0x2d8] sm:$0xff]
  %v130 = vld [vmem:[%s1 + $0x2e0] sm:$0xff]
  %v131 = vld [vmem:[%s1 + $0x2e8] sm:$0xff]
  %v132 = vld [vmem:[%s1 + $0x2f0] sm:$0xff]
  %v133 = vld [vmem:[%s1 + $0x2f8] sm:$0xff]
  %v134 = vld [vmem:[%s2] sm:$0x1]
  %v136 = vperm.slane %v134, 0
  %138 = vmatpush.msra.mxu0 %v53
  %139 = vmatpush.msra.mxu0 %v52
  %140 = vmatpush.msra.mxu0 %v51
  %141 = vmatpush.msra.mxu0 %v50
  %142 = vmatpush.msra.mxu0 %v49
  %143 = vmatpush.msra.mxu0 %v48
  %144 = vmatpush.msra.mxu0 %v47
  %145 = vmatpush.msra.mxu0 %v46
  %146 = vmatpush.msra.mxu0 %v45
  %147 = vmatpush.msra.mxu0 %v44
  %148 = vmatpush.msra.mxu0 %v43
  %149 = vmatpush.msra.mxu0 %v42
  %150 = vmatpush.msra.mxu0 %v41
  %151 = vmatpush.msra.mxu0 %v40
  %152 = vmatpush.msra.mxu0 %v39
  %153 = vmatpush.msra.mxu0 %v38
  %154 = vmatmul.f32.gmra.mxu0 %v26
  %v155 = vpop.f32.mrf.mxu0
  %v156 = vadd.f32 %v136, %v155
  %157 = vmatmul.f32.gmra.mxu0 %v32
  %v158 = vpop.f32.mrf.mxu0
  %v159 = vadd.f32 %v136, %v158
  %160 = vdwg.mxu0
  %161 = vmatpush.msra.mxu0 %v69
  %162 = vmatpush.msra.mxu0 %v68
  %163 = vmatpush.msra.mxu0 %v67
  %164 = vmatpush.msra.mxu0 %v66
  %165 = vmatpush.msra.mxu0 %v65
  %166 = vmatpush.msra.mxu0 %v64
  %167 = vmatpush.msra.mxu0 %v63
  %168 = vmatpush.msra.mxu0 %v62
  %169 = vmatpush.msra.mxu0 %v61
  %170 = vmatpush.msra.mxu0 %v60
  %171 = vmatpush.msra.mxu0 %v59
  %172 = vmatpush.msra.mxu0 %v58
  %173 = vmatpush.msra.mxu0 %v57
  %174 = vmatpush.msra.mxu0 %v56
  %175 = vmatpush.msra.mxu0 %v55
  %176 = vmatpush.msra.mxu0 %v54
  %177 = vmatmul.f32.gmra.mxu0 %v27
  %v178 = vpop.f32.mrf.mxu0
  %v179 = vadd.f32 %v156, %v178
  %180 = vmatmul.f32.gmra.mxu0 %v33
  %v181 = vpop.f32.mrf.mxu0
  %v182 = vadd.f32 %v159, %v181
  %183 = vdwg.mxu0
  %184 = vmatpush.msra.mxu0 %v85
  %185 = vmatpush.msra.mxu0 %v84
  %186 = vmatpush.msra.mxu0 %v83
  %187 = vmatpush.msra.mxu0 %v82
  %188 = vmatpush.msra.mxu0 %v81
  %189 = vmatpush.msra.mxu0 %v80
  %190 = vmatpush.msra.mxu0 %v79
  %191 = vmatpush.msra.mxu0 %v78
  %192 = vmatpush.msra.mxu0 %v77
  %193 = vmatpush.msra.mxu0 %v76
  %194 = vmatpush.msra.mxu0 %v75
  %195 = vmatpush.msra.mxu0 %v74
  %196 = vmatpush.msra.mxu0 %v73
  %197 = vmatpush.msra.mxu0 %v72
  %198 = vmatpush.msra.mxu0 %v71
  %199 = vmatpush.msra.mxu0 %v70
  %200 = vmatmul.f32.gmra.mxu0 %v28
  %v201 = vpop.f32.mrf.mxu0
  %v202 = vadd.f32 %v179, %v201
  %203 = vmatmul.f32.gmra.mxu0 %v34
  %v204 = vpop.f32.mrf.mxu0
  %v205 = vadd.f32 %v182, %v204
  %206 = vdwg.mxu0
  %207 = vmatpush.msra.mxu0 %v101
  %208 = vmatpush.msra.mxu0 %v100
  %209 = vmatpush.msra.mxu0 %v99
  %210 = vmatpush.msra.mxu0 %v98
  %211 = vmatpush.msra.mxu0 %v97
  %212 = vmatpush.msra.mxu0 %v96
  %213 = vmatpush.msra.mxu0 %v95
  %214 = vmatpush.msra.mxu0 %v94
  %215 = vmatpush.msra.mxu0 %v93
  %216 = vmatpush.msra.mxu0 %v92
  %217 = vmatpush.msra.mxu0 %v91
  %218 = vmatpush.msra.mxu0 %v90
  %219 = vmatpush.msra.mxu0 %v89
  %220 = vmatpush.msra.mxu0 %v88
  %221 = vmatpush.msra.mxu0 %v87
  %222 = vmatpush.msra.mxu0 %v86
  %223 = vmatmul.f32.gmra.mxu0 %v29
  %v224 = vpop.f32.mrf.mxu0
  %v225 = vadd.f32 %v202, %v224
  %226 = vmatmul.f32.gmra.mxu0 %v35
  %v227 = vpop.f32.mrf.mxu0
  %v228 = vadd.f32 %v205, %v227
  %229 = vdwg.mxu0
  %230 = vmatpush.msra.mxu0 %v117
  %231 = vmatpush.msra.mxu0 %v116
  %232 = vmatpush.msra.mxu0 %v115
  %233 = vmatpush.msra.mxu0 %v114
  %234 = vmatpush.msra.mxu0 %v113
  %235 = vmatpush.msra.mxu0 %v112
  %236 = vmatpush.msra.mxu0 %v111
  %237 = vmatpush.msra.mxu0 %v110
  %238 = vmatpush.msra.mxu0 %v109
  %239 = vmatpush.msra.mxu0 %v108
  %240 = vmatpush.msra.mxu0 %v107
  %241 = vmatpush.msra.mxu0 %v106
  %242 = vmatpush.msra.mxu0 %v105
  %243 = vmatpush.msra.mxu0 %v104
  %244 = vmatpush.msra.mxu0 %v103
  %245 = vmatpush.msra.mxu0 %v102
  %246 = vmatmul.f32.gmra.mxu0 %v30
  %v247 = vpop.f32.mrf.mxu0
  %v248 = vadd.f32 %v225, %v247
  %249 = vmatmul.f32.gmra.mxu0 %v36
  %v250 = vpop.f32.mrf.mxu0
  %v251 = vadd.f32 %v228, %v250
  %252 = vdwg.mxu0
  %253 = vmatpush.msra.mxu0 %v133
  %254 = vmatpush.msra.mxu0 %v132
  %255 = vmatpush.msra.mxu0 %v131
  %256 = vmatpush.msra.mxu0 %v130
  %257 = vmatpush.msra.mxu0 %v129
  %258 = vmatpush.msra.mxu0 %v128
  %259 = vmatpush.msra.mxu0 %v127
  %260 = vmatpush.msra.mxu0 %v126
  %261 = vmatpush.msra.mxu0 %v125
  %262 = vmatpush.msra.mxu0 %v124
  %263 = vmatpush.msra.mxu0 %v123
  %264 = vmatpush.msra.mxu0 %v122
  %265 = vmatpush.msra.mxu0 %v121
  %266 = vmatpush.msra.mxu0 %v120
  %267 = vmatpush.msra.mxu0 %v119
  %268 = vmatpush.msra.mxu0 %v118
  %269 = vmatmul.f32.gmra.mxu0 %v31
  %v270 = vpop.f32.mrf.mxu0
  %v271 = vadd.f32 %v248, %v270
  %272 = vmatmul.f32.gmra.mxu0 %v37
  %v273 = vpop.f32.mrf.mxu0
  %v274 = vadd.f32 %v251, %v273
  %275 = vdwg.mxu0
  %276 = vst [vmem:[%s3] sm:$0xff] %v271
  %277 = vst [vmem:[%s3 + $0x8] sm:$0xff] %v274
  // Predicated region
  $region14: #{_lambda_.46} parent=0 // pred_check
    _
  $region15: #{_lambda_.46} parent=0 // pred_check_branch
    %279 = sbr.rel (0) target = $region17
  $region16: #{_lambda_.46} parent=0 // pred_region
    _
  $region17: #{_lambda_.46} parent=0 // pred_fallthru
    _
  // Predicated region
  $region18: #{_lambda_.46} parent=0 // pred_check
    _
  $region19: #{_lambda_.46} parent=0 // pred_check_branch
    %281 = sbr.rel (0) target = $region21
  $region20: #{_lambda_.46} parent=0 // pred_region
    _
  $region21: #{_lambda_.46} parent=0 // pred_fallthru
    _

// kernel: _lambda_.47
$region0: #{_lambda_.47}
  #allocation0 [shape = 'u32[]', space=smem, size = 0x4, offset = 0x4, fixed_abs, tag = 'smem constant byte address 0x4 - core index']
  #allocation1 [shape = 'u32[72,128]{1,0:T(1,128)}', space=vmem, size = 0x9000, scoped, tag = 'internal scratch']
  %s0 = inlined_call_operand.vmem [shape: f32[16,128], index: 0, kind: input, shape index: {}]
  %s1 = inlined_call_operand.vmem [shape: f32[128,128], index: 1, kind: input, shape index: {}]
  %s2 = inlined_call_operand.vmem [shape: f32[1,128], index: 2, kind: input, shape index: {}]
  %s3 = inlined_call_operand.vmem [shape: f32[128,128], index: 3, kind: input, shape index: {}]
  %s4 = inlined_call_operand.vmem [shape: f32[1,128], index: 4, kind: input, shape index: {}]
  %s5 = inlined_call_operand.vmem [shape: f32[16,128], index: 5, kind: output, shape index: {}]
  %s6 = sld [smem:[#allocation0]]
  $region30: #{_lambda_.47} parent=0
    _
  %s8 = ssub.s32 1, %s6
  %s9 = scalar_select 0, %s8, %s6
  // Predicated region
  $region2: #{_lambda_.47} parent=0 // pred_check
    _
  $region3: #{_lambda_.47} parent=0 // pred_check_branch
    %11 = sbr.rel (0) target = $region5
  $region4: #{_lambda_.47} parent=0 // pred_region
    _
  $region5: #{_lambda_.47} parent=0 // pred_fallthru
    _
  // Predicated region
  $region6: #{_lambda_.47} parent=0 // pred_check
    _
  $region7: #{_lambda_.47} parent=0 // pred_check_branch
    %13 = sbr.rel (0) target = $region9
  $region8: #{_lambda_.47} parent=0 // pred_region
    _
  $region9: #{_lambda_.47} parent=0 // pred_fallthru
    _
  // Predicated region
  $region10: #{_lambda_.47} parent=0 // pred_check
    _
  $region11: #{_lambda_.47} parent=0 // pred_check_branch
    %15 = sbr.rel (0) target = $region13
  $region12: #{_lambda_.47} parent=0 // pred_region
    _
  $region13: #{_lambda_.47} parent=0 // pred_fallthru
    _
  // Predicated region
  $region14: #{_lambda_.47} parent=0 // pred_check
    _
  $region15: #{_lambda_.47} parent=0 // pred_check_branch
    %17 = sbr.rel (0) target = $region17
  $region16: #{_lambda_.47} parent=0 // pred_region
    _
  $region17: #{_lambda_.47} parent=0 // pred_fallthru
    _
  // Predicated region
  $region18: #{_lambda_.47} parent=0 // pred_check
    _
  $region19: #{_lambda_.47} parent=0 // pred_check_branch
    %19 = sbr.rel (0) target = $region21
  $region20: #{_lambda_.47} parent=0 // pred_region
    _
  $region21: #{_lambda_.47} parent=0 // pred_fallthru
    _
  %v20 = vld [vmem:[%s0] sm:$0xff]
  %v21 = vld [vmem:[%s0 + $0x8] sm:$0xff]
  %v22 = vmax.f32 %v20, 0.0
  %v23 = vmax.f32 %v21, 0.0
  %v24 = vld [vmem:[%s1] sm:$0xff]
  %v25 = vld [vmem:[%s1 + $0x8] sm:$0xff]
  %v26 = vld [vmem:[%s1 + $0x10] sm:$0xff]
  %v27 = vld [vmem:[%s1 + $0x18] sm:$0xff]
  %v28 = vld [vmem:[%s1 + $0x20] sm:$0xff]
  %v29 = vld [vmem:[%s1 + $0x28] sm:$0xff]
  %v30 = vld [vmem:[%s1 + $0x30] sm:$0xff]
  %v31 = vld [vmem:[%s1 + $0x38] sm:$0xff]
  %v32 = vld [vmem:[%s1 + $0x40] sm:$0xff]
  %v33 = vld [vmem:[%s1 + $0x48] sm:$0xff]
  %v34 = vld [vmem:[%s1 + $0x50] sm:$0xff]
  %v35 = vld [vmem:[%s1 + $0x58] sm:$0xff]
  %v36 = vld [vmem:[%s1 + $0x60] sm:$0xff]
  %v37 = vld [vmem:[%s1 + $0x68] sm:$0xff]
  %v38 = vld [vmem:[%s1 + $0x70] sm:$0xff]
  %v39 = vld [vmem:[%s1 + $0x78] sm:$0xff]
  %v40 = vld [vmem:[%s2] sm:$0x1]
  %v42 = vperm.slane %v40, 0
  %44 = vmatpush.msra.mxu0 %v39
  %45 = vmatpush.msra.mxu0 %v38
  %46 = vmatpush.msra.mxu0 %v37
  %47 = vmatpush.msra.mxu0 %v36
  %48 = vmatpush.msra.mxu0 %v35
  %49 = vmatpush.msra.mxu0 %v34
  %50 = vmatpush.msra.mxu0 %v33
  %51 = vmatpush.msra.mxu0 %v32
  %52 = vmatpush.msra.mxu0 %v31
  %53 = vmatpush.msra.mxu0 %v30
  %54 = vmatpush.msra.mxu0 %v29
  %55 = vmatpush.msra.mxu0 %v28
  %56 = vmatpush.msra.mxu0 %v27
  %57 = vmatpush.msra.mxu0 %v26
  %58 = vmatpush.msra.mxu0 %v25
  %59 = vmatpush.msra.mxu0 %v24
  %60 = vmatmul.f32.gmra.mxu0 %v22
  %v61 = vpop.f32.mrf.mxu0
  %v62 = vadd.f32 %v42, %v61
  %63 = vmatmul.f32.gmra.mxu0 %v23
  %v64 = vpop.f32.mrf.mxu0
  %v65 = vadd.f32 %v42, %v64
  %66 = vdwg.mxu0
  %v67 = vmax.f32 %v62, 0.0
  %v68 = vmax.f32 %v65, 0.0
  %v69 = vld [vmem:[%s3] sm:$0xff]
  %v70 = vld [vmem:[%s3 + $0x8] sm:$0xff]
  %v71 = vld [vmem:[%s3 + $0x10] sm:$0xff]
  %v72 = vld [vmem:[%s3 + $0x18] sm:$0xff]
  %v73 = vld [vmem:[%s3 + $0x20] sm:$0xff]
  %v74 = vld [vmem:[%s3 + $0x28] sm:$0xff]
  %v75 = vld [vmem:[%s3 + $0x30] sm:$0xff]
  %v76 = vld [vmem:[%s3 + $0x38] sm:$0xff]
  %v77 = vld [vmem:[%s3 + $0x40] sm:$0xff]
  %v78 = vld [vmem:[%s3 + $0x48] sm:$0xff]
  %v79 = vld [vmem:[%s3 + $0x50] sm:$0xff]
  %v80 = vld [vmem:[%s3 + $0x58] sm:$0xff]
  %v81 = vld [vmem:[%s3 + $0x60] sm:$0xff]
  %v82 = vld [vmem:[%s3 + $0x68] sm:$0xff]
  %v83 = vld [vmem:[%s3 + $0x70] sm:$0xff]
  %v84 = vld [vmem:[%s3 + $0x78] sm:$0xff]
  %v85 = vld [vmem:[%s4] sm:$0x1]
  %v87 = vperm.slane %v85, 0
  %89 = vmatpush.msra.mxu0 %v84
  %90 = vmatpush.msra.mxu0 %v83
  %91 = vmatpush.msra.mxu0 %v82
  %92 = vmatpush.msra.mxu0 %v81
  %93 = vmatpush.msra.mxu0 %v80
  %94 = vmatpush.msra.mxu0 %v79
  %95 = vmatpush.msra.mxu0 %v78
  %96 = vmatpush.msra.mxu0 %v77
  %97 = vmatpush.msra.mxu0 %v76
  %98 = vmatpush.msra.mxu0 %v75
  %99 = vmatpush.msra.mxu0 %v74
  %100 = vmatpush.msra.mxu0 %v73
  %101 = vmatpush.msra.mxu0 %v72
  %102 = vmatpush.msra.mxu0 %v71
  %103 = vmatpush.msra.mxu0 %v70
  %104 = vmatpush.msra.mxu0 %v69
  %105 = vmatmul.f32.gmra.mxu0 %v67
  %v106 = vpop.f32.mrf.mxu0
  %v107 = vadd.f32 %v87, %v106
  %108 = vmatmul.f32.gmra.mxu0 %v68
  %v109 = vpop.f32.mrf.mxu0
  %v110 = vadd.f32 %v87, %v109
  %111 = vdwg.mxu0
  %v112 = vadd.f32 %v107, %v20
  %v113 = vadd.f32 %v110, %v21
  %114 = vst [vmem:[%s5] sm:$0xff] %v112
  %115 = vst [vmem:[%s5 + $0x8] sm:$0xff] %v113
  // Predicated region
  $region22: #{_lambda_.47} parent=0 // pred_check
    _
  $region23: #{_lambda_.47} parent=0 // pred_check_branch
    %117 = sbr.rel (0) target = $region25
  $region24: #{_lambda_.47} parent=0 // pred_region
    _
  $region25: #{_lambda_.47} parent=0 // pred_fallthru
    _
  // Predicated region
  $region26: #{_lambda_.47} parent=0 // pred_check
    _
  $region27: #{_lambda_.47} parent=0 // pred_check_branch
    %119 = sbr.rel (0) target = $region29
  $region28: #{_lambda_.47} parent=0 // pred_region
    _
  $region29: #{_lambda_.47} parent=0 // pred_fallthru
    _

// kernel: _lambda_.50
$region0: #{_lambda_.50}
  #allocation0 [shape = 'u32[]', space=smem, size = 0x4, offset = 0x4, fixed_abs, tag = 'smem constant byte address 0x4 - core index']
  #allocation1 [shape = 'u32[72,128]{1,0:T(1,128)}', space=vmem, size = 0x9000, scoped, tag = 'internal scratch']
  %s0 = inlined_call_operand.vmem [shape: f32[16,128], index: 0, kind: input, shape index: {}]
  %s1 = inlined_call_operand.vmem [shape: f32[128,14], index: 1, kind: input, shape index: {}]
  %s2 = inlined_call_operand.vmem [shape: f32[1,14], index: 2, kind: input, shape index: {}]
  %s3 = inlined_call_operand.vmem [shape: f32[16,14], index: 3, kind: output, shape index: {}]
  %s4 = sld [smem:[#allocation0]]
  $region22: #{_lambda_.50} parent=0
    _
  %s6 = ssub.s32 1, %s4
  %s7 = scalar_select 0, %s6, %s4
  // Predicated region
  $region2: #{_lambda_.50} parent=0 // pred_check
    _
  $region3: #{_lambda_.50} parent=0 // pred_check_branch
    %9 = sbr.rel (0) target = $region5
  $region4: #{_lambda_.50} parent=0 // pred_region
    _
  $region5: #{_lambda_.50} parent=0 // pred_fallthru
    _
  // Predicated region
  $region6: #{_lambda_.50} parent=0 // pred_check
    _
  $region7: #{_lambda_.50} parent=0 // pred_check_branch
    %11 = sbr.rel (0) target = $region9
  $region8: #{_lambda_.50} parent=0 // pred_region
    _
  $region9: #{_lambda_.50} parent=0 // pred_fallthru
    _
  // Predicated region
  $region10: #{_lambda_.50} parent=0 // pred_check
    _
  $region11: #{_lambda_.50} parent=0 // pred_check_branch
    %13 = sbr.rel (0) target = $region13
  $region12: #{_lambda_.50} parent=0 // pred_region
    _
  $region13: #{_lambda_.50} parent=0 // pred_fallthru
    _
  %v14 = vld [vmem:[%s0] sm:$0xff]
  %v15 = vld [vmem:[%s0 + $0x8] sm:$0xff]
  %v16 = vmax.f32 %v14, 0.0
  %v17 = vmax.f32 %v15, 0.0
  %v18 = vld [vmem:[%s1] sm:$0xff]
  %v19 = vld [vmem:[%s1 + $0x8] sm:$0xff]
  %v20 = vld [vmem:[%s1 + $0x10] sm:$0xff]
  %v21 = vld [vmem:[%s1 + $0x18] sm:$0xff]
  %v22 = vld [vmem:[%s1 + $0x20] sm:$0xff]
  %v23 = vld [vmem:[%s1 + $0x28] sm:$0xff]
  %v24 = vld [vmem:[%s1 + $0x30] sm:$0xff]
  %v25 = vld [vmem:[%s1 + $0x38] sm:$0xff]
  %v26 = vld [vmem:[%s1 + $0x40] sm:$0xff]
  %v27 = vld [vmem:[%s1 + $0x48] sm:$0xff]
  %v28 = vld [vmem:[%s1 + $0x50] sm:$0xff]
  %v29 = vld [vmem:[%s1 + $0x58] sm:$0xff]
  %v30 = vld [vmem:[%s1 + $0x60] sm:$0xff]
  %v31 = vld [vmem:[%s1 + $0x68] sm:$0xff]
  %v32 = vld [vmem:[%s1 + $0x70] sm:$0xff]
  %v33 = vld [vmem:[%s1 + $0x78] sm:$0xff]
  %v34 = vld [vmem:[%s2] sm:$0x1]
  %v36 = vperm.slane %v34, 0
  %38 = vmatpush.msra.mxu0 %v33
  %39 = vmatpush.msra.mxu0 %v32
  %40 = vmatpush.msra.mxu0 %v31
  %41 = vmatpush.msra.mxu0 %v30
  %42 = vmatpush.msra.mxu0 %v29
  %43 = vmatpush.msra.mxu0 %v28
  %44 = vmatpush.msra.mxu0 %v27
  %45 = vmatpush.msra.mxu0 %v26
  %46 = vmatpush.msra.mxu0 %v25
  %47 = vmatpush.msra.mxu0 %v24
  %48 = vmatpush.msra.mxu0 %v23
  %49 = vmatpush.msra.mxu0 %v22
  %50 = vmatpush.msra.mxu0 %v21
  %51 = vmatpush.msra.mxu0 %v20
  %52 = vmatpush.msra.mxu0 %v19
  %53 = vmatpush.msra.mxu0 %v18
  %54 = vmatmul.f32.gmra.mxu0 %v16
  %v55 = vpop.f32.mrf.mxu0
  %v56 = vadd.f32 %v36, %v55
  %57 = vmatmul.f32.gmra.mxu0 %v17
  %v58 = vpop.f32.mrf.mxu0
  %v59 = vadd.f32 %v36, %v58
  %60 = vdwg.mxu0
  %vm61 = vcmask 113664
  %62 = vst.msk [vmem:[%s3] sm:$0xff] %vm61, %v56
  %63 = vst.msk [vmem:[%s3 + $0x8] sm:$0xff] %vm61, %v59
  // Predicated region
  $region14: #{_lambda_.50} parent=0 // pred_check
    _
  $region15: #{_lambda_.50} parent=0 // pred_check_branch
    %65 = sbr.rel (0) target = $region17
  $region16: #{_lambda_.50} parent=0 // pred_region
    _
  $region17: #{_lambda_.50} parent=0 // pred_fallthru
    _
  // Predicated region
  $region18: #{_lambda_.50} parent=0 // pred_check
    _
  $region19: #{_lambda_.50} parent=0 // pred_check_branch
    %67 = sbr.rel (0) target = $region21
  $region20: #{_lambda_.50} parent=0 // pred_region
    _
  $region21: #{_lambda_.50} parent=0 // pred_fallthru
    _

// kernel: mul.101
$region0: #{mul.101}
  #allocation0 [shape = 's32[1]{0}', space=sflag, size = 0x4, scoped, tag = 'scoped memory for mul.101']
  %s0 = inlined_call_operand.vmem [shape: f32[16,14], index: 0, kind: input, shape index: {}, may-alias: {0,1}]
  %s1 = inlined_call_operand.vmem [shape: f32[16,14], index: 1, kind: input, shape index: {}, may-alias: {0,1}]
  %s2 = inlined_call_operand.vmem [shape: f32[16,14], index: 2, kind: output, shape index: {}]
  %v3 = vld [vmem:[%s0] sm:$0xff]
  %v4 = vld [vmem:[%s1] sm:$0xff]
  %5 = xla_tuple %v3, %v4
  %6 = xla_tuple %5
  %v7 = vmul.f32 %v3, %v4
  %8 = xla_tuple %v7
  %9 = vst [vmem:[%s2] sm:$0xff] %v7
  %s10 = scalar_lea.vmem %s0, 8
  %v11 = vld [vmem:[%s10] sm:$0xff]
  %s12 = scalar_lea.vmem %s1, 8
  %v13 = vld [vmem:[%s12] sm:$0xff]
  %14 = xla_tuple %v11, %v13
  %15 = xla_tuple %14
  %v16 = vmul.f32 %v11, %v13
  %17 = xla_tuple %v16
  %s18 = scalar_lea.vmem %s2, 8
  %19 = vst [vmem:[%s18] sm:$0xff] %v16

// kernel: _lambda_.51
$region0: #{_lambda_.51}
  #allocation0 [shape = 'u32[]', space=smem, size = 0x4, offset = 0x4, fixed_abs, tag = 'smem constant byte address 0x4 - core index']
  #allocation1 [shape = 'u32[72,128]{1,0:T(1,128)}', space=vmem, size = 0x9000, scoped, tag = 'internal scratch']
  #allocation2 [shape = 'f32[1,1]{1,0:T(1,128)S(1)}', space=vmem, size = 0x200, scoped, tag = 'scoped memory for _lambda_.51']
  %s0 = inlined_call_operand.vmem [shape: f32[16,384], index: 0, kind: input, shape index: {}]
  %s1 = inlined_call_operand.vmem [shape: f32[384,128], index: 1, kind: input, shape index: {}]
  %s2 = inlined_call_operand.vmem [shape: f32[1,128], index: 2, kind: input, shape index: {}]
  %s3 = inlined_call_operand.vmem [shape: f32[128,1], index: 3, kind: input, shape index: {}]
  %s4 = inlined_call_operand.<no memory space> [shape: f32[1,1], index: 4, kind: input, shape index: {}]
  %s5 = inlined_call_operand.vmem [shape: f32[16,1], index: 5, kind: output, shape index: {}]
  %s6 = sld [smem:[#allocation0]]
  $region30: #{_lambda_.51} parent=0
    _
  %s8 = ssub.s32 1, %s6
  %s9 = scalar_select 0, %s8, %s6
  %v10 = vstv %s4
  %11 = vst [vmem:[#allocation2] sm:$0x1] %v10
  // Predicated region
  $region2: #{_lambda_.51} parent=0 // pred_check
    _
  $region3: #{_lambda_.51} parent=0 // pred_check_branch
    %13 = sbr.rel (0) target = $region5
  $region4: #{_lambda_.51} parent=0 // pred_region
    _
  $region5: #{_lambda_.51} parent=0 // pred_fallthru
    _
  // Predicated region
  $region6: #{_lambda_.51} parent=0 // pred_check
    _
  $region7: #{_lambda_.51} parent=0 // pred_check_branch
    %15 = sbr.rel (0) target = $region9
  $region8: #{_lambda_.51} parent=0 // pred_region
    _
  $region9: #{_lambda_.51} parent=0 // pred_fallthru
    _
  // Predicated region
  $region10: #{_lambda_.51} parent=0 // pred_check
    _
  $region11: #{_lambda_.51} parent=0 // pred_check_branch
    %17 = sbr.rel (0) target = $region13
  $region12: #{_lambda_.51} parent=0 // pred_region
    _
  $region13: #{_lambda_.51} parent=0 // pred_fallthru
    _
  // Predicated region
  $region14: #{_lambda_.51} parent=0 // pred_check
    _
  $region15: #{_lambda_.51} parent=0 // pred_check_branch
    %19 = sbr.rel (0) target = $region17
  $region16: #{_lambda_.51} parent=0 // pred_region
    _
  $region17: #{_lambda_.51} parent=0 // pred_fallthru
    _
  // Predicated region
  $region18: #{_lambda_.51} parent=0 // pred_check
    _
  $region19: #{_lambda_.51} parent=0 // pred_check_branch
    %21 = sbr.rel (0) target = $region21
  $region20: #{_lambda_.51} parent=0 // pred_region
    _
  $region21: #{_lambda_.51} parent=0 // pred_fallthru
    _
  %v22 = vld [vmem:[%s0] sm:$0xff]
  %v23 = vld [vmem:[%s0 + $0x8] sm:$0xff]
  %v24 = vld [vmem:[%s0 + $0x10] sm:$0xff]
  %v25 = vld [vmem:[%s0 + $0x18] sm:$0xff]
  %v26 = vld [vmem:[%s0 + $0x20] sm:$0xff]
  %v27 = vld [vmem:[%s0 + $0x28] sm:$0xff]
  %v28 = vld [vmem:[%s1] sm:$0xff]
  %v29 = vld [vmem:[%s1 + $0x8] sm:$0xff]
  %v30 = vld [vmem:[%s1 + $0x10] sm:$0xff]
  %v31 = vld [vmem:[%s1 + $0x18] sm:$0xff]
  %v32 = vld [vmem:[%s1 + $0x20] sm:$0xff]
  %v33 = vld [vmem:[%s1 + $0x28] sm:$0xff]
  %v34 = vld [vmem:[%s1 + $0x30] sm:$0xff]
  %v35 = vld [vmem:[%s1 + $0x38] sm:$0xff]
  %v36 = vld [vmem:[%s1 + $0x40] sm:$0xff]
  %v37 = vld [vmem:[%s1 + $0x48] sm:$0xff]
  %v38 = vld [vmem:[%s1 + $0x50] sm:$0xff]
  %v39 = vld [vmem:[%s1 + $0x58] sm:$0xff]
  %v40 = vld [vmem:[%s1 + $0x60] sm:$0xff]
  %v41 = vld [vmem:[%s1 + $0x68] sm:$0xff]
  %v42 = vld [vmem:[%s1 + $0x70] sm:$0xff]
  %v43 = vld [vmem:[%s1 + $0x78] sm:$0xff]
  %v44 = vld [vmem:[%s1 + $0x80] sm:$0xff]
  %v45 = vld [vmem:[%s1 + $0x88] sm:$0xff]
  %v46 = vld [vmem:[%s1 + $0x90] sm:$0xff]
  %v47 = vld [vmem:[%s1 + $0x98] sm:$0xff]
  %v48 = vld [vmem:[%s1 + $0xa0] sm:$0xff]
  %v49 = vld [vmem:[%s1 + $0xa8] sm:$0xff]
  %v50 = vld [vmem:[%s1 + $0xb0] sm:$0xff]
  %v51 = vld [vmem:[%s1 + $0xb8] sm:$0xff]
  %v52 = vld [vmem:[%s1 + $0xc0] sm:$0xff]
  %v53 = vld [vmem:[%s1 + $0xc8] sm:$0xff]
  %v54 = vld [vmem:[%s1 + $0xd0] sm:$0xff]
  %v55 = vld [vmem:[%s1 + $0xd8] sm:$0xff]
  %v56 = vld [vmem:[%s1 + $0xe0] sm:$0xff]
  %v57 = vld [vmem:[%s1 + $0xe8] sm:$0xff]
  %v58 = vld [vmem:[%s1 + $0xf0] sm:$0xff]
  %v59 = vld [vmem:[%s1 + $0xf8] sm:$0xff]
  %v60 = vld [vmem:[%s1 + $0x100] sm:$0xff]
  %v61 = vld [vmem:[%s1 + $0x108] sm:$0xff]
  %v62 = vld [vmem:[%s1 + $0x110] sm:$0xff]
  %v63 = vld [vmem:[%s1 + $0x118] sm:$0xff]
  %v64 = vld [vmem:[%s1 + $0x120] sm:$0xff]
  %v65 = vld [vmem:[%s1 + $0x128] sm:$0xff]
  %v66 = vld [vmem:[%s1 + $0x130] sm:$0xff]
  %v67 = vld [vmem:[%s1 + $0x138] sm:$0xff]
  %v68 = vld [vmem:[%s1 + $0x140] sm:$0xff]
  %v69 = vld [vmem:[%s1 + $0x148] sm:$0xff]
  %v70 = vld [vmem:[%s1 + $0x150] sm:$0xff]
  %v71 = vld [vmem:[%s1 + $0x158] sm:$0xff]
  %v72 = vld [vmem:[%s1 + $0x160] sm:$0xff]
  %v73 = vld [vmem:[%s1 + $0x168] sm:$0xff]
  %v74 = vld [vmem:[%s1 + $0x170] sm:$0xff]
  %v75 = vld [vmem:[%s1 + $0x178] sm:$0xff]
  %v76 = vld [vmem:[%s2] sm:$0x1]
  %v78 = vperm.slane %v76, 0
  %80 = vmatpush.msra.mxu0 %v43
  %81 = vmatpush.msra.mxu0 %v42
  %82 = vmatpush.msra.mxu0 %v41
  %83 = vmatpush.msra.mxu0 %v40
  %84 = vmatpush.msra.mxu0 %v39
  %85 = vmatpush.msra.mxu0 %v38
  %86 = vmatpush.msra.mxu0 %v37
  %87 = vmatpush.msra.mxu0 %v36
  %88 = vmatpush.msra.mxu0 %v35
  %89 = vmatpush.msra.mxu0 %v34
  %90 = vmatpush.msra.mxu0 %v33
  %91 = vmatpush.msra.mxu0 %v32
  %92 = vmatpush.msra.mxu0 %v31
  %93 = vmatpush.msra.mxu0 %v30
  %94 = vmatpush.msra.mxu0 %v29
  %95 = vmatpush.msra.mxu0 %v28
  %96 = vmatmul.f32.gmra.mxu0 %v22
  %v97 = vpop.f32.mrf.mxu0
  %v98 = vadd.f32 %v78, %v97
  %99 = vmatmul.f32.gmra.mxu0 %v25
  %v100 = vpop.f32.mrf.mxu0
  %v101 = vadd.f32 %v78, %v100
  %102 = vdwg.mxu0
  %103 = vmatpush.msra.mxu0 %v59
  %104 = vmatpush.msra.mxu0 %v58
  %105 = vmatpush.msra.mxu0 %v57
  %106 = vmatpush.msra.mxu0 %v56
  %107 = vmatpush.msra.mxu0 %v55
  %108 = vmatpush.msra.mxu0 %v54
  %109 = vmatpush.msra.mxu0 %v53
  %110 = vmatpush.msra.mxu0 %v52
  %111 = vmatpush.msra.mxu0 %v51
  %112 = vmatpush.msra.mxu0 %v50
  %113 = vmatpush.msra.mxu0 %v49
  %114 = vmatpush.msra.mxu0 %v48
  %115 = vmatpush.msra.mxu0 %v47
  %116 = vmatpush.msra.mxu0 %v46
  %117 = vmatpush.msra.mxu0 %v45
  %118 = vmatpush.msra.mxu0 %v44
  %119 = vmatmul.f32.gmra.mxu0 %v23
  %v120 = vpop.f32.mrf.mxu0
  %v121 = vadd.f32 %v98, %v120
  %122 = vmatmul.f32.gmra.mxu0 %v26
  %v123 = vpop.f32.mrf.mxu0
  %v124 = vadd.f32 %v101, %v123
  %125 = vdwg.mxu0
  %126 = vmatpush.msra.mxu0 %v75
  %127 = vmatpush.msra.mxu0 %v74
  %128 = vmatpush.msra.mxu0 %v73
  %129 = vmatpush.msra.mxu0 %v72
  %130 = vmatpush.msra.mxu0 %v71
  %131 = vmatpush.msra.mxu0 %v70
  %132 = vmatpush.msra.mxu0 %v69
  %133 = vmatpush.msra.mxu0 %v68
  %134 = vmatpush.msra.mxu0 %v67
  %135 = vmatpush.msra.mxu0 %v66
  %136 = vmatpush.msra.mxu0 %v65
  %137 = vmatpush.msra.mxu0 %v64
  %138 = vmatpush.msra.mxu0 %v63
  %139 = vmatpush.msra.mxu0 %v62
  %140 = vmatpush.msra.mxu0 %v61
  %141 = vmatpush.msra.mxu0 %v60
  %142 = vmatmul.f32.gmra.mxu0 %v24
  %v143 = vpop.f32.mrf.mxu0
  %v144 = vadd.f32 %v121, %v143
  %145 = vmatmul.f32.gmra.mxu0 %v27
  %v146 = vpop.f32.mrf.mxu0
  %v147 = vadd.f32 %v124, %v146
  %148 = vdwg.mxu0
  %v149 = vmax.f32 %v144, 0.0
  %v150 = vmax.f32 %v147, 0.0
  %v151 = vld [vmem:[%s3] sm:$0xff]
  %v152 = vld [vmem:[%s3 + $0x8] sm:$0xff]
  %v153 = vld [vmem:[%s3 + $0x10] sm:$0xff]
  %v154 = vld [vmem:[%s3 + $0x18] sm:$0xff]
  %v155 = vld [vmem:[%s3 + $0x20] sm:$0xff]
  %v156 = vld [vmem:[%s3 + $0x28] sm:$0xff]
  %v157 = vld [vmem:[%s3 + $0x30] sm:$0xff]
  %v158 = vld [vmem:[%s3 + $0x38] sm:$0xff]
  %v159 = vld [vmem:[%s3 + $0x40] sm:$0xff]
  %v160 = vld [vmem:[%s3 + $0x48] sm:$0xff]
  %v161 = vld [vmem:[%s3 + $0x50] sm:$0xff]
  %v162 = vld [vmem:[%s3 + $0x58] sm:$0xff]
  %v163 = vld [vmem:[%s3 + $0x60] sm:$0xff]
  %v164 = vld [vmem:[%s3 + $0x68] sm:$0xff]
  %v165 = vld [vmem:[%s3 + $0x70] sm:$0xff]
  %v166 = vld [vmem:[%s3 + $0x78] sm:$0xff]
  %v167 = vld [vmem:[#allocation2] sm:$0x1]
  %v169 = vperm.slane %v167, 0
  %171 = vmatpush.msra.mxu0 %v166
  %172 = vmatpush.msra.mxu0 %v165
  %173 = vmatpush.msra.mxu0 %v164
  %174 = vmatpush.msra.mxu0 %v163
  %175 = vmatpush.msra.mxu0 %v162
  %176 = vmatpush.msra.mxu0 %v161
  %177 = vmatpush.msra.mxu0 %v160
  %178 = vmatpush.msra.mxu0 %v159
  %179 = vmatpush.msra.mxu0 %v158
  %180 = vmatpush.msra.mxu0 %v157
  %181 = vmatpush.msra.mxu0 %v156
  %182 = vmatpush.msra.mxu0 %v155
  %183 = vmatpush.msra.mxu0 %v154
  %184 = vmatpush.msra.mxu0 %v153
  %185 = vmatpush.msra.mxu0 %v152
  %186 = vmatpush.msra.mxu0 %v151
  %187 = vmatmul.f32.gmra.mxu0 %v149
  %v188 = vpop.f32.mrf.mxu0
  %v189 = vadd.f32 %v169, %v188
  %190 = vmatmul.f32.gmra.mxu0 %v150
  %v191 = vpop.f32.mrf.mxu0
  %v192 = vadd.f32 %v169, %v191
  %193 = vdwg.mxu0
  %v194 = vsub.f32 0.0, %v189
  %v195 = vsub.f32 0.0, %v192
  %v196 = vmul.f32 %v194, 1.442695
  %v197 = vpow.pop %v196
  %v198 = vmul.f32 %v195, 1.442695
  %v199 = vpow.pop %v198
  %v200 = vadd.f32 %v197, 1.0
  %v201 = vadd.f32 %v199, 1.0
  %v202 = vrcp.pop %v200
  %v203 = vmul.f32 %v200, %v202
  %v204 = vsub.f32 1.0, %v203
  %v205 = vmul.f32 %v202, %v204
  %v206 = vadd.f32 %v202, %v205
  %vm207 = vweird.f32 %v200
  %vm208 = vweird.f32 %v202
  %vm209 = vmor %vm207, %vm208
  %v210 = vsel %vm209, %v202, %v206
  %v211 = vand.u32 2147483647, %v200
  %vm212 = vcmp.eq.f32.partialorder %v211, 8.507059e+37
  %v213 = vand.u32 %v200, 2147483648
  %v214 = vor.u32 1.1754944e-38, %v213
  %v215 = vsel %vm212, %v214, %v210
  %v216 = vmul.f32 1.0, %v215
  %v217 = vrcp.pop %v201
  %v218 = vmul.f32 %v201, %v217
  %v219 = vsub.f32 1.0, %v218
  %v220 = vmul.f32 %v217, %v219
  %v221 = vadd.f32 %v217, %v220
  %vm222 = vweird.f32 %v201
  %vm223 = vweird.f32 %v217
  %vm224 = vmor %vm222, %vm223
  %v225 = vsel %vm224, %v217, %v221
  %v226 = vand.u32 2147483647, %v201
  %vm227 = vcmp.eq.f32.partialorder %v226, 8.507059e+37
  %v228 = vand.u32 %v201, 2147483648
  %v229 = vor.u32 1.1754944e-38, %v228
  %v230 = vsel %vm227, %v229, %v225
  %v231 = vmul.f32 1.0, %v230
  %vm232 = vcmask 7168
  %233 = vst.msk [vmem:[%s5] sm:$0xff] %vm232, %v216
  %234 = vst.msk [vmem:[%s5 + $0x8] sm:$0xff] %vm232, %v231
  // Predicated region
  $region22: #{_lambda_.51} parent=0 // pred_check
    _
  $region23: #{_lambda_.51} parent=0 // pred_check_branch
    %236 = sbr.rel (0) target = $region25
  $region24: #{_lambda_.51} parent=0 // pred_region
    _
  $region25: #{_lambda_.51} parent=0 // pred_fallthru
    _
  // Predicated region
  $region26: #{_lambda_.51} parent=0 // pred_check
    _
  $region27: #{_lambda_.51} parent=0 // pred_check_branch
    %238 = sbr.rel (0) target = $region29
  $region28: #{_lambda_.51} parent=0 // pred_region
    _
  $region29: #{_lambda_.51} parent=0 // pred_fallthru
    _

</llo_original>
